<compile_context>
chip_gen: v6e
topology: v6e:2x2x1
jax: 0.10.0
libtpu: 0.0.40
codegen_flags: <defaults>
</compile_context>

<pallas_src>
import functools

import jax
import jax.numpy as jnp
from jax.experimental import pallas as pl
from jax.experimental.pallas import tpu as pltpu  # noqa: F401  (TPU backend)


# --------------------------- in-kernel math helpers ---------------------------

def _erf(x):
    # Abramowitz & Stegun 7.1.26 rational approximation, |abs error| <= 1.5e-7.
    # Reciprocal goes to the (otherwise idle) EUP slot instead of a VALU divide.
    a1, a2, a3, a4, a5 = (0.254829592, -0.284496736, 1.421413741,
                          -1.453152027, 1.061405429)
    p = 0.3275911
    sgn = jnp.where(x < 0.0, -1.0, 1.0)
    ax = jnp.abs(x)
    t = pl.reciprocal(1.0 + p * ax, approx=True)
    poly = ((((a5 * t + a4) * t + a3) * t + a2) * t + a1) * t
    return sgn * (1.0 - poly * jnp.exp(-ax * ax))


def _gelu(x):
    # Exact (erf) GELU, PyTorch nn.GELU / F.gelu default.
    return 0.5 * x * (1.0 + _erf(x * 0.7071067811865476))


# Number of weight tensors consumed per ViG block inside the fused kernel.
_PER_BLOCK = 19


# --------------------- the single fused whole-forward kernel ------------------

def _vgnn_kernel(x_ref, *refs, B, N, k, n_embed):
    """Whole VGNN forward in one pallas_call (no grid; everything in VMEM).

    refs layout:
      (w, scale, shift) x n_embed                      # patch embedding, BN folded
      pose                                             # (N, C)
      per block: i1w1,i1b1,i1w2,i1b2, mwe,mwo,mb,
                 o1w1,o1b1,o1w2,o1b2, i2w1,i2b1,i2w2,i2b2,
                 o2w1,o2b1,o2w2,o2b2
      out_ref                                          # (B*N, C)
    """
    o_ref = refs[-1]
    embed_refs = refs[:3 * n_embed]
    pose_ref = refs[3 * n_embed]
    block_refs = refs[3 * n_embed + 1:-1]
    n_blocks = len(block_refs) // _PER_BLOCK

    BN = B * N
    NEG = jnp.float32(-jnp.inf)

    def mm(a, w_ref):
        return jnp.dot(a, w_ref[...], preferred_element_type=jnp.float32)

    def two_layer_nn(v, w1, b1, w2, b2):
        # TODO(synk): TwoLayerNN assumed = Linear -> GELU -> Linear.
        return mm(_gelu(mm(v, w1) + b1[...]), w2) + b2[...]

    # ------------- patch embedding: 6 x (Linear + folded BN [+ GELU]) -----------
    h = x_ref[...]                                     # (BN, D_in)
    for li in range(n_embed):
        w_ref, s_ref, sh_ref = embed_refs[3 * li: 3 * li + 3]
        h = mm(h, w_ref) * s_ref[...] + sh_ref[...]    # Linear + eval-mode BN
        if li < n_embed - 1:                           # no GELU after last BN
            h = _gelu(h)

    # positional embedding (shared across batch)
    pose = pose_ref[...]                               # (N, C)
    h = h + jnp.concatenate([pose] * B, axis=0)        # (BN, C)

    # shared iota / block-diagonal (same-batch) mask for the flattened batch
    col = jax.lax.broadcasted_iota(jnp.int32, (BN, BN), 1)
    row = jax.lax.broadcasted_iota(jnp.int32, (BN, BN), 0)
    colf = col.astype(jnp.float32)
    same_batch = None
    for b in range(B):
        in_b = ((row >= b * N) & (row < (b + 1) * N)
                & (col >= b * N) & (col < (b + 1) * N))
        same_batch = in_b if same_batch is None else (same_batch | in_b)

    # ------------------------------- ViG blocks ---------------------------------
    for bi in range(n_blocks):
        (i1w1, i1b1, i1w2, i1b2,
         mwe, mwo, mb,
         o1w1, o1b1, o1w2, o1b2,
         i2w1, i2b1, i2w2, i2b2,
         o2w1, o2b1, o2w2, o2b2) = block_refs[bi * _PER_BLOCK:(bi + 1) * _PER_BLOCK]

        x = h                                          # (BN, C) shortcut

        # --- KNN graph: block-diagonal pairwise similarity + in-kernel top-k ----
        sim = jax.lax.dot_general(
            x, x, dimension_numbers=(((1,), (1,)), ((), ())),
            preferred_element_type=jnp.float32)        # x @ x^T, (BN, BN)
        sim = jnp.where(same_batch, sim, NEG)          # keep within-batch cols

        sels = []
        for _ in range(k):                             # k passes of masked argmax
            m = jnp.max(sim, axis=-1, keepdims=True)   # (BN, 1)
            cand = jnp.where(sim >= m, colf, jnp.float32(BN))
            idx = jnp.min(cand, axis=-1, keepdims=True)    # first max column
            sel_b = colf == idx                        # exact one-hot (bool)
            sels.append(sel_b.astype(jnp.float32))
            sim = jnp.where(sel_b, NEG, sim)           # mask out selected col

        # --- in_layer1, then k-way neighbor max aggregation (one MXU matmul) ----
        h1 = two_layer_nn(x, i1w1, i1b1, i1w2, i1b2)   # (BN, C)
        S = jnp.concatenate(sels, axis=0)              # (k*BN, BN) 0/1 selector
        gathered = jnp.dot(S, h1, preferred_element_type=jnp.float32)  # (k*BN, C)
        agg = gathered[0:BN]
        for kk in range(1, k):
            agg = jnp.maximum(agg, gathered[kk * BN:(kk + 1) * BN])
        rel = agg - h1                                 # max_k h1[nbr] - h1

        # --- multi_head_fc on interleaved [h1, rel] ------------------------------
        #   stack([h1, rel], -1).view(BN, 2C) @ W == h1 @ W[0::2] + rel @ W[1::2]
        y = mm(h1, mwe) + mm(rel, mwo) + mb[...]
        y = two_layer_nn(_gelu(y), o1w1, o1b1, o1w2, o1b2)   # out_layer1(gelu(.))
        x1 = y + x                                           # + shortcut

        z = two_layer_nn(x1, i2w1, i2b1, i2w2, i2b2)         # in_layer2
        z = two_layer_nn(_gelu(z), o2w1, o2b1, o2w2, o2b2)   # out_layer2(gelu(.))
        h = z + x1

    o_ref[...] = h


# ---------------------------------- wrappers -----------------------------------

def simple_patchify(img, patch):
    # TODO(synk): SimplePatchifier assumed = non-overlapping PxP patches (C,P,P).
    B, C, H, W = img.shape
    x = img.reshape(B, C, H // patch, patch, W // patch, patch)
    x = x.transpose(0, 2, 4, 1, 3, 5)                   # (B, h, w, C, P, P)
    return x.reshape(B, (H // patch) * (W // patch), C * patch * patch)


def fold_params(params, eps=1e-5):
    """One-time parameter prep (outside jit): fold eval-mode BatchNorm into
    scale/shift, reshape biases to (1,F) rows, split multi_head_fc weight into
    even/odd (h / rel) halves. Returns the flat tensor list fed to the kernel."""
    row = lambda b: b.reshape(1, -1)
    flat = []
    for layer in params["embed"]:
        s = layer["gamma"] * jax.lax.rsqrt(layer["var"] + eps)
        sh = (layer["b"] - layer["mean"]) * s + layer["beta"]
        flat += [layer["w"], row(s), row(sh)]
    flat.append(params["pose"])
    for p in params["blocks"]:
        flat += [
            p["in1"]["w1"], row(p["in1"]["b1"]), p["in1"]["w2"], row(p["in1"]["b2"]),
            p["mhfc_w"][0::2], p["mhfc_w"][1::2], row(p["mhfc_b"]),
            p["out1"]["w1"], row(p["out1"]["b1"]), p["out1"]["w2"], row(p["out1"]["b2"]),
            p["in2"]["w1"], row(p["in2"]["b1"]), p["in2"]["w2"], row(p["in2"]["b2"]),
            p["out2"]["w1"], row(p["out2"]["b1"]), p["out2"]["w2"], row(p["out2"]["b2"]),
        ]
    meta = dict(n_embed=len(params["embed"]),
                n_blocks=len(params["blocks"]),
                num_patches=params["pose"].shape[0],
                out_feature=params["pose"].shape[1])
    return flat, meta


def vgnn_forward(img, flat_params, meta, patch, num_edges):
    x = simple_patchify(img, patch)                     # (B, N, in_features)
    B, N, D_in = x.shape
    C = meta["out_feature"]
    kernel = functools.partial(_vgnn_kernel, B=B, N=N, k=num_edges,
                               n_embed=meta["n_embed"])
    out = pl.pallas_call(
        kernel,
        out_shape=jax.ShapeDtypeStruct((B * N, C), jnp.float32),
    )(x.reshape(B * N, D_in), *flat_params)
    return out.reshape(B, N, C)


# ------------------------ deterministic parameters ----------------------------

def init_params(key, in_features, out_feature, num_patches, num_blocks):
    keys = iter(jax.random.split(key, 512))

    def lin(fi, fo):
        w = jax.random.normal(next(keys), (fi, fo), jnp.float32) / jnp.sqrt(fi)
        b = 0.02 * jax.random.normal(next(keys), (fo,), jnp.float32)
        return w, b

    def bn(fo):
        gamma = 1.0 + 0.1 * jax.random.normal(next(keys), (fo,), jnp.float32)
        beta = 0.05 * jax.random.normal(next(keys), (fo,), jnp.float32)
        mean = 0.05 * jax.random.normal(next(keys), (fo,), jnp.float32)
        var = jax.random.uniform(next(keys), (fo,), jnp.float32,
                                 minval=0.8, maxval=1.2)
        return gamma, beta, mean, var

    dims = [in_features, out_feature // 2, out_feature // 4, out_feature // 8,
            out_feature // 4, out_feature // 2, out_feature]
    embed = []
    for li in range(6):
        w, b = lin(dims[li], dims[li + 1])
        gamma, beta, mean, var = bn(dims[li + 1])
        embed.append(dict(w=w, b=b, gamma=gamma, beta=beta, mean=mean, var=var))

    pose = jax.random.uniform(next(keys), (num_patches, out_feature), jnp.float32)

    def tln(fi, hidden):
        w1, b1 = lin(fi, hidden)
        w2, b2 = lin(hidden, fi)
        return dict(w1=w1, b1=b1, w2=w2, b2=b2)

    C = out_feature
    blocks = []
    for _ in range(num_blocks):
        mw, mb = lin(2 * C, C)
        blocks.append(dict(in1=tln(C, C), out1=tln(C, C),
                           in2=tln(C, 4 * C), out2=tln(C, 4 * C),
                           mhfc_w=mw, mhfc_b=mb))
    return dict(embed=embed, pose=pose, blocks=blocks)


# ---------------------------------- main ---------------------------------------

if __name__ == "__main__":
    key = jax.random.PRNGKey(0)
    B, Cimg, H, W = 2, 3, 64, 64
    patch = 16
    out_feature = 128                      # lane-dense C (full 128-lane stores)
    num_blocks = 2
    num_edges = 4
    N = (H // patch) * (W // patch)        # 16 patches
    in_features = Cimg * patch * patch     # 768

    k_img, k_par = jax.random.split(key)
    img = jax.random.normal(k_img, (B, Cimg, H, W), jnp.float32)
    params = init_params(k_par, in_features, out_feature, N, num_blocks)
    flat, meta = fold_params(params)       # one-time BN fold / weight prep

    fwd = jax.jit(functools.partial(vgnn_forward, meta=meta, patch=patch,
                                    num_edges=num_edges))
    out = fwd(img, flat)
    out = jax.block_until_ready(out)
    assert out.shape == (B, N, out_feature), out.shape
    assert bool(jnp.all(jnp.isfinite(out)))
    print("KERNEL_OK")
</pallas_src>

<mosaic_0001>
module attributes {stable_mosaic.version = 11 : i64} {
  func.func @_vgnn_kernel(%arg0: memref<32x768xf32, #tpu.memory_space<vmem>>, %arg1: memref<768x64xf32, #tpu.memory_space<vmem>>, %arg2: memref<1x64xf32, #tpu.memory_space<vmem>>, %arg3: memref<1x64xf32, #tpu.memory_space<vmem>>, %arg4: memref<64x32xf32, #tpu.memory_space<vmem>>, %arg5: memref<1x32xf32, #tpu.memory_space<vmem>>, %arg6: memref<1x32xf32, #tpu.memory_space<vmem>>, %arg7: memref<32x16xf32, #tpu.memory_space<vmem>>, %arg8: memref<1x16xf32, #tpu.memory_space<vmem>>, %arg9: memref<1x16xf32, #tpu.memory_space<vmem>>, %arg10: memref<16x32xf32, #tpu.memory_space<vmem>>, %arg11: memref<1x32xf32, #tpu.memory_space<vmem>>, %arg12: memref<1x32xf32, #tpu.memory_space<vmem>>, %arg13: memref<32x64xf32, #tpu.memory_space<vmem>>, %arg14: memref<1x64xf32, #tpu.memory_space<vmem>>, %arg15: memref<1x64xf32, #tpu.memory_space<vmem>>, %arg16: memref<64x128xf32, #tpu.memory_space<vmem>>, %arg17: memref<1x128xf32, #tpu.memory_space<vmem>>, %arg18: memref<1x128xf32, #tpu.memory_space<vmem>>, %arg19: memref<16x128xf32, #tpu.memory_space<vmem>>, %arg20: memref<128x128xf32, #tpu.memory_space<vmem>>, %arg21: memref<1x128xf32, #tpu.memory_space<vmem>>, %arg22: memref<128x128xf32, #tpu.memory_space<vmem>>, %arg23: memref<1x128xf32, #tpu.memory_space<vmem>>, %arg24: memref<128x128xf32, #tpu.memory_space<vmem>>, %arg25: memref<128x128xf32, #tpu.memory_space<vmem>>, %arg26: memref<1x128xf32, #tpu.memory_space<vmem>>, %arg27: memref<128x128xf32, #tpu.memory_space<vmem>>, %arg28: memref<1x128xf32, #tpu.memory_space<vmem>>, %arg29: memref<128x128xf32, #tpu.memory_space<vmem>>, %arg30: memref<1x128xf32, #tpu.memory_space<vmem>>, %arg31: memref<128x512xf32, #tpu.memory_space<vmem>>, %arg32: memref<1x512xf32, #tpu.memory_space<vmem>>, %arg33: memref<512x128xf32, #tpu.memory_space<vmem>>, %arg34: memref<1x128xf32, #tpu.memory_space<vmem>>, %arg35: memref<128x512xf32, #tpu.memory_space<vmem>>, %arg36: memref<1x512xf32, #tpu.memory_space<vmem>>, %arg37: memref<512x128xf32, #tpu.memory_space<vmem>>, %arg38: memref<1x128xf32, #tpu.memory_space<vmem>>, %arg39: memref<128x128xf32, #tpu.memory_space<vmem>>, %arg40: memref<1x128xf32, #tpu.memory_space<vmem>>, %arg41: memref<128x128xf32, #tpu.memory_space<vmem>>, %arg42: memref<1x128xf32, #tpu.memory_space<vmem>>, %arg43: memref<128x128xf32, #tpu.memory_space<vmem>>, %arg44: memref<128x128xf32, #tpu.memory_space<vmem>>, %arg45: memref<1x128xf32, #tpu.memory_space<vmem>>, %arg46: memref<128x128xf32, #tpu.memory_space<vmem>>, %arg47: memref<1x128xf32, #tpu.memory_space<vmem>>, %arg48: memref<128x128xf32, #tpu.memory_space<vmem>>, %arg49: memref<1x128xf32, #tpu.memory_space<vmem>>, %arg50: memref<128x512xf32, #tpu.memory_space<vmem>>, %arg51: memref<1x512xf32, #tpu.memory_space<vmem>>, %arg52: memref<512x128xf32, #tpu.memory_space<vmem>>, %arg53: memref<1x128xf32, #tpu.memory_space<vmem>>, %arg54: memref<128x512xf32, #tpu.memory_space<vmem>>, %arg55: memref<1x512xf32, #tpu.memory_space<vmem>>, %arg56: memref<512x128xf32, #tpu.memory_space<vmem>>, %arg57: memref<1x128xf32, #tpu.memory_space<vmem>>, %arg58: memref<32x128xf32, #tpu.memory_space<vmem>>) attributes {dimension_semantics = [], scalar_prefetch = 0 : i64, scratch_operands = 0 : i64, tpu.core_type = #tpu.core_type<tc>} {
    %c0 = arith.constant 0 : index
    %c0_0 = arith.constant 0 : index
    %0 = vector.load %arg0[%c0, %c0_0] : memref<32x768xf32, #tpu.memory_space<vmem>>, vector<32x768xf32>
    %c0_1 = arith.constant 0 : index
    %c0_2 = arith.constant 0 : index
    %1 = vector.load %arg1[%c0_1, %c0_2] : memref<768x64xf32, #tpu.memory_space<vmem>>, vector<768x64xf32>
    %cst = arith.constant dense<0.000000e+00> : vector<32x64xf32>
    %2 = tpu.matmul %0, %1, %cst {dimension_numbers = #tpu.dot_dimension_numbers<[1], [0], [0], [1], [0, 0, 1, 1], [], []>} : vector<32x768xf32>, vector<768x64xf32>, vector<32x64xf32> -> vector<32x64xf32>
    %c0_3 = arith.constant 0 : index
    %c0_4 = arith.constant 0 : index
    %3 = vector.load %arg2[%c0_3, %c0_4] : memref<1x64xf32, #tpu.memory_space<vmem>>, vector<1x64xf32>
    %4 = vector.broadcast %3 : vector<1x64xf32> to vector<32x64xf32>
    %5 = arith.mulf %2, %4 : vector<32x64xf32>
    %c0_5 = arith.constant 0 : index
    %c0_6 = arith.constant 0 : index
    %6 = vector.load %arg3[%c0_5, %c0_6] : memref<1x64xf32, #tpu.memory_space<vmem>>, vector<1x64xf32>
    %7 = vector.broadcast %6 : vector<1x64xf32> to vector<32x64xf32>
    %8 = arith.addf %5, %7 : vector<32x64xf32>
    %cst_7 = arith.constant 5.000000e-01 : f32
    %9 = vector.broadcast %cst_7 : f32 to vector<32x64xf32>
    %10 = arith.mulf %9, %8 : vector<32x64xf32>
    %cst_8 = arith.constant 0.707106769 : f32
    %11 = vector.broadcast %cst_8 : f32 to vector<32x64xf32>
    %12 = arith.mulf %8, %11 : vector<32x64xf32>
    %cst_9 = arith.constant 0.000000e+00 : f32
    %13 = vector.broadcast %cst_9 : f32 to vector<32x64xf32>
    %14 = arith.cmpf olt, %12, %13 : vector<32x64xf32>
    %cst_10 = arith.constant -1.000000e+00 : f32
    %cst_11 = arith.constant 1.000000e+00 : f32
    %15 = vector.broadcast %cst_10 : f32 to vector<32x64xf32>
    %16 = vector.broadcast %cst_11 : f32 to vector<32x64xf32>
    %17 = arith.select %14, %15, %16 : vector<32x64xi1>, vector<32x64xf32>
    %18 = math.absf %12 : vector<32x64xf32>
    %cst_12 = arith.constant 0.327591091 : f32
    %19 = vector.broadcast %cst_12 : f32 to vector<32x64xf32>
    %20 = arith.mulf %19, %18 : vector<32x64xf32>
    %cst_13 = arith.constant 1.000000e+00 : f32
    %21 = vector.broadcast %cst_13 : f32 to vector<32x64xf32>
    %22 = arith.addf %21, %20 : vector<32x64xf32>
    %23 = tpu.reciprocal %22 {approx = true} : vector<32x64xf32> -> vector<32x64xf32>
    %cst_14 = arith.constant 1.06140542 : f32
    %24 = vector.broadcast %cst_14 : f32 to vector<32x64xf32>
    %25 = arith.mulf %24, %23 : vector<32x64xf32>
    %cst_15 = arith.constant -1.45315206 : f32
    %26 = vector.broadcast %cst_15 : f32 to vector<32x64xf32>
    %27 = arith.addf %25, %26 : vector<32x64xf32>
    %28 = arith.mulf %27, %23 : vector<32x64xf32>
    %cst_16 = arith.constant 1.42141378 : f32
    %29 = vector.broadcast %cst_16 : f32 to vector<32x64xf32>
    %30 = arith.addf %28, %29 : vector<32x64xf32>
    %31 = arith.mulf %30, %23 : vector<32x64xf32>
    %cst_17 = arith.constant -0.284496725 : f32
    %32 = vector.broadcast %cst_17 : f32 to vector<32x64xf32>
    %33 = arith.addf %31, %32 : vector<32x64xf32>
    %34 = arith.mulf %33, %23 : vector<32x64xf32>
    %cst_18 = arith.constant 0.254829586 : f32
    %35 = vector.broadcast %cst_18 : f32 to vector<32x64xf32>
    %36 = arith.addf %34, %35 : vector<32x64xf32>
    %37 = arith.mulf %36, %23 : vector<32x64xf32>
    %cst_19 = arith.constant 0.000000e+00 : f32
    %38 = vector.broadcast %cst_19 : f32 to vector<32x64xf32>
    %39 = arith.subf %38, %18 : vector<32x64xf32>
    %40 = arith.mulf %39, %18 : vector<32x64xf32>
    %41 = math.exp %40 : vector<32x64xf32>
    %42 = arith.mulf %37, %41 : vector<32x64xf32>
    %cst_20 = arith.constant 1.000000e+00 : f32
    %43 = vector.broadcast %cst_20 : f32 to vector<32x64xf32>
    %44 = arith.subf %43, %42 : vector<32x64xf32>
    %45 = arith.mulf %17, %44 : vector<32x64xf32>
    %cst_21 = arith.constant 1.000000e+00 : f32
    %46 = vector.broadcast %cst_21 : f32 to vector<32x64xf32>
    %47 = arith.addf %46, %45 : vector<32x64xf32>
    %48 = arith.mulf %10, %47 : vector<32x64xf32>
    %c0_22 = arith.constant 0 : index
    %c0_23 = arith.constant 0 : index
    %49 = vector.load %arg4[%c0_22, %c0_23] : memref<64x32xf32, #tpu.memory_space<vmem>>, vector<64x32xf32>
    %cst_24 = arith.constant dense<0.000000e+00> : vector<32x32xf32>
    %50 = tpu.matmul %48, %49, %cst_24 {dimension_numbers = #tpu.dot_dimension_numbers<[1], [0], [0], [1], [0, 0, 1, 1], [], []>} : vector<32x64xf32>, vector<64x32xf32>, vector<32x32xf32> -> vector<32x32xf32>
    %c0_25 = arith.constant 0 : index
    %c0_26 = arith.constant 0 : index
    %51 = vector.load %arg5[%c0_25, %c0_26] : memref<1x32xf32, #tpu.memory_space<vmem>>, vector<1x32xf32>
    %52 = vector.broadcast %51 : vector<1x32xf32> to vector<32x32xf32>
    %53 = arith.mulf %50, %52 : vector<32x32xf32>
    %c0_27 = arith.constant 0 : index
    %c0_28 = arith.constant 0 : index
    %54 = vector.load %arg6[%c0_27, %c0_28] : memref<1x32xf32, #tpu.memory_space<vmem>>, vector<1x32xf32>
    %55 = vector.broadcast %54 : vector<1x32xf32> to vector<32x32xf32>
    %56 = arith.addf %53, %55 : vector<32x32xf32>
    %cst_29 = arith.constant 5.000000e-01 : f32
    %57 = vector.broadcast %cst_29 : f32 to vector<32x32xf32>
    %58 = arith.mulf %57, %56 : vector<32x32xf32>
    %cst_30 = arith.constant 0.707106769 : f32
    %59 = vector.broadcast %cst_30 : f32 to vector<32x32xf32>
    %60 = arith.mulf %56, %59 : vector<32x32xf32>
    %cst_31 = arith.constant 0.000000e+00 : f32
    %61 = vector.broadcast %cst_31 : f32 to vector<32x32xf32>
    %62 = arith.cmpf olt, %60, %61 : vector<32x32xf32>
    %cst_32 = arith.constant -1.000000e+00 : f32
    %cst_33 = arith.constant 1.000000e+00 : f32
    %63 = vector.broadcast %cst_32 : f32 to vector<32x32xf32>
    %64 = vector.broadcast %cst_33 : f32 to vector<32x32xf32>
    %65 = arith.select %62, %63, %64 : vector<32x32xi1>, vector<32x32xf32>
    %66 = math.absf %60 : vector<32x32xf32>
    %cst_34 = arith.constant 0.327591091 : f32
    %67 = vector.broadcast %cst_34 : f32 to vector<32x32xf32>
    %68 = arith.mulf %67, %66 : vector<32x32xf32>
    %cst_35 = arith.constant 1.000000e+00 : f32
    %69 = vector.broadcast %cst_35 : f32 to vector<32x32xf32>
    %70 = arith.addf %69, %68 : vector<32x32xf32>
    %71 = tpu.reciprocal %70 {approx = true} : vector<32x32xf32> -> vector<32x32xf32>
    %cst_36 = arith.constant 1.06140542 : f32
    %72 = vector.broadcast %cst_36 : f32 to vector<32x32xf32>
    %73 = arith.mulf %72, %71 : vector<32x32xf32>
    %cst_37 = arith.constant -1.45315206 : f32
    %74 = vector.broadcast %cst_37 : f32 to vector<32x32xf32>
    %75 = arith.addf %73, %74 : vector<32x32xf32>
    %76 = arith.mulf %75, %71 : vector<32x32xf32>
    %cst_38 = arith.constant 1.42141378 : f32
    %77 = vector.broadcast %cst_38 : f32 to vector<32x32xf32>
    %78 = arith.addf %76, %77 : vector<32x32xf32>
    %79 = arith.mulf %78, %71 : vector<32x32xf32>
    %cst_39 = arith.constant -0.284496725 : f32
    %80 = vector.broadcast %cst_39 : f32 to vector<32x32xf32>
    %81 = arith.addf %79, %80 : vector<32x32xf32>
    %82 = arith.mulf %81, %71 : vector<32x32xf32>
    %cst_40 = arith.constant 0.254829586 : f32
    %83 = vector.broadcast %cst_40 : f32 to vector<32x32xf32>
    %84 = arith.addf %82, %83 : vector<32x32xf32>
    %85 = arith.mulf %84, %71 : vector<32x32xf32>
    %cst_41 = arith.constant 0.000000e+00 : f32
    %86 = vector.broadcast %cst_41 : f32 to vector<32x32xf32>
    %87 = arith.subf %86, %66 : vector<32x32xf32>
    %88 = arith.mulf %87, %66 : vector<32x32xf32>
    %89 = math.exp %88 : vector<32x32xf32>
    %90 = arith.mulf %85, %89 : vector<32x32xf32>
    %cst_42 = arith.constant 1.000000e+00 : f32
    %91 = vector.broadcast %cst_42 : f32 to vector<32x32xf32>
    %92 = arith.subf %91, %90 : vector<32x32xf32>
    %93 = arith.mulf %65, %92 : vector<32x32xf32>
    %cst_43 = arith.constant 1.000000e+00 : f32
    %94 = vector.broadcast %cst_43 : f32 to vector<32x32xf32>
    %95 = arith.addf %94, %93 : vector<32x32xf32>
    %96 = arith.mulf %58, %95 : vector<32x32xf32>
    %c0_44 = arith.constant 0 : index
    %c0_45 = arith.constant 0 : index
    %97 = vector.load %arg7[%c0_44, %c0_45] : memref<32x16xf32, #tpu.memory_space<vmem>>, vector<32x16xf32>
    %cst_46 = arith.constant dense<0.000000e+00> : vector<32x16xf32>
    %98 = tpu.matmul %96, %97, %cst_46 {dimension_numbers = #tpu.dot_dimension_numbers<[1], [0], [0], [1], [0, 0, 1, 1], [], []>} : vector<32x32xf32>, vector<32x16xf32>, vector<32x16xf32> -> vector<32x16xf32>
    %c0_47 = arith.constant 0 : index
    %c0_48 = arith.constant 0 : index
    %99 = vector.load %arg8[%c0_47, %c0_48] : memref<1x16xf32, #tpu.memory_space<vmem>>, vector<1x16xf32>
    %100 = vector.broadcast %99 : vector<1x16xf32> to vector<32x16xf32>
    %101 = arith.mulf %98, %100 : vector<32x16xf32>
    %c0_49 = arith.constant 0 : index
    %c0_50 = arith.constant 0 : index
    %102 = vector.load %arg9[%c0_49, %c0_50] : memref<1x16xf32, #tpu.memory_space<vmem>>, vector<1x16xf32>
    %103 = vector.broadcast %102 : vector<1x16xf32> to vector<32x16xf32>
    %104 = arith.addf %101, %103 : vector<32x16xf32>
    %cst_51 = arith.constant 5.000000e-01 : f32
    %105 = vector.broadcast %cst_51 : f32 to vector<32x16xf32>
    %106 = arith.mulf %105, %104 : vector<32x16xf32>
    %cst_52 = arith.constant 0.707106769 : f32
    %107 = vector.broadcast %cst_52 : f32 to vector<32x16xf32>
    %108 = arith.mulf %104, %107 : vector<32x16xf32>
    %cst_53 = arith.constant 0.000000e+00 : f32
    %109 = vector.broadcast %cst_53 : f32 to vector<32x16xf32>
    %110 = arith.cmpf olt, %108, %109 : vector<32x16xf32>
    %cst_54 = arith.constant -1.000000e+00 : f32
    %cst_55 = arith.constant 1.000000e+00 : f32
    %111 = vector.broadcast %cst_54 : f32 to vector<32x16xf32>
    %112 = vector.broadcast %cst_55 : f32 to vector<32x16xf32>
    %113 = arith.select %110, %111, %112 : vector<32x16xi1>, vector<32x16xf32>
    %114 = math.absf %108 : vector<32x16xf32>
    %cst_56 = arith.constant 0.327591091 : f32
    %115 = vector.broadcast %cst_56 : f32 to vector<32x16xf32>
    %116 = arith.mulf %115, %114 : vector<32x16xf32>
    %cst_57 = arith.constant 1.000000e+00 : f32
    %117 = vector.broadcast %cst_57 : f32 to vector<32x16xf32>
    %118 = arith.addf %117, %116 : vector<32x16xf32>
    %119 = tpu.reciprocal %118 {approx = true} : vector<32x16xf32> -> vector<32x16xf32>
    %cst_58 = arith.constant 1.06140542 : f32
    %120 = vector.broadcast %cst_58 : f32 to vector<32x16xf32>
    %121 = arith.mulf %120, %119 : vector<32x16xf32>
    %cst_59 = arith.constant -1.45315206 : f32
    %122 = vector.broadcast %cst_59 : f32 to vector<32x16xf32>
    %123 = arith.addf %121, %122 : vector<32x16xf32>
    %124 = arith.mulf %123, %119 : vector<32x16xf32>
    %cst_60 = arith.constant 1.42141378 : f32
    %125 = vector.broadcast %cst_60 : f32 to vector<32x16xf32>
    %126 = arith.addf %124, %125 : vector<32x16xf32>
    %127 = arith.mulf %126, %119 : vector<32x16xf32>
    %cst_61 = arith.constant -0.284496725 : f32
    %128 = vector.broadcast %cst_61 : f32 to vector<32x16xf32>
    %129 = arith.addf %127, %128 : vector<32x16xf32>
    %130 = arith.mulf %129, %119 : vector<32x16xf32>
    %cst_62 = arith.constant 0.254829586 : f32
    %131 = vector.broadcast %cst_62 : f32 to vector<32x16xf32>
    %132 = arith.addf %130, %131 : vector<32x16xf32>
    %133 = arith.mulf %132, %119 : vector<32x16xf32>
    %cst_63 = arith.constant 0.000000e+00 : f32
    %134 = vector.broadcast %cst_63 : f32 to vector<32x16xf32>
    %135 = arith.subf %134, %114 : vector<32x16xf32>
    %136 = arith.mulf %135, %114 : vector<32x16xf32>
    %137 = math.exp %136 : vector<32x16xf32>
    %138 = arith.mulf %133, %137 : vector<32x16xf32>
    %cst_64 = arith.constant 1.000000e+00 : f32
    %139 = vector.broadcast %cst_64 : f32 to vector<32x16xf32>
    %140 = arith.subf %139, %138 : vector<32x16xf32>
    %141 = arith.mulf %113, %140 : vector<32x16xf32>
    %cst_65 = arith.constant 1.000000e+00 : f32
    %142 = vector.broadcast %cst_65 : f32 to vector<32x16xf32>
    %143 = arith.addf %142, %141 : vector<32x16xf32>
    %144 = arith.mulf %106, %143 : vector<32x16xf32>
    %c0_66 = arith.constant 0 : index
    %c0_67 = arith.constant 0 : index
    %145 = vector.load %arg10[%c0_66, %c0_67] : memref<16x32xf32, #tpu.memory_space<vmem>>, vector<16x32xf32>
    %cst_68 = arith.constant dense<0.000000e+00> : vector<32x32xf32>
    %146 = tpu.matmul %144, %145, %cst_68 {dimension_numbers = #tpu.dot_dimension_numbers<[1], [0], [0], [1], [0, 0, 1, 1], [], []>} : vector<32x16xf32>, vector<16x32xf32>, vector<32x32xf32> -> vector<32x32xf32>
    %c0_69 = arith.constant 0 : index
    %c0_70 = arith.constant 0 : index
    %147 = vector.load %arg11[%c0_69, %c0_70] : memref<1x32xf32, #tpu.memory_space<vmem>>, vector<1x32xf32>
    %148 = vector.broadcast %147 : vector<1x32xf32> to vector<32x32xf32>
    %149 = arith.mulf %146, %148 : vector<32x32xf32>
    %c0_71 = arith.constant 0 : index
    %c0_72 = arith.constant 0 : index
    %150 = vector.load %arg12[%c0_71, %c0_72] : memref<1x32xf32, #tpu.memory_space<vmem>>, vector<1x32xf32>
    %151 = vector.broadcast %150 : vector<1x32xf32> to vector<32x32xf32>
    %152 = arith.addf %149, %151 : vector<32x32xf32>
    %cst_73 = arith.constant 5.000000e-01 : f32
    %153 = vector.broadcast %cst_73 : f32 to vector<32x32xf32>
    %154 = arith.mulf %153, %152 : vector<32x32xf32>
    %cst_74 = arith.constant 0.707106769 : f32
    %155 = vector.broadcast %cst_74 : f32 to vector<32x32xf32>
    %156 = arith.mulf %152, %155 : vector<32x32xf32>
    %cst_75 = arith.constant 0.000000e+00 : f32
    %157 = vector.broadcast %cst_75 : f32 to vector<32x32xf32>
    %158 = arith.cmpf olt, %156, %157 : vector<32x32xf32>
    %cst_76 = arith.constant -1.000000e+00 : f32
    %cst_77 = arith.constant 1.000000e+00 : f32
    %159 = vector.broadcast %cst_76 : f32 to vector<32x32xf32>
    %160 = vector.broadcast %cst_77 : f32 to vector<32x32xf32>
    %161 = arith.select %158, %159, %160 : vector<32x32xi1>, vector<32x32xf32>
    %162 = math.absf %156 : vector<32x32xf32>
    %cst_78 = arith.constant 0.327591091 : f32
    %163 = vector.broadcast %cst_78 : f32 to vector<32x32xf32>
    %164 = arith.mulf %163, %162 : vector<32x32xf32>
    %cst_79 = arith.constant 1.000000e+00 : f32
    %165 = vector.broadcast %cst_79 : f32 to vector<32x32xf32>
    %166 = arith.addf %165, %164 : vector<32x32xf32>
    %167 = tpu.reciprocal %166 {approx = true} : vector<32x32xf32> -> vector<32x32xf32>
    %cst_80 = arith.constant 1.06140542 : f32
    %168 = vector.broadcast %cst_80 : f32 to vector<32x32xf32>
    %169 = arith.mulf %168, %167 : vector<32x32xf32>
    %cst_81 = arith.constant -1.45315206 : f32
    %170 = vector.broadcast %cst_81 : f32 to vector<32x32xf32>
    %171 = arith.addf %169, %170 : vector<32x32xf32>
    %172 = arith.mulf %171, %167 : vector<32x32xf32>
    %cst_82 = arith.constant 1.42141378 : f32
    %173 = vector.broadcast %cst_82 : f32 to vector<32x32xf32>
    %174 = arith.addf %172, %173 : vector<32x32xf32>
    %175 = arith.mulf %174, %167 : vector<32x32xf32>
    %cst_83 = arith.constant -0.284496725 : f32
    %176 = vector.broadcast %cst_83 : f32 to vector<32x32xf32>
    %177 = arith.addf %175, %176 : vector<32x32xf32>
    %178 = arith.mulf %177, %167 : vector<32x32xf32>
    %cst_84 = arith.constant 0.254829586 : f32
    %179 = vector.broadcast %cst_84 : f32 to vector<32x32xf32>
    %180 = arith.addf %178, %179 : vector<32x32xf32>
    %181 = arith.mulf %180, %167 : vector<32x32xf32>
    %cst_85 = arith.constant 0.000000e+00 : f32
    %182 = vector.broadcast %cst_85 : f32 to vector<32x32xf32>
    %183 = arith.subf %182, %162 : vector<32x32xf32>
    %184 = arith.mulf %183, %162 : vector<32x32xf32>
    %185 = math.exp %184 : vector<32x32xf32>
    %186 = arith.mulf %181, %185 : vector<32x32xf32>
    %cst_86 = arith.constant 1.000000e+00 : f32
    %187 = vector.broadcast %cst_86 : f32 to vector<32x32xf32>
    %188 = arith.subf %187, %186 : vector<32x32xf32>
    %189 = arith.mulf %161, %188 : vector<32x32xf32>
    %cst_87 = arith.constant 1.000000e+00 : f32
    %190 = vector.broadcast %cst_87 : f32 to vector<32x32xf32>
    %191 = arith.addf %190, %189 : vector<32x32xf32>
    %192 = arith.mulf %154, %191 : vector<32x32xf32>
    %c0_88 = arith.constant 0 : index
    %c0_89 = arith.constant 0 : index
    %193 = vector.load %arg13[%c0_88, %c0_89] : memref<32x64xf32, #tpu.memory_space<vmem>>, vector<32x64xf32>
    %cst_90 = arith.constant dense<0.000000e+00> : vector<32x64xf32>
    %194 = tpu.matmul %192, %193, %cst_90 {dimension_numbers = #tpu.dot_dimension_numbers<[1], [0], [0], [1], [0, 0, 1, 1], [], []>} : vector<32x32xf32>, vector<32x64xf32>, vector<32x64xf32> -> vector<32x64xf32>
    %c0_91 = arith.constant 0 : index
    %c0_92 = arith.constant 0 : index
    %195 = vector.load %arg14[%c0_91, %c0_92] : memref<1x64xf32, #tpu.memory_space<vmem>>, vector<1x64xf32>
    %196 = vector.broadcast %195 : vector<1x64xf32> to vector<32x64xf32>
    %197 = arith.mulf %194, %196 : vector<32x64xf32>
    %c0_93 = arith.constant 0 : index
    %c0_94 = arith.constant 0 : index
    %198 = vector.load %arg15[%c0_93, %c0_94] : memref<1x64xf32, #tpu.memory_space<vmem>>, vector<1x64xf32>
    %199 = vector.broadcast %198 : vector<1x64xf32> to vector<32x64xf32>
    %200 = arith.addf %197, %199 : vector<32x64xf32>
    %cst_95 = arith.constant 5.000000e-01 : f32
    %201 = vector.broadcast %cst_95 : f32 to vector<32x64xf32>
    %202 = arith.mulf %201, %200 : vector<32x64xf32>
    %cst_96 = arith.constant 0.707106769 : f32
    %203 = vector.broadcast %cst_96 : f32 to vector<32x64xf32>
    %204 = arith.mulf %200, %203 : vector<32x64xf32>
    %cst_97 = arith.constant 0.000000e+00 : f32
    %205 = vector.broadcast %cst_97 : f32 to vector<32x64xf32>
    %206 = arith.cmpf olt, %204, %205 : vector<32x64xf32>
    %cst_98 = arith.constant -1.000000e+00 : f32
    %cst_99 = arith.constant 1.000000e+00 : f32
    %207 = vector.broadcast %cst_98 : f32 to vector<32x64xf32>
    %208 = vector.broadcast %cst_99 : f32 to vector<32x64xf32>
    %209 = arith.select %206, %207, %208 : vector<32x64xi1>, vector<32x64xf32>
    %210 = math.absf %204 : vector<32x64xf32>
    %cst_100 = arith.constant 0.327591091 : f32
    %211 = vector.broadcast %cst_100 : f32 to vector<32x64xf32>
    %212 = arith.mulf %211, %210 : vector<32x64xf32>
    %cst_101 = arith.constant 1.000000e+00 : f32
    %213 = vector.broadcast %cst_101 : f32 to vector<32x64xf32>
    %214 = arith.addf %213, %212 : vector<32x64xf32>
    %215 = tpu.reciprocal %214 {approx = true} : vector<32x64xf32> -> vector<32x64xf32>
    %cst_102 = arith.constant 1.06140542 : f32
    %216 = vector.broadcast %cst_102 : f32 to vector<32x64xf32>
    %217 = arith.mulf %216, %215 : vector<32x64xf32>
    %cst_103 = arith.constant -1.45315206 : f32
    %218 = vector.broadcast %cst_103 : f32 to vector<32x64xf32>
    %219 = arith.addf %217, %218 : vector<32x64xf32>
    %220 = arith.mulf %219, %215 : vector<32x64xf32>
    %cst_104 = arith.constant 1.42141378 : f32
    %221 = vector.broadcast %cst_104 : f32 to vector<32x64xf32>
    %222 = arith.addf %220, %221 : vector<32x64xf32>
    %223 = arith.mulf %222, %215 : vector<32x64xf32>
    %cst_105 = arith.constant -0.284496725 : f32
    %224 = vector.broadcast %cst_105 : f32 to vector<32x64xf32>
    %225 = arith.addf %223, %224 : vector<32x64xf32>
    %226 = arith.mulf %225, %215 : vector<32x64xf32>
    %cst_106 = arith.constant 0.254829586 : f32
    %227 = vector.broadcast %cst_106 : f32 to vector<32x64xf32>
    %228 = arith.addf %226, %227 : vector<32x64xf32>
    %229 = arith.mulf %228, %215 : vector<32x64xf32>
    %cst_107 = arith.constant 0.000000e+00 : f32
    %230 = vector.broadcast %cst_107 : f32 to vector<32x64xf32>
    %231 = arith.subf %230, %210 : vector<32x64xf32>
    %232 = arith.mulf %231, %210 : vector<32x64xf32>
    %233 = math.exp %232 : vector<32x64xf32>
    %234 = arith.mulf %229, %233 : vector<32x64xf32>
    %cst_108 = arith.constant 1.000000e+00 : f32
    %235 = vector.broadcast %cst_108 : f32 to vector<32x64xf32>
    %236 = arith.subf %235, %234 : vector<32x64xf32>
    %237 = arith.mulf %209, %236 : vector<32x64xf32>
    %cst_109 = arith.constant 1.000000e+00 : f32
    %238 = vector.broadcast %cst_109 : f32 to vector<32x64xf32>
    %239 = arith.addf %238, %237 : vector<32x64xf32>
    %240 = arith.mulf %202, %239 : vector<32x64xf32>
    %c0_110 = arith.constant 0 : index
    %c0_111 = arith.constant 0 : index
    %241 = vector.load %arg16[%c0_110, %c0_111] : memref<64x128xf32, #tpu.memory_space<vmem>>, vector<64x128xf32>
    %cst_112 = arith.constant dense<0.000000e+00> : vector<32x128xf32>
    %242 = tpu.matmul %240, %241, %cst_112 {dimension_numbers = #tpu.dot_dimension_numbers<[1], [0], [0], [1], [0, 0, 1, 1], [], []>} : vector<32x64xf32>, vector<64x128xf32>, vector<32x128xf32> -> vector<32x128xf32>
    %c0_113 = arith.constant 0 : index
    %c0_114 = arith.constant 0 : index
    %243 = vector.load %arg17[%c0_113, %c0_114] : memref<1x128xf32, #tpu.memory_space<vmem>>, vector<1x128xf32>
    %244 = vector.broadcast %243 : vector<1x128xf32> to vector<32x128xf32>
    %245 = arith.mulf %242, %244 : vector<32x128xf32>
    %c0_115 = arith.constant 0 : index
    %c0_116 = arith.constant 0 : index
    %246 = vector.load %arg18[%c0_115, %c0_116] : memref<1x128xf32, #tpu.memory_space<vmem>>, vector<1x128xf32>
    %247 = vector.broadcast %246 : vector<1x128xf32> to vector<32x128xf32>
    %248 = arith.addf %245, %247 : vector<32x128xf32>
    %c0_117 = arith.constant 0 : index
    %c0_118 = arith.constant 0 : index
    %249 = vector.load %arg19[%c0_117, %c0_118] : memref<16x128xf32, #tpu.memory_space<vmem>>, vector<16x128xf32>
    %250 = tpu.concatenate %249, %249 in 0 : vector<16x128xf32>, vector<16x128xf32> -> vector<32x128xf32>
    %251 = arith.addf %248, %250 : vector<32x128xf32>
    %252 = tpu.iota {dimensions = array<i32: 1>} : vector<32x32xi32>
    %253 = tpu.iota {dimensions = array<i32: 0>} : vector<32x32xi32>
    %254 = arith.sitofp %252 : vector<32x32xi32> to vector<32x32xf32>
    %c0_i32 = arith.constant 0 : i32
    %255 = vector.broadcast %c0_i32 : i32 to vector<32x32xi32>
    %256 = arith.cmpi sge, %253, %255 : vector<32x32xi32>
    %c16_i32 = arith.constant 16 : i32
    %257 = vector.broadcast %c16_i32 : i32 to vector<32x32xi32>
    %258 = arith.cmpi slt, %253, %257 : vector<32x32xi32>
    %259 = arith.andi %256, %258 : vector<32x32xi1>
    %c0_i32_119 = arith.constant 0 : i32
    %260 = vector.broadcast %c0_i32_119 : i32 to vector<32x32xi32>
    %261 = arith.cmpi sge, %252, %260 : vector<32x32xi32>
    %262 = arith.andi %259, %261 : vector<32x32xi1>
    %c16_i32_120 = arith.constant 16 : i32
    %263 = vector.broadcast %c16_i32_120 : i32 to vector<32x32xi32>
    %264 = arith.cmpi slt, %252, %263 : vector<32x32xi32>
    %265 = arith.andi %262, %264 : vector<32x32xi1>
    %c16_i32_121 = arith.constant 16 : i32
    %266 = vector.broadcast %c16_i32_121 : i32 to vector<32x32xi32>
    %267 = arith.cmpi sge, %253, %266 : vector<32x32xi32>
    %c32_i32 = arith.constant 32 : i32
    %268 = vector.broadcast %c32_i32 : i32 to vector<32x32xi32>
    %269 = arith.cmpi slt, %253, %268 : vector<32x32xi32>
    %270 = arith.andi %267, %269 : vector<32x32xi1>
    %c16_i32_122 = arith.constant 16 : i32
    %271 = vector.broadcast %c16_i32_122 : i32 to vector<32x32xi32>
    %272 = arith.cmpi sge, %252, %271 : vector<32x32xi32>
    %273 = arith.andi %270, %272 : vector<32x32xi1>
    %c32_i32_123 = arith.constant 32 : i32
    %274 = vector.broadcast %c32_i32_123 : i32 to vector<32x32xi32>
    %275 = arith.cmpi slt, %252, %274 : vector<32x32xi32>
    %276 = arith.andi %273, %275 : vector<32x32xi1>
    %277 = arith.ori %265, %276 : vector<32x32xi1>
    %cst_124 = arith.constant dense<0.000000e+00> : vector<32x32xf32>
    %278 = tpu.matmul %251, %251, %cst_124 {dimension_numbers = #tpu.dot_dimension_numbers<[1], [1], [0], [0], [0, 0, 1, 0], [], []>} : vector<32x128xf32>, vector<32x128xf32>, vector<32x32xf32> -> vector<32x32xf32>
    %cst_125 = arith.constant 0xFF800000 : f32
    %279 = vector.broadcast %cst_125 : f32 to vector<32x32xf32>
    %280 = arith.select %277, %278, %279 : vector<32x32xi1>, vector<32x32xf32>
    %cst_126 = arith.constant dense<0xFF800000> : vector<32xf32>
    %281 = vector.multi_reduction <maximumf>, %280, %cst_126 [1] : vector<32x32xf32> to vector<32xf32>
    %282 = vector.shape_cast %281 : vector<32xf32> to vector<32x1xf32>
    %283 = vector.broadcast %282 : vector<32x1xf32> to vector<32x32xf32>
    %284 = arith.cmpf oge, %280, %283 : vector<32x32xf32>
    %cst_127 = arith.constant 3.200000e+01 : f32
    %285 = vector.broadcast %cst_127 : f32 to vector<32x32xf32>
    %286 = arith.select %284, %254, %285 : vector<32x32xi1>, vector<32x32xf32>
    %cst_128 = arith.constant dense<0x7F800000> : vector<32xf32>
    %287 = vector.multi_reduction <minimumf>, %286, %cst_128 [1] : vector<32x32xf32> to vector<32xf32>
    %288 = vector.shape_cast %287 : vector<32xf32> to vector<32x1xf32>
    %289 = vector.broadcast %288 : vector<32x1xf32> to vector<32x32xf32>
    %290 = arith.cmpf oeq, %254, %289 : vector<32x32xf32>
    %291 = arith.extui %290 : vector<32x32xi1> to vector<32x32xi32>
    %292 = arith.sitofp %291 : vector<32x32xi32> to vector<32x32xf32>
    %cst_129 = arith.constant 0xFF800000 : f32
    %293 = vector.broadcast %cst_129 : f32 to vector<32x32xf32>
    %294 = arith.select %290, %293, %280 : vector<32x32xi1>, vector<32x32xf32>
    %cst_130 = arith.constant dense<0xFF800000> : vector<32xf32>
    %295 = vector.multi_reduction <maximumf>, %294, %cst_130 [1] : vector<32x32xf32> to vector<32xf32>
    %296 = vector.shape_cast %295 : vector<32xf32> to vector<32x1xf32>
    %297 = vector.broadcast %296 : vector<32x1xf32> to vector<32x32xf32>
    %298 = arith.cmpf oge, %294, %297 : vector<32x32xf32>
    %cst_131 = arith.constant 3.200000e+01 : f32
    %299 = vector.broadcast %cst_131 : f32 to vector<32x32xf32>
    %300 = arith.select %298, %254, %299 : vector<32x32xi1>, vector<32x32xf32>
    %cst_132 = arith.constant dense<0x7F800000> : vector<32xf32>
    %301 = vector.multi_reduction <minimumf>, %300, %cst_132 [1] : vector<32x32xf32> to vector<32xf32>
    %302 = vector.shape_cast %301 : vector<32xf32> to vector<32x1xf32>
    %303 = vector.broadcast %302 : vector<32x1xf32> to vector<32x32xf32>
    %304 = arith.cmpf oeq, %254, %303 : vector<32x32xf32>
    %305 = arith.extui %304 : vector<32x32xi1> to vector<32x32xi32>
    %306 = arith.sitofp %305 : vector<32x32xi32> to vector<32x32xf32>
    %cst_133 = arith.constant 0xFF800000 : f32
    %307 = vector.broadcast %cst_133 : f32 to vector<32x32xf32>
    %308 = arith.select %304, %307, %294 : vector<32x32xi1>, vector<32x32xf32>
    %cst_134 = arith.constant dense<0xFF800000> : vector<32xf32>
    %309 = vector.multi_reduction <maximumf>, %308, %cst_134 [1] : vector<32x32xf32> to vector<32xf32>
    %310 = vector.shape_cast %309 : vector<32xf32> to vector<32x1xf32>
    %311 = vector.broadcast %310 : vector<32x1xf32> to vector<32x32xf32>
    %312 = arith.cmpf oge, %308, %311 : vector<32x32xf32>
    %cst_135 = arith.constant 3.200000e+01 : f32
    %313 = vector.broadcast %cst_135 : f32 to vector<32x32xf32>
    %314 = arith.select %312, %254, %313 : vector<32x32xi1>, vector<32x32xf32>
    %cst_136 = arith.constant dense<0x7F800000> : vector<32xf32>
    %315 = vector.multi_reduction <minimumf>, %314, %cst_136 [1] : vector<32x32xf32> to vector<32xf32>
    %316 = vector.shape_cast %315 : vector<32xf32> to vector<32x1xf32>
    %317 = vector.broadcast %316 : vector<32x1xf32> to vector<32x32xf32>
    %318 = arith.cmpf oeq, %254, %317 : vector<32x32xf32>
    %319 = arith.extui %318 : vector<32x32xi1> to vector<32x32xi32>
    %320 = arith.sitofp %319 : vector<32x32xi32> to vector<32x32xf32>
    %cst_137 = arith.constant 0xFF800000 : f32
    %321 = vector.broadcast %cst_137 : f32 to vector<32x32xf32>
    %322 = arith.select %318, %321, %308 : vector<32x32xi1>, vector<32x32xf32>
    %cst_138 = arith.constant dense<0xFF800000> : vector<32xf32>
    %323 = vector.multi_reduction <maximumf>, %322, %cst_138 [1] : vector<32x32xf32> to vector<32xf32>
    %324 = vector.shape_cast %323 : vector<32xf32> to vector<32x1xf32>
    %325 = vector.broadcast %324 : vector<32x1xf32> to vector<32x32xf32>
    %326 = arith.cmpf oge, %322, %325 : vector<32x32xf32>
    %cst_139 = arith.constant 3.200000e+01 : f32
    %327 = vector.broadcast %cst_139 : f32 to vector<32x32xf32>
    %328 = arith.select %326, %254, %327 : vector<32x32xi1>, vector<32x32xf32>
    %cst_140 = arith.constant dense<0x7F800000> : vector<32xf32>
    %329 = vector.multi_reduction <minimumf>, %328, %cst_140 [1] : vector<32x32xf32> to vector<32xf32>
    %330 = vector.shape_cast %329 : vector<32xf32> to vector<32x1xf32>
    %331 = vector.broadcast %330 : vector<32x1xf32> to vector<32x32xf32>
    %332 = arith.cmpf oeq, %254, %331 : vector<32x32xf32>
    %333 = arith.extui %332 : vector<32x32xi1> to vector<32x32xi32>
    %334 = arith.sitofp %333 : vector<32x32xi32> to vector<32x32xf32>
    %c0_141 = arith.constant 0 : index
    %c0_142 = arith.constant 0 : index
    %335 = vector.load %arg20[%c0_141, %c0_142] : memref<128x128xf32, #tpu.memory_space<vmem>>, vector<128x128xf32>
    %cst_143 = arith.constant dense<0.000000e+00> : vector<32x128xf32>
    %336 = tpu.matmul %251, %335, %cst_143 {dimension_numbers = #tpu.dot_dimension_numbers<[1], [0], [0], [1], [0, 0, 1, 1], [], []>} : vector<32x128xf32>, vector<128x128xf32>, vector<32x128xf32> -> vector<32x128xf32>
    %c0_144 = arith.constant 0 : index
    %c0_145 = arith.constant 0 : index
    %337 = vector.load %arg21[%c0_144, %c0_145] : memref<1x128xf32, #tpu.memory_space<vmem>>, vector<1x128xf32>
    %338 = vector.broadcast %337 : vector<1x128xf32> to vector<32x128xf32>
    %339 = arith.addf %336, %338 : vector<32x128xf32>
    %cst_146 = arith.constant 5.000000e-01 : f32
    %340 = vector.broadcast %cst_146 : f32 to vector<32x128xf32>
    %341 = arith.mulf %340, %339 : vector<32x128xf32>
    %cst_147 = arith.constant 0.707106769 : f32
    %342 = vector.broadcast %cst_147 : f32 to vector<32x128xf32>
    %343 = arith.mulf %339, %342 : vector<32x128xf32>
    %cst_148 = arith.constant 0.000000e+00 : f32
    %344 = vector.broadcast %cst_148 : f32 to vector<32x128xf32>
    %345 = arith.cmpf olt, %343, %344 : vector<32x128xf32>
    %cst_149 = arith.constant -1.000000e+00 : f32
    %cst_150 = arith.constant 1.000000e+00 : f32
    %346 = vector.broadcast %cst_149 : f32 to vector<32x128xf32>
    %347 = vector.broadcast %cst_150 : f32 to vector<32x128xf32>
    %348 = arith.select %345, %346, %347 : vector<32x128xi1>, vector<32x128xf32>
    %349 = math.absf %343 : vector<32x128xf32>
    %cst_151 = arith.constant 0.327591091 : f32
    %350 = vector.broadcast %cst_151 : f32 to vector<32x128xf32>
    %351 = arith.mulf %350, %349 : vector<32x128xf32>
    %cst_152 = arith.constant 1.000000e+00 : f32
    %352 = vector.broadcast %cst_152 : f32 to vector<32x128xf32>
    %353 = arith.addf %352, %351 : vector<32x128xf32>
    %354 = tpu.reciprocal %353 {approx = true} : vector<32x128xf32> -> vector<32x128xf32>
    %cst_153 = arith.constant 1.06140542 : f32
    %355 = vector.broadcast %cst_153 : f32 to vector<32x128xf32>
    %356 = arith.mulf %355, %354 : vector<32x128xf32>
    %cst_154 = arith.constant -1.45315206 : f32
    %357 = vector.broadcast %cst_154 : f32 to vector<32x128xf32>
    %358 = arith.addf %356, %357 : vector<32x128xf32>
    %359 = arith.mulf %358, %354 : vector<32x128xf32>
    %cst_155 = arith.constant 1.42141378 : f32
    %360 = vector.broadcast %cst_155 : f32 to vector<32x128xf32>
    %361 = arith.addf %359, %360 : vector<32x128xf32>
    %362 = arith.mulf %361, %354 : vector<32x128xf32>
    %cst_156 = arith.constant -0.284496725 : f32
    %363 = vector.broadcast %cst_156 : f32 to vector<32x128xf32>
    %364 = arith.addf %362, %363 : vector<32x128xf32>
    %365 = arith.mulf %364, %354 : vector<32x128xf32>
    %cst_157 = arith.constant 0.254829586 : f32
    %366 = vector.broadcast %cst_157 : f32 to vector<32x128xf32>
    %367 = arith.addf %365, %366 : vector<32x128xf32>
    %368 = arith.mulf %367, %354 : vector<32x128xf32>
    %cst_158 = arith.constant 0.000000e+00 : f32
    %369 = vector.broadcast %cst_158 : f32 to vector<32x128xf32>
    %370 = arith.subf %369, %349 : vector<32x128xf32>
    %371 = arith.mulf %370, %349 : vector<32x128xf32>
    %372 = math.exp %371 : vector<32x128xf32>
    %373 = arith.mulf %368, %372 : vector<32x128xf32>
    %cst_159 = arith.constant 1.000000e+00 : f32
    %374 = vector.broadcast %cst_159 : f32 to vector<32x128xf32>
    %375 = arith.subf %374, %373 : vector<32x128xf32>
    %376 = arith.mulf %348, %375 : vector<32x128xf32>
    %cst_160 = arith.constant 1.000000e+00 : f32
    %377 = vector.broadcast %cst_160 : f32 to vector<32x128xf32>
    %378 = arith.addf %377, %376 : vector<32x128xf32>
    %379 = arith.mulf %341, %378 : vector<32x128xf32>
    %c0_161 = arith.constant 0 : index
    %c0_162 = arith.constant 0 : index
    %380 = vector.load %arg22[%c0_161, %c0_162] : memref<128x128xf32, #tpu.memory_space<vmem>>, vector<128x128xf32>
    %cst_163 = arith.constant dense<0.000000e+00> : vector<32x128xf32>
    %381 = tpu.matmul %379, %380, %cst_163 {dimension_numbers = #tpu.dot_dimension_numbers<[1], [0], [0], [1], [0, 0, 1, 1], [], []>} : vector<32x128xf32>, vector<128x128xf32>, vector<32x128xf32> -> vector<32x128xf32>
    %c0_164 = arith.constant 0 : index
    %c0_165 = arith.constant 0 : index
    %382 = vector.load %arg23[%c0_164, %c0_165] : memref<1x128xf32, #tpu.memory_space<vmem>>, vector<1x128xf32>
    %383 = vector.broadcast %382 : vector<1x128xf32> to vector<32x128xf32>
    %384 = arith.addf %381, %383 : vector<32x128xf32>
    %385 = tpu.concatenate %292, %306, %320, %334 in 0 : vector<32x32xf32>, vector<32x32xf32>, vector<32x32xf32>, vector<32x32xf32> -> vector<128x32xf32>
    %cst_166 = arith.constant dense<0.000000e+00> : vector<128x128xf32>
    %386 = tpu.matmul %385, %384, %cst_166 {dimension_numbers = #tpu.dot_dimension_numbers<[1], [0], [0], [1], [0, 0, 1, 1], [], []>} : vector<128x32xf32>, vector<32x128xf32>, vector<128x128xf32> -> vector<128x128xf32>
    %387 = vector.extract_strided_slice %386 {offsets = [0, 0], sizes = [32, 128], strides = [1, 1]} : vector<128x128xf32> to vector<32x128xf32>
    %388 = vector.extract_strided_slice %386 {offsets = [32, 0], sizes = [32, 128], strides = [1, 1]} : vector<128x128xf32> to vector<32x128xf32>
    %389 = arith.maximumf %387, %388 : vector<32x128xf32>
    %390 = vector.extract_strided_slice %386 {offsets = [64, 0], sizes = [32, 128], strides = [1, 1]} : vector<128x128xf32> to vector<32x128xf32>
    %391 = arith.maximumf %389, %390 : vector<32x128xf32>
    %392 = vector.extract_strided_slice %386 {offsets = [96, 0], sizes = [32, 128], strides = [1, 1]} : vector<128x128xf32> to vector<32x128xf32>
    %393 = arith.maximumf %391, %392 : vector<32x128xf32>
    %394 = arith.subf %393, %384 : vector<32x128xf32>
    %c0_167 = arith.constant 0 : index
    %c0_168 = arith.constant 0 : index
    %395 = vector.load %arg24[%c0_167, %c0_168] : memref<128x128xf32, #tpu.memory_space<vmem>>, vector<128x128xf32>
    %cst_169 = arith.constant dense<0.000000e+00> : vector<32x128xf32>
    %396 = tpu.matmul %384, %395, %cst_169 {dimension_numbers = #tpu.dot_dimension_numbers<[1], [0], [0], [1], [0, 0, 1, 1], [], []>} : vector<32x128xf32>, vector<128x128xf32>, vector<32x128xf32> -> vector<32x128xf32>
    %c0_170 = arith.constant 0 : index
    %c0_171 = arith.constant 0 : index
    %397 = vector.load %arg25[%c0_170, %c0_171] : memref<128x128xf32, #tpu.memory_space<vmem>>, vector<128x128xf32>
    %cst_172 = arith.constant dense<0.000000e+00> : vector<32x128xf32>
    %398 = tpu.matmul %394, %397, %cst_172 {dimension_numbers = #tpu.dot_dimension_numbers<[1], [0], [0], [1], [0, 0, 1, 1], [], []>} : vector<32x128xf32>, vector<128x128xf32>, vector<32x128xf32> -> vector<32x128xf32>
    %399 = arith.addf %396, %398 : vector<32x128xf32>
    %c0_173 = arith.constant 0 : index
    %c0_174 = arith.constant 0 : index
    %400 = vector.load %arg26[%c0_173, %c0_174] : memref<1x128xf32, #tpu.memory_space<vmem>>, vector<1x128xf32>
    %401 = vector.broadcast %400 : vector<1x128xf32> to vector<32x128xf32>
    %402 = arith.addf %399, %401 : vector<32x128xf32>
    %cst_175 = arith.constant 5.000000e-01 : f32
    %403 = vector.broadcast %cst_175 : f32 to vector<32x128xf32>
    %404 = arith.mulf %403, %402 : vector<32x128xf32>
    %cst_176 = arith.constant 0.707106769 : f32
    %405 = vector.broadcast %cst_176 : f32 to vector<32x128xf32>
    %406 = arith.mulf %402, %405 : vector<32x128xf32>
    %cst_177 = arith.constant 0.000000e+00 : f32
    %407 = vector.broadcast %cst_177 : f32 to vector<32x128xf32>
    %408 = arith.cmpf olt, %406, %407 : vector<32x128xf32>
    %cst_178 = arith.constant -1.000000e+00 : f32
    %cst_179 = arith.constant 1.000000e+00 : f32
    %409 = vector.broadcast %cst_178 : f32 to vector<32x128xf32>
    %410 = vector.broadcast %cst_179 : f32 to vector<32x128xf32>
    %411 = arith.select %408, %409, %410 : vector<32x128xi1>, vector<32x128xf32>
    %412 = math.absf %406 : vector<32x128xf32>
    %cst_180 = arith.constant 0.327591091 : f32
    %413 = vector.broadcast %cst_180 : f32 to vector<32x128xf32>
    %414 = arith.mulf %413, %412 : vector<32x128xf32>
    %cst_181 = arith.constant 1.000000e+00 : f32
    %415 = vector.broadcast %cst_181 : f32 to vector<32x128xf32>
    %416 = arith.addf %415, %414 : vector<32x128xf32>
    %417 = tpu.reciprocal %416 {approx = true} : vector<32x128xf32> -> vector<32x128xf32>
    %cst_182 = arith.constant 1.06140542 : f32
    %418 = vector.broadcast %cst_182 : f32 to vector<32x128xf32>
    %419 = arith.mulf %418, %417 : vector<32x128xf32>
    %cst_183 = arith.constant -1.45315206 : f32
    %420 = vector.broadcast %cst_183 : f32 to vector<32x128xf32>
    %421 = arith.addf %419, %420 : vector<32x128xf32>
    %422 = arith.mulf %421, %417 : vector<32x128xf32>
    %cst_184 = arith.constant 1.42141378 : f32
    %423 = vector.broadcast %cst_184 : f32 to vector<32x128xf32>
    %424 = arith.addf %422, %423 : vector<32x128xf32>
    %425 = arith.mulf %424, %417 : vector<32x128xf32>
    %cst_185 = arith.constant -0.284496725 : f32
    %426 = vector.broadcast %cst_185 : f32 to vector<32x128xf32>
    %427 = arith.addf %425, %426 : vector<32x128xf32>
    %428 = arith.mulf %427, %417 : vector<32x128xf32>
    %cst_186 = arith.constant 0.254829586 : f32
    %429 = vector.broadcast %cst_186 : f32 to vector<32x128xf32>
    %430 = arith.addf %428, %429 : vector<32x128xf32>
    %431 = arith.mulf %430, %417 : vector<32x128xf32>
    %cst_187 = arith.constant 0.000000e+00 : f32
    %432 = vector.broadcast %cst_187 : f32 to vector<32x128xf32>
    %433 = arith.subf %432, %412 : vector<32x128xf32>
    %434 = arith.mulf %433, %412 : vector<32x128xf32>
    %435 = math.exp %434 : vector<32x128xf32>
    %436 = arith.mulf %431, %435 : vector<32x128xf32>
    %cst_188 = arith.constant 1.000000e+00 : f32
    %437 = vector.broadcast %cst_188 : f32 to vector<32x128xf32>
    %438 = arith.subf %437, %436 : vector<32x128xf32>
    %439 = arith.mulf %411, %438 : vector<32x128xf32>
    %cst_189 = arith.constant 1.000000e+00 : f32
    %440 = vector.broadcast %cst_189 : f32 to vector<32x128xf32>
    %441 = arith.addf %440, %439 : vector<32x128xf32>
    %442 = arith.mulf %404, %441 : vector<32x128xf32>
    %c0_190 = arith.constant 0 : index
    %c0_191 = arith.constant 0 : index
    %443 = vector.load %arg27[%c0_190, %c0_191] : memref<128x128xf32, #tpu.memory_space<vmem>>, vector<128x128xf32>
    %cst_192 = arith.constant dense<0.000000e+00> : vector<32x128xf32>
    %444 = tpu.matmul %442, %443, %cst_192 {dimension_numbers = #tpu.dot_dimension_numbers<[1], [0], [0], [1], [0, 0, 1, 1], [], []>} : vector<32x128xf32>, vector<128x128xf32>, vector<32x128xf32> -> vector<32x128xf32>
    %c0_193 = arith.constant 0 : index
    %c0_194 = arith.constant 0 : index
    %445 = vector.load %arg28[%c0_193, %c0_194] : memref<1x128xf32, #tpu.memory_space<vmem>>, vector<1x128xf32>
    %446 = vector.broadcast %445 : vector<1x128xf32> to vector<32x128xf32>
    %447 = arith.addf %444, %446 : vector<32x128xf32>
    %cst_195 = arith.constant 5.000000e-01 : f32
    %448 = vector.broadcast %cst_195 : f32 to vector<32x128xf32>
    %449 = arith.mulf %448, %447 : vector<32x128xf32>
    %cst_196 = arith.constant 0.707106769 : f32
    %450 = vector.broadcast %cst_196 : f32 to vector<32x128xf32>
    %451 = arith.mulf %447, %450 : vector<32x128xf32>
    %cst_197 = arith.constant 0.000000e+00 : f32
    %452 = vector.broadcast %cst_197 : f32 to vector<32x128xf32>
    %453 = arith.cmpf olt, %451, %452 : vector<32x128xf32>
    %cst_198 = arith.constant -1.000000e+00 : f32
    %cst_199 = arith.constant 1.000000e+00 : f32
    %454 = vector.broadcast %cst_198 : f32 to vector<32x128xf32>
    %455 = vector.broadcast %cst_199 : f32 to vector<32x128xf32>
    %456 = arith.select %453, %454, %455 : vector<32x128xi1>, vector<32x128xf32>
    %457 = math.absf %451 : vector<32x128xf32>
    %cst_200 = arith.constant 0.327591091 : f32
    %458 = vector.broadcast %cst_200 : f32 to vector<32x128xf32>
    %459 = arith.mulf %458, %457 : vector<32x128xf32>
    %cst_201 = arith.constant 1.000000e+00 : f32
    %460 = vector.broadcast %cst_201 : f32 to vector<32x128xf32>
    %461 = arith.addf %460, %459 : vector<32x128xf32>
    %462 = tpu.reciprocal %461 {approx = true} : vector<32x128xf32> -> vector<32x128xf32>
    %cst_202 = arith.constant 1.06140542 : f32
    %463 = vector.broadcast %cst_202 : f32 to vector<32x128xf32>
    %464 = arith.mulf %463, %462 : vector<32x128xf32>
    %cst_203 = arith.constant -1.45315206 : f32
    %465 = vector.broadcast %cst_203 : f32 to vector<32x128xf32>
    %466 = arith.addf %464, %465 : vector<32x128xf32>
    %467 = arith.mulf %466, %462 : vector<32x128xf32>
    %cst_204 = arith.constant 1.42141378 : f32
    %468 = vector.broadcast %cst_204 : f32 to vector<32x128xf32>
    %469 = arith.addf %467, %468 : vector<32x128xf32>
    %470 = arith.mulf %469, %462 : vector<32x128xf32>
    %cst_205 = arith.constant -0.284496725 : f32
    %471 = vector.broadcast %cst_205 : f32 to vector<32x128xf32>
    %472 = arith.addf %470, %471 : vector<32x128xf32>
    %473 = arith.mulf %472, %462 : vector<32x128xf32>
    %cst_206 = arith.constant 0.254829586 : f32
    %474 = vector.broadcast %cst_206 : f32 to vector<32x128xf32>
    %475 = arith.addf %473, %474 : vector<32x128xf32>
    %476 = arith.mulf %475, %462 : vector<32x128xf32>
    %cst_207 = arith.constant 0.000000e+00 : f32
    %477 = vector.broadcast %cst_207 : f32 to vector<32x128xf32>
    %478 = arith.subf %477, %457 : vector<32x128xf32>
    %479 = arith.mulf %478, %457 : vector<32x128xf32>
    %480 = math.exp %479 : vector<32x128xf32>
    %481 = arith.mulf %476, %480 : vector<32x128xf32>
    %cst_208 = arith.constant 1.000000e+00 : f32
    %482 = vector.broadcast %cst_208 : f32 to vector<32x128xf32>
    %483 = arith.subf %482, %481 : vector<32x128xf32>
    %484 = arith.mulf %456, %483 : vector<32x128xf32>
    %cst_209 = arith.constant 1.000000e+00 : f32
    %485 = vector.broadcast %cst_209 : f32 to vector<32x128xf32>
    %486 = arith.addf %485, %484 : vector<32x128xf32>
    %487 = arith.mulf %449, %486 : vector<32x128xf32>
    %c0_210 = arith.constant 0 : index
    %c0_211 = arith.constant 0 : index
    %488 = vector.load %arg29[%c0_210, %c0_211] : memref<128x128xf32, #tpu.memory_space<vmem>>, vector<128x128xf32>
    %cst_212 = arith.constant dense<0.000000e+00> : vector<32x128xf32>
    %489 = tpu.matmul %487, %488, %cst_212 {dimension_numbers = #tpu.dot_dimension_numbers<[1], [0], [0], [1], [0, 0, 1, 1], [], []>} : vector<32x128xf32>, vector<128x128xf32>, vector<32x128xf32> -> vector<32x128xf32>
    %c0_213 = arith.constant 0 : index
    %c0_214 = arith.constant 0 : index
    %490 = vector.load %arg30[%c0_213, %c0_214] : memref<1x128xf32, #tpu.memory_space<vmem>>, vector<1x128xf32>
    %491 = vector.broadcast %490 : vector<1x128xf32> to vector<32x128xf32>
    %492 = arith.addf %489, %491 : vector<32x128xf32>
    %493 = arith.addf %492, %251 : vector<32x128xf32>
    %c0_215 = arith.constant 0 : index
    %c0_216 = arith.constant 0 : index
    %494 = vector.load %arg31[%c0_215, %c0_216] : memref<128x512xf32, #tpu.memory_space<vmem>>, vector<128x512xf32>
    %cst_217 = arith.constant dense<0.000000e+00> : vector<32x512xf32>
    %495 = tpu.matmul %493, %494, %cst_217 {dimension_numbers = #tpu.dot_dimension_numbers<[1], [0], [0], [1], [0, 0, 1, 1], [], []>} : vector<32x128xf32>, vector<128x512xf32>, vector<32x512xf32> -> vector<32x512xf32>
    %c0_218 = arith.constant 0 : index
    %c0_219 = arith.constant 0 : index
    %496 = vector.load %arg32[%c0_218, %c0_219] : memref<1x512xf32, #tpu.memory_space<vmem>>, vector<1x512xf32>
    %497 = vector.broadcast %496 : vector<1x512xf32> to vector<32x512xf32>
    %498 = arith.addf %495, %497 : vector<32x512xf32>
    %cst_220 = arith.constant 5.000000e-01 : f32
    %499 = vector.broadcast %cst_220 : f32 to vector<32x512xf32>
    %500 = arith.mulf %499, %498 : vector<32x512xf32>
    %cst_221 = arith.constant 0.707106769 : f32
    %501 = vector.broadcast %cst_221 : f32 to vector<32x512xf32>
    %502 = arith.mulf %498, %501 : vector<32x512xf32>
    %cst_222 = arith.constant 0.000000e+00 : f32
    %503 = vector.broadcast %cst_222 : f32 to vector<32x512xf32>
    %504 = arith.cmpf olt, %502, %503 : vector<32x512xf32>
    %cst_223 = arith.constant -1.000000e+00 : f32
    %cst_224 = arith.constant 1.000000e+00 : f32
    %505 = vector.broadcast %cst_223 : f32 to vector<32x512xf32>
    %506 = vector.broadcast %cst_224 : f32 to vector<32x512xf32>
    %507 = arith.select %504, %505, %506 : vector<32x512xi1>, vector<32x512xf32>
    %508 = math.absf %502 : vector<32x512xf32>
    %cst_225 = arith.constant 0.327591091 : f32
    %509 = vector.broadcast %cst_225 : f32 to vector<32x512xf32>
    %510 = arith.mulf %509, %508 : vector<32x512xf32>
    %cst_226 = arith.constant 1.000000e+00 : f32
    %511 = vector.broadcast %cst_226 : f32 to vector<32x512xf32>
    %512 = arith.addf %511, %510 : vector<32x512xf32>
    %513 = tpu.reciprocal %512 {approx = true} : vector<32x512xf32> -> vector<32x512xf32>
    %cst_227 = arith.constant 1.06140542 : f32
    %514 = vector.broadcast %cst_227 : f32 to vector<32x512xf32>
    %515 = arith.mulf %514, %513 : vector<32x512xf32>
    %cst_228 = arith.constant -1.45315206 : f32
    %516 = vector.broadcast %cst_228 : f32 to vector<32x512xf32>
    %517 = arith.addf %515, %516 : vector<32x512xf32>
    %518 = arith.mulf %517, %513 : vector<32x512xf32>
    %cst_229 = arith.constant 1.42141378 : f32
    %519 = vector.broadcast %cst_229 : f32 to vector<32x512xf32>
    %520 = arith.addf %518, %519 : vector<32x512xf32>
    %521 = arith.mulf %520, %513 : vector<32x512xf32>
    %cst_230 = arith.constant -0.284496725 : f32
    %522 = vector.broadcast %cst_230 : f32 to vector<32x512xf32>
    %523 = arith.addf %521, %522 : vector<32x512xf32>
    %524 = arith.mulf %523, %513 : vector<32x512xf32>
    %cst_231 = arith.constant 0.254829586 : f32
    %525 = vector.broadcast %cst_231 : f32 to vector<32x512xf32>
    %526 = arith.addf %524, %525 : vector<32x512xf32>
    %527 = arith.mulf %526, %513 : vector<32x512xf32>
    %cst_232 = arith.constant 0.000000e+00 : f32
    %528 = vector.broadcast %cst_232 : f32 to vector<32x512xf32>
    %529 = arith.subf %528, %508 : vector<32x512xf32>
    %530 = arith.mulf %529, %508 : vector<32x512xf32>
    %531 = math.exp %530 : vector<32x512xf32>
    %532 = arith.mulf %527, %531 : vector<32x512xf32>
    %cst_233 = arith.constant 1.000000e+00 : f32
    %533 = vector.broadcast %cst_233 : f32 to vector<32x512xf32>
    %534 = arith.subf %533, %532 : vector<32x512xf32>
    %535 = arith.mulf %507, %534 : vector<32x512xf32>
    %cst_234 = arith.constant 1.000000e+00 : f32
    %536 = vector.broadcast %cst_234 : f32 to vector<32x512xf32>
    %537 = arith.addf %536, %535 : vector<32x512xf32>
    %538 = arith.mulf %500, %537 : vector<32x512xf32>
    %c0_235 = arith.constant 0 : index
    %c0_236 = arith.constant 0 : index
    %539 = vector.load %arg33[%c0_235, %c0_236] : memref<512x128xf32, #tpu.memory_space<vmem>>, vector<512x128xf32>
    %cst_237 = arith.constant dense<0.000000e+00> : vector<32x128xf32>
    %540 = tpu.matmul %538, %539, %cst_237 {dimension_numbers = #tpu.dot_dimension_numbers<[1], [0], [0], [1], [0, 0, 1, 1], [], []>} : vector<32x512xf32>, vector<512x128xf32>, vector<32x128xf32> -> vector<32x128xf32>
    %c0_238 = arith.constant 0 : index
    %c0_239 = arith.constant 0 : index
    %541 = vector.load %arg34[%c0_238, %c0_239] : memref<1x128xf32, #tpu.memory_space<vmem>>, vector<1x128xf32>
    %542 = vector.broadcast %541 : vector<1x128xf32> to vector<32x128xf32>
    %543 = arith.addf %540, %542 : vector<32x128xf32>
    %cst_240 = arith.constant 5.000000e-01 : f32
    %544 = vector.broadcast %cst_240 : f32 to vector<32x128xf32>
    %545 = arith.mulf %544, %543 : vector<32x128xf32>
    %cst_241 = arith.constant 0.707106769 : f32
    %546 = vector.broadcast %cst_241 : f32 to vector<32x128xf32>
    %547 = arith.mulf %543, %546 : vector<32x128xf32>
    %cst_242 = arith.constant 0.000000e+00 : f32
    %548 = vector.broadcast %cst_242 : f32 to vector<32x128xf32>
    %549 = arith.cmpf olt, %547, %548 : vector<32x128xf32>
    %cst_243 = arith.constant -1.000000e+00 : f32
    %cst_244 = arith.constant 1.000000e+00 : f32
    %550 = vector.broadcast %cst_243 : f32 to vector<32x128xf32>
    %551 = vector.broadcast %cst_244 : f32 to vector<32x128xf32>
    %552 = arith.select %549, %550, %551 : vector<32x128xi1>, vector<32x128xf32>
    %553 = math.absf %547 : vector<32x128xf32>
    %cst_245 = arith.constant 0.327591091 : f32
    %554 = vector.broadcast %cst_245 : f32 to vector<32x128xf32>
    %555 = arith.mulf %554, %553 : vector<32x128xf32>
    %cst_246 = arith.constant 1.000000e+00 : f32
    %556 = vector.broadcast %cst_246 : f32 to vector<32x128xf32>
    %557 = arith.addf %556, %555 : vector<32x128xf32>
    %558 = tpu.reciprocal %557 {approx = true} : vector<32x128xf32> -> vector<32x128xf32>
    %cst_247 = arith.constant 1.06140542 : f32
    %559 = vector.broadcast %cst_247 : f32 to vector<32x128xf32>
    %560 = arith.mulf %559, %558 : vector<32x128xf32>
    %cst_248 = arith.constant -1.45315206 : f32
    %561 = vector.broadcast %cst_248 : f32 to vector<32x128xf32>
    %562 = arith.addf %560, %561 : vector<32x128xf32>
    %563 = arith.mulf %562, %558 : vector<32x128xf32>
    %cst_249 = arith.constant 1.42141378 : f32
    %564 = vector.broadcast %cst_249 : f32 to vector<32x128xf32>
    %565 = arith.addf %563, %564 : vector<32x128xf32>
    %566 = arith.mulf %565, %558 : vector<32x128xf32>
    %cst_250 = arith.constant -0.284496725 : f32
    %567 = vector.broadcast %cst_250 : f32 to vector<32x128xf32>
    %568 = arith.addf %566, %567 : vector<32x128xf32>
    %569 = arith.mulf %568, %558 : vector<32x128xf32>
    %cst_251 = arith.constant 0.254829586 : f32
    %570 = vector.broadcast %cst_251 : f32 to vector<32x128xf32>
    %571 = arith.addf %569, %570 : vector<32x128xf32>
    %572 = arith.mulf %571, %558 : vector<32x128xf32>
    %cst_252 = arith.constant 0.000000e+00 : f32
    %573 = vector.broadcast %cst_252 : f32 to vector<32x128xf32>
    %574 = arith.subf %573, %553 : vector<32x128xf32>
    %575 = arith.mulf %574, %553 : vector<32x128xf32>
    %576 = math.exp %575 : vector<32x128xf32>
    %577 = arith.mulf %572, %576 : vector<32x128xf32>
    %cst_253 = arith.constant 1.000000e+00 : f32
    %578 = vector.broadcast %cst_253 : f32 to vector<32x128xf32>
    %579 = arith.subf %578, %577 : vector<32x128xf32>
    %580 = arith.mulf %552, %579 : vector<32x128xf32>
    %cst_254 = arith.constant 1.000000e+00 : f32
    %581 = vector.broadcast %cst_254 : f32 to vector<32x128xf32>
    %582 = arith.addf %581, %580 : vector<32x128xf32>
    %583 = arith.mulf %545, %582 : vector<32x128xf32>
    %c0_255 = arith.constant 0 : index
    %c0_256 = arith.constant 0 : index
    %584 = vector.load %arg35[%c0_255, %c0_256] : memref<128x512xf32, #tpu.memory_space<vmem>>, vector<128x512xf32>
    %cst_257 = arith.constant dense<0.000000e+00> : vector<32x512xf32>
    %585 = tpu.matmul %583, %584, %cst_257 {dimension_numbers = #tpu.dot_dimension_numbers<[1], [0], [0], [1], [0, 0, 1, 1], [], []>} : vector<32x128xf32>, vector<128x512xf32>, vector<32x512xf32> -> vector<32x512xf32>
    %c0_258 = arith.constant 0 : index
    %c0_259 = arith.constant 0 : index
    %586 = vector.load %arg36[%c0_258, %c0_259] : memref<1x512xf32, #tpu.memory_space<vmem>>, vector<1x512xf32>
    %587 = vector.broadcast %586 : vector<1x512xf32> to vector<32x512xf32>
    %588 = arith.addf %585, %587 : vector<32x512xf32>
    %cst_260 = arith.constant 5.000000e-01 : f32
    %589 = vector.broadcast %cst_260 : f32 to vector<32x512xf32>
    %590 = arith.mulf %589, %588 : vector<32x512xf32>
    %cst_261 = arith.constant 0.707106769 : f32
    %591 = vector.broadcast %cst_261 : f32 to vector<32x512xf32>
    %592 = arith.mulf %588, %591 : vector<32x512xf32>
    %cst_262 = arith.constant 0.000000e+00 : f32
    %593 = vector.broadcast %cst_262 : f32 to vector<32x512xf32>
    %594 = arith.cmpf olt, %592, %593 : vector<32x512xf32>
    %cst_263 = arith.constant -1.000000e+00 : f32
    %cst_264 = arith.constant 1.000000e+00 : f32
    %595 = vector.broadcast %cst_263 : f32 to vector<32x512xf32>
    %596 = vector.broadcast %cst_264 : f32 to vector<32x512xf32>
    %597 = arith.select %594, %595, %596 : vector<32x512xi1>, vector<32x512xf32>
    %598 = math.absf %592 : vector<32x512xf32>
    %cst_265 = arith.constant 0.327591091 : f32
    %599 = vector.broadcast %cst_265 : f32 to vector<32x512xf32>
    %600 = arith.mulf %599, %598 : vector<32x512xf32>
    %cst_266 = arith.constant 1.000000e+00 : f32
    %601 = vector.broadcast %cst_266 : f32 to vector<32x512xf32>
    %602 = arith.addf %601, %600 : vector<32x512xf32>
    %603 = tpu.reciprocal %602 {approx = true} : vector<32x512xf32> -> vector<32x512xf32>
    %cst_267 = arith.constant 1.06140542 : f32
    %604 = vector.broadcast %cst_267 : f32 to vector<32x512xf32>
    %605 = arith.mulf %604, %603 : vector<32x512xf32>
    %cst_268 = arith.constant -1.45315206 : f32
    %606 = vector.broadcast %cst_268 : f32 to vector<32x512xf32>
    %607 = arith.addf %605, %606 : vector<32x512xf32>
    %608 = arith.mulf %607, %603 : vector<32x512xf32>
    %cst_269 = arith.constant 1.42141378 : f32
    %609 = vector.broadcast %cst_269 : f32 to vector<32x512xf32>
    %610 = arith.addf %608, %609 : vector<32x512xf32>
    %611 = arith.mulf %610, %603 : vector<32x512xf32>
    %cst_270 = arith.constant -0.284496725 : f32
    %612 = vector.broadcast %cst_270 : f32 to vector<32x512xf32>
    %613 = arith.addf %611, %612 : vector<32x512xf32>
    %614 = arith.mulf %613, %603 : vector<32x512xf32>
    %cst_271 = arith.constant 0.254829586 : f32
    %615 = vector.broadcast %cst_271 : f32 to vector<32x512xf32>
    %616 = arith.addf %614, %615 : vector<32x512xf32>
    %617 = arith.mulf %616, %603 : vector<32x512xf32>
    %cst_272 = arith.constant 0.000000e+00 : f32
    %618 = vector.broadcast %cst_272 : f32 to vector<32x512xf32>
    %619 = arith.subf %618, %598 : vector<32x512xf32>
    %620 = arith.mulf %619, %598 : vector<32x512xf32>
    %621 = math.exp %620 : vector<32x512xf32>
    %622 = arith.mulf %617, %621 : vector<32x512xf32>
    %cst_273 = arith.constant 1.000000e+00 : f32
    %623 = vector.broadcast %cst_273 : f32 to vector<32x512xf32>
    %624 = arith.subf %623, %622 : vector<32x512xf32>
    %625 = arith.mulf %597, %624 : vector<32x512xf32>
    %cst_274 = arith.constant 1.000000e+00 : f32
    %626 = vector.broadcast %cst_274 : f32 to vector<32x512xf32>
    %627 = arith.addf %626, %625 : vector<32x512xf32>
    %628 = arith.mulf %590, %627 : vector<32x512xf32>
    %c0_275 = arith.constant 0 : index
    %c0_276 = arith.constant 0 : index
    %629 = vector.load %arg37[%c0_275, %c0_276] : memref<512x128xf32, #tpu.memory_space<vmem>>, vector<512x128xf32>
    %cst_277 = arith.constant dense<0.000000e+00> : vector<32x128xf32>
    %630 = tpu.matmul %628, %629, %cst_277 {dimension_numbers = #tpu.dot_dimension_numbers<[1], [0], [0], [1], [0, 0, 1, 1], [], []>} : vector<32x512xf32>, vector<512x128xf32>, vector<32x128xf32> -> vector<32x128xf32>
    %c0_278 = arith.constant 0 : index
    %c0_279 = arith.constant 0 : index
    %631 = vector.load %arg38[%c0_278, %c0_279] : memref<1x128xf32, #tpu.memory_space<vmem>>, vector<1x128xf32>
    %632 = vector.broadcast %631 : vector<1x128xf32> to vector<32x128xf32>
    %633 = arith.addf %630, %632 : vector<32x128xf32>
    %634 = arith.addf %633, %493 : vector<32x128xf32>
    %cst_280 = arith.constant dense<0.000000e+00> : vector<32x32xf32>
    %635 = tpu.matmul %634, %634, %cst_280 {dimension_numbers = #tpu.dot_dimension_numbers<[1], [1], [0], [0], [0, 0, 1, 0], [], []>} : vector<32x128xf32>, vector<32x128xf32>, vector<32x32xf32> -> vector<32x32xf32>
    %cst_281 = arith.constant 0xFF800000 : f32
    %636 = vector.broadcast %cst_281 : f32 to vector<32x32xf32>
    %637 = arith.select %277, %635, %636 : vector<32x32xi1>, vector<32x32xf32>
    %cst_282 = arith.constant dense<0xFF800000> : vector<32xf32>
    %638 = vector.multi_reduction <maximumf>, %637, %cst_282 [1] : vector<32x32xf32> to vector<32xf32>
    %639 = vector.shape_cast %638 : vector<32xf32> to vector<32x1xf32>
    %640 = vector.broadcast %639 : vector<32x1xf32> to vector<32x32xf32>
    %641 = arith.cmpf oge, %637, %640 : vector<32x32xf32>
    %cst_283 = arith.constant 3.200000e+01 : f32
    %642 = vector.broadcast %cst_283 : f32 to vector<32x32xf32>
    %643 = arith.select %641, %254, %642 : vector<32x32xi1>, vector<32x32xf32>
    %cst_284 = arith.constant dense<0x7F800000> : vector<32xf32>
    %644 = vector.multi_reduction <minimumf>, %643, %cst_284 [1] : vector<32x32xf32> to vector<32xf32>
    %645 = vector.shape_cast %644 : vector<32xf32> to vector<32x1xf32>
    %646 = vector.broadcast %645 : vector<32x1xf32> to vector<32x32xf32>
    %647 = arith.cmpf oeq, %254, %646 : vector<32x32xf32>
    %648 = arith.extui %647 : vector<32x32xi1> to vector<32x32xi32>
    %649 = arith.sitofp %648 : vector<32x32xi32> to vector<32x32xf32>
    %cst_285 = arith.constant 0xFF800000 : f32
    %650 = vector.broadcast %cst_285 : f32 to vector<32x32xf32>
    %651 = arith.select %647, %650, %637 : vector<32x32xi1>, vector<32x32xf32>
    %cst_286 = arith.constant dense<0xFF800000> : vector<32xf32>
    %652 = vector.multi_reduction <maximumf>, %651, %cst_286 [1] : vector<32x32xf32> to vector<32xf32>
    %653 = vector.shape_cast %652 : vector<32xf32> to vector<32x1xf32>
    %654 = vector.broadcast %653 : vector<32x1xf32> to vector<32x32xf32>
    %655 = arith.cmpf oge, %651, %654 : vector<32x32xf32>
    %cst_287 = arith.constant 3.200000e+01 : f32
    %656 = vector.broadcast %cst_287 : f32 to vector<32x32xf32>
    %657 = arith.select %655, %254, %656 : vector<32x32xi1>, vector<32x32xf32>
    %cst_288 = arith.constant dense<0x7F800000> : vector<32xf32>
    %658 = vector.multi_reduction <minimumf>, %657, %cst_288 [1] : vector<32x32xf32> to vector<32xf32>
    %659 = vector.shape_cast %658 : vector<32xf32> to vector<32x1xf32>
    %660 = vector.broadcast %659 : vector<32x1xf32> to vector<32x32xf32>
    %661 = arith.cmpf oeq, %254, %660 : vector<32x32xf32>
    %662 = arith.extui %661 : vector<32x32xi1> to vector<32x32xi32>
    %663 = arith.sitofp %662 : vector<32x32xi32> to vector<32x32xf32>
    %cst_289 = arith.constant 0xFF800000 : f32
    %664 = vector.broadcast %cst_289 : f32 to vector<32x32xf32>
    %665 = arith.select %661, %664, %651 : vector<32x32xi1>, vector<32x32xf32>
    %cst_290 = arith.constant dense<0xFF800000> : vector<32xf32>
    %666 = vector.multi_reduction <maximumf>, %665, %cst_290 [1] : vector<32x32xf32> to vector<32xf32>
    %667 = vector.shape_cast %666 : vector<32xf32> to vector<32x1xf32>
    %668 = vector.broadcast %667 : vector<32x1xf32> to vector<32x32xf32>
    %669 = arith.cmpf oge, %665, %668 : vector<32x32xf32>
    %cst_291 = arith.constant 3.200000e+01 : f32
    %670 = vector.broadcast %cst_291 : f32 to vector<32x32xf32>
    %671 = arith.select %669, %254, %670 : vector<32x32xi1>, vector<32x32xf32>
    %cst_292 = arith.constant dense<0x7F800000> : vector<32xf32>
    %672 = vector.multi_reduction <minimumf>, %671, %cst_292 [1] : vector<32x32xf32> to vector<32xf32>
    %673 = vector.shape_cast %672 : vector<32xf32> to vector<32x1xf32>
    %674 = vector.broadcast %673 : vector<32x1xf32> to vector<32x32xf32>
    %675 = arith.cmpf oeq, %254, %674 : vector<32x32xf32>
    %676 = arith.extui %675 : vector<32x32xi1> to vector<32x32xi32>
    %677 = arith.sitofp %676 : vector<32x32xi32> to vector<32x32xf32>
    %cst_293 = arith.constant 0xFF800000 : f32
    %678 = vector.broadcast %cst_293 : f32 to vector<32x32xf32>
    %679 = arith.select %675, %678, %665 : vector<32x32xi1>, vector<32x32xf32>
    %cst_294 = arith.constant dense<0xFF800000> : vector<32xf32>
    %680 = vector.multi_reduction <maximumf>, %679, %cst_294 [1] : vector<32x32xf32> to vector<32xf32>
    %681 = vector.shape_cast %680 : vector<32xf32> to vector<32x1xf32>
    %682 = vector.broadcast %681 : vector<32x1xf32> to vector<32x32xf32>
    %683 = arith.cmpf oge, %679, %682 : vector<32x32xf32>
    %cst_295 = arith.constant 3.200000e+01 : f32
    %684 = vector.broadcast %cst_295 : f32 to vector<32x32xf32>
    %685 = arith.select %683, %254, %684 : vector<32x32xi1>, vector<32x32xf32>
    %cst_296 = arith.constant dense<0x7F800000> : vector<32xf32>
    %686 = vector.multi_reduction <minimumf>, %685, %cst_296 [1] : vector<32x32xf32> to vector<32xf32>
    %687 = vector.shape_cast %686 : vector<32xf32> to vector<32x1xf32>
    %688 = vector.broadcast %687 : vector<32x1xf32> to vector<32x32xf32>
    %689 = arith.cmpf oeq, %254, %688 : vector<32x32xf32>
    %690 = arith.extui %689 : vector<32x32xi1> to vector<32x32xi32>
    %691 = arith.sitofp %690 : vector<32x32xi32> to vector<32x32xf32>
    %c0_297 = arith.constant 0 : index
    %c0_298 = arith.constant 0 : index
    %692 = vector.load %arg39[%c0_297, %c0_298] : memref<128x128xf32, #tpu.memory_space<vmem>>, vector<128x128xf32>
    %cst_299 = arith.constant dense<0.000000e+00> : vector<32x128xf32>
    %693 = tpu.matmul %634, %692, %cst_299 {dimension_numbers = #tpu.dot_dimension_numbers<[1], [0], [0], [1], [0, 0, 1, 1], [], []>} : vector<32x128xf32>, vector<128x128xf32>, vector<32x128xf32> -> vector<32x128xf32>
    %c0_300 = arith.constant 0 : index
    %c0_301 = arith.constant 0 : index
    %694 = vector.load %arg40[%c0_300, %c0_301] : memref<1x128xf32, #tpu.memory_space<vmem>>, vector<1x128xf32>
    %695 = vector.broadcast %694 : vector<1x128xf32> to vector<32x128xf32>
    %696 = arith.addf %693, %695 : vector<32x128xf32>
    %cst_302 = arith.constant 5.000000e-01 : f32
    %697 = vector.broadcast %cst_302 : f32 to vector<32x128xf32>
    %698 = arith.mulf %697, %696 : vector<32x128xf32>
    %cst_303 = arith.constant 0.707106769 : f32
    %699 = vector.broadcast %cst_303 : f32 to vector<32x128xf32>
    %700 = arith.mulf %696, %699 : vector<32x128xf32>
    %cst_304 = arith.constant 0.000000e+00 : f32
    %701 = vector.broadcast %cst_304 : f32 to vector<32x128xf32>
    %702 = arith.cmpf olt, %700, %701 : vector<32x128xf32>
    %cst_305 = arith.constant -1.000000e+00 : f32
    %cst_306 = arith.constant 1.000000e+00 : f32
    %703 = vector.broadcast %cst_305 : f32 to vector<32x128xf32>
    %704 = vector.broadcast %cst_306 : f32 to vector<32x128xf32>
    %705 = arith.select %702, %703, %704 : vector<32x128xi1>, vector<32x128xf32>
    %706 = math.absf %700 : vector<32x128xf32>
    %cst_307 = arith.constant 0.327591091 : f32
    %707 = vector.broadcast %cst_307 : f32 to vector<32x128xf32>
    %708 = arith.mulf %707, %706 : vector<32x128xf32>
    %cst_308 = arith.constant 1.000000e+00 : f32
    %709 = vector.broadcast %cst_308 : f32 to vector<32x128xf32>
    %710 = arith.addf %709, %708 : vector<32x128xf32>
    %711 = tpu.reciprocal %710 {approx = true} : vector<32x128xf32> -> vector<32x128xf32>
    %cst_309 = arith.constant 1.06140542 : f32
    %712 = vector.broadcast %cst_309 : f32 to vector<32x128xf32>
    %713 = arith.mulf %712, %711 : vector<32x128xf32>
    %cst_310 = arith.constant -1.45315206 : f32
    %714 = vector.broadcast %cst_310 : f32 to vector<32x128xf32>
    %715 = arith.addf %713, %714 : vector<32x128xf32>
    %716 = arith.mulf %715, %711 : vector<32x128xf32>
    %cst_311 = arith.constant 1.42141378 : f32
    %717 = vector.broadcast %cst_311 : f32 to vector<32x128xf32>
    %718 = arith.addf %716, %717 : vector<32x128xf32>
    %719 = arith.mulf %718, %711 : vector<32x128xf32>
    %cst_312 = arith.constant -0.284496725 : f32
    %720 = vector.broadcast %cst_312 : f32 to vector<32x128xf32>
    %721 = arith.addf %719, %720 : vector<32x128xf32>
    %722 = arith.mulf %721, %711 : vector<32x128xf32>
    %cst_313 = arith.constant 0.254829586 : f32
    %723 = vector.broadcast %cst_313 : f32 to vector<32x128xf32>
    %724 = arith.addf %722, %723 : vector<32x128xf32>
    %725 = arith.mulf %724, %711 : vector<32x128xf32>
    %cst_314 = arith.constant 0.000000e+00 : f32
    %726 = vector.broadcast %cst_314 : f32 to vector<32x128xf32>
    %727 = arith.subf %726, %706 : vector<32x128xf32>
    %728 = arith.mulf %727, %706 : vector<32x128xf32>
    %729 = math.exp %728 : vector<32x128xf32>
    %730 = arith.mulf %725, %729 : vector<32x128xf32>
    %cst_315 = arith.constant 1.000000e+00 : f32
    %731 = vector.broadcast %cst_315 : f32 to vector<32x128xf32>
    %732 = arith.subf %731, %730 : vector<32x128xf32>
    %733 = arith.mulf %705, %732 : vector<32x128xf32>
    %cst_316 = arith.constant 1.000000e+00 : f32
    %734 = vector.broadcast %cst_316 : f32 to vector<32x128xf32>
    %735 = arith.addf %734, %733 : vector<32x128xf32>
    %736 = arith.mulf %698, %735 : vector<32x128xf32>
    %c0_317 = arith.constant 0 : index
    %c0_318 = arith.constant 0 : index
    %737 = vector.load %arg41[%c0_317, %c0_318] : memref<128x128xf32, #tpu.memory_space<vmem>>, vector<128x128xf32>
    %cst_319 = arith.constant dense<0.000000e+00> : vector<32x128xf32>
    %738 = tpu.matmul %736, %737, %cst_319 {dimension_numbers = #tpu.dot_dimension_numbers<[1], [0], [0], [1], [0, 0, 1, 1], [], []>} : vector<32x128xf32>, vector<128x128xf32>, vector<32x128xf32> -> vector<32x128xf32>
    %c0_320 = arith.constant 0 : index
    %c0_321 = arith.constant 0 : index
    %739 = vector.load %arg42[%c0_320, %c0_321] : memref<1x128xf32, #tpu.memory_space<vmem>>, vector<1x128xf32>
    %740 = vector.broadcast %739 : vector<1x128xf32> to vector<32x128xf32>
    %741 = arith.addf %738, %740 : vector<32x128xf32>
    %742 = tpu.concatenate %649, %663, %677, %691 in 0 : vector<32x32xf32>, vector<32x32xf32>, vector<32x32xf32>, vector<32x32xf32> -> vector<128x32xf32>
    %cst_322 = arith.constant dense<0.000000e+00> : vector<128x128xf32>
    %743 = tpu.matmul %742, %741, %cst_322 {dimension_numbers = #tpu.dot_dimension_numbers<[1], [0], [0], [1], [0, 0, 1, 1], [], []>} : vector<128x32xf32>, vector<32x128xf32>, vector<128x128xf32> -> vector<128x128xf32>
    %744 = vector.extract_strided_slice %743 {offsets = [0, 0], sizes = [32, 128], strides = [1, 1]} : vector<128x128xf32> to vector<32x128xf32>
    %745 = vector.extract_strided_slice %743 {offsets = [32, 0], sizes = [32, 128], strides = [1, 1]} : vector<128x128xf32> to vector<32x128xf32>
    %746 = arith.maximumf %744, %745 : vector<32x128xf32>
    %747 = vector.extract_strided_slice %743 {offsets = [64, 0], sizes = [32, 128], strides = [1, 1]} : vector<128x128xf32> to vector<32x128xf32>
    %748 = arith.maximumf %746, %747 : vector<32x128xf32>
    %749 = vector.extract_strided_slice %743 {offsets = [96, 0], sizes = [32, 128], strides = [1, 1]} : vector<128x128xf32> to vector<32x128xf32>
    %750 = arith.maximumf %748, %749 : vector<32x128xf32>
    %751 = arith.subf %750, %741 : vector<32x128xf32>
    %c0_323 = arith.constant 0 : index
    %c0_324 = arith.constant 0 : index
    %752 = vector.load %arg43[%c0_323, %c0_324] : memref<128x128xf32, #tpu.memory_space<vmem>>, vector<128x128xf32>
    %cst_325 = arith.constant dense<0.000000e+00> : vector<32x128xf32>
    %753 = tpu.matmul %741, %752, %cst_325 {dimension_numbers = #tpu.dot_dimension_numbers<[1], [0], [0], [1], [0, 0, 1, 1], [], []>} : vector<32x128xf32>, vector<128x128xf32>, vector<32x128xf32> -> vector<32x128xf32>
    %c0_326 = arith.constant 0 : index
    %c0_327 = arith.constant 0 : index
    %754 = vector.load %arg44[%c0_326, %c0_327] : memref<128x128xf32, #tpu.memory_space<vmem>>, vector<128x128xf32>
    %cst_328 = arith.constant dense<0.000000e+00> : vector<32x128xf32>
    %755 = tpu.matmul %751, %754, %cst_328 {dimension_numbers = #tpu.dot_dimension_numbers<[1], [0], [0], [1], [0, 0, 1, 1], [], []>} : vector<32x128xf32>, vector<128x128xf32>, vector<32x128xf32> -> vector<32x128xf32>
    %756 = arith.addf %753, %755 : vector<32x128xf32>
    %c0_329 = arith.constant 0 : index
    %c0_330 = arith.constant 0 : index
    %757 = vector.load %arg45[%c0_329, %c0_330] : memref<1x128xf32, #tpu.memory_space<vmem>>, vector<1x128xf32>
    %758 = vector.broadcast %757 : vector<1x128xf32> to vector<32x128xf32>
    %759 = arith.addf %756, %758 : vector<32x128xf32>
    %cst_331 = arith.constant 5.000000e-01 : f32
    %760 = vector.broadcast %cst_331 : f32 to vector<32x128xf32>
    %761 = arith.mulf %760, %759 : vector<32x128xf32>
    %cst_332 = arith.constant 0.707106769 : f32
    %762 = vector.broadcast %cst_332 : f32 to vector<32x128xf32>
    %763 = arith.mulf %759, %762 : vector<32x128xf32>
    %cst_333 = arith.constant 0.000000e+00 : f32
    %764 = vector.broadcast %cst_333 : f32 to vector<32x128xf32>
    %765 = arith.cmpf olt, %763, %764 : vector<32x128xf32>
    %cst_334 = arith.constant -1.000000e+00 : f32
    %cst_335 = arith.constant 1.000000e+00 : f32
    %766 = vector.broadcast %cst_334 : f32 to vector<32x128xf32>
    %767 = vector.broadcast %cst_335 : f32 to vector<32x128xf32>
    %768 = arith.select %765, %766, %767 : vector<32x128xi1>, vector<32x128xf32>
    %769 = math.absf %763 : vector<32x128xf32>
    %cst_336 = arith.constant 0.327591091 : f32
    %770 = vector.broadcast %cst_336 : f32 to vector<32x128xf32>
    %771 = arith.mulf %770, %769 : vector<32x128xf32>
    %cst_337 = arith.constant 1.000000e+00 : f32
    %772 = vector.broadcast %cst_337 : f32 to vector<32x128xf32>
    %773 = arith.addf %772, %771 : vector<32x128xf32>
    %774 = tpu.reciprocal %773 {approx = true} : vector<32x128xf32> -> vector<32x128xf32>
    %cst_338 = arith.constant 1.06140542 : f32
    %775 = vector.broadcast %cst_338 : f32 to vector<32x128xf32>
    %776 = arith.mulf %775, %774 : vector<32x128xf32>
    %cst_339 = arith.constant -1.45315206 : f32
    %777 = vector.broadcast %cst_339 : f32 to vector<32x128xf32>
    %778 = arith.addf %776, %777 : vector<32x128xf32>
    %779 = arith.mulf %778, %774 : vector<32x128xf32>
    %cst_340 = arith.constant 1.42141378 : f32
    %780 = vector.broadcast %cst_340 : f32 to vector<32x128xf32>
    %781 = arith.addf %779, %780 : vector<32x128xf32>
    %782 = arith.mulf %781, %774 : vector<32x128xf32>
    %cst_341 = arith.constant -0.284496725 : f32
    %783 = vector.broadcast %cst_341 : f32 to vector<32x128xf32>
    %784 = arith.addf %782, %783 : vector<32x128xf32>
    %785 = arith.mulf %784, %774 : vector<32x128xf32>
    %cst_342 = arith.constant 0.254829586 : f32
    %786 = vector.broadcast %cst_342 : f32 to vector<32x128xf32>
    %787 = arith.addf %785, %786 : vector<32x128xf32>
    %788 = arith.mulf %787, %774 : vector<32x128xf32>
    %cst_343 = arith.constant 0.000000e+00 : f32
    %789 = vector.broadcast %cst_343 : f32 to vector<32x128xf32>
    %790 = arith.subf %789, %769 : vector<32x128xf32>
    %791 = arith.mulf %790, %769 : vector<32x128xf32>
    %792 = math.exp %791 : vector<32x128xf32>
    %793 = arith.mulf %788, %792 : vector<32x128xf32>
    %cst_344 = arith.constant 1.000000e+00 : f32
    %794 = vector.broadcast %cst_344 : f32 to vector<32x128xf32>
    %795 = arith.subf %794, %793 : vector<32x128xf32>
    %796 = arith.mulf %768, %795 : vector<32x128xf32>
    %cst_345 = arith.constant 1.000000e+00 : f32
    %797 = vector.broadcast %cst_345 : f32 to vector<32x128xf32>
    %798 = arith.addf %797, %796 : vector<32x128xf32>
    %799 = arith.mulf %761, %798 : vector<32x128xf32>
    %c0_346 = arith.constant 0 : index
    %c0_347 = arith.constant 0 : index
    %800 = vector.load %arg46[%c0_346, %c0_347] : memref<128x128xf32, #tpu.memory_space<vmem>>, vector<128x128xf32>
    %cst_348 = arith.constant dense<0.000000e+00> : vector<32x128xf32>
    %801 = tpu.matmul %799, %800, %cst_348 {dimension_numbers = #tpu.dot_dimension_numbers<[1], [0], [0], [1], [0, 0, 1, 1], [], []>} : vector<32x128xf32>, vector<128x128xf32>, vector<32x128xf32> -> vector<32x128xf32>
    %c0_349 = arith.constant 0 : index
    %c0_350 = arith.constant 0 : index
    %802 = vector.load %arg47[%c0_349, %c0_350] : memref<1x128xf32, #tpu.memory_space<vmem>>, vector<1x128xf32>
    %803 = vector.broadcast %802 : vector<1x128xf32> to vector<32x128xf32>
    %804 = arith.addf %801, %803 : vector<32x128xf32>
    %cst_351 = arith.constant 5.000000e-01 : f32
    %805 = vector.broadcast %cst_351 : f32 to vector<32x128xf32>
    %806 = arith.mulf %805, %804 : vector<32x128xf32>
    %cst_352 = arith.constant 0.707106769 : f32
    %807 = vector.broadcast %cst_352 : f32 to vector<32x128xf32>
    %808 = arith.mulf %804, %807 : vector<32x128xf32>
    %cst_353 = arith.constant 0.000000e+00 : f32
    %809 = vector.broadcast %cst_353 : f32 to vector<32x128xf32>
    %810 = arith.cmpf olt, %808, %809 : vector<32x128xf32>
    %cst_354 = arith.constant -1.000000e+00 : f32
    %cst_355 = arith.constant 1.000000e+00 : f32
    %811 = vector.broadcast %cst_354 : f32 to vector<32x128xf32>
    %812 = vector.broadcast %cst_355 : f32 to vector<32x128xf32>
    %813 = arith.select %810, %811, %812 : vector<32x128xi1>, vector<32x128xf32>
    %814 = math.absf %808 : vector<32x128xf32>
    %cst_356 = arith.constant 0.327591091 : f32
    %815 = vector.broadcast %cst_356 : f32 to vector<32x128xf32>
    %816 = arith.mulf %815, %814 : vector<32x128xf32>
    %cst_357 = arith.constant 1.000000e+00 : f32
    %817 = vector.broadcast %cst_357 : f32 to vector<32x128xf32>
    %818 = arith.addf %817, %816 : vector<32x128xf32>
    %819 = tpu.reciprocal %818 {approx = true} : vector<32x128xf32> -> vector<32x128xf32>
    %cst_358 = arith.constant 1.06140542 : f32
    %820 = vector.broadcast %cst_358 : f32 to vector<32x128xf32>
    %821 = arith.mulf %820, %819 : vector<32x128xf32>
    %cst_359 = arith.constant -1.45315206 : f32
    %822 = vector.broadcast %cst_359 : f32 to vector<32x128xf32>
    %823 = arith.addf %821, %822 : vector<32x128xf32>
    %824 = arith.mulf %823, %819 : vector<32x128xf32>
    %cst_360 = arith.constant 1.42141378 : f32
    %825 = vector.broadcast %cst_360 : f32 to vector<32x128xf32>
    %826 = arith.addf %824, %825 : vector<32x128xf32>
    %827 = arith.mulf %826, %819 : vector<32x128xf32>
    %cst_361 = arith.constant -0.284496725 : f32
    %828 = vector.broadcast %cst_361 : f32 to vector<32x128xf32>
    %829 = arith.addf %827, %828 : vector<32x128xf32>
    %830 = arith.mulf %829, %819 : vector<32x128xf32>
    %cst_362 = arith.constant 0.254829586 : f32
    %831 = vector.broadcast %cst_362 : f32 to vector<32x128xf32>
    %832 = arith.addf %830, %831 : vector<32x128xf32>
    %833 = arith.mulf %832, %819 : vector<32x128xf32>
    %cst_363 = arith.constant 0.000000e+00 : f32
    %834 = vector.broadcast %cst_363 : f32 to vector<32x128xf32>
    %835 = arith.subf %834, %814 : vector<32x128xf32>
    %836 = arith.mulf %835, %814 : vector<32x128xf32>
    %837 = math.exp %836 : vector<32x128xf32>
    %838 = arith.mulf %833, %837 : vector<32x128xf32>
    %cst_364 = arith.constant 1.000000e+00 : f32
    %839 = vector.broadcast %cst_364 : f32 to vector<32x128xf32>
    %840 = arith.subf %839, %838 : vector<32x128xf32>
    %841 = arith.mulf %813, %840 : vector<32x128xf32>
    %cst_365 = arith.constant 1.000000e+00 : f32
    %842 = vector.broadcast %cst_365 : f32 to vector<32x128xf32>
    %843 = arith.addf %842, %841 : vector<32x128xf32>
    %844 = arith.mulf %806, %843 : vector<32x128xf32>
    %c0_366 = arith.constant 0 : index
    %c0_367 = arith.constant 0 : index
    %845 = vector.load %arg48[%c0_366, %c0_367] : memref<128x128xf32, #tpu.memory_space<vmem>>, vector<128x128xf32>
    %cst_368 = arith.constant dense<0.000000e+00> : vector<32x128xf32>
    %846 = tpu.matmul %844, %845, %cst_368 {dimension_numbers = #tpu.dot_dimension_numbers<[1], [0], [0], [1], [0, 0, 1, 1], [], []>} : vector<32x128xf32>, vector<128x128xf32>, vector<32x128xf32> -> vector<32x128xf32>
    %c0_369 = arith.constant 0 : index
    %c0_370 = arith.constant 0 : index
    %847 = vector.load %arg49[%c0_369, %c0_370] : memref<1x128xf32, #tpu.memory_space<vmem>>, vector<1x128xf32>
    %848 = vector.broadcast %847 : vector<1x128xf32> to vector<32x128xf32>
    %849 = arith.addf %846, %848 : vector<32x128xf32>
    %850 = arith.addf %849, %634 : vector<32x128xf32>
    %c0_371 = arith.constant 0 : index
    %c0_372 = arith.constant 0 : index
    %851 = vector.load %arg50[%c0_371, %c0_372] : memref<128x512xf32, #tpu.memory_space<vmem>>, vector<128x512xf32>
    %cst_373 = arith.constant dense<0.000000e+00> : vector<32x512xf32>
    %852 = tpu.matmul %850, %851, %cst_373 {dimension_numbers = #tpu.dot_dimension_numbers<[1], [0], [0], [1], [0, 0, 1, 1], [], []>} : vector<32x128xf32>, vector<128x512xf32>, vector<32x512xf32> -> vector<32x512xf32>
    %c0_374 = arith.constant 0 : index
    %c0_375 = arith.constant 0 : index
    %853 = vector.load %arg51[%c0_374, %c0_375] : memref<1x512xf32, #tpu.memory_space<vmem>>, vector<1x512xf32>
    %854 = vector.broadcast %853 : vector<1x512xf32> to vector<32x512xf32>
    %855 = arith.addf %852, %854 : vector<32x512xf32>
    %cst_376 = arith.constant 5.000000e-01 : f32
    %856 = vector.broadcast %cst_376 : f32 to vector<32x512xf32>
    %857 = arith.mulf %856, %855 : vector<32x512xf32>
    %cst_377 = arith.constant 0.707106769 : f32
    %858 = vector.broadcast %cst_377 : f32 to vector<32x512xf32>
    %859 = arith.mulf %855, %858 : vector<32x512xf32>
    %cst_378 = arith.constant 0.000000e+00 : f32
    %860 = vector.broadcast %cst_378 : f32 to vector<32x512xf32>
    %861 = arith.cmpf olt, %859, %860 : vector<32x512xf32>
    %cst_379 = arith.constant -1.000000e+00 : f32
    %cst_380 = arith.constant 1.000000e+00 : f32
    %862 = vector.broadcast %cst_379 : f32 to vector<32x512xf32>
    %863 = vector.broadcast %cst_380 : f32 to vector<32x512xf32>
    %864 = arith.select %861, %862, %863 : vector<32x512xi1>, vector<32x512xf32>
    %865 = math.absf %859 : vector<32x512xf32>
    %cst_381 = arith.constant 0.327591091 : f32
    %866 = vector.broadcast %cst_381 : f32 to vector<32x512xf32>
    %867 = arith.mulf %866, %865 : vector<32x512xf32>
    %cst_382 = arith.constant 1.000000e+00 : f32
    %868 = vector.broadcast %cst_382 : f32 to vector<32x512xf32>
    %869 = arith.addf %868, %867 : vector<32x512xf32>
    %870 = tpu.reciprocal %869 {approx = true} : vector<32x512xf32> -> vector<32x512xf32>
    %cst_383 = arith.constant 1.06140542 : f32
    %871 = vector.broadcast %cst_383 : f32 to vector<32x512xf32>
    %872 = arith.mulf %871, %870 : vector<32x512xf32>
    %cst_384 = arith.constant -1.45315206 : f32
    %873 = vector.broadcast %cst_384 : f32 to vector<32x512xf32>
    %874 = arith.addf %872, %873 : vector<32x512xf32>
    %875 = arith.mulf %874, %870 : vector<32x512xf32>
    %cst_385 = arith.constant 1.42141378 : f32
    %876 = vector.broadcast %cst_385 : f32 to vector<32x512xf32>
    %877 = arith.addf %875, %876 : vector<32x512xf32>
    %878 = arith.mulf %877, %870 : vector<32x512xf32>
    %cst_386 = arith.constant -0.284496725 : f32
    %879 = vector.broadcast %cst_386 : f32 to vector<32x512xf32>
    %880 = arith.addf %878, %879 : vector<32x512xf32>
    %881 = arith.mulf %880, %870 : vector<32x512xf32>
    %cst_387 = arith.constant 0.254829586 : f32
    %882 = vector.broadcast %cst_387 : f32 to vector<32x512xf32>
    %883 = arith.addf %881, %882 : vector<32x512xf32>
    %884 = arith.mulf %883, %870 : vector<32x512xf32>
    %cst_388 = arith.constant 0.000000e+00 : f32
    %885 = vector.broadcast %cst_388 : f32 to vector<32x512xf32>
    %886 = arith.subf %885, %865 : vector<32x512xf32>
    %887 = arith.mulf %886, %865 : vector<32x512xf32>
    %888 = math.exp %887 : vector<32x512xf32>
    %889 = arith.mulf %884, %888 : vector<32x512xf32>
    %cst_389 = arith.constant 1.000000e+00 : f32
    %890 = vector.broadcast %cst_389 : f32 to vector<32x512xf32>
    %891 = arith.subf %890, %889 : vector<32x512xf32>
    %892 = arith.mulf %864, %891 : vector<32x512xf32>
    %cst_390 = arith.constant 1.000000e+00 : f32
    %893 = vector.broadcast %cst_390 : f32 to vector<32x512xf32>
    %894 = arith.addf %893, %892 : vector<32x512xf32>
    %895 = arith.mulf %857, %894 : vector<32x512xf32>
    %c0_391 = arith.constant 0 : index
    %c0_392 = arith.constant 0 : index
    %896 = vector.load %arg52[%c0_391, %c0_392] : memref<512x128xf32, #tpu.memory_space<vmem>>, vector<512x128xf32>
    %cst_393 = arith.constant dense<0.000000e+00> : vector<32x128xf32>
    %897 = tpu.matmul %895, %896, %cst_393 {dimension_numbers = #tpu.dot_dimension_numbers<[1], [0], [0], [1], [0, 0, 1, 1], [], []>} : vector<32x512xf32>, vector<512x128xf32>, vector<32x128xf32> -> vector<32x128xf32>
    %c0_394 = arith.constant 0 : index
    %c0_395 = arith.constant 0 : index
    %898 = vector.load %arg53[%c0_394, %c0_395] : memref<1x128xf32, #tpu.memory_space<vmem>>, vector<1x128xf32>
    %899 = vector.broadcast %898 : vector<1x128xf32> to vector<32x128xf32>
    %900 = arith.addf %897, %899 : vector<32x128xf32>
    %cst_396 = arith.constant 5.000000e-01 : f32
    %901 = vector.broadcast %cst_396 : f32 to vector<32x128xf32>
    %902 = arith.mulf %901, %900 : vector<32x128xf32>
    %cst_397 = arith.constant 0.707106769 : f32
    %903 = vector.broadcast %cst_397 : f32 to vector<32x128xf32>
    %904 = arith.mulf %900, %903 : vector<32x128xf32>
    %cst_398 = arith.constant 0.000000e+00 : f32
    %905 = vector.broadcast %cst_398 : f32 to vector<32x128xf32>
    %906 = arith.cmpf olt, %904, %905 : vector<32x128xf32>
    %cst_399 = arith.constant -1.000000e+00 : f32
    %cst_400 = arith.constant 1.000000e+00 : f32
    %907 = vector.broadcast %cst_399 : f32 to vector<32x128xf32>
    %908 = vector.broadcast %cst_400 : f32 to vector<32x128xf32>
    %909 = arith.select %906, %907, %908 : vector<32x128xi1>, vector<32x128xf32>
    %910 = math.absf %904 : vector<32x128xf32>
    %cst_401 = arith.constant 0.327591091 : f32
    %911 = vector.broadcast %cst_401 : f32 to vector<32x128xf32>
    %912 = arith.mulf %911, %910 : vector<32x128xf32>
    %cst_402 = arith.constant 1.000000e+00 : f32
    %913 = vector.broadcast %cst_402 : f32 to vector<32x128xf32>
    %914 = arith.addf %913, %912 : vector<32x128xf32>
    %915 = tpu.reciprocal %914 {approx = true} : vector<32x128xf32> -> vector<32x128xf32>
    %cst_403 = arith.constant 1.06140542 : f32
    %916 = vector.broadcast %cst_403 : f32 to vector<32x128xf32>
    %917 = arith.mulf %916, %915 : vector<32x128xf32>
    %cst_404 = arith.constant -1.45315206 : f32
    %918 = vector.broadcast %cst_404 : f32 to vector<32x128xf32>
    %919 = arith.addf %917, %918 : vector<32x128xf32>
    %920 = arith.mulf %919, %915 : vector<32x128xf32>
    %cst_405 = arith.constant 1.42141378 : f32
    %921 = vector.broadcast %cst_405 : f32 to vector<32x128xf32>
    %922 = arith.addf %920, %921 : vector<32x128xf32>
    %923 = arith.mulf %922, %915 : vector<32x128xf32>
    %cst_406 = arith.constant -0.284496725 : f32
    %924 = vector.broadcast %cst_406 : f32 to vector<32x128xf32>
    %925 = arith.addf %923, %924 : vector<32x128xf32>
    %926 = arith.mulf %925, %915 : vector<32x128xf32>
    %cst_407 = arith.constant 0.254829586 : f32
    %927 = vector.broadcast %cst_407 : f32 to vector<32x128xf32>
    %928 = arith.addf %926, %927 : vector<32x128xf32>
    %929 = arith.mulf %928, %915 : vector<32x128xf32>
    %cst_408 = arith.constant 0.000000e+00 : f32
    %930 = vector.broadcast %cst_408 : f32 to vector<32x128xf32>
    %931 = arith.subf %930, %910 : vector<32x128xf32>
    %932 = arith.mulf %931, %910 : vector<32x128xf32>
    %933 = math.exp %932 : vector<32x128xf32>
    %934 = arith.mulf %929, %933 : vector<32x128xf32>
    %cst_409 = arith.constant 1.000000e+00 : f32
    %935 = vector.broadcast %cst_409 : f32 to vector<32x128xf32>
    %936 = arith.subf %935, %934 : vector<32x128xf32>
    %937 = arith.mulf %909, %936 : vector<32x128xf32>
    %cst_410 = arith.constant 1.000000e+00 : f32
    %938 = vector.broadcast %cst_410 : f32 to vector<32x128xf32>
    %939 = arith.addf %938, %937 : vector<32x128xf32>
    %940 = arith.mulf %902, %939 : vector<32x128xf32>
    %c0_411 = arith.constant 0 : index
    %c0_412 = arith.constant 0 : index
    %941 = vector.load %arg54[%c0_411, %c0_412] : memref<128x512xf32, #tpu.memory_space<vmem>>, vector<128x512xf32>
    %cst_413 = arith.constant dense<0.000000e+00> : vector<32x512xf32>
    %942 = tpu.matmul %940, %941, %cst_413 {dimension_numbers = #tpu.dot_dimension_numbers<[1], [0], [0], [1], [0, 0, 1, 1], [], []>} : vector<32x128xf32>, vector<128x512xf32>, vector<32x512xf32> -> vector<32x512xf32>
    %c0_414 = arith.constant 0 : index
    %c0_415 = arith.constant 0 : index
    %943 = vector.load %arg55[%c0_414, %c0_415] : memref<1x512xf32, #tpu.memory_space<vmem>>, vector<1x512xf32>
    %944 = vector.broadcast %943 : vector<1x512xf32> to vector<32x512xf32>
    %945 = arith.addf %942, %944 : vector<32x512xf32>
    %cst_416 = arith.constant 5.000000e-01 : f32
    %946 = vector.broadcast %cst_416 : f32 to vector<32x512xf32>
    %947 = arith.mulf %946, %945 : vector<32x512xf32>
    %cst_417 = arith.constant 0.707106769 : f32
    %948 = vector.broadcast %cst_417 : f32 to vector<32x512xf32>
    %949 = arith.mulf %945, %948 : vector<32x512xf32>
    %cst_418 = arith.constant 0.000000e+00 : f32
    %950 = vector.broadcast %cst_418 : f32 to vector<32x512xf32>
    %951 = arith.cmpf olt, %949, %950 : vector<32x512xf32>
    %cst_419 = arith.constant -1.000000e+00 : f32
    %cst_420 = arith.constant 1.000000e+00 : f32
    %952 = vector.broadcast %cst_419 : f32 to vector<32x512xf32>
    %953 = vector.broadcast %cst_420 : f32 to vector<32x512xf32>
    %954 = arith.select %951, %952, %953 : vector<32x512xi1>, vector<32x512xf32>
    %955 = math.absf %949 : vector<32x512xf32>
    %cst_421 = arith.constant 0.327591091 : f32
    %956 = vector.broadcast %cst_421 : f32 to vector<32x512xf32>
    %957 = arith.mulf %956, %955 : vector<32x512xf32>
    %cst_422 = arith.constant 1.000000e+00 : f32
    %958 = vector.broadcast %cst_422 : f32 to vector<32x512xf32>
    %959 = arith.addf %958, %957 : vector<32x512xf32>
    %960 = tpu.reciprocal %959 {approx = true} : vector<32x512xf32> -> vector<32x512xf32>
    %cst_423 = arith.constant 1.06140542 : f32
    %961 = vector.broadcast %cst_423 : f32 to vector<32x512xf32>
    %962 = arith.mulf %961, %960 : vector<32x512xf32>
    %cst_424 = arith.constant -1.45315206 : f32
    %963 = vector.broadcast %cst_424 : f32 to vector<32x512xf32>
    %964 = arith.addf %962, %963 : vector<32x512xf32>
    %965 = arith.mulf %964, %960 : vector<32x512xf32>
    %cst_425 = arith.constant 1.42141378 : f32
    %966 = vector.broadcast %cst_425 : f32 to vector<32x512xf32>
    %967 = arith.addf %965, %966 : vector<32x512xf32>
    %968 = arith.mulf %967, %960 : vector<32x512xf32>
    %cst_426 = arith.constant -0.284496725 : f32
    %969 = vector.broadcast %cst_426 : f32 to vector<32x512xf32>
    %970 = arith.addf %968, %969 : vector<32x512xf32>
    %971 = arith.mulf %970, %960 : vector<32x512xf32>
    %cst_427 = arith.constant 0.254829586 : f32
    %972 = vector.broadcast %cst_427 : f32 to vector<32x512xf32>
    %973 = arith.addf %971, %972 : vector<32x512xf32>
    %974 = arith.mulf %973, %960 : vector<32x512xf32>
    %cst_428 = arith.constant 0.000000e+00 : f32
    %975 = vector.broadcast %cst_428 : f32 to vector<32x512xf32>
    %976 = arith.subf %975, %955 : vector<32x512xf32>
    %977 = arith.mulf %976, %955 : vector<32x512xf32>
    %978 = math.exp %977 : vector<32x512xf32>
    %979 = arith.mulf %974, %978 : vector<32x512xf32>
    %cst_429 = arith.constant 1.000000e+00 : f32
    %980 = vector.broadcast %cst_429 : f32 to vector<32x512xf32>
    %981 = arith.subf %980, %979 : vector<32x512xf32>
    %982 = arith.mulf %954, %981 : vector<32x512xf32>
    %cst_430 = arith.constant 1.000000e+00 : f32
    %983 = vector.broadcast %cst_430 : f32 to vector<32x512xf32>
    %984 = arith.addf %983, %982 : vector<32x512xf32>
    %985 = arith.mulf %947, %984 : vector<32x512xf32>
    %c0_431 = arith.constant 0 : index
    %c0_432 = arith.constant 0 : index
    %986 = vector.load %arg56[%c0_431, %c0_432] : memref<512x128xf32, #tpu.memory_space<vmem>>, vector<512x128xf32>
    %cst_433 = arith.constant dense<0.000000e+00> : vector<32x128xf32>
    %987 = tpu.matmul %985, %986, %cst_433 {dimension_numbers = #tpu.dot_dimension_numbers<[1], [0], [0], [1], [0, 0, 1, 1], [], []>} : vector<32x512xf32>, vector<512x128xf32>, vector<32x128xf32> -> vector<32x128xf32>
    %c0_434 = arith.constant 0 : index
    %c0_435 = arith.constant 0 : index
    %988 = vector.load %arg57[%c0_434, %c0_435] : memref<1x128xf32, #tpu.memory_space<vmem>>, vector<1x128xf32>
    %989 = vector.broadcast %988 : vector<1x128xf32> to vector<32x128xf32>
    %990 = arith.addf %987, %989 : vector<32x128xf32>
    %991 = arith.addf %990, %850 : vector<32x128xf32>
    %c0_436 = arith.constant 0 : index
    %c0_437 = arith.constant 0 : index
    %992 = vector.load %arg58[%c0_436, %c0_437] : memref<32x128xf32, #tpu.memory_space<vmem>>, vector<32x128xf32>
    tpu.vector_store %arg58[%c0_436, %c0_437], %991 {strides = array<i32>} : memref<32x128xf32, #tpu.memory_space<vmem>>, vector<32x128xf32>,
    return
  }
}

</mosaic_0001>

<llo_original>
// kernel: vgnn_forward.1
$region0: #{vgnn_forward.1}
  #allocation0 [shape = 'u32[]', space=smem, size = 0x4, offset = 0x4, fixed_abs, tag = 'smem constant byte address 0x4 - core index']
  #allocation1 [shape = 'u32[144,128]{1,0:T(1,128)}', space=vmem, size = 0x12000, scoped, tag = 'internal scratch']
  %s0 = inlined_call_operand.smem [shape: u32[59], index: -1, kind: input, shape index: {}]
  %s1 = sld [smem:[%s0]]
  %s2 = scalar_lea.smem %s0, 1
  %s3 = sld [smem:[%s2]]
  %s4 = scalar_lea.smem %s0, 2
  %s5 = sld [smem:[%s4]]
  %s6 = scalar_lea.smem %s0, 3
  %s7 = sld [smem:[%s6]]
  %s8 = scalar_lea.smem %s0, 4
  %s9 = sld [smem:[%s8]]
  %s10 = scalar_lea.smem %s0, 5
  %s11 = sld [smem:[%s10]]
  %s12 = scalar_lea.smem %s0, 6
  %s13 = sld [smem:[%s12]]
  %s14 = scalar_lea.smem %s0, 7
  %s15 = sld [smem:[%s14]]
  %s16 = scalar_lea.smem %s0, 8
  %s17 = sld [smem:[%s16]]
  %s18 = scalar_lea.smem %s0, 9
  %s19 = sld [smem:[%s18]]
  %s20 = scalar_lea.smem %s0, 10
  %s21 = sld [smem:[%s20]]
  %s22 = scalar_lea.smem %s0, 11
  %s23 = sld [smem:[%s22]]
  %s24 = scalar_lea.smem %s0, 12
  %s25 = sld [smem:[%s24]]
  %s26 = scalar_lea.smem %s0, 13
  %s27 = sld [smem:[%s26]]
  %s28 = scalar_lea.smem %s0, 14
  %s29 = sld [smem:[%s28]]
  %s30 = scalar_lea.smem %s0, 15
  %s31 = sld [smem:[%s30]]
  %s32 = scalar_lea.smem %s0, 16
  %s33 = sld [smem:[%s32]]
  %s34 = scalar_lea.smem %s0, 17
  %s35 = sld [smem:[%s34]]
  %s36 = scalar_lea.smem %s0, 18
  %s37 = sld [smem:[%s36]]
  %s38 = scalar_lea.smem %s0, 19
  %s39 = sld [smem:[%s38]]
  %s40 = scalar_lea.smem %s0, 20
  %s41 = sld [smem:[%s40]]
  %s42 = scalar_lea.smem %s0, 21
  %s43 = sld [smem:[%s42]]
  %s44 = scalar_lea.smem %s0, 22
  %s45 = sld [smem:[%s44]]
  %s46 = scalar_lea.smem %s0, 23
  %s47 = sld [smem:[%s46]]
  %s48 = scalar_lea.smem %s0, 24
  %s49 = sld [smem:[%s48]]
  %s50 = scalar_lea.smem %s0, 25
  %s51 = sld [smem:[%s50]]
  %s52 = scalar_lea.smem %s0, 26
  %s53 = sld [smem:[%s52]]
  %s54 = scalar_lea.smem %s0, 27
  %s55 = sld [smem:[%s54]]
  %s56 = scalar_lea.smem %s0, 28
  %s57 = sld [smem:[%s56]]
  %s58 = scalar_lea.smem %s0, 29
  %s59 = sld [smem:[%s58]]
  %s60 = scalar_lea.smem %s0, 30
  %s61 = sld [smem:[%s60]]
  %s62 = scalar_lea.smem %s0, 31
  %s63 = sld [smem:[%s62]]
  %s64 = scalar_lea.smem %s0, 32
  %s65 = sld [smem:[%s64]]
  %s66 = scalar_lea.smem %s0, 33
  %s67 = sld [smem:[%s66]]
  %s68 = scalar_lea.smem %s0, 34
  %s69 = sld [smem:[%s68]]
  %s70 = scalar_lea.smem %s0, 35
  %s71 = sld [smem:[%s70]]
  %s72 = scalar_lea.smem %s0, 36
  %s73 = sld [smem:[%s72]]
  %s74 = scalar_lea.smem %s0, 37
  %s75 = sld [smem:[%s74]]
  %s76 = scalar_lea.smem %s0, 38
  %s77 = sld [smem:[%s76]]
  %s78 = scalar_lea.smem %s0, 39
  %s79 = sld [smem:[%s78]]
  %s80 = scalar_lea.smem %s0, 40
  %s81 = sld [smem:[%s80]]
  %s82 = scalar_lea.smem %s0, 41
  %s83 = sld [smem:[%s82]]
  %s84 = scalar_lea.smem %s0, 42
  %s85 = sld [smem:[%s84]]
  %s86 = scalar_lea.smem %s0, 43
  %s87 = sld [smem:[%s86]]
  %s88 = scalar_lea.smem %s0, 44
  %s89 = sld [smem:[%s88]]
  %s90 = scalar_lea.smem %s0, 45
  %s91 = sld [smem:[%s90]]
  %s92 = scalar_lea.smem %s0, 46
  %s93 = sld [smem:[%s92]]
  %s94 = scalar_lea.smem %s0, 47
  %s95 = sld [smem:[%s94]]
  %s96 = scalar_lea.smem %s0, 48
  %s97 = sld [smem:[%s96]]
  %s98 = scalar_lea.smem %s0, 49
  %s99 = sld [smem:[%s98]]
  %s100 = scalar_lea.smem %s0, 50
  %s101 = sld [smem:[%s100]]
  %s102 = scalar_lea.smem %s0, 51
  %s103 = sld [smem:[%s102]]
  %s104 = scalar_lea.smem %s0, 52
  %s105 = sld [smem:[%s104]]
  %s106 = scalar_lea.smem %s0, 53
  %s107 = sld [smem:[%s106]]
  %s108 = scalar_lea.smem %s0, 54
  %s109 = sld [smem:[%s108]]
  %s110 = scalar_lea.smem %s0, 55
  %s111 = sld [smem:[%s110]]
  %s112 = scalar_lea.smem %s0, 56
  %s113 = sld [smem:[%s112]]
  %s114 = scalar_lea.smem %s0, 57
  %s115 = sld [smem:[%s114]]
  %s116 = scalar_lea.smem %s0, 58
  %s117 = sld [smem:[%s116]]
  %s118 = sld [smem:[#allocation0]]
  $region310: #{vgnn_forward.1} parent=0
    _
  %s120 = ssub.s32 1, %s118
  %s121 = scalar_select 0, %s120, %s118
  $region1: #{vgnn_forward.1} parent=0
    #allocation2 [shape = 'u8[512]{0}', space=vmem, size = 0x400, scoped, tag = 'input window, operand 15, single buffered']
    #allocation3 [shape = 's32[1]{0}', space=sflag, size = 0x4, scoped, tag = 'scoped memory for vgnn_forward.1']
    #allocation4 [shape = 's32[1]{0}', space=sflag, size = 0x4, scoped, tag = 'scoped memory for vgnn_forward.1']
    #allocation5 [shape = 'u8[512]{0}', space=vmem, size = 0x400, scoped, tag = 'input window, operand 17, single buffered']
    #allocation6 [shape = 's32[1]{0}', space=sflag, size = 0x4, scoped, tag = 'scoped memory for vgnn_forward.1']
    #allocation7 [shape = 'u8[512]{0}', space=vmem, size = 0x400, scoped, tag = 'input window, operand 18, single buffered']
    #allocation8 [shape = 'u8[512]{0}', space=vmem, size = 0x400, scoped, tag = 'input window, operand 21, single buffered']
    #allocation9 [shape = 's32[1]{0}', space=sflag, size = 0x4, scoped, tag = 'scoped memory for vgnn_forward.1']
    #allocation10 [shape = 'u8[512]{0}', space=vmem, size = 0x400, scoped, tag = 'input window, operand 23, single buffered']
    #allocation11 [shape = 'u8[512]{0}', space=vmem, size = 0x400, scoped, tag = 'input window, operand 26, single buffered']
    #allocation12 [shape = 's32[1]{0}', space=sflag, size = 0x4, scoped, tag = 'scoped memory for vgnn_forward.1']
    #allocation13 [shape = 'u8[512]{0}', space=vmem, size = 0x400, scoped, tag = 'input window, operand 28, single buffered']
    #allocation14 [shape = 'u8[512]{0}', space=vmem, size = 0x400, scoped, tag = 'input window, operand 30, single buffered']
    #allocation15 [shape = 's32[1]{0}', space=sflag, size = 0x4, scoped, tag = 'scoped memory for vgnn_forward.1']
    #allocation16 [shape = 'u8[512]{0}', space=vmem, size = 0x400, scoped, tag = 'input window, operand 34, single buffered']
    #allocation17 [shape = 'u8[512]{0}', space=vmem, size = 0x400, scoped, tag = 'input window, operand 38, single buffered']
    #allocation18 [shape = 's32[1]{0}', space=sflag, size = 0x4, scoped, tag = 'scoped memory for vgnn_forward.1']
    #allocation19 [shape = 'u8[512]{0}', space=vmem, size = 0x400, scoped, tag = 'input window, operand 40, single buffered']
    #allocation20 [shape = 'u8[512]{0}', space=vmem, size = 0x400, scoped, tag = 'input window, operand 42, single buffered']
    #allocation21 [shape = 's32[1]{0}', space=sflag, size = 0x4, scoped, tag = 'scoped memory for vgnn_forward.1']
    #allocation22 [shape = 'u8[512]{0}', space=vmem, size = 0x400, scoped, tag = 'input window, operand 45, single buffered']
    #allocation23 [shape = 'u8[512]{0}', space=vmem, size = 0x400, scoped, tag = 'input window, operand 47, single buffered']
    #allocation24 [shape = 's32[1]{0}', space=sflag, size = 0x4, scoped, tag = 'scoped memory for vgnn_forward.1']
    #allocation25 [shape = 'u8[512]{0}', space=vmem, size = 0x400, scoped, tag = 'input window, operand 49, single buffered']
    #allocation26 [shape = 'u8[512]{0}', space=vmem, size = 0x400, scoped, tag = 'input window, operand 53, single buffered']
    #allocation27 [shape = 's32[1]{0}', space=sflag, size = 0x4, scoped, tag = 'scoped memory for vgnn_forward.1']
    #allocation28 [shape = 'u8[512]{0}', space=vmem, size = 0x400, scoped, tag = 'input window, operand 57, single buffered']
    #allocation29 [shape = 'u8[16384]{0}', space=vmem, size = 0x4000, scoped, tag = 'output window, operand 0, single buffered']
    %122 = vsyncpa [#allocation3], 0
    %123 = vsyncpa [#allocation6], 0
    %124 = vsyncpa [#allocation9], 0
    %125 = vsyncpa [#allocation12], 0
    %126 = vsyncpa [#allocation15], 0
    %127 = vsyncpa [#allocation18], 0
    %128 = vsyncpa [#allocation21], 0
    %129 = vsyncpa [#allocation24], 0
    %130 = vsyncpa [#allocation27], 0
    %131 = vsyncpa [#allocation4], 0
    // Predicated region
    $region2: #{vgnn_forward.1} parent=1 // pred_check
      _
    $region3: #{vgnn_forward.1} parent=1 // pred_check_branch
      %133 = sbr.rel (0) target = $region5
    $region4: #{vgnn_forward.1} parent=1 // pred_region
      _
    $region5: #{vgnn_forward.1} parent=1 // pred_fallthru
      _
    // Predicated region
    $region6: #{vgnn_forward.1} parent=1 // pred_check
      _
    $region7: #{vgnn_forward.1} parent=1 // pred_check_branch
      %135 = sbr.rel (0) target = $region9
    $region8: #{vgnn_forward.1} parent=1 // pred_region
      _
    $region9: #{vgnn_forward.1} parent=1 // pred_fallthru
      _
    // Predicated region
    $region10: #{vgnn_forward.1} parent=1 // pred_check
      _
    $region11: #{vgnn_forward.1} parent=1 // pred_check_branch
      %137 = sbr.rel (0) target = $region13
    $region12: #{vgnn_forward.1} parent=1 // pred_region
      _
    $region13: #{vgnn_forward.1} parent=1 // pred_fallthru
      _
    // Predicated region
    $region14: #{vgnn_forward.1} parent=1 // pred_check
      _
    $region15: #{vgnn_forward.1} parent=1 // pred_check_branch
      %139 = sbr.rel (0) target = $region17
    $region16: #{vgnn_forward.1} parent=1 // pred_region
      _
    $region17: #{vgnn_forward.1} parent=1 // pred_fallthru
      _
    // Predicated region
    $region18: #{vgnn_forward.1} parent=1 // pred_check
      _
    $region19: #{vgnn_forward.1} parent=1 // pred_check_branch
      %141 = sbr.rel (0) target = $region21
    $region20: #{vgnn_forward.1} parent=1 // pred_region
      _
    $region21: #{vgnn_forward.1} parent=1 // pred_fallthru
      _
    // Predicated region
    $region22: #{vgnn_forward.1} parent=1 // pred_check
      _
    $region23: #{vgnn_forward.1} parent=1 // pred_check_branch
      %143 = sbr.rel (0) target = $region25
    $region24: #{vgnn_forward.1} parent=1 // pred_region
      _
    $region25: #{vgnn_forward.1} parent=1 // pred_fallthru
      _
    // Predicated region
    $region26: #{vgnn_forward.1} parent=1 // pred_check
      _
    $region27: #{vgnn_forward.1} parent=1 // pred_check_branch
      %145 = sbr.rel (0) target = $region29
    $region28: #{vgnn_forward.1} parent=1 // pred_region
      _
    $region29: #{vgnn_forward.1} parent=1 // pred_fallthru
      _
    // Predicated region
    $region30: #{vgnn_forward.1} parent=1 // pred_check
      _
    $region31: #{vgnn_forward.1} parent=1 // pred_check_branch
      %147 = sbr.rel (0) target = $region33
    $region32: #{vgnn_forward.1} parent=1 // pred_region
      _
    $region33: #{vgnn_forward.1} parent=1 // pred_fallthru
      _
    // Predicated region
    $region34: #{vgnn_forward.1} parent=1 // pred_check
      _
    $region35: #{vgnn_forward.1} parent=1 // pred_check_branch
      %149 = sbr.rel (0) target = $region37
    $region36: #{vgnn_forward.1} parent=1 // pred_region
      _
    $region37: #{vgnn_forward.1} parent=1 // pred_fallthru
      _
    // Predicated region
    $region38: #{vgnn_forward.1} parent=1 // pred_check
      _
    $region39: #{vgnn_forward.1} parent=1 // pred_check_branch
      %151 = sbr.rel (0) target = $region41
    $region40: #{vgnn_forward.1} parent=1 // pred_region
      _
    $region41: #{vgnn_forward.1} parent=1 // pred_fallthru
      _
    // Predicated region
    $region42: #{vgnn_forward.1} parent=1 // pred_check
      _
    $region43: #{vgnn_forward.1} parent=1 // pred_check_branch
      %153 = sbr.rel (0) target = $region45
    $region44: #{vgnn_forward.1} parent=1 // pred_region
      _
    $region45: #{vgnn_forward.1} parent=1 // pred_fallthru
      _
    // Predicated region
    $region46: #{vgnn_forward.1} parent=1 // pred_check
      _
    $region47: #{vgnn_forward.1} parent=1 // pred_check_branch
      %155 = sbr.rel (0) target = $region49
    $region48: #{vgnn_forward.1} parent=1 // pred_region
      _
    $region49: #{vgnn_forward.1} parent=1 // pred_fallthru
      _
    // Predicated region
    $region50: #{vgnn_forward.1} parent=1 // pred_check
      _
    $region51: #{vgnn_forward.1} parent=1 // pred_check_branch
      %157 = sbr.rel (0) target = $region53
    $region52: #{vgnn_forward.1} parent=1 // pred_region
      _
    $region53: #{vgnn_forward.1} parent=1 // pred_fallthru
      _
    // Predicated region
    $region54: #{vgnn_forward.1} parent=1 // pred_check
      _
    $region55: #{vgnn_forward.1} parent=1 // pred_check_branch
      %159 = sbr.rel (0) target = $region57
    $region56: #{vgnn_forward.1} parent=1 // pred_region
      _
    $region57: #{vgnn_forward.1} parent=1 // pred_fallthru
      _
    // Predicated region
    $region58: #{vgnn_forward.1} parent=1 // pred_check
      _
    $region59: #{vgnn_forward.1} parent=1 // pred_check_branch
      %161 = sbr.rel (0) target = $region61
    $region60: #{vgnn_forward.1} parent=1 // pred_region
      _
    $region61: #{vgnn_forward.1} parent=1 // pred_fallthru
      _
    // Predicated region
    $region62: #{vgnn_forward.1} parent=1 // pred_check
      _
    $region63: #{vgnn_forward.1} parent=1 // pred_check_branch
      %163 = sbr.rel (0) target = $region65
    $region64: #{vgnn_forward.1} parent=1 // pred_region
      %s165 = ssub.s32 16, 16
      %166 = vsyncadd [#allocation3], %s165
      %s168 = sshll.u32 [#allocation2], 4
      %s169 = int_to_ptr.vmem [resolvable:$true] %s168
      %171 = dma.hbm_to_vmem [thread:$0]  %s31, 16, %s169, [#allocation3]
    $region65: #{vgnn_forward.1} parent=1 // pred_fallthru
      _
    // Predicated region
    $region66: #{vgnn_forward.1} parent=1 // pred_check
      _
    $region67: #{vgnn_forward.1} parent=1 // pred_check_branch
      %173 = sbr.rel (0) target = $region69
    $region68: #{vgnn_forward.1} parent=1 // pred_region
      _
    $region69: #{vgnn_forward.1} parent=1 // pred_fallthru
      _
    // Predicated region
    $region70: #{vgnn_forward.1} parent=1 // pred_check
      _
    $region71: #{vgnn_forward.1} parent=1 // pred_check_branch
      %175 = sbr.rel (0) target = $region73
    $region72: #{vgnn_forward.1} parent=1 // pred_region
      %s177 = ssub.s32 16, 16
      %178 = vsyncadd [#allocation6], %s177
      %s180 = sshll.u32 [#allocation5], 4
      %s181 = int_to_ptr.vmem [resolvable:$true] %s180
      %183 = dma.hbm_to_vmem [thread:$0]  %s35, 16, %s181, [#allocation6]
    $region73: #{vgnn_forward.1} parent=1 // pred_fallthru
      _
    // Predicated region
    $region74: #{vgnn_forward.1} parent=1 // pred_check
      _
    $region75: #{vgnn_forward.1} parent=1 // pred_check_branch
      %185 = sbr.rel (0) target = $region77
    $region76: #{vgnn_forward.1} parent=1 // pred_region
      %s187 = ssub.s32 16, 16
      %188 = vsyncadd [#allocation6], %s187
      %s190 = sshll.u32 [#allocation7], 4
      %s191 = int_to_ptr.vmem [resolvable:$true] %s190
      %193 = dma.hbm_to_vmem [thread:$0]  %s37, 16, %s191, [#allocation6]
    $region77: #{vgnn_forward.1} parent=1 // pred_fallthru
      _
    // Predicated region
    $region78: #{vgnn_forward.1} parent=1 // pred_check
      _
    $region79: #{vgnn_forward.1} parent=1 // pred_check_branch
      %195 = sbr.rel (0) target = $region81
    $region80: #{vgnn_forward.1} parent=1 // pred_region
      _
    $region81: #{vgnn_forward.1} parent=1 // pred_fallthru
      _
    // Predicated region
    $region82: #{vgnn_forward.1} parent=1 // pred_check
      _
    $region83: #{vgnn_forward.1} parent=1 // pred_check_branch
      %197 = sbr.rel (0) target = $region85
    $region84: #{vgnn_forward.1} parent=1 // pred_region
      _
    $region85: #{vgnn_forward.1} parent=1 // pred_fallthru
      _
    // Predicated region
    $region86: #{vgnn_forward.1} parent=1 // pred_check
      _
    $region87: #{vgnn_forward.1} parent=1 // pred_check_branch
      %199 = sbr.rel (0) target = $region89
    $region88: #{vgnn_forward.1} parent=1 // pred_region
      %s201 = ssub.s32 16, 16
      %202 = vsyncadd [#allocation9], %s201
      %s204 = sshll.u32 [#allocation8], 4
      %s205 = int_to_ptr.vmem [resolvable:$true] %s204
      %207 = dma.hbm_to_vmem [thread:$0]  %s43, 16, %s205, [#allocation9]
    $region89: #{vgnn_forward.1} parent=1 // pred_fallthru
      _
    // Predicated region
    $region90: #{vgnn_forward.1} parent=1 // pred_check
      _
    $region91: #{vgnn_forward.1} parent=1 // pred_check_branch
      %209 = sbr.rel (0) target = $region93
    $region92: #{vgnn_forward.1} parent=1 // pred_region
      _
    $region93: #{vgnn_forward.1} parent=1 // pred_fallthru
      _
    // Predicated region
    $region94: #{vgnn_forward.1} parent=1 // pred_check
      _
    $region95: #{vgnn_forward.1} parent=1 // pred_check_branch
      %211 = sbr.rel (0) target = $region97
    $region96: #{vgnn_forward.1} parent=1 // pred_region
      %s213 = ssub.s32 16, 16
      %214 = vsyncadd [#allocation9], %s213
      %s216 = sshll.u32 [#allocation10], 4
      %s217 = int_to_ptr.vmem [resolvable:$true] %s216
      %219 = dma.hbm_to_vmem [thread:$0]  %s47, 16, %s217, [#allocation9]
    $region97: #{vgnn_forward.1} parent=1 // pred_fallthru
      _
    // Predicated region
    $region98: #{vgnn_forward.1} parent=1 // pred_check
      _
    $region99: #{vgnn_forward.1} parent=1 // pred_check_branch
      %221 = sbr.rel (0) target = $region101
    $region100: #{vgnn_forward.1} parent=1 // pred_region
      _
    $region101: #{vgnn_forward.1} parent=1 // pred_fallthru
      _
    // Predicated region
    $region102: #{vgnn_forward.1} parent=1 // pred_check
      _
    $region103: #{vgnn_forward.1} parent=1 // pred_check_branch
      %223 = sbr.rel (0) target = $region105
    $region104: #{vgnn_forward.1} parent=1 // pred_region
      _
    $region105: #{vgnn_forward.1} parent=1 // pred_fallthru
      _
    // Predicated region
    $region106: #{vgnn_forward.1} parent=1 // pred_check
      _
    $region107: #{vgnn_forward.1} parent=1 // pred_check_branch
      %225 = sbr.rel (0) target = $region109
    $region108: #{vgnn_forward.1} parent=1 // pred_region
      %s227 = ssub.s32 16, 16
      %228 = vsyncadd [#allocation12], %s227
      %s230 = sshll.u32 [#allocation11], 4
      %s231 = int_to_ptr.vmem [resolvable:$true] %s230
      %233 = dma.hbm_to_vmem [thread:$0]  %s53, 16, %s231, [#allocation12]
    $region109: #{vgnn_forward.1} parent=1 // pred_fallthru
      _
    // Predicated region
    $region110: #{vgnn_forward.1} parent=1 // pred_check
      _
    $region111: #{vgnn_forward.1} parent=1 // pred_check_branch
      %235 = sbr.rel (0) target = $region113
    $region112: #{vgnn_forward.1} parent=1 // pred_region
      _
    $region113: #{vgnn_forward.1} parent=1 // pred_fallthru
      _
    // Predicated region
    $region114: #{vgnn_forward.1} parent=1 // pred_check
      _
    $region115: #{vgnn_forward.1} parent=1 // pred_check_branch
      %237 = sbr.rel (0) target = $region117
    $region116: #{vgnn_forward.1} parent=1 // pred_region
      %s239 = ssub.s32 16, 16
      %240 = vsyncadd [#allocation12], %s239
      %s242 = sshll.u32 [#allocation13], 4
      %s243 = int_to_ptr.vmem [resolvable:$true] %s242
      %245 = dma.hbm_to_vmem [thread:$0]  %s57, 16, %s243, [#allocation12]
    $region117: #{vgnn_forward.1} parent=1 // pred_fallthru
      _
    // Predicated region
    $region118: #{vgnn_forward.1} parent=1 // pred_check
      _
    $region119: #{vgnn_forward.1} parent=1 // pred_check_branch
      %247 = sbr.rel (0) target = $region121
    $region120: #{vgnn_forward.1} parent=1 // pred_region
      _
    $region121: #{vgnn_forward.1} parent=1 // pred_fallthru
      _
    // Predicated region
    $region122: #{vgnn_forward.1} parent=1 // pred_check
      _
    $region123: #{vgnn_forward.1} parent=1 // pred_check_branch
      %249 = sbr.rel (0) target = $region125
    $region124: #{vgnn_forward.1} parent=1 // pred_region
      %s251 = ssub.s32 16, 16
      %252 = vsyncadd [#allocation15], %s251
      %s254 = sshll.u32 [#allocation14], 4
      %s255 = int_to_ptr.vmem [resolvable:$true] %s254
      %257 = dma.hbm_to_vmem [thread:$0]  %s61, 16, %s255, [#allocation15]
    $region125: #{vgnn_forward.1} parent=1 // pred_fallthru
      _
    // Predicated region
    $region126: #{vgnn_forward.1} parent=1 // pred_check
      _
    $region127: #{vgnn_forward.1} parent=1 // pred_check_branch
      %259 = sbr.rel (0) target = $region129
    $region128: #{vgnn_forward.1} parent=1 // pred_region
      _
    $region129: #{vgnn_forward.1} parent=1 // pred_fallthru
      _
    // Predicated region
    $region130: #{vgnn_forward.1} parent=1 // pred_check
      _
    $region131: #{vgnn_forward.1} parent=1 // pred_check_branch
      %261 = sbr.rel (0) target = $region133
    $region132: #{vgnn_forward.1} parent=1 // pred_region
      _
    $region133: #{vgnn_forward.1} parent=1 // pred_fallthru
      _
    // Predicated region
    $region134: #{vgnn_forward.1} parent=1 // pred_check
      _
    $region135: #{vgnn_forward.1} parent=1 // pred_check_branch
      %263 = sbr.rel (0) target = $region137
    $region136: #{vgnn_forward.1} parent=1 // pred_region
      _
    $region137: #{vgnn_forward.1} parent=1 // pred_fallthru
      _
    // Predicated region
    $region138: #{vgnn_forward.1} parent=1 // pred_check
      _
    $region139: #{vgnn_forward.1} parent=1 // pred_check_branch
      %265 = sbr.rel (0) target = $region141
    $region140: #{vgnn_forward.1} parent=1 // pred_region
      %s267 = ssub.s32 16, 16
      %268 = vsyncadd [#allocation15], %s267
      %s270 = sshll.u32 [#allocation16], 4
      %s271 = int_to_ptr.vmem [resolvable:$true] %s270
      %273 = dma.hbm_to_vmem [thread:$0]  %s69, 16, %s271, [#allocation15]
    $region141: #{vgnn_forward.1} parent=1 // pred_fallthru
      _
    // Predicated region
    $region142: #{vgnn_forward.1} parent=1 // pred_check
      _
    $region143: #{vgnn_forward.1} parent=1 // pred_check_branch
      %275 = sbr.rel (0) target = $region145
    $region144: #{vgnn_forward.1} parent=1 // pred_region
      _
    $region145: #{vgnn_forward.1} parent=1 // pred_fallthru
      _
    // Predicated region
    $region146: #{vgnn_forward.1} parent=1 // pred_check
      _
    $region147: #{vgnn_forward.1} parent=1 // pred_check_branch
      %277 = sbr.rel (0) target = $region149
    $region148: #{vgnn_forward.1} parent=1 // pred_region
      _
    $region149: #{vgnn_forward.1} parent=1 // pred_fallthru
      _
    // Predicated region
    $region150: #{vgnn_forward.1} parent=1 // pred_check
      _
    $region151: #{vgnn_forward.1} parent=1 // pred_check_branch
      %279 = sbr.rel (0) target = $region153
    $region152: #{vgnn_forward.1} parent=1 // pred_region
      _
    $region153: #{vgnn_forward.1} parent=1 // pred_fallthru
      _
    // Predicated region
    $region154: #{vgnn_forward.1} parent=1 // pred_check
      _
    $region155: #{vgnn_forward.1} parent=1 // pred_check_branch
      %281 = sbr.rel (0) target = $region157
    $region156: #{vgnn_forward.1} parent=1 // pred_region
      %s283 = ssub.s32 16, 16
      %284 = vsyncadd [#allocation18], %s283
      %s286 = sshll.u32 [#allocation17], 4
      %s287 = int_to_ptr.vmem [resolvable:$true] %s286
      %289 = dma.hbm_to_vmem [thread:$0]  %s77, 16, %s287, [#allocation18]
    $region157: #{vgnn_forward.1} parent=1 // pred_fallthru
      _
    // Predicated region
    $region158: #{vgnn_forward.1} parent=1 // pred_check
      _
    $region159: #{vgnn_forward.1} parent=1 // pred_check_branch
      %291 = sbr.rel (0) target = $region161
    $region160: #{vgnn_forward.1} parent=1 // pred_region
      _
    $region161: #{vgnn_forward.1} parent=1 // pred_fallthru
      _
    // Predicated region
    $region162: #{vgnn_forward.1} parent=1 // pred_check
      _
    $region163: #{vgnn_forward.1} parent=1 // pred_check_branch
      %293 = sbr.rel (0) target = $region165
    $region164: #{vgnn_forward.1} parent=1 // pred_region
      %s295 = ssub.s32 16, 16
      %296 = vsyncadd [#allocation18], %s295
      %s298 = sshll.u32 [#allocation19], 4
      %s299 = int_to_ptr.vmem [resolvable:$true] %s298
      %301 = dma.hbm_to_vmem [thread:$0]  %s81, 16, %s299, [#allocation18]
    $region165: #{vgnn_forward.1} parent=1 // pred_fallthru
      _
    // Predicated region
    $region166: #{vgnn_forward.1} parent=1 // pred_check
      _
    $region167: #{vgnn_forward.1} parent=1 // pred_check_branch
      %303 = sbr.rel (0) target = $region169
    $region168: #{vgnn_forward.1} parent=1 // pred_region
      _
    $region169: #{vgnn_forward.1} parent=1 // pred_fallthru
      _
    // Predicated region
    $region170: #{vgnn_forward.1} parent=1 // pred_check
      _
    $region171: #{vgnn_forward.1} parent=1 // pred_check_branch
      %305 = sbr.rel (0) target = $region173
    $region172: #{vgnn_forward.1} parent=1 // pred_region
      %s307 = ssub.s32 16, 16
      %308 = vsyncadd [#allocation21], %s307
      %s310 = sshll.u32 [#allocation20], 4
      %s311 = int_to_ptr.vmem [resolvable:$true] %s310
      %313 = dma.hbm_to_vmem [thread:$0]  %s85, 16, %s311, [#allocation21]
    $region173: #{vgnn_forward.1} parent=1 // pred_fallthru
      _
    // Predicated region
    $region174: #{vgnn_forward.1} parent=1 // pred_check
      _
    $region175: #{vgnn_forward.1} parent=1 // pred_check_branch
      %315 = sbr.rel (0) target = $region177
    $region176: #{vgnn_forward.1} parent=1 // pred_region
      _
    $region177: #{vgnn_forward.1} parent=1 // pred_fallthru
      _
    // Predicated region
    $region178: #{vgnn_forward.1} parent=1 // pred_check
      _
    $region179: #{vgnn_forward.1} parent=1 // pred_check_branch
      %317 = sbr.rel (0) target = $region181
    $region180: #{vgnn_forward.1} parent=1 // pred_region
      _
    $region181: #{vgnn_forward.1} parent=1 // pred_fallthru
      _
    // Predicated region
    $region182: #{vgnn_forward.1} parent=1 // pred_check
      _
    $region183: #{vgnn_forward.1} parent=1 // pred_check_branch
      %319 = sbr.rel (0) target = $region185
    $region184: #{vgnn_forward.1} parent=1 // pred_region
      %s321 = ssub.s32 16, 16
      %322 = vsyncadd [#allocation21], %s321
      %s324 = sshll.u32 [#allocation22], 4
      %s325 = int_to_ptr.vmem [resolvable:$true] %s324
      %327 = dma.hbm_to_vmem [thread:$0]  %s91, 16, %s325, [#allocation21]
    $region185: #{vgnn_forward.1} parent=1 // pred_fallthru
      _
    // Predicated region
    $region186: #{vgnn_forward.1} parent=1 // pred_check
      _
    $region187: #{vgnn_forward.1} parent=1 // pred_check_branch
      %329 = sbr.rel (0) target = $region189
    $region188: #{vgnn_forward.1} parent=1 // pred_region
      _
    $region189: #{vgnn_forward.1} parent=1 // pred_fallthru
      _
    // Predicated region
    $region190: #{vgnn_forward.1} parent=1 // pred_check
      _
    $region191: #{vgnn_forward.1} parent=1 // pred_check_branch
      %331 = sbr.rel (0) target = $region193
    $region192: #{vgnn_forward.1} parent=1 // pred_region
      %s333 = ssub.s32 16, 16
      %334 = vsyncadd [#allocation24], %s333
      %s336 = sshll.u32 [#allocation23], 4
      %s337 = int_to_ptr.vmem [resolvable:$true] %s336
      %339 = dma.hbm_to_vmem [thread:$0]  %s95, 16, %s337, [#allocation24]
    $region193: #{vgnn_forward.1} parent=1 // pred_fallthru
      _
    // Predicated region
    $region194: #{vgnn_forward.1} parent=1 // pred_check
      _
    $region195: #{vgnn_forward.1} parent=1 // pred_check_branch
      %341 = sbr.rel (0) target = $region197
    $region196: #{vgnn_forward.1} parent=1 // pred_region
      _
    $region197: #{vgnn_forward.1} parent=1 // pred_fallthru
      _
    // Predicated region
    $region198: #{vgnn_forward.1} parent=1 // pred_check
      _
    $region199: #{vgnn_forward.1} parent=1 // pred_check_branch
      %343 = sbr.rel (0) target = $region201
    $region200: #{vgnn_forward.1} parent=1 // pred_region
      %s345 = ssub.s32 16, 16
      %346 = vsyncadd [#allocation24], %s345
      %s348 = sshll.u32 [#allocation25], 4
      %s349 = int_to_ptr.vmem [resolvable:$true] %s348
      %351 = dma.hbm_to_vmem [thread:$0]  %s99, 16, %s349, [#allocation24]
    $region201: #{vgnn_forward.1} parent=1 // pred_fallthru
      _
    // Predicated region
    $region202: #{vgnn_forward.1} parent=1 // pred_check
      _
    $region203: #{vgnn_forward.1} parent=1 // pred_check_branch
      %353 = sbr.rel (0) target = $region205
    $region204: #{vgnn_forward.1} parent=1 // pred_region
      _
    $region205: #{vgnn_forward.1} parent=1 // pred_fallthru
      _
    // Predicated region
    $region206: #{vgnn_forward.1} parent=1 // pred_check
      _
    $region207: #{vgnn_forward.1} parent=1 // pred_check_branch
      %355 = sbr.rel (0) target = $region209
    $region208: #{vgnn_forward.1} parent=1 // pred_region
      _
    $region209: #{vgnn_forward.1} parent=1 // pred_fallthru
      _
    // Predicated region
    $region210: #{vgnn_forward.1} parent=1 // pred_check
      _
    $region211: #{vgnn_forward.1} parent=1 // pred_check_branch
      %357 = sbr.rel (0) target = $region213
    $region212: #{vgnn_forward.1} parent=1 // pred_region
      _
    $region213: #{vgnn_forward.1} parent=1 // pred_fallthru
      _
    // Predicated region
    $region214: #{vgnn_forward.1} parent=1 // pred_check
      _
    $region215: #{vgnn_forward.1} parent=1 // pred_check_branch
      %359 = sbr.rel (0) target = $region217
    $region216: #{vgnn_forward.1} parent=1 // pred_region
      %s361 = ssub.s32 16, 16
      %362 = vsyncadd [#allocation27], %s361
      %s364 = sshll.u32 [#allocation26], 4
      %s365 = int_to_ptr.vmem [resolvable:$true] %s364
      %367 = dma.hbm_to_vmem [thread:$0]  %s107, 16, %s365, [#allocation27]
    $region217: #{vgnn_forward.1} parent=1 // pred_fallthru
      _
    // Predicated region
    $region218: #{vgnn_forward.1} parent=1 // pred_check
      _
    $region219: #{vgnn_forward.1} parent=1 // pred_check_branch
      %369 = sbr.rel (0) target = $region221
    $region220: #{vgnn_forward.1} parent=1 // pred_region
      _
    $region221: #{vgnn_forward.1} parent=1 // pred_fallthru
      _
    // Predicated region
    $region222: #{vgnn_forward.1} parent=1 // pred_check
      _
    $region223: #{vgnn_forward.1} parent=1 // pred_check_branch
      %371 = sbr.rel (0) target = $region225
    $region224: #{vgnn_forward.1} parent=1 // pred_region
      _
    $region225: #{vgnn_forward.1} parent=1 // pred_fallthru
      _
    // Predicated region
    $region226: #{vgnn_forward.1} parent=1 // pred_check
      _
    $region227: #{vgnn_forward.1} parent=1 // pred_check_branch
      %373 = sbr.rel (0) target = $region229
    $region228: #{vgnn_forward.1} parent=1 // pred_region
      _
    $region229: #{vgnn_forward.1} parent=1 // pred_fallthru
      _
    // Predicated region
    $region230: #{vgnn_forward.1} parent=1 // pred_check
      _
    $region231: #{vgnn_forward.1} parent=1 // pred_check_branch
      %375 = sbr.rel (0) target = $region233
    $region232: #{vgnn_forward.1} parent=1 // pred_region
      %s377 = ssub.s32 16, 16
      %378 = vsyncadd [#allocation27], %s377
      %s380 = sshll.u32 [#allocation28], 4
      %s381 = int_to_ptr.vmem [resolvable:$true] %s380
      %383 = dma.hbm_to_vmem [thread:$0]  %s115, 16, %s381, [#allocation27]
    $region233: #{vgnn_forward.1} parent=1 // pred_fallthru
      _
    // Predicated region
    $region234: #{vgnn_forward.1} parent=1 // pred_check
      _
    $region235: #{vgnn_forward.1} parent=1 // pred_check_branch
      %385 = sbr.rel (0) target = $region237
    $region236: #{vgnn_forward.1} parent=1 // pred_region
      %386 = dma.done [#allocation3], 16
    $region237: #{vgnn_forward.1} parent=1 // pred_fallthru
      _
    // Predicated region
    $region238: #{vgnn_forward.1} parent=1 // pred_check
      _
    $region239: #{vgnn_forward.1} parent=1 // pred_check_branch
      %388 = sbr.rel (0) target = $region241
    $region240: #{vgnn_forward.1} parent=1 // pred_region
      %389 = dma.done [#allocation6], 16
    $region241: #{vgnn_forward.1} parent=1 // pred_fallthru
      _
    // Predicated region
    $region242: #{vgnn_forward.1} parent=1 // pred_check
      _
    $region243: #{vgnn_forward.1} parent=1 // pred_check_branch
      %391 = sbr.rel (0) target = $region245
    $region244: #{vgnn_forward.1} parent=1 // pred_region
      %392 = dma.done [#allocation6], 16
    $region245: #{vgnn_forward.1} parent=1 // pred_fallthru
      _
    // Predicated region
    $region246: #{vgnn_forward.1} parent=1 // pred_check
      _
    $region247: #{vgnn_forward.1} parent=1 // pred_check_branch
      %394 = sbr.rel (0) target = $region249
    $region248: #{vgnn_forward.1} parent=1 // pred_region
      %395 = dma.done [#allocation9], 16
    $region249: #{vgnn_forward.1} parent=1 // pred_fallthru
      _
    // Predicated region
    $region250: #{vgnn_forward.1} parent=1 // pred_check
      _
    $region251: #{vgnn_forward.1} parent=1 // pred_check_branch
      %397 = sbr.rel (0) target = $region253
    $region252: #{vgnn_forward.1} parent=1 // pred_region
      %398 = dma.done [#allocation9], 16
    $region253: #{vgnn_forward.1} parent=1 // pred_fallthru
      _
    // Predicated region
    $region254: #{vgnn_forward.1} parent=1 // pred_check
      _
    $region255: #{vgnn_forward.1} parent=1 // pred_check_branch
      %400 = sbr.rel (0) target = $region257
    $region256: #{vgnn_forward.1} parent=1 // pred_region
      %401 = dma.done [#allocation12], 16
    $region257: #{vgnn_forward.1} parent=1 // pred_fallthru
      _
    // Predicated region
    $region258: #{vgnn_forward.1} parent=1 // pred_check
      _
    $region259: #{vgnn_forward.1} parent=1 // pred_check_branch
      %403 = sbr.rel (0) target = $region261
    $region260: #{vgnn_forward.1} parent=1 // pred_region
      %404 = dma.done [#allocation12], 16
    $region261: #{vgnn_forward.1} parent=1 // pred_fallthru
      _
    // Predicated region
    $region262: #{vgnn_forward.1} parent=1 // pred_check
      _
    $region263: #{vgnn_forward.1} parent=1 // pred_check_branch
      %406 = sbr.rel (0) target = $region265
    $region264: #{vgnn_forward.1} parent=1 // pred_region
      %407 = dma.done [#allocation15], 16
    $region265: #{vgnn_forward.1} parent=1 // pred_fallthru
      _
    // Predicated region
    $region266: #{vgnn_forward.1} parent=1 // pred_check
      _
    $region267: #{vgnn_forward.1} parent=1 // pred_check_branch
      %409 = sbr.rel (0) target = $region269
    $region268: #{vgnn_forward.1} parent=1 // pred_region
      %410 = dma.done [#allocation15], 16
    $region269: #{vgnn_forward.1} parent=1 // pred_fallthru
      _
    // Predicated region
    $region270: #{vgnn_forward.1} parent=1 // pred_check
      _
    $region271: #{vgnn_forward.1} parent=1 // pred_check_branch
      %412 = sbr.rel (0) target = $region273
    $region272: #{vgnn_forward.1} parent=1 // pred_region
      %413 = dma.done [#allocation18], 16
    $region273: #{vgnn_forward.1} parent=1 // pred_fallthru
      _
    // Predicated region
    $region274: #{vgnn_forward.1} parent=1 // pred_check
      _
    $region275: #{vgnn_forward.1} parent=1 // pred_check_branch
      %415 = sbr.rel (0) target = $region277
    $region276: #{vgnn_forward.1} parent=1 // pred_region
      %416 = dma.done [#allocation18], 16
    $region277: #{vgnn_forward.1} parent=1 // pred_fallthru
      _
    // Predicated region
    $region278: #{vgnn_forward.1} parent=1 // pred_check
      _
    $region279: #{vgnn_forward.1} parent=1 // pred_check_branch
      %418 = sbr.rel (0) target = $region281
    $region280: #{vgnn_forward.1} parent=1 // pred_region
      %419 = dma.done [#allocation21], 16
    $region281: #{vgnn_forward.1} parent=1 // pred_fallthru
      _
    // Predicated region
    $region282: #{vgnn_forward.1} parent=1 // pred_check
      _
    $region283: #{vgnn_forward.1} parent=1 // pred_check_branch
      %421 = sbr.rel (0) target = $region285
    $region284: #{vgnn_forward.1} parent=1 // pred_region
      %422 = dma.done [#allocation21], 16
    $region285: #{vgnn_forward.1} parent=1 // pred_fallthru
      _
    // Predicated region
    $region286: #{vgnn_forward.1} parent=1 // pred_check
      _
    $region287: #{vgnn_forward.1} parent=1 // pred_check_branch
      %424 = sbr.rel (0) target = $region289
    $region288: #{vgnn_forward.1} parent=1 // pred_region
      %425 = dma.done [#allocation24], 16
    $region289: #{vgnn_forward.1} parent=1 // pred_fallthru
      _
    // Predicated region
    $region290: #{vgnn_forward.1} parent=1 // pred_check
      _
    $region291: #{vgnn_forward.1} parent=1 // pred_check_branch
      %427 = sbr.rel (0) target = $region293
    $region292: #{vgnn_forward.1} parent=1 // pred_region
      %428 = dma.done [#allocation24], 16
    $region293: #{vgnn_forward.1} parent=1 // pred_fallthru
      _
    // Predicated region
    $region294: #{vgnn_forward.1} parent=1 // pred_check
      _
    $region295: #{vgnn_forward.1} parent=1 // pred_check_branch
      %430 = sbr.rel (0) target = $region297
    $region296: #{vgnn_forward.1} parent=1 // pred_region
      %431 = dma.done [#allocation27], 16
    $region297: #{vgnn_forward.1} parent=1 // pred_fallthru
      _
    // Predicated region
    $region298: #{vgnn_forward.1} parent=1 // pred_check
      _
    $region299: #{vgnn_forward.1} parent=1 // pred_check_branch
      %433 = sbr.rel (0) target = $region301
    $region300: #{vgnn_forward.1} parent=1 // pred_region
      %434 = dma.done [#allocation27], 16
    $region301: #{vgnn_forward.1} parent=1 // pred_fallthru
      _
    %v435 = vld [vmem:[%s1] sm:$0xff]
    %v436 = vld [vmem:[%s1 + $0x8] sm:$0xff]
    %v437 = vld [vmem:[%s1 + $0x10] sm:$0xff]
    %v438 = vld [vmem:[%s1 + $0x18] sm:$0xff]
    %v439 = vld [vmem:[%s1 + $0x20] sm:$0xff]
    %v440 = vld [vmem:[%s1 + $0x28] sm:$0xff]
    %v441 = vld [vmem:[%s1 + $0x30] sm:$0xff]
    %v442 = vld [vmem:[%s1 + $0x38] sm:$0xff]
    %v443 = vld [vmem:[%s1 + $0x40] sm:$0xff]
    %v444 = vld [vmem:[%s1 + $0x48] sm:$0xff]
    %v445 = vld [vmem:[%s1 + $0x50] sm:$0xff]
    %v446 = vld [vmem:[%s1 + $0x58] sm:$0xff]
    %v447 = vld [vmem:[%s1 + $0x60] sm:$0xff]
    %v448 = vld [vmem:[%s1 + $0x68] sm:$0xff]
    %v449 = vld [vmem:[%s1 + $0x70] sm:$0xff]
    %v450 = vld [vmem:[%s1 + $0x78] sm:$0xff]
    %v451 = vld [vmem:[%s1 + $0x80] sm:$0xff]
    %v452 = vld [vmem:[%s1 + $0x88] sm:$0xff]
    %v453 = vld [vmem:[%s1 + $0x90] sm:$0xff]
    %v454 = vld [vmem:[%s1 + $0x98] sm:$0xff]
    %v455 = vld [vmem:[%s1 + $0xa0] sm:$0xff]
    %v456 = vld [vmem:[%s1 + $0xa8] sm:$0xff]
    %v457 = vld [vmem:[%s1 + $0xb0] sm:$0xff]
    %v458 = vld [vmem:[%s1 + $0xb8] sm:$0xff]
    %v459 = vld [vmem:[%s3] sm:$0xff]
    %v460 = vld [vmem:[%s3 + $0x8] sm:$0xff]
    %v461 = vld [vmem:[%s3 + $0x10] sm:$0xff]
    %v462 = vld [vmem:[%s3 + $0x18] sm:$0xff]
    %v463 = vld [vmem:[%s3 + $0x20] sm:$0xff]
    %v464 = vld [vmem:[%s3 + $0x28] sm:$0xff]
    %v465 = vld [vmem:[%s3 + $0x30] sm:$0xff]
    %v466 = vld [vmem:[%s3 + $0x38] sm:$0xff]
    %v467 = vld [vmem:[%s3 + $0x40] sm:$0xff]
    %v468 = vld [vmem:[%s3 + $0x48] sm:$0xff]
    %v469 = vld [vmem:[%s3 + $0x50] sm:$0xff]
    %v470 = vld [vmem:[%s3 + $0x58] sm:$0xff]
    %v471 = vld [vmem:[%s3 + $0x60] sm:$0xff]
    %v472 = vld [vmem:[%s3 + $0x68] sm:$0xff]
    %v473 = vld [vmem:[%s3 + $0x70] sm:$0xff]
    %v474 = vld [vmem:[%s3 + $0x78] sm:$0xff]
    %v475 = vld [vmem:[%s3 + $0x80] sm:$0xff]
    %v476 = vld [vmem:[%s3 + $0x88] sm:$0xff]
    %v477 = vld [vmem:[%s3 + $0x90] sm:$0xff]
    %v478 = vld [vmem:[%s3 + $0x98] sm:$0xff]
    %v479 = vld [vmem:[%s3 + $0xa0] sm:$0xff]
    %v480 = vld [vmem:[%s3 + $0xa8] sm:$0xff]
    %v481 = vld [vmem:[%s3 + $0xb0] sm:$0xff]
    %v482 = vld [vmem:[%s3 + $0xb8] sm:$0xff]
    %v483 = vld [vmem:[%s3 + $0xc0] sm:$0xff]
    %v484 = vld [vmem:[%s3 + $0xc8] sm:$0xff]
    %v485 = vld [vmem:[%s3 + $0xd0] sm:$0xff]
    %v486 = vld [vmem:[%s3 + $0xd8] sm:$0xff]
    %v487 = vld [vmem:[%s3 + $0xe0] sm:$0xff]
    %v488 = vld [vmem:[%s3 + $0xe8] sm:$0xff]
    %v489 = vld [vmem:[%s3 + $0xf0] sm:$0xff]
    %v490 = vld [vmem:[%s3 + $0xf8] sm:$0xff]
    %v491 = vld [vmem:[%s3 + $0x100] sm:$0xff]
    %v492 = vld [vmem:[%s3 + $0x108] sm:$0xff]
    %v493 = vld [vmem:[%s3 + $0x110] sm:$0xff]
    %v494 = vld [vmem:[%s3 + $0x118] sm:$0xff]
    %v495 = vld [vmem:[%s3 + $0x120] sm:$0xff]
    %v496 = vld [vmem:[%s3 + $0x128] sm:$0xff]
    %v497 = vld [vmem:[%s3 + $0x130] sm:$0xff]
    %v498 = vld [vmem:[%s3 + $0x138] sm:$0xff]
    %v499 = vld [vmem:[%s3 + $0x140] sm:$0xff]
    %v500 = vld [vmem:[%s3 + $0x148] sm:$0xff]
    %v501 = vld [vmem:[%s3 + $0x150] sm:$0xff]
    %v502 = vld [vmem:[%s3 + $0x158] sm:$0xff]
    %v503 = vld [vmem:[%s3 + $0x160] sm:$0xff]
    %v504 = vld [vmem:[%s3 + $0x168] sm:$0xff]
    %v505 = vld [vmem:[%s3 + $0x170] sm:$0xff]
    %v506 = vld [vmem:[%s3 + $0x178] sm:$0xff]
    %v507 = vld [vmem:[%s3 + $0x180] sm:$0xff]
    %v508 = vld [vmem:[%s3 + $0x188] sm:$0xff]
    %v509 = vld [vmem:[%s3 + $0x190] sm:$0xff]
    %v510 = vld [vmem:[%s3 + $0x198] sm:$0xff]
    %v511 = vld [vmem:[%s3 + $0x1a0] sm:$0xff]
    %v512 = vld [vmem:[%s3 + $0x1a8] sm:$0xff]
    %v513 = vld [vmem:[%s3 + $0x1b0] sm:$0xff]
    %v514 = vld [vmem:[%s3 + $0x1b8] sm:$0xff]
    %v515 = vld [vmem:[%s3 + $0x1c0] sm:$0xff]
    %v516 = vld [vmem:[%s3 + $0x1c8] sm:$0xff]
    %v517 = vld [vmem:[%s3 + $0x1d0] sm:$0xff]
    %v518 = vld [vmem:[%s3 + $0x1d8] sm:$0xff]
    %v519 = vld [vmem:[%s3 + $0x1e0] sm:$0xff]
    %v520 = vld [vmem:[%s3 + $0x1e8] sm:$0xff]
    %v521 = vld [vmem:[%s3 + $0x1f0] sm:$0xff]
    %v522 = vld [vmem:[%s3 + $0x1f8] sm:$0xff]
    %v523 = vld [vmem:[%s3 + $0x200] sm:$0xff]
    %v524 = vld [vmem:[%s3 + $0x208] sm:$0xff]
    %v525 = vld [vmem:[%s3 + $0x210] sm:$0xff]
    %v526 = vld [vmem:[%s3 + $0x218] sm:$0xff]
    %v527 = vld [vmem:[%s3 + $0x220] sm:$0xff]
    %v528 = vld [vmem:[%s3 + $0x228] sm:$0xff]
    %v529 = vld [vmem:[%s3 + $0x230] sm:$0xff]
    %v530 = vld [vmem:[%s3 + $0x238] sm:$0xff]
    %v531 = vld [vmem:[%s3 + $0x240] sm:$0xff]
    %v532 = vld [vmem:[%s3 + $0x248] sm:$0xff]
    %v533 = vld [vmem:[%s3 + $0x250] sm:$0xff]
    %v534 = vld [vmem:[%s3 + $0x258] sm:$0xff]
    %v535 = vld [vmem:[%s3 + $0x260] sm:$0xff]
    %v536 = vld [vmem:[%s3 + $0x268] sm:$0xff]
    %v537 = vld [vmem:[%s3 + $0x270] sm:$0xff]
    %v538 = vld [vmem:[%s3 + $0x278] sm:$0xff]
    %v539 = vld [vmem:[%s3 + $0x280] sm:$0xff]
    %v540 = vld [vmem:[%s3 + $0x288] sm:$0xff]
    %v541 = vld [vmem:[%s3 + $0x290] sm:$0xff]
    %v542 = vld [vmem:[%s3 + $0x298] sm:$0xff]
    %v543 = vld [vmem:[%s3 + $0x2a0] sm:$0xff]
    %v544 = vld [vmem:[%s3 + $0x2a8] sm:$0xff]
    %v545 = vld [vmem:[%s3 + $0x2b0] sm:$0xff]
    %v546 = vld [vmem:[%s3 + $0x2b8] sm:$0xff]
    %v547 = vld [vmem:[%s3 + $0x2c0] sm:$0xff]
    %v548 = vld [vmem:[%s3 + $0x2c8] sm:$0xff]
    %v549 = vld [vmem:[%s3 + $0x2d0] sm:$0xff]
    %v550 = vld [vmem:[%s3 + $0x2d8] sm:$0xff]
    %v551 = vld [vmem:[%s3 + $0x2e0] sm:$0xff]
    %v552 = vld [vmem:[%s3 + $0x2e8] sm:$0xff]
    %v553 = vld [vmem:[%s3 + $0x2f0] sm:$0xff]
    %v554 = vld [vmem:[%s3 + $0x2f8] sm:$0xff]
    %555 = vmatprep.subr.mxu0 0.0
    %556 = vmatpush1.msra.mxu0 %v474
    %557 = vmatprep.subr.mxu0 0.0
    %558 = vmatpush1.msra.mxu0 %v473
    %559 = vmatprep.subr.mxu0 0.0
    %560 = vmatpush1.msra.mxu0 %v472
    %561 = vmatprep.subr.mxu0 0.0
    %562 = vmatpush1.msra.mxu0 %v471
    %563 = vmatprep.subr.mxu0 0.0
    %564 = vmatpush1.msra.mxu0 %v470
    %565 = vmatprep.subr.mxu0 0.0
    %566 = vmatpush1.msra.mxu0 %v469
    %567 = vmatprep.subr.mxu0 0.0
    %568 = vmatpush1.msra.mxu0 %v468
    %569 = vmatprep.subr.mxu0 0.0
    %570 = vmatpush1.msra.mxu0 %v467
    %571 = vmatprep.subr.mxu0 0.0
    %572 = vmatpush1.msra.mxu0 %v466
    %573 = vmatprep.subr.mxu0 0.0
    %574 = vmatpush1.msra.mxu0 %v465
    %575 = vmatprep.subr.mxu0 0.0
    %576 = vmatpush1.msra.mxu0 %v464
    %577 = vmatprep.subr.mxu0 0.0
    %578 = vmatpush1.msra.mxu0 %v463
    %579 = vmatprep.subr.mxu0 0.0
    %580 = vmatpush1.msra.mxu0 %v462
    %581 = vmatprep.subr.mxu0 0.0
    %582 = vmatpush1.msra.mxu0 %v461
    %583 = vmatprep.subr.mxu0 0.0
    %584 = vmatpush1.msra.mxu0 %v460
    %585 = vmatprep.subr.mxu0 0.0
    %586 = vmatpush1.msra.mxu0 %v459
    %587 = vmatprep.subr.mxu0 0.0
    %588 = vmatpush2.msra.mxu0 %v490
    %589 = vmatprep.subr.mxu0 0.0
    %590 = vmatpush2.msra.mxu0 %v489
    %591 = vmatprep.subr.mxu0 0.0
    %592 = vmatpush2.msra.mxu0 %v488
    %593 = vmatprep.subr.mxu0 0.0
    %594 = vmatpush2.msra.mxu0 %v487
    %595 = vmatprep.subr.mxu0 0.0
    %596 = vmatpush2.msra.mxu0 %v486
    %597 = vmatprep.subr.mxu0 0.0
    %598 = vmatpush2.msra.mxu0 %v485
    %599 = vmatprep.subr.mxu0 0.0
    %600 = vmatpush2.msra.mxu0 %v484
    %601 = vmatprep.subr.mxu0 0.0
    %602 = vmatpush2.msra.mxu0 %v483
    %603 = vmatprep.subr.mxu0 0.0
    %604 = vmatpush2.msra.mxu0 %v482
    %605 = vmatprep.subr.mxu0 0.0
    %606 = vmatpush2.msra.mxu0 %v481
    %607 = vmatprep.subr.mxu0 0.0
    %608 = vmatpush2.msra.mxu0 %v480
    %609 = vmatprep.subr.mxu0 0.0
    %610 = vmatpush2.msra.mxu0 %v479
    %611 = vmatprep.subr.mxu0 0.0
    %612 = vmatpush2.msra.mxu0 %v478
    %613 = vmatprep.subr.mxu0 0.0
    %614 = vmatpush2.msra.mxu0 %v477
    %615 = vmatprep.subr.mxu0 0.0
    %616 = vmatpush2.msra.mxu0 %v476
    %617 = vmatprep.subr.mxu0 0.0
    %618 = vmatpush2.msra.mxu0 %v475
    %619 = vmatprep.mubr.f32.mxu0 %v436
    %620 = vmatmul.mubr.f32.gmra.mxu0 %v435
    %v621 = vpop.f32.mrf.mxu0
    %v622 = vadd.f32 0.0, %v621
    %v623 = vpop.f32.mrf.mxu0
    %624 = vmatprep.mubr.f32.mxu0 %v442
    %625 = vmatmul.mubr.f32.gmra.mxu0 %v441
    %v626 = vpop.f32.mrf.mxu0
    %v627 = vadd.f32 0.0, %v626
    %v628 = vpop.f32.mrf.mxu0
    %629 = vmatprep.mubr.f32.mxu0 %v448
    %630 = vmatmul.mubr.f32.gmra.mxu0 %v447
    %v631 = vpop.f32.mrf.mxu0
    %v632 = vadd.f32 0.0, %v631
    %v633 = vpop.f32.mrf.mxu0
    %634 = vmatprep.mubr.f32.mxu0 %v454
    %635 = vmatmul.mubr.f32.gmra.mxu0 %v453
    %v636 = vpop.f32.mrf.mxu0
    %v637 = vadd.f32 0.0, %v636
    %v638 = vpop.f32.mrf.mxu0
    %639 = vdwg.mxu0
    %640 = vmatprep.subr.mxu0 0.0
    %641 = vmatpush1.msra.mxu0 %v506
    %642 = vmatprep.subr.mxu0 0.0
    %643 = vmatpush1.msra.mxu0 %v505
    %644 = vmatprep.subr.mxu0 0.0
    %645 = vmatpush1.msra.mxu0 %v504
    %646 = vmatprep.subr.mxu0 0.0
    %647 = vmatpush1.msra.mxu0 %v503
    %648 = vmatprep.subr.mxu0 0.0
    %649 = vmatpush1.msra.mxu0 %v502
    %650 = vmatprep.subr.mxu0 0.0
    %651 = vmatpush1.msra.mxu0 %v501
    %652 = vmatprep.subr.mxu0 0.0
    %653 = vmatpush1.msra.mxu0 %v500
    %654 = vmatprep.subr.mxu0 0.0
    %655 = vmatpush1.msra.mxu0 %v499
    %656 = vmatprep.subr.mxu0 0.0
    %657 = vmatpush1.msra.mxu0 %v498
    %658 = vmatprep.subr.mxu0 0.0
    %659 = vmatpush1.msra.mxu0 %v497
    %660 = vmatprep.subr.mxu0 0.0
    %661 = vmatpush1.msra.mxu0 %v496
    %662 = vmatprep.subr.mxu0 0.0
    %663 = vmatpush1.msra.mxu0 %v495
    %664 = vmatprep.subr.mxu0 0.0
    %665 = vmatpush1.msra.mxu0 %v494
    %666 = vmatprep.subr.mxu0 0.0
    %667 = vmatpush1.msra.mxu0 %v493
    %668 = vmatprep.subr.mxu0 0.0
    %669 = vmatpush1.msra.mxu0 %v492
    %670 = vmatprep.subr.mxu0 0.0
    %671 = vmatpush1.msra.mxu0 %v491
    %672 = vmatprep.subr.mxu0 0.0
    %673 = vmatpush2.msra.mxu0 %v522
    %674 = vmatprep.subr.mxu0 0.0
    %675 = vmatpush2.msra.mxu0 %v521
    %676 = vmatprep.subr.mxu0 0.0
    %677 = vmatpush2.msra.mxu0 %v520
    %678 = vmatprep.subr.mxu0 0.0
    %679 = vmatpush2.msra.mxu0 %v519
    %680 = vmatprep.subr.mxu0 0.0
    %681 = vmatpush2.msra.mxu0 %v518
    %682 = vmatprep.subr.mxu0 0.0
    %683 = vmatpush2.msra.mxu0 %v517
    %684 = vmatprep.subr.mxu0 0.0
    %685 = vmatpush2.msra.mxu0 %v516
    %686 = vmatprep.subr.mxu0 0.0
    %687 = vmatpush2.msra.mxu0 %v515
    %688 = vmatprep.subr.mxu0 0.0
    %689 = vmatpush2.msra.mxu0 %v514
    %690 = vmatprep.subr.mxu0 0.0
    %691 = vmatpush2.msra.mxu0 %v513
    %692 = vmatprep.subr.mxu0 0.0
    %693 = vmatpush2.msra.mxu0 %v512
    %694 = vmatprep.subr.mxu0 0.0
    %695 = vmatpush2.msra.mxu0 %v511
    %696 = vmatprep.subr.mxu0 0.0
    %697 = vmatpush2.msra.mxu0 %v510
    %698 = vmatprep.subr.mxu0 0.0
    %699 = vmatpush2.msra.mxu0 %v509
    %700 = vmatprep.subr.mxu0 0.0
    %701 = vmatpush2.msra.mxu0 %v508
    %702 = vmatprep.subr.mxu0 0.0
    %703 = vmatpush2.msra.mxu0 %v507
    %704 = vmatprep.mubr.f32.mxu0 %v438
    %705 = vmatmul.mubr.f32.gmra.mxu0 %v437
    %v706 = vpop.f32.mrf.mxu0
    %v707 = vadd.f32 %v622, %v706
    %v708 = vpop.f32.mrf.mxu0
    %709 = vmatprep.mubr.f32.mxu0 %v444
    %710 = vmatmul.mubr.f32.gmra.mxu0 %v443
    %v711 = vpop.f32.mrf.mxu0
    %v712 = vadd.f32 %v627, %v711
    %v713 = vpop.f32.mrf.mxu0
    %714 = vmatprep.mubr.f32.mxu0 %v450
    %715 = vmatmul.mubr.f32.gmra.mxu0 %v449
    %v716 = vpop.f32.mrf.mxu0
    %v717 = vadd.f32 %v632, %v716
    %v718 = vpop.f32.mrf.mxu0
    %719 = vmatprep.mubr.f32.mxu0 %v456
    %720 = vmatmul.mubr.f32.gmra.mxu0 %v455
    %v721 = vpop.f32.mrf.mxu0
    %v722 = vadd.f32 %v637, %v721
    %v723 = vpop.f32.mrf.mxu0
    %724 = vdwg.mxu0
    %725 = vmatprep.subr.mxu0 0.0
    %726 = vmatpush1.msra.mxu0 %v538
    %727 = vmatprep.subr.mxu0 0.0
    %728 = vmatpush1.msra.mxu0 %v537
    %729 = vmatprep.subr.mxu0 0.0
    %730 = vmatpush1.msra.mxu0 %v536
    %731 = vmatprep.subr.mxu0 0.0
    %732 = vmatpush1.msra.mxu0 %v535
    %733 = vmatprep.subr.mxu0 0.0
    %734 = vmatpush1.msra.mxu0 %v534
    %735 = vmatprep.subr.mxu0 0.0
    %736 = vmatpush1.msra.mxu0 %v533
    %737 = vmatprep.subr.mxu0 0.0
    %738 = vmatpush1.msra.mxu0 %v532
    %739 = vmatprep.subr.mxu0 0.0
    %740 = vmatpush1.msra.mxu0 %v531
    %741 = vmatprep.subr.mxu0 0.0
    %742 = vmatpush1.msra.mxu0 %v530
    %743 = vmatprep.subr.mxu0 0.0
    %744 = vmatpush1.msra.mxu0 %v529
    %745 = vmatprep.subr.mxu0 0.0
    %746 = vmatpush1.msra.mxu0 %v528
    %747 = vmatprep.subr.mxu0 0.0
    %748 = vmatpush1.msra.mxu0 %v527
    %749 = vmatprep.subr.mxu0 0.0
    %750 = vmatpush1.msra.mxu0 %v526
    %751 = vmatprep.subr.mxu0 0.0
    %752 = vmatpush1.msra.mxu0 %v525
    %753 = vmatprep.subr.mxu0 0.0
    %754 = vmatpush1.msra.mxu0 %v524
    %755 = vmatprep.subr.mxu0 0.0
    %756 = vmatpush1.msra.mxu0 %v523
    %757 = vmatprep.subr.mxu0 0.0
    %758 = vmatpush2.msra.mxu0 %v554
    %759 = vmatprep.subr.mxu0 0.0
    %760 = vmatpush2.msra.mxu0 %v553
    %761 = vmatprep.subr.mxu0 0.0
    %762 = vmatpush2.msra.mxu0 %v552
    %763 = vmatprep.subr.mxu0 0.0
    %764 = vmatpush2.msra.mxu0 %v551
    %765 = vmatprep.subr.mxu0 0.0
    %766 = vmatpush2.msra.mxu0 %v550
    %767 = vmatprep.subr.mxu0 0.0
    %768 = vmatpush2.msra.mxu0 %v549
    %769 = vmatprep.subr.mxu0 0.0
    %770 = vmatpush2.msra.mxu0 %v548
    %771 = vmatprep.subr.mxu0 0.0
    %772 = vmatpush2.msra.mxu0 %v547
    %773 = vmatprep.subr.mxu0 0.0
    %774 = vmatpush2.msra.mxu0 %v546
    %775 = vmatprep.subr.mxu0 0.0
    %776 = vmatpush2.msra.mxu0 %v545
    %777 = vmatprep.subr.mxu0 0.0
    %778 = vmatpush2.msra.mxu0 %v544
    %779 = vmatprep.subr.mxu0 0.0
    %780 = vmatpush2.msra.mxu0 %v543
    %781 = vmatprep.subr.mxu0 0.0
    %782 = vmatpush2.msra.mxu0 %v542
    %783 = vmatprep.subr.mxu0 0.0
    %784 = vmatpush2.msra.mxu0 %v541
    %785 = vmatprep.subr.mxu0 0.0
    %786 = vmatpush2.msra.mxu0 %v540
    %787 = vmatprep.subr.mxu0 0.0
    %788 = vmatpush2.msra.mxu0 %v539
    %789 = vmatprep.mubr.f32.mxu0 %v440
    %790 = vmatmul.mubr.f32.gmra.mxu0 %v439
    %v791 = vpop.f32.mrf.mxu0
    %v792 = vadd.f32 %v707, %v791
    %v793 = vpop.f32.mrf.mxu0
    %794 = vmatprep.mubr.f32.mxu0 %v446
    %795 = vmatmul.mubr.f32.gmra.mxu0 %v445
    %v796 = vpop.f32.mrf.mxu0
    %v797 = vadd.f32 %v712, %v796
    %v798 = vpop.f32.mrf.mxu0
    %799 = vmatprep.mubr.f32.mxu0 %v452
    %800 = vmatmul.mubr.f32.gmra.mxu0 %v451
    %v801 = vpop.f32.mrf.mxu0
    %v802 = vadd.f32 %v717, %v801
    %v803 = vpop.f32.mrf.mxu0
    %804 = vmatprep.mubr.f32.mxu0 %v458
    %805 = vmatmul.mubr.f32.gmra.mxu0 %v457
    %v806 = vpop.f32.mrf.mxu0
    %v807 = vadd.f32 %v722, %v806
    %v808 = vpop.f32.mrf.mxu0
    %809 = vdwg.mxu0
    %v810 = vld [vmem:[%s5] sm:$0x1]
    %v812 = vlaneseq
    %v813 = vshrl.u32 %v812, 7
    %v814 = vsub.s32 0, %v813
    %v815 = vrot.slane %v810, %v814
    %v817 = vmul.f32 %v792, %v815
    %v818 = vmul.f32 %v797, %v815
    %v819 = vmul.f32 %v802, %v815
    %v820 = vmul.f32 %v807, %v815
    %v821 = vld [vmem:[%s7] sm:$0x1]
    %v823 = vlaneseq
    %v824 = vshrl.u32 %v823, 7
    %v825 = vsub.s32 0, %v824
    %v826 = vrot.slane %v821, %v825
    %v828 = vadd.f32 %v817, %v826
    %v829 = vadd.f32 %v818, %v826
    %v830 = vadd.f32 %v819, %v826
    %v831 = vadd.f32 %v820, %v826
    %v832 = vmul.f32 %v828, 0.5
    %v833 = vmul.f32 %v829, 0.5
    %v834 = vmul.f32 %v830, 0.5
    %v835 = vmul.f32 %v831, 0.5
    %v836 = vmul.f32 %v828, 0.70710677
    %v837 = vmul.f32 %v829, 0.70710677
    %v838 = vmul.f32 %v830, 0.70710677
    %v839 = vmul.f32 %v831, 0.70710677
    %vm840 = vcmp.lt.f32.partialorder %v836, 0.0
    %vm841 = vcmp.lt.f32.partialorder %v837, 0.0
    %vm842 = vcmp.lt.f32.partialorder %v838, 0.0
    %vm843 = vcmp.lt.f32.partialorder %v839, 0.0
    %v844 = vsel %vm840, -1.0, 1.0
    %v845 = vsel %vm841, -1.0, 1.0
    %v846 = vsel %vm842, -1.0, 1.0
    %v847 = vsel %vm843, -1.0, 1.0
    %v848 = vand.u32 2147483647, %v836
    %v849 = vand.u32 2147483647, %v837
    %v850 = vand.u32 2147483647, %v838
    %v851 = vand.u32 2147483647, %v839
    %v852 = vmul.f32 %v848, 0.3275911
    %v853 = vmul.f32 %v849, 0.3275911
    %v854 = vmul.f32 %v850, 0.3275911
    %v855 = vmul.f32 %v851, 0.3275911
    %v856 = vadd.f32 %v852, 1.0
    %v857 = vadd.f32 %v853, 1.0
    %v858 = vadd.f32 %v854, 1.0
    %v859 = vadd.f32 %v855, 1.0
    %v860 = vrcp.pop %v856
    %v861 = vrcp.pop %v857
    %v862 = vrcp.pop %v858
    %v863 = vrcp.pop %v859
    %v864 = vmul.f32 %v860, 1.0614054
    %v865 = vmul.f32 %v861, 1.0614054
    %v866 = vmul.f32 %v862, 1.0614054
    %v867 = vmul.f32 %v863, 1.0614054
    %v868 = vadd.f32 %v864, -1.4531521
    %v869 = vadd.f32 %v865, -1.4531521
    %v870 = vadd.f32 %v866, -1.4531521
    %v871 = vadd.f32 %v867, -1.4531521
    %v872 = vmul.f32 %v868, %v860
    %v873 = vmul.f32 %v869, %v861
    %v874 = vmul.f32 %v870, %v862
    %v875 = vmul.f32 %v871, %v863
    %v876 = vadd.f32 %v872, 1.4214138
    %v877 = vadd.f32 %v873, 1.4214138
    %v878 = vadd.f32 %v874, 1.4214138
    %v879 = vadd.f32 %v875, 1.4214138
    %v880 = vmul.f32 %v876, %v860
    %v881 = vmul.f32 %v877, %v861
    %v882 = vmul.f32 %v878, %v862
    %v883 = vmul.f32 %v879, %v863
    %v884 = vadd.f32 %v880, -0.28449672
    %v885 = vadd.f32 %v881, -0.28449672
    %v886 = vadd.f32 %v882, -0.28449672
    %v887 = vadd.f32 %v883, -0.28449672
    %v888 = vmul.f32 %v884, %v860
    %v889 = vmul.f32 %v885, %v861
    %v890 = vmul.f32 %v886, %v862
    %v891 = vmul.f32 %v887, %v863
    %v892 = vadd.f32 %v888, 0.2548296
    %v893 = vadd.f32 %v889, 0.2548296
    %v894 = vadd.f32 %v890, 0.2548296
    %v895 = vadd.f32 %v891, 0.2548296
    %v896 = vmul.f32 %v892, %v860
    %v897 = vmul.f32 %v893, %v861
    %v898 = vmul.f32 %v894, %v862
    %v899 = vmul.f32 %v895, %v863
    %v900 = vsub.f32 0.0, %v848
    %v901 = vsub.f32 0.0, %v849
    %v902 = vsub.f32 0.0, %v850
    %v903 = vsub.f32 0.0, %v851
    %v904 = vmul.f32 %v900, %v848
    %v905 = vmul.f32 %v901, %v849
    %v906 = vmul.f32 %v902, %v850
    %v907 = vmul.f32 %v903, %v851
    %v908 = vmul.f32 %v904, 1.442695
    %v909 = vpow.pop %v908
    %v910 = vmul.f32 %v905, 1.442695
    %v911 = vpow.pop %v910
    %v912 = vmul.f32 %v906, 1.442695
    %v913 = vpow.pop %v912
    %v914 = vmul.f32 %v907, 1.442695
    %v915 = vpow.pop %v914
    %v916 = vmul.f32 %v896, %v909
    %v917 = vmul.f32 %v897, %v911
    %v918 = vmul.f32 %v898, %v913
    %v919 = vmul.f32 %v899, %v915
    %v920 = vsub.f32 1.0, %v916
    %v921 = vsub.f32 1.0, %v917
    %v922 = vsub.f32 1.0, %v918
    %v923 = vsub.f32 1.0, %v919
    %v924 = vmul.f32 %v844, %v920
    %v925 = vmul.f32 %v845, %v921
    %v926 = vmul.f32 %v846, %v922
    %v927 = vmul.f32 %v847, %v923
    %v928 = vadd.f32 %v924, 1.0
    %v929 = vadd.f32 %v925, 1.0
    %v930 = vadd.f32 %v926, 1.0
    %v931 = vadd.f32 %v927, 1.0
    %v932 = vmul.f32 %v832, %v928
    %v933 = vmul.f32 %v833, %v929
    %v934 = vmul.f32 %v834, %v930
    %v935 = vmul.f32 %v835, %v931
    %v936 = vld [vmem:[%s9] sm:$0xff]
    %v937 = vld [vmem:[%s9 + $0x8] sm:$0xff]
    %v938 = vld [vmem:[%s9 + $0x10] sm:$0xff]
    %v939 = vld [vmem:[%s9 + $0x18] sm:$0xff]
    %v940 = vld [vmem:[%s9 + $0x20] sm:$0xff]
    %v941 = vld [vmem:[%s9 + $0x28] sm:$0xff]
    %v942 = vld [vmem:[%s9 + $0x30] sm:$0xff]
    %v943 = vld [vmem:[%s9 + $0x38] sm:$0xff]
    %vm944 = vcmask 523264
    %v946 = vsel %vm944, %v932, 0
    %v949 = vsel %vm944, %v933, 0
    %v952 = vsel %vm944, %v934, 0
    %v955 = vsel %vm944, %v935, 0
    %957 = vmatprep.subr.mxu0 0.0
    %958 = vmatpush1.msra.mxu0 0.0
    %959 = vmatprep.subr.mxu0 0.0
    %960 = vmatpush1.msra.mxu0 0.0
    %961 = vmatprep.subr.mxu0 0.0
    %962 = vmatpush1.msra.mxu0 0.0
    %963 = vmatprep.subr.mxu0 0.0
    %964 = vmatpush1.msra.mxu0 0.0
    %965 = vmatprep.subr.mxu0 0.0
    %966 = vmatpush1.msra.mxu0 0.0
    %967 = vmatprep.subr.mxu0 0.0
    %968 = vmatpush1.msra.mxu0 0.0
    %969 = vmatprep.subr.mxu0 0.0
    %970 = vmatpush1.msra.mxu0 0.0
    %971 = vmatprep.subr.mxu0 0.0
    %972 = vmatpush1.msra.mxu0 0.0
    %973 = vmatprep.subr.mxu0 0.0
    %974 = vmatpush1.msra.mxu0 %v943
    %975 = vmatprep.subr.mxu0 0.0
    %976 = vmatpush1.msra.mxu0 %v942
    %977 = vmatprep.subr.mxu0 0.0
    %978 = vmatpush1.msra.mxu0 %v941
    %979 = vmatprep.subr.mxu0 0.0
    %980 = vmatpush1.msra.mxu0 %v940
    %981 = vmatprep.subr.mxu0 0.0
    %982 = vmatpush1.msra.mxu0 %v939
    %983 = vmatprep.subr.mxu0 0.0
    %984 = vmatpush1.msra.mxu0 %v938
    %985 = vmatprep.subr.mxu0 0.0
    %986 = vmatpush1.msra.mxu0 %v937
    %987 = vmatprep.subr.mxu0 0.0
    %988 = vmatpush1.msra.mxu0 %v936
    %989 = vmatprep.subr.mxu0 0.0
    %990 = vmatpush2.msra.mxu0 0.0
    %991 = vmatprep.subr.mxu0 0.0
    %992 = vmatpush2.msra.mxu0 0.0
    %993 = vmatprep.subr.mxu0 0.0
    %994 = vmatpush2.msra.mxu0 0.0
    %995 = vmatprep.subr.mxu0 0.0
    %996 = vmatpush2.msra.mxu0 0.0
    %997 = vmatprep.subr.mxu0 0.0
    %998 = vmatpush2.msra.mxu0 0.0
    %999 = vmatprep.subr.mxu0 0.0
    %1000 = vmatpush2.msra.mxu0 0.0
    %1001 = vmatprep.subr.mxu0 0.0
    %1002 = vmatpush2.msra.mxu0 0.0
    %1003 = vmatprep.subr.mxu0 0.0
    %1004 = vmatpush2.msra.mxu0 0.0
    %1005 = vmatprep.subr.mxu0 0.0
    %1006 = vmatpush2.msra.mxu0 0.0
    %1007 = vmatprep.subr.mxu0 0.0
    %1008 = vmatpush2.msra.mxu0 0.0
    %1009 = vmatprep.subr.mxu0 0.0
    %1010 = vmatpush2.msra.mxu0 0.0
    %1011 = vmatprep.subr.mxu0 0.0
    %1012 = vmatpush2.msra.mxu0 0.0
    %1013 = vmatprep.subr.mxu0 0.0
    %1014 = vmatpush2.msra.mxu0 0.0
    %1015 = vmatprep.subr.mxu0 0.0
    %1016 = vmatpush2.msra.mxu0 0.0
    %1017 = vmatprep.subr.mxu0 0.0
    %1018 = vmatpush2.msra.mxu0 0.0
    %1019 = vmatprep.subr.mxu0 0.0
    %1020 = vmatpush2.msra.mxu0 0.0
    %1021 = vmatprep.mubr.f32.mxu0 0.0
    %1022 = vmatmul.mubr.f32.gmra.mxu0 %v946
    %v1023 = vpop.f32.mrf.mxu0
    %v1024 = vadd.f32 0.0, %v1023
    %v1025 = vpop.f32.mrf.mxu0
    %1026 = vmatprep.mubr.f32.mxu0 0.0
    %1027 = vmatmul.mubr.f32.gmra.mxu0 %v949
    %v1028 = vpop.f32.mrf.mxu0
    %v1029 = vadd.f32 0.0, %v1028
    %v1030 = vpop.f32.mrf.mxu0
    %1031 = vmatprep.mubr.f32.mxu0 0.0
    %1032 = vmatmul.mubr.f32.gmra.mxu0 %v952
    %v1033 = vpop.f32.mrf.mxu0
    %v1034 = vadd.f32 0.0, %v1033
    %v1035 = vpop.f32.mrf.mxu0
    %1036 = vmatprep.mubr.f32.mxu0 0.0
    %1037 = vmatmul.mubr.f32.gmra.mxu0 %v955
    %v1038 = vpop.f32.mrf.mxu0
    %v1039 = vadd.f32 0.0, %v1038
    %v1040 = vpop.f32.mrf.mxu0
    %1041 = vdwg.mxu0
    %v1042 = vld [vmem:[%s11] sm:$0x1]
    %v1044 = vlaneseq
    %v1045 = vshrl.u32 %v1044, 7
    %v1046 = vsub.s32 0, %v1045
    %v1047 = vrot.slane %v1042, %v1046
    %v1049 = vmul.f32 %v1024, %v1047
    %v1050 = vmul.f32 %v1029, %v1047
    %v1051 = vmul.f32 %v1034, %v1047
    %v1052 = vmul.f32 %v1039, %v1047
    %v1053 = vld [vmem:[%s13] sm:$0x1]
    %v1055 = vlaneseq
    %v1056 = vshrl.u32 %v1055, 7
    %v1057 = vsub.s32 0, %v1056
    %v1058 = vrot.slane %v1053, %v1057
    %v1060 = vadd.f32 %v1049, %v1058
    %v1061 = vadd.f32 %v1050, %v1058
    %v1062 = vadd.f32 %v1051, %v1058
    %v1063 = vadd.f32 %v1052, %v1058
    %v1064 = vmul.f32 %v1060, 0.5
    %v1065 = vmul.f32 %v1061, 0.5
    %v1066 = vmul.f32 %v1062, 0.5
    %v1067 = vmul.f32 %v1063, 0.5
    %v1068 = vmul.f32 %v1060, 0.70710677
    %v1069 = vmul.f32 %v1061, 0.70710677
    %v1070 = vmul.f32 %v1062, 0.70710677
    %v1071 = vmul.f32 %v1063, 0.70710677
    %vm1072 = vcmp.lt.f32.partialorder %v1068, 0.0
    %vm1073 = vcmp.lt.f32.partialorder %v1069, 0.0
    %vm1074 = vcmp.lt.f32.partialorder %v1070, 0.0
    %vm1075 = vcmp.lt.f32.partialorder %v1071, 0.0
    %v1076 = vsel %vm1072, -1.0, 1.0
    %v1077 = vsel %vm1073, -1.0, 1.0
    %v1078 = vsel %vm1074, -1.0, 1.0
    %v1079 = vsel %vm1075, -1.0, 1.0
    %v1080 = vand.u32 2147483647, %v1068
    %v1081 = vand.u32 2147483647, %v1069
    %v1082 = vand.u32 2147483647, %v1070
    %v1083 = vand.u32 2147483647, %v1071
    %v1084 = vmul.f32 %v1080, 0.3275911
    %v1085 = vmul.f32 %v1081, 0.3275911
    %v1086 = vmul.f32 %v1082, 0.3275911
    %v1087 = vmul.f32 %v1083, 0.3275911
    %v1088 = vadd.f32 %v1084, 1.0
    %v1089 = vadd.f32 %v1085, 1.0
    %v1090 = vadd.f32 %v1086, 1.0
    %v1091 = vadd.f32 %v1087, 1.0
    %v1092 = vrcp.pop %v1088
    %v1093 = vrcp.pop %v1089
    %v1094 = vrcp.pop %v1090
    %v1095 = vrcp.pop %v1091
    %v1096 = vmul.f32 %v1092, 1.0614054
    %v1097 = vmul.f32 %v1093, 1.0614054
    %v1098 = vmul.f32 %v1094, 1.0614054
    %v1099 = vmul.f32 %v1095, 1.0614054
    %v1100 = vadd.f32 %v1096, -1.4531521
    %v1101 = vadd.f32 %v1097, -1.4531521
    %v1102 = vadd.f32 %v1098, -1.4531521
    %v1103 = vadd.f32 %v1099, -1.4531521
    %v1104 = vmul.f32 %v1100, %v1092
    %v1105 = vmul.f32 %v1101, %v1093
    %v1106 = vmul.f32 %v1102, %v1094
    %v1107 = vmul.f32 %v1103, %v1095
    %v1108 = vadd.f32 %v1104, 1.4214138
    %v1109 = vadd.f32 %v1105, 1.4214138
    %v1110 = vadd.f32 %v1106, 1.4214138
    %v1111 = vadd.f32 %v1107, 1.4214138
    %v1112 = vmul.f32 %v1108, %v1092
    %v1113 = vmul.f32 %v1109, %v1093
    %v1114 = vmul.f32 %v1110, %v1094
    %v1115 = vmul.f32 %v1111, %v1095
    %v1116 = vadd.f32 %v1112, -0.28449672
    %v1117 = vadd.f32 %v1113, -0.28449672
    %v1118 = vadd.f32 %v1114, -0.28449672
    %v1119 = vadd.f32 %v1115, -0.28449672
    %v1120 = vmul.f32 %v1116, %v1092
    %v1121 = vmul.f32 %v1117, %v1093
    %v1122 = vmul.f32 %v1118, %v1094
    %v1123 = vmul.f32 %v1119, %v1095
    %v1124 = vadd.f32 %v1120, 0.2548296
    %v1125 = vadd.f32 %v1121, 0.2548296
    %v1126 = vadd.f32 %v1122, 0.2548296
    %v1127 = vadd.f32 %v1123, 0.2548296
    %v1128 = vmul.f32 %v1124, %v1092
    %v1129 = vmul.f32 %v1125, %v1093
    %v1130 = vmul.f32 %v1126, %v1094
    %v1131 = vmul.f32 %v1127, %v1095
    %v1132 = vsub.f32 0.0, %v1080
    %v1133 = vsub.f32 0.0, %v1081
    %v1134 = vsub.f32 0.0, %v1082
    %v1135 = vsub.f32 0.0, %v1083
    %v1136 = vmul.f32 %v1132, %v1080
    %v1137 = vmul.f32 %v1133, %v1081
    %v1138 = vmul.f32 %v1134, %v1082
    %v1139 = vmul.f32 %v1135, %v1083
    %v1140 = vmul.f32 %v1136, 1.442695
    %v1141 = vpow.pop %v1140
    %v1142 = vmul.f32 %v1137, 1.442695
    %v1143 = vpow.pop %v1142
    %v1144 = vmul.f32 %v1138, 1.442695
    %v1145 = vpow.pop %v1144
    %v1146 = vmul.f32 %v1139, 1.442695
    %v1147 = vpow.pop %v1146
    %v1148 = vmul.f32 %v1128, %v1141
    %v1149 = vmul.f32 %v1129, %v1143
    %v1150 = vmul.f32 %v1130, %v1145
    %v1151 = vmul.f32 %v1131, %v1147
    %v1152 = vsub.f32 1.0, %v1148
    %v1153 = vsub.f32 1.0, %v1149
    %v1154 = vsub.f32 1.0, %v1150
    %v1155 = vsub.f32 1.0, %v1151
    %v1156 = vmul.f32 %v1076, %v1152
    %v1157 = vmul.f32 %v1077, %v1153
    %v1158 = vmul.f32 %v1078, %v1154
    %v1159 = vmul.f32 %v1079, %v1155
    %v1160 = vadd.f32 %v1156, 1.0
    %v1161 = vadd.f32 %v1157, 1.0
    %v1162 = vadd.f32 %v1158, 1.0
    %v1163 = vadd.f32 %v1159, 1.0
    %v1164 = vmul.f32 %v1064, %v1160
    %v1165 = vmul.f32 %v1065, %v1161
    %v1166 = vmul.f32 %v1066, %v1162
    %v1167 = vmul.f32 %v1067, %v1163
    %v1168 = vld [vmem:[%s15] sm:$0xff]
    %v1169 = vld [vmem:[%s15 + $0x8] sm:$0xff]
    %v1170 = vld [vmem:[%s15 + $0x10] sm:$0xff]
    %v1171 = vld [vmem:[%s15 + $0x18] sm:$0xff]
    %vm1172 = vcmask 261120
    %v1174 = vsel %vm1172, %v1164, 0
    %v1177 = vsel %vm1172, %v1165, 0
    %v1180 = vsel %vm1172, %v1166, 0
    %v1183 = vsel %vm1172, %v1167, 0
    %1185 = vmatprep.subr.mxu0 0.0
    %1186 = vmatpush1.msra.mxu0 0.0
    %1187 = vmatprep.subr.mxu0 0.0
    %1188 = vmatpush1.msra.mxu0 0.0
    %1189 = vmatprep.subr.mxu0 0.0
    %1190 = vmatpush1.msra.mxu0 0.0
    %1191 = vmatprep.subr.mxu0 0.0
    %1192 = vmatpush1.msra.mxu0 0.0
    %1193 = vmatprep.subr.mxu0 0.0
    %1194 = vmatpush1.msra.mxu0 0.0
    %1195 = vmatprep.subr.mxu0 0.0
    %1196 = vmatpush1.msra.mxu0 0.0
    %1197 = vmatprep.subr.mxu0 0.0
    %1198 = vmatpush1.msra.mxu0 0.0
    %1199 = vmatprep.subr.mxu0 0.0
    %1200 = vmatpush1.msra.mxu0 0.0
    %1201 = vmatprep.subr.mxu0 0.0
    %1202 = vmatpush1.msra.mxu0 0.0
    %1203 = vmatprep.subr.mxu0 0.0
    %1204 = vmatpush1.msra.mxu0 0.0
    %1205 = vmatprep.subr.mxu0 0.0
    %1206 = vmatpush1.msra.mxu0 0.0
    %1207 = vmatprep.subr.mxu0 0.0
    %1208 = vmatpush1.msra.mxu0 0.0
    %1209 = vmatprep.subr.mxu0 0.0
    %1210 = vmatpush1.msra.mxu0 %v1171
    %1211 = vmatprep.subr.mxu0 0.0
    %1212 = vmatpush1.msra.mxu0 %v1170
    %1213 = vmatprep.subr.mxu0 0.0
    %1214 = vmatpush1.msra.mxu0 %v1169
    %1215 = vmatprep.subr.mxu0 0.0
    %1216 = vmatpush1.msra.mxu0 %v1168
    %1217 = vmatprep.subr.mxu0 0.0
    %1218 = vmatpush2.msra.mxu0 0.0
    %1219 = vmatprep.subr.mxu0 0.0
    %1220 = vmatpush2.msra.mxu0 0.0
    %1221 = vmatprep.subr.mxu0 0.0
    %1222 = vmatpush2.msra.mxu0 0.0
    %1223 = vmatprep.subr.mxu0 0.0
    %1224 = vmatpush2.msra.mxu0 0.0
    %1225 = vmatprep.subr.mxu0 0.0
    %1226 = vmatpush2.msra.mxu0 0.0
    %1227 = vmatprep.subr.mxu0 0.0
    %1228 = vmatpush2.msra.mxu0 0.0
    %1229 = vmatprep.subr.mxu0 0.0
    %1230 = vmatpush2.msra.mxu0 0.0
    %1231 = vmatprep.subr.mxu0 0.0
    %1232 = vmatpush2.msra.mxu0 0.0
    %1233 = vmatprep.subr.mxu0 0.0
    %1234 = vmatpush2.msra.mxu0 0.0
    %1235 = vmatprep.subr.mxu0 0.0
    %1236 = vmatpush2.msra.mxu0 0.0
    %1237 = vmatprep.subr.mxu0 0.0
    %1238 = vmatpush2.msra.mxu0 0.0
    %1239 = vmatprep.subr.mxu0 0.0
    %1240 = vmatpush2.msra.mxu0 0.0
    %1241 = vmatprep.subr.mxu0 0.0
    %1242 = vmatpush2.msra.mxu0 0.0
    %1243 = vmatprep.subr.mxu0 0.0
    %1244 = vmatpush2.msra.mxu0 0.0
    %1245 = vmatprep.subr.mxu0 0.0
    %1246 = vmatpush2.msra.mxu0 0.0
    %1247 = vmatprep.subr.mxu0 0.0
    %1248 = vmatpush2.msra.mxu0 0.0
    %1249 = vmatprep.mubr.f32.mxu0 0.0
    %1250 = vmatmul.mubr.f32.gmra.mxu0 %v1174
    %v1251 = vpop.f32.mrf.mxu0
    %v1252 = vadd.f32 0.0, %v1251
    %v1253 = vpop.f32.mrf.mxu0
    %1254 = vmatprep.mubr.f32.mxu0 0.0
    %1255 = vmatmul.mubr.f32.gmra.mxu0 %v1177
    %v1256 = vpop.f32.mrf.mxu0
    %v1257 = vadd.f32 0.0, %v1256
    %v1258 = vpop.f32.mrf.mxu0
    %1259 = vmatprep.mubr.f32.mxu0 0.0
    %1260 = vmatmul.mubr.f32.gmra.mxu0 %v1180
    %v1261 = vpop.f32.mrf.mxu0
    %v1262 = vadd.f32 0.0, %v1261
    %v1263 = vpop.f32.mrf.mxu0
    %1264 = vmatprep.mubr.f32.mxu0 0.0
    %1265 = vmatmul.mubr.f32.gmra.mxu0 %v1183
    %v1266 = vpop.f32.mrf.mxu0
    %v1267 = vadd.f32 0.0, %v1266
    %v1268 = vpop.f32.mrf.mxu0
    %1269 = vdwg.mxu0
    %v1270 = vld [vmem:[%s17] sm:$0x1]
    %v1272 = vlaneseq
    %v1273 = vshrl.u32 %v1272, 7
    %v1274 = vsub.s32 0, %v1273
    %v1275 = vrot.slane %v1270, %v1274
    %v1277 = vmul.f32 %v1252, %v1275
    %v1278 = vmul.f32 %v1257, %v1275
    %v1279 = vmul.f32 %v1262, %v1275
    %v1280 = vmul.f32 %v1267, %v1275
    %v1281 = vld [vmem:[%s19] sm:$0x1]
    %v1283 = vlaneseq
    %v1284 = vshrl.u32 %v1283, 7
    %v1285 = vsub.s32 0, %v1284
    %v1286 = vrot.slane %v1281, %v1285
    %v1288 = vadd.f32 %v1277, %v1286
    %v1289 = vadd.f32 %v1278, %v1286
    %v1290 = vadd.f32 %v1279, %v1286
    %v1291 = vadd.f32 %v1280, %v1286
    %v1292 = vmul.f32 %v1288, 0.5
    %v1293 = vmul.f32 %v1289, 0.5
    %v1294 = vmul.f32 %v1290, 0.5
    %v1295 = vmul.f32 %v1291, 0.5
    %v1296 = vmul.f32 %v1288, 0.70710677
    %v1297 = vmul.f32 %v1289, 0.70710677
    %v1298 = vmul.f32 %v1290, 0.70710677
    %v1299 = vmul.f32 %v1291, 0.70710677
    %vm1300 = vcmp.lt.f32.partialorder %v1296, 0.0
    %vm1301 = vcmp.lt.f32.partialorder %v1297, 0.0
    %vm1302 = vcmp.lt.f32.partialorder %v1298, 0.0
    %vm1303 = vcmp.lt.f32.partialorder %v1299, 0.0
    %v1304 = vsel %vm1300, -1.0, 1.0
    %v1305 = vsel %vm1301, -1.0, 1.0
    %v1306 = vsel %vm1302, -1.0, 1.0
    %v1307 = vsel %vm1303, -1.0, 1.0
    %v1308 = vand.u32 2147483647, %v1296
    %v1309 = vand.u32 2147483647, %v1297
    %v1310 = vand.u32 2147483647, %v1298
    %v1311 = vand.u32 2147483647, %v1299
    %v1312 = vmul.f32 %v1308, 0.3275911
    %v1313 = vmul.f32 %v1309, 0.3275911
    %v1314 = vmul.f32 %v1310, 0.3275911
    %v1315 = vmul.f32 %v1311, 0.3275911
    %v1316 = vadd.f32 %v1312, 1.0
    %v1317 = vadd.f32 %v1313, 1.0
    %v1318 = vadd.f32 %v1314, 1.0
    %v1319 = vadd.f32 %v1315, 1.0
    %v1320 = vrcp.pop %v1316
    %v1321 = vrcp.pop %v1317
    %v1322 = vrcp.pop %v1318
    %v1323 = vrcp.pop %v1319
    %v1324 = vmul.f32 %v1320, 1.0614054
    %v1325 = vmul.f32 %v1321, 1.0614054
    %v1326 = vmul.f32 %v1322, 1.0614054
    %v1327 = vmul.f32 %v1323, 1.0614054
    %v1328 = vadd.f32 %v1324, -1.4531521
    %v1329 = vadd.f32 %v1325, -1.4531521
    %v1330 = vadd.f32 %v1326, -1.4531521
    %v1331 = vadd.f32 %v1327, -1.4531521
    %v1332 = vmul.f32 %v1328, %v1320
    %v1333 = vmul.f32 %v1329, %v1321
    %v1334 = vmul.f32 %v1330, %v1322
    %v1335 = vmul.f32 %v1331, %v1323
    %v1336 = vadd.f32 %v1332, 1.4214138
    %v1337 = vadd.f32 %v1333, 1.4214138
    %v1338 = vadd.f32 %v1334, 1.4214138
    %v1339 = vadd.f32 %v1335, 1.4214138
    %v1340 = vmul.f32 %v1336, %v1320
    %v1341 = vmul.f32 %v1337, %v1321
    %v1342 = vmul.f32 %v1338, %v1322
    %v1343 = vmul.f32 %v1339, %v1323
    %v1344 = vadd.f32 %v1340, -0.28449672
    %v1345 = vadd.f32 %v1341, -0.28449672
    %v1346 = vadd.f32 %v1342, -0.28449672
    %v1347 = vadd.f32 %v1343, -0.28449672
    %v1348 = vmul.f32 %v1344, %v1320
    %v1349 = vmul.f32 %v1345, %v1321
    %v1350 = vmul.f32 %v1346, %v1322
    %v1351 = vmul.f32 %v1347, %v1323
    %v1352 = vadd.f32 %v1348, 0.2548296
    %v1353 = vadd.f32 %v1349, 0.2548296
    %v1354 = vadd.f32 %v1350, 0.2548296
    %v1355 = vadd.f32 %v1351, 0.2548296
    %v1356 = vmul.f32 %v1352, %v1320
    %v1357 = vmul.f32 %v1353, %v1321
    %v1358 = vmul.f32 %v1354, %v1322
    %v1359 = vmul.f32 %v1355, %v1323
    %v1360 = vsub.f32 0.0, %v1308
    %v1361 = vsub.f32 0.0, %v1309
    %v1362 = vsub.f32 0.0, %v1310
    %v1363 = vsub.f32 0.0, %v1311
    %v1364 = vmul.f32 %v1360, %v1308
    %v1365 = vmul.f32 %v1361, %v1309
    %v1366 = vmul.f32 %v1362, %v1310
    %v1367 = vmul.f32 %v1363, %v1311
    %v1368 = vmul.f32 %v1364, 1.442695
    %v1369 = vpow.pop %v1368
    %v1370 = vmul.f32 %v1365, 1.442695
    %v1371 = vpow.pop %v1370
    %v1372 = vmul.f32 %v1366, 1.442695
    %v1373 = vpow.pop %v1372
    %v1374 = vmul.f32 %v1367, 1.442695
    %v1375 = vpow.pop %v1374
    %v1376 = vmul.f32 %v1356, %v1369
    %v1377 = vmul.f32 %v1357, %v1371
    %v1378 = vmul.f32 %v1358, %v1373
    %v1379 = vmul.f32 %v1359, %v1375
    %v1380 = vsub.f32 1.0, %v1376
    %v1381 = vsub.f32 1.0, %v1377
    %v1382 = vsub.f32 1.0, %v1378
    %v1383 = vsub.f32 1.0, %v1379
    %v1384 = vmul.f32 %v1304, %v1380
    %v1385 = vmul.f32 %v1305, %v1381
    %v1386 = vmul.f32 %v1306, %v1382
    %v1387 = vmul.f32 %v1307, %v1383
    %v1388 = vadd.f32 %v1384, 1.0
    %v1389 = vadd.f32 %v1385, 1.0
    %v1390 = vadd.f32 %v1386, 1.0
    %v1391 = vadd.f32 %v1387, 1.0
    %v1392 = vmul.f32 %v1292, %v1388
    %v1393 = vmul.f32 %v1293, %v1389
    %v1394 = vmul.f32 %v1294, %v1390
    %v1395 = vmul.f32 %v1295, %v1391
    %v1396 = vld [vmem:[%s21] sm:$0xff]
    %v1397 = vld [vmem:[%s21 + $0x8] sm:$0xff]
    %vm1398 = vcmask 130048
    %v1400 = vsel %vm1398, %v1392, 0
    %v1403 = vsel %vm1398, %v1393, 0
    %v1406 = vsel %vm1398, %v1394, 0
    %v1409 = vsel %vm1398, %v1395, 0
    %1411 = vmatprep.subr.mxu0 0.0
    %1412 = vmatpush1.msra.mxu0 0.0
    %1413 = vmatprep.subr.mxu0 0.0
    %1414 = vmatpush1.msra.mxu0 0.0
    %1415 = vmatprep.subr.mxu0 0.0
    %1416 = vmatpush1.msra.mxu0 0.0
    %1417 = vmatprep.subr.mxu0 0.0
    %1418 = vmatpush1.msra.mxu0 0.0
    %1419 = vmatprep.subr.mxu0 0.0
    %1420 = vmatpush1.msra.mxu0 0.0
    %1421 = vmatprep.subr.mxu0 0.0
    %1422 = vmatpush1.msra.mxu0 0.0
    %1423 = vmatprep.subr.mxu0 0.0
    %1424 = vmatpush1.msra.mxu0 0.0
    %1425 = vmatprep.subr.mxu0 0.0
    %1426 = vmatpush1.msra.mxu0 0.0
    %1427 = vmatprep.subr.mxu0 0.0
    %1428 = vmatpush1.msra.mxu0 0.0
    %1429 = vmatprep.subr.mxu0 0.0
    %1430 = vmatpush1.msra.mxu0 0.0
    %1431 = vmatprep.subr.mxu0 0.0
    %1432 = vmatpush1.msra.mxu0 0.0
    %1433 = vmatprep.subr.mxu0 0.0
    %1434 = vmatpush1.msra.mxu0 0.0
    %1435 = vmatprep.subr.mxu0 0.0
    %1436 = vmatpush1.msra.mxu0 0.0
    %1437 = vmatprep.subr.mxu0 0.0
    %1438 = vmatpush1.msra.mxu0 0.0
    %1439 = vmatprep.subr.mxu0 0.0
    %1440 = vmatpush1.msra.mxu0 %v1397
    %1441 = vmatprep.subr.mxu0 0.0
    %1442 = vmatpush1.msra.mxu0 %v1396
    %1443 = vmatprep.subr.mxu0 0.0
    %1444 = vmatpush2.msra.mxu0 0.0
    %1445 = vmatprep.subr.mxu0 0.0
    %1446 = vmatpush2.msra.mxu0 0.0
    %1447 = vmatprep.subr.mxu0 0.0
    %1448 = vmatpush2.msra.mxu0 0.0
    %1449 = vmatprep.subr.mxu0 0.0
    %1450 = vmatpush2.msra.mxu0 0.0
    %1451 = vmatprep.subr.mxu0 0.0
    %1452 = vmatpush2.msra.mxu0 0.0
    %1453 = vmatprep.subr.mxu0 0.0
    %1454 = vmatpush2.msra.mxu0 0.0
    %1455 = vmatprep.subr.mxu0 0.0
    %1456 = vmatpush2.msra.mxu0 0.0
    %1457 = vmatprep.subr.mxu0 0.0
    %1458 = vmatpush2.msra.mxu0 0.0
    %1459 = vmatprep.subr.mxu0 0.0
    %1460 = vmatpush2.msra.mxu0 0.0
    %1461 = vmatprep.subr.mxu0 0.0
    %1462 = vmatpush2.msra.mxu0 0.0
    %1463 = vmatprep.subr.mxu0 0.0
    %1464 = vmatpush2.msra.mxu0 0.0
    %1465 = vmatprep.subr.mxu0 0.0
    %1466 = vmatpush2.msra.mxu0 0.0
    %1467 = vmatprep.subr.mxu0 0.0
    %1468 = vmatpush2.msra.mxu0 0.0
    %1469 = vmatprep.subr.mxu0 0.0
    %1470 = vmatpush2.msra.mxu0 0.0
    %1471 = vmatprep.subr.mxu0 0.0
    %1472 = vmatpush2.msra.mxu0 0.0
    %1473 = vmatprep.subr.mxu0 0.0
    %1474 = vmatpush2.msra.mxu0 0.0
    %1475 = vmatprep.mubr.f32.mxu0 0.0
    %1476 = vmatmul.mubr.f32.gmra.mxu0 %v1400
    %v1477 = vpop.f32.mrf.mxu0
    %v1478 = vadd.f32 0.0, %v1477
    %v1479 = vpop.f32.mrf.mxu0
    %1480 = vmatprep.mubr.f32.mxu0 0.0
    %1481 = vmatmul.mubr.f32.gmra.mxu0 %v1403
    %v1482 = vpop.f32.mrf.mxu0
    %v1483 = vadd.f32 0.0, %v1482
    %v1484 = vpop.f32.mrf.mxu0
    %1485 = vmatprep.mubr.f32.mxu0 0.0
    %1486 = vmatmul.mubr.f32.gmra.mxu0 %v1406
    %v1487 = vpop.f32.mrf.mxu0
    %v1488 = vadd.f32 0.0, %v1487
    %v1489 = vpop.f32.mrf.mxu0
    %1490 = vmatprep.mubr.f32.mxu0 0.0
    %1491 = vmatmul.mubr.f32.gmra.mxu0 %v1409
    %v1492 = vpop.f32.mrf.mxu0
    %v1493 = vadd.f32 0.0, %v1492
    %v1494 = vpop.f32.mrf.mxu0
    %1495 = vdwg.mxu0
    %v1496 = vld [vmem:[%s23] sm:$0x1]
    %v1498 = vlaneseq
    %v1499 = vshrl.u32 %v1498, 7
    %v1500 = vsub.s32 0, %v1499
    %v1501 = vrot.slane %v1496, %v1500
    %v1503 = vmul.f32 %v1478, %v1501
    %v1504 = vmul.f32 %v1483, %v1501
    %v1505 = vmul.f32 %v1488, %v1501
    %v1506 = vmul.f32 %v1493, %v1501
    %v1507 = vld [vmem:[%s25] sm:$0x1]
    %v1509 = vlaneseq
    %v1510 = vshrl.u32 %v1509, 7
    %v1511 = vsub.s32 0, %v1510
    %v1512 = vrot.slane %v1507, %v1511
    %v1514 = vadd.f32 %v1503, %v1512
    %v1515 = vadd.f32 %v1504, %v1512
    %v1516 = vadd.f32 %v1505, %v1512
    %v1517 = vadd.f32 %v1506, %v1512
    %v1518 = vmul.f32 %v1514, 0.5
    %v1519 = vmul.f32 %v1515, 0.5
    %v1520 = vmul.f32 %v1516, 0.5
    %v1521 = vmul.f32 %v1517, 0.5
    %v1522 = vmul.f32 %v1514, 0.70710677
    %v1523 = vmul.f32 %v1515, 0.70710677
    %v1524 = vmul.f32 %v1516, 0.70710677
    %v1525 = vmul.f32 %v1517, 0.70710677
    %vm1526 = vcmp.lt.f32.partialorder %v1522, 0.0
    %vm1527 = vcmp.lt.f32.partialorder %v1523, 0.0
    %vm1528 = vcmp.lt.f32.partialorder %v1524, 0.0
    %vm1529 = vcmp.lt.f32.partialorder %v1525, 0.0
    %v1530 = vsel %vm1526, -1.0, 1.0
    %v1531 = vsel %vm1527, -1.0, 1.0
    %v1532 = vsel %vm1528, -1.0, 1.0
    %v1533 = vsel %vm1529, -1.0, 1.0
    %v1534 = vand.u32 2147483647, %v1522
    %v1535 = vand.u32 2147483647, %v1523
    %v1536 = vand.u32 2147483647, %v1524
    %v1537 = vand.u32 2147483647, %v1525
    %v1538 = vmul.f32 %v1534, 0.3275911
    %v1539 = vmul.f32 %v1535, 0.3275911
    %v1540 = vmul.f32 %v1536, 0.3275911
    %v1541 = vmul.f32 %v1537, 0.3275911
    %v1542 = vadd.f32 %v1538, 1.0
    %v1543 = vadd.f32 %v1539, 1.0
    %v1544 = vadd.f32 %v1540, 1.0
    %v1545 = vadd.f32 %v1541, 1.0
    %v1546 = vrcp.pop %v1542
    %v1547 = vrcp.pop %v1543
    %v1548 = vrcp.pop %v1544
    %v1549 = vrcp.pop %v1545
    %v1550 = vmul.f32 %v1546, 1.0614054
    %v1551 = vmul.f32 %v1547, 1.0614054
    %v1552 = vmul.f32 %v1548, 1.0614054
    %v1553 = vmul.f32 %v1549, 1.0614054
    %v1554 = vadd.f32 %v1550, -1.4531521
    %v1555 = vadd.f32 %v1551, -1.4531521
    %v1556 = vadd.f32 %v1552, -1.4531521
    %v1557 = vadd.f32 %v1553, -1.4531521
    %v1558 = vmul.f32 %v1554, %v1546
    %v1559 = vmul.f32 %v1555, %v1547
    %v1560 = vmul.f32 %v1556, %v1548
    %v1561 = vmul.f32 %v1557, %v1549
    %v1562 = vadd.f32 %v1558, 1.4214138
    %v1563 = vadd.f32 %v1559, 1.4214138
    %v1564 = vadd.f32 %v1560, 1.4214138
    %v1565 = vadd.f32 %v1561, 1.4214138
    %v1566 = vmul.f32 %v1562, %v1546
    %v1567 = vmul.f32 %v1563, %v1547
    %v1568 = vmul.f32 %v1564, %v1548
    %v1569 = vmul.f32 %v1565, %v1549
    %v1570 = vadd.f32 %v1566, -0.28449672
    %v1571 = vadd.f32 %v1567, -0.28449672
    %v1572 = vadd.f32 %v1568, -0.28449672
    %v1573 = vadd.f32 %v1569, -0.28449672
    %v1574 = vmul.f32 %v1570, %v1546
    %v1575 = vmul.f32 %v1571, %v1547
    %v1576 = vmul.f32 %v1572, %v1548
    %v1577 = vmul.f32 %v1573, %v1549
    %v1578 = vadd.f32 %v1574, 0.2548296
    %v1579 = vadd.f32 %v1575, 0.2548296
    %v1580 = vadd.f32 %v1576, 0.2548296
    %v1581 = vadd.f32 %v1577, 0.2548296
    %v1582 = vmul.f32 %v1578, %v1546
    %v1583 = vmul.f32 %v1579, %v1547
    %v1584 = vmul.f32 %v1580, %v1548
    %v1585 = vmul.f32 %v1581, %v1549
    %v1586 = vsub.f32 0.0, %v1534
    %v1587 = vsub.f32 0.0, %v1535
    %v1588 = vsub.f32 0.0, %v1536
    %v1589 = vsub.f32 0.0, %v1537
    %v1590 = vmul.f32 %v1586, %v1534
    %v1591 = vmul.f32 %v1587, %v1535
    %v1592 = vmul.f32 %v1588, %v1536
    %v1593 = vmul.f32 %v1589, %v1537
    %v1594 = vmul.f32 %v1590, 1.442695
    %v1595 = vpow.pop %v1594
    %v1596 = vmul.f32 %v1591, 1.442695
    %v1597 = vpow.pop %v1596
    %v1598 = vmul.f32 %v1592, 1.442695
    %v1599 = vpow.pop %v1598
    %v1600 = vmul.f32 %v1593, 1.442695
    %v1601 = vpow.pop %v1600
    %v1602 = vmul.f32 %v1582, %v1595
    %v1603 = vmul.f32 %v1583, %v1597
    %v1604 = vmul.f32 %v1584, %v1599
    %v1605 = vmul.f32 %v1585, %v1601
    %v1606 = vsub.f32 1.0, %v1602
    %v1607 = vsub.f32 1.0, %v1603
    %v1608 = vsub.f32 1.0, %v1604
    %v1609 = vsub.f32 1.0, %v1605
    %v1610 = vmul.f32 %v1530, %v1606
    %v1611 = vmul.f32 %v1531, %v1607
    %v1612 = vmul.f32 %v1532, %v1608
    %v1613 = vmul.f32 %v1533, %v1609
    %v1614 = vadd.f32 %v1610, 1.0
    %v1615 = vadd.f32 %v1611, 1.0
    %v1616 = vadd.f32 %v1612, 1.0
    %v1617 = vadd.f32 %v1613, 1.0
    %v1618 = vmul.f32 %v1518, %v1614
    %v1619 = vmul.f32 %v1519, %v1615
    %v1620 = vmul.f32 %v1520, %v1616
    %v1621 = vmul.f32 %v1521, %v1617
    %v1622 = vld [vmem:[%s27] sm:$0xff]
    %v1623 = vld [vmem:[%s27 + $0x8] sm:$0xff]
    %v1624 = vld [vmem:[%s27 + $0x10] sm:$0xff]
    %v1625 = vld [vmem:[%s27 + $0x18] sm:$0xff]
    %v1627 = vsel %vm1172, %v1618, 0
    %v1630 = vsel %vm1172, %v1619, 0
    %v1633 = vsel %vm1172, %v1620, 0
    %v1636 = vsel %vm1172, %v1621, 0
    %1638 = vmatprep.subr.mxu0 0.0
    %1639 = vmatpush1.msra.mxu0 0.0
    %1640 = vmatprep.subr.mxu0 0.0
    %1641 = vmatpush1.msra.mxu0 0.0
    %1642 = vmatprep.subr.mxu0 0.0
    %1643 = vmatpush1.msra.mxu0 0.0
    %1644 = vmatprep.subr.mxu0 0.0
    %1645 = vmatpush1.msra.mxu0 0.0
    %1646 = vmatprep.subr.mxu0 0.0
    %1647 = vmatpush1.msra.mxu0 0.0
    %1648 = vmatprep.subr.mxu0 0.0
    %1649 = vmatpush1.msra.mxu0 0.0
    %1650 = vmatprep.subr.mxu0 0.0
    %1651 = vmatpush1.msra.mxu0 0.0
    %1652 = vmatprep.subr.mxu0 0.0
    %1653 = vmatpush1.msra.mxu0 0.0
    %1654 = vmatprep.subr.mxu0 0.0
    %1655 = vmatpush1.msra.mxu0 0.0
    %1656 = vmatprep.subr.mxu0 0.0
    %1657 = vmatpush1.msra.mxu0 0.0
    %1658 = vmatprep.subr.mxu0 0.0
    %1659 = vmatpush1.msra.mxu0 0.0
    %1660 = vmatprep.subr.mxu0 0.0
    %1661 = vmatpush1.msra.mxu0 0.0
    %1662 = vmatprep.subr.mxu0 0.0
    %1663 = vmatpush1.msra.mxu0 %v1625
    %1664 = vmatprep.subr.mxu0 0.0
    %1665 = vmatpush1.msra.mxu0 %v1624
    %1666 = vmatprep.subr.mxu0 0.0
    %1667 = vmatpush1.msra.mxu0 %v1623
    %1668 = vmatprep.subr.mxu0 0.0
    %1669 = vmatpush1.msra.mxu0 %v1622
    %1670 = vmatprep.subr.mxu0 0.0
    %1671 = vmatpush2.msra.mxu0 0.0
    %1672 = vmatprep.subr.mxu0 0.0
    %1673 = vmatpush2.msra.mxu0 0.0
    %1674 = vmatprep.subr.mxu0 0.0
    %1675 = vmatpush2.msra.mxu0 0.0
    %1676 = vmatprep.subr.mxu0 0.0
    %1677 = vmatpush2.msra.mxu0 0.0
    %1678 = vmatprep.subr.mxu0 0.0
    %1679 = vmatpush2.msra.mxu0 0.0
    %1680 = vmatprep.subr.mxu0 0.0
    %1681 = vmatpush2.msra.mxu0 0.0
    %1682 = vmatprep.subr.mxu0 0.0
    %1683 = vmatpush2.msra.mxu0 0.0
    %1684 = vmatprep.subr.mxu0 0.0
    %1685 = vmatpush2.msra.mxu0 0.0
    %1686 = vmatprep.subr.mxu0 0.0
    %1687 = vmatpush2.msra.mxu0 0.0
    %1688 = vmatprep.subr.mxu0 0.0
    %1689 = vmatpush2.msra.mxu0 0.0
    %1690 = vmatprep.subr.mxu0 0.0
    %1691 = vmatpush2.msra.mxu0 0.0
    %1692 = vmatprep.subr.mxu0 0.0
    %1693 = vmatpush2.msra.mxu0 0.0
    %1694 = vmatprep.subr.mxu0 0.0
    %1695 = vmatpush2.msra.mxu0 0.0
    %1696 = vmatprep.subr.mxu0 0.0
    %1697 = vmatpush2.msra.mxu0 0.0
    %1698 = vmatprep.subr.mxu0 0.0
    %1699 = vmatpush2.msra.mxu0 0.0
    %1700 = vmatprep.subr.mxu0 0.0
    %1701 = vmatpush2.msra.mxu0 0.0
    %1702 = vmatprep.mubr.f32.mxu0 0.0
    %1703 = vmatmul.mubr.f32.gmra.mxu0 %v1627
    %v1704 = vpop.f32.mrf.mxu0
    %v1705 = vadd.f32 0.0, %v1704
    %v1706 = vpop.f32.mrf.mxu0
    %1707 = vmatprep.mubr.f32.mxu0 0.0
    %1708 = vmatmul.mubr.f32.gmra.mxu0 %v1630
    %v1709 = vpop.f32.mrf.mxu0
    %v1710 = vadd.f32 0.0, %v1709
    %v1711 = vpop.f32.mrf.mxu0
    %1712 = vmatprep.mubr.f32.mxu0 0.0
    %1713 = vmatmul.mubr.f32.gmra.mxu0 %v1633
    %v1714 = vpop.f32.mrf.mxu0
    %v1715 = vadd.f32 0.0, %v1714
    %v1716 = vpop.f32.mrf.mxu0
    %1717 = vmatprep.mubr.f32.mxu0 0.0
    %1718 = vmatmul.mubr.f32.gmra.mxu0 %v1636
    %v1719 = vpop.f32.mrf.mxu0
    %v1720 = vadd.f32 0.0, %v1719
    %v1721 = vpop.f32.mrf.mxu0
    %1722 = vdwg.mxu0
    %v1723 = vld [vmem:[%s29] sm:$0x1]
    %v1725 = vlaneseq
    %v1726 = vshrl.u32 %v1725, 7
    %v1727 = vsub.s32 0, %v1726
    %v1728 = vrot.slane %v1723, %v1727
    %v1730 = vmul.f32 %v1705, %v1728
    %v1731 = vmul.f32 %v1710, %v1728
    %v1732 = vmul.f32 %v1715, %v1728
    %v1733 = vmul.f32 %v1720, %v1728
    %v1734 = vld [vmem:[#allocation2] sm:$0x1]
    %v1736 = vlaneseq
    %v1737 = vshrl.u32 %v1736, 7
    %v1738 = vsub.s32 0, %v1737
    %v1739 = vrot.slane %v1734, %v1738
    %v1741 = vadd.f32 %v1730, %v1739
    %v1742 = vadd.f32 %v1731, %v1739
    %v1743 = vadd.f32 %v1732, %v1739
    %v1744 = vadd.f32 %v1733, %v1739
    %v1745 = vmul.f32 %v1741, 0.5
    %v1746 = vmul.f32 %v1742, 0.5
    %v1747 = vmul.f32 %v1743, 0.5
    %v1748 = vmul.f32 %v1744, 0.5
    %v1749 = vmul.f32 %v1741, 0.70710677
    %v1750 = vmul.f32 %v1742, 0.70710677
    %v1751 = vmul.f32 %v1743, 0.70710677
    %v1752 = vmul.f32 %v1744, 0.70710677
    %vm1753 = vcmp.lt.f32.partialorder %v1749, 0.0
    %vm1754 = vcmp.lt.f32.partialorder %v1750, 0.0
    %vm1755 = vcmp.lt.f32.partialorder %v1751, 0.0
    %vm1756 = vcmp.lt.f32.partialorder %v1752, 0.0
    %v1757 = vsel %vm1753, -1.0, 1.0
    %v1758 = vsel %vm1754, -1.0, 1.0
    %v1759 = vsel %vm1755, -1.0, 1.0
    %v1760 = vsel %vm1756, -1.0, 1.0
    %v1761 = vand.u32 2147483647, %v1749
    %v1762 = vand.u32 2147483647, %v1750
    %v1763 = vand.u32 2147483647, %v1751
    %v1764 = vand.u32 2147483647, %v1752
    %v1765 = vmul.f32 %v1761, 0.3275911
    %v1766 = vmul.f32 %v1762, 0.3275911
    %v1767 = vmul.f32 %v1763, 0.3275911
    %v1768 = vmul.f32 %v1764, 0.3275911
    %v1769 = vadd.f32 %v1765, 1.0
    %v1770 = vadd.f32 %v1766, 1.0
    %v1771 = vadd.f32 %v1767, 1.0
    %v1772 = vadd.f32 %v1768, 1.0
    %v1773 = vrcp.pop %v1769
    %v1774 = vrcp.pop %v1770
    %v1775 = vrcp.pop %v1771
    %v1776 = vrcp.pop %v1772
    %v1777 = vmul.f32 %v1773, 1.0614054
    %v1778 = vmul.f32 %v1774, 1.0614054
    %v1779 = vmul.f32 %v1775, 1.0614054
    %v1780 = vmul.f32 %v1776, 1.0614054
    %v1781 = vadd.f32 %v1777, -1.4531521
    %v1782 = vadd.f32 %v1778, -1.4531521
    %v1783 = vadd.f32 %v1779, -1.4531521
    %v1784 = vadd.f32 %v1780, -1.4531521
    %v1785 = vmul.f32 %v1781, %v1773
    %v1786 = vmul.f32 %v1782, %v1774
    %v1787 = vmul.f32 %v1783, %v1775
    %v1788 = vmul.f32 %v1784, %v1776
    %v1789 = vadd.f32 %v1785, 1.4214138
    %v1790 = vadd.f32 %v1786, 1.4214138
    %v1791 = vadd.f32 %v1787, 1.4214138
    %v1792 = vadd.f32 %v1788, 1.4214138
    %v1793 = vmul.f32 %v1789, %v1773
    %v1794 = vmul.f32 %v1790, %v1774
    %v1795 = vmul.f32 %v1791, %v1775
    %v1796 = vmul.f32 %v1792, %v1776
    %v1797 = vadd.f32 %v1793, -0.28449672
    %v1798 = vadd.f32 %v1794, -0.28449672
    %v1799 = vadd.f32 %v1795, -0.28449672
    %v1800 = vadd.f32 %v1796, -0.28449672
    %v1801 = vmul.f32 %v1797, %v1773
    %v1802 = vmul.f32 %v1798, %v1774
    %v1803 = vmul.f32 %v1799, %v1775
    %v1804 = vmul.f32 %v1800, %v1776
    %v1805 = vadd.f32 %v1801, 0.2548296
    %v1806 = vadd.f32 %v1802, 0.2548296
    %v1807 = vadd.f32 %v1803, 0.2548296
    %v1808 = vadd.f32 %v1804, 0.2548296
    %v1809 = vmul.f32 %v1805, %v1773
    %v1810 = vmul.f32 %v1806, %v1774
    %v1811 = vmul.f32 %v1807, %v1775
    %v1812 = vmul.f32 %v1808, %v1776
    %v1813 = vsub.f32 0.0, %v1761
    %v1814 = vsub.f32 0.0, %v1762
    %v1815 = vsub.f32 0.0, %v1763
    %v1816 = vsub.f32 0.0, %v1764
    %v1817 = vmul.f32 %v1813, %v1761
    %v1818 = vmul.f32 %v1814, %v1762
    %v1819 = vmul.f32 %v1815, %v1763
    %v1820 = vmul.f32 %v1816, %v1764
    %v1821 = vmul.f32 %v1817, 1.442695
    %v1822 = vpow.pop %v1821
    %v1823 = vmul.f32 %v1818, 1.442695
    %v1824 = vpow.pop %v1823
    %v1825 = vmul.f32 %v1819, 1.442695
    %v1826 = vpow.pop %v1825
    %v1827 = vmul.f32 %v1820, 1.442695
    %v1828 = vpow.pop %v1827
    %v1829 = vmul.f32 %v1809, %v1822
    %v1830 = vmul.f32 %v1810, %v1824
    %v1831 = vmul.f32 %v1811, %v1826
    %v1832 = vmul.f32 %v1812, %v1828
    %v1833 = vsub.f32 1.0, %v1829
    %v1834 = vsub.f32 1.0, %v1830
    %v1835 = vsub.f32 1.0, %v1831
    %v1836 = vsub.f32 1.0, %v1832
    %v1837 = vmul.f32 %v1757, %v1833
    %v1838 = vmul.f32 %v1758, %v1834
    %v1839 = vmul.f32 %v1759, %v1835
    %v1840 = vmul.f32 %v1760, %v1836
    %v1841 = vadd.f32 %v1837, 1.0
    %v1842 = vadd.f32 %v1838, 1.0
    %v1843 = vadd.f32 %v1839, 1.0
    %v1844 = vadd.f32 %v1840, 1.0
    %v1845 = vmul.f32 %v1745, %v1841
    %v1846 = vmul.f32 %v1746, %v1842
    %v1847 = vmul.f32 %v1747, %v1843
    %v1848 = vmul.f32 %v1748, %v1844
    %v1849 = vld [vmem:[%s33] sm:$0xff]
    %v1850 = vld [vmem:[%s33 + $0x8] sm:$0xff]
    %v1851 = vld [vmem:[%s33 + $0x10] sm:$0xff]
    %v1852 = vld [vmem:[%s33 + $0x18] sm:$0xff]
    %v1853 = vld [vmem:[%s33 + $0x20] sm:$0xff]
    %v1854 = vld [vmem:[%s33 + $0x28] sm:$0xff]
    %v1855 = vld [vmem:[%s33 + $0x30] sm:$0xff]
    %v1856 = vld [vmem:[%s33 + $0x38] sm:$0xff]
    %v1858 = vsel %vm944, %v1845, 0
    %v1861 = vsel %vm944, %v1846, 0
    %v1864 = vsel %vm944, %v1847, 0
    %v1867 = vsel %vm944, %v1848, 0
    %1869 = vmatprep.subr.mxu0 0.0
    %1870 = vmatpush1.msra.mxu0 0.0
    %1871 = vmatprep.subr.mxu0 0.0
    %1872 = vmatpush1.msra.mxu0 0.0
    %1873 = vmatprep.subr.mxu0 0.0
    %1874 = vmatpush1.msra.mxu0 0.0
    %1875 = vmatprep.subr.mxu0 0.0
    %1876 = vmatpush1.msra.mxu0 0.0
    %1877 = vmatprep.subr.mxu0 0.0
    %1878 = vmatpush1.msra.mxu0 0.0
    %1879 = vmatprep.subr.mxu0 0.0
    %1880 = vmatpush1.msra.mxu0 0.0
    %1881 = vmatprep.subr.mxu0 0.0
    %1882 = vmatpush1.msra.mxu0 0.0
    %1883 = vmatprep.subr.mxu0 0.0
    %1884 = vmatpush1.msra.mxu0 0.0
    %1885 = vmatprep.subr.mxu0 0.0
    %1886 = vmatpush1.msra.mxu0 %v1856
    %1887 = vmatprep.subr.mxu0 0.0
    %1888 = vmatpush1.msra.mxu0 %v1855
    %1889 = vmatprep.subr.mxu0 0.0
    %1890 = vmatpush1.msra.mxu0 %v1854
    %1891 = vmatprep.subr.mxu0 0.0
    %1892 = vmatpush1.msra.mxu0 %v1853
    %1893 = vmatprep.subr.mxu0 0.0
    %1894 = vmatpush1.msra.mxu0 %v1852
    %1895 = vmatprep.subr.mxu0 0.0
    %1896 = vmatpush1.msra.mxu0 %v1851
    %1897 = vmatprep.subr.mxu0 0.0
    %1898 = vmatpush1.msra.mxu0 %v1850
    %1899 = vmatprep.subr.mxu0 0.0
    %1900 = vmatpush1.msra.mxu0 %v1849
    %1901 = vmatprep.subr.mxu0 0.0
    %1902 = vmatpush2.msra.mxu0 0.0
    %1903 = vmatprep.subr.mxu0 0.0
    %1904 = vmatpush2.msra.mxu0 0.0
    %1905 = vmatprep.subr.mxu0 0.0
    %1906 = vmatpush2.msra.mxu0 0.0
    %1907 = vmatprep.subr.mxu0 0.0
    %1908 = vmatpush2.msra.mxu0 0.0
    %1909 = vmatprep.subr.mxu0 0.0
    %1910 = vmatpush2.msra.mxu0 0.0
    %1911 = vmatprep.subr.mxu0 0.0
    %1912 = vmatpush2.msra.mxu0 0.0
    %1913 = vmatprep.subr.mxu0 0.0
    %1914 = vmatpush2.msra.mxu0 0.0
    %1915 = vmatprep.subr.mxu0 0.0
    %1916 = vmatpush2.msra.mxu0 0.0
    %1917 = vmatprep.subr.mxu0 0.0
    %1918 = vmatpush2.msra.mxu0 0.0
    %1919 = vmatprep.subr.mxu0 0.0
    %1920 = vmatpush2.msra.mxu0 0.0
    %1921 = vmatprep.subr.mxu0 0.0
    %1922 = vmatpush2.msra.mxu0 0.0
    %1923 = vmatprep.subr.mxu0 0.0
    %1924 = vmatpush2.msra.mxu0 0.0
    %1925 = vmatprep.subr.mxu0 0.0
    %1926 = vmatpush2.msra.mxu0 0.0
    %1927 = vmatprep.subr.mxu0 0.0
    %1928 = vmatpush2.msra.mxu0 0.0
    %1929 = vmatprep.subr.mxu0 0.0
    %1930 = vmatpush2.msra.mxu0 0.0
    %1931 = vmatprep.subr.mxu0 0.0
    %1932 = vmatpush2.msra.mxu0 0.0
    %1933 = vmatprep.mubr.f32.mxu0 0.0
    %1934 = vmatmul.mubr.f32.gmra.mxu0 %v1858
    %v1935 = vpop.f32.mrf.mxu0
    %v1936 = vadd.f32 0.0, %v1935
    %v1937 = vpop.f32.mrf.mxu0
    %1938 = vmatprep.mubr.f32.mxu0 0.0
    %1939 = vmatmul.mubr.f32.gmra.mxu0 %v1861
    %v1940 = vpop.f32.mrf.mxu0
    %v1941 = vadd.f32 0.0, %v1940
    %v1942 = vpop.f32.mrf.mxu0
    %1943 = vmatprep.mubr.f32.mxu0 0.0
    %1944 = vmatmul.mubr.f32.gmra.mxu0 %v1864
    %v1945 = vpop.f32.mrf.mxu0
    %v1946 = vadd.f32 0.0, %v1945
    %v1947 = vpop.f32.mrf.mxu0
    %1948 = vmatprep.mubr.f32.mxu0 0.0
    %1949 = vmatmul.mubr.f32.gmra.mxu0 %v1867
    %v1950 = vpop.f32.mrf.mxu0
    %v1951 = vadd.f32 0.0, %v1950
    %v1952 = vpop.f32.mrf.mxu0
    %1953 = vdwg.mxu0
    %v1954 = vld [vmem:[#allocation5] sm:$0x1]
    %v1956 = vlaneseq
    %v1957 = vshrl.u32 %v1956, 7
    %v1958 = vsub.s32 0, %v1957
    %v1959 = vrot.slane %v1954, %v1958
    %v1961 = vmul.f32 %v1936, %v1959
    %v1962 = vmul.f32 %v1941, %v1959
    %v1963 = vmul.f32 %v1946, %v1959
    %v1964 = vmul.f32 %v1951, %v1959
    %v1965 = vld [vmem:[#allocation7] sm:$0x1]
    %v1967 = vlaneseq
    %v1968 = vshrl.u32 %v1967, 7
    %v1969 = vsub.s32 0, %v1968
    %v1970 = vrot.slane %v1965, %v1969
    %v1972 = vadd.f32 %v1961, %v1970
    %v1973 = vadd.f32 %v1962, %v1970
    %v1974 = vadd.f32 %v1963, %v1970
    %v1975 = vadd.f32 %v1964, %v1970
    %v1976 = vld [vmem:[%s39] sm:$0xff]
    %v1977 = vld [vmem:[%s39 + $0x8] sm:$0xff]
    %v1978 = vadd.f32 %v1972, %v1976
    %v1979 = vadd.f32 %v1973, %v1977
    %v1980 = vadd.f32 %v1974, %v1976
    %v1981 = vadd.f32 %v1975, %v1977
    %v1982 = vlaneseq
    %v1983 = vand.u32 %v1982, 127
    %v1984 = vlaneseq
    %v1985 = vshrl.u32 %v1984, 7
    %v1986 = vadd.s32 %v1985, 8
    %v1987 = vadd.s32 %v1985, 16
    %v1988 = vadd.s32 %v1985, 24
    %v1989 = vcvt.s32.f32 %v1983
    %vm1990 = vcmp.ge.s32.totalorder %v1985, 0
    %vm1991 = vcmp.ge.s32.totalorder %v1986, 0
    %vm1992 = vcmp.ge.s32.totalorder %v1987, 0
    %vm1993 = vcmp.ge.s32.totalorder %v1988, 0
    %vm1994 = vcmp.lt.s32.totalorder %v1985, 16
    %vm1995 = vcmp.lt.s32.totalorder %v1986, 16
    %vm1996 = vcmp.lt.s32.totalorder %v1987, 16
    %vm1997 = vcmp.lt.s32.totalorder %v1988, 16
    %vm1998 = vmand %vm1990, %vm1994
    %vm1999 = vmand %vm1991, %vm1995
    %vm2000 = vmand %vm1992, %vm1996
    %vm2001 = vmand %vm1993, %vm1997
    %vm2002 = vcmp.ge.s32.totalorder %v1983, 0
    %vm2003 = vmand %vm1998, %vm2002
    %vm2004 = vmand %vm1999, %vm2002
    %vm2005 = vmand %vm2000, %vm2002
    %vm2006 = vmand %vm2001, %vm2002
    %vm2007 = vcmp.lt.s32.totalorder %v1983, 16
    %vm2008 = vmand %vm2003, %vm2007
    %vm2009 = vmand %vm2004, %vm2007
    %vm2010 = vmand %vm2005, %vm2007
    %vm2011 = vmand %vm2006, %vm2007
    %vm2012 = vcmp.ge.s32.totalorder %v1985, 16
    %vm2013 = vcmp.ge.s32.totalorder %v1986, 16
    %vm2014 = vcmp.ge.s32.totalorder %v1987, 16
    %vm2015 = vcmp.ge.s32.totalorder %v1988, 16
    %vm2016 = vcmp.lt.s32.totalorder %v1985, 32
    %vm2017 = vcmp.lt.s32.totalorder %v1986, 32
    %vm2018 = vcmp.lt.s32.totalorder %v1987, 32
    %vm2019 = vcmp.lt.s32.totalorder %v1988, 32
    %vm2020 = vmand %vm2012, %vm2016
    %vm2021 = vmand %vm2013, %vm2017
    %vm2022 = vmand %vm2014, %vm2018
    %vm2023 = vmand %vm2015, %vm2019
    %vm2024 = vcmp.ge.s32.totalorder %v1983, 16
    %vm2025 = vmand %vm2020, %vm2024
    %vm2026 = vmand %vm2021, %vm2024
    %vm2027 = vmand %vm2022, %vm2024
    %vm2028 = vmand %vm2023, %vm2024
    %vm2029 = vcmp.lt.s32.totalorder %v1983, 32
    %vm2030 = vmand %vm2025, %vm2029
    %vm2031 = vmand %vm2026, %vm2029
    %vm2032 = vmand %vm2027, %vm2029
    %vm2033 = vmand %vm2028, %vm2029
    %vm2034 = vmor %vm2008, %vm2030
    %vm2035 = vmor %vm2009, %vm2031
    %vm2036 = vmor %vm2010, %vm2032
    %vm2037 = vmor %vm2011, %vm2033
    %2038 = vmatprep.subr.mxu0 0.0
    %2039 = vmatpush1.xpose.msra.mxu0 0.0
    %2040 = vmatprep.subr.mxu0 0.0
    %2041 = vmatpush1.xpose.msra.mxu0 0.0
    %2042 = vmatprep.subr.mxu0 0.0
    %2043 = vmatpush1.xpose.msra.mxu0 0.0
    %2044 = vmatprep.subr.mxu0 0.0
    %2045 = vmatpush1.xpose.msra.mxu0 0.0
    %2046 = vmatprep.subr.mxu0 0.0
    %2047 = vmatpush1.xpose.msra.mxu0 0.0
    %2048 = vmatprep.subr.mxu0 0.0
    %2049 = vmatpush1.xpose.msra.mxu0 0.0
    %2050 = vmatprep.subr.mxu0 0.0
    %2051 = vmatpush1.xpose.msra.mxu0 0.0
    %2052 = vmatprep.subr.mxu0 0.0
    %2053 = vmatpush1.xpose.msra.mxu0 0.0
    %2054 = vmatprep.subr.mxu0 0.0
    %2055 = vmatpush1.xpose.msra.mxu0 0.0
    %2056 = vmatprep.subr.mxu0 0.0
    %2057 = vmatpush1.xpose.msra.mxu0 0.0
    %2058 = vmatprep.subr.mxu0 0.0
    %2059 = vmatpush1.xpose.msra.mxu0 0.0
    %2060 = vmatprep.subr.mxu0 0.0
    %2061 = vmatpush1.xpose.msra.mxu0 0.0
    %2062 = vmatprep.subr.mxu0 0.0
    %2063 = vmatpush1.xpose.msra.mxu0 %v1981
    %2064 = vmatprep.subr.mxu0 0.0
    %2065 = vmatpush1.xpose.msra.mxu0 %v1980
    %2066 = vmatprep.subr.mxu0 0.0
    %2067 = vmatpush1.xpose.msra.mxu0 %v1979
    %2068 = vmatprep.subr.mxu0 0.0
    %2069 = vmatpush1.xpose.msra.mxu0 %v1978
    %2070 = vmatprep.subr.mxu0 0.0
    %2071 = vmatpush2.xpose.msra.mxu0 0.0
    %2072 = vmatprep.subr.mxu0 0.0
    %2073 = vmatpush2.xpose.msra.mxu0 0.0
    %2074 = vmatprep.subr.mxu0 0.0
    %2075 = vmatpush2.xpose.msra.mxu0 0.0
    %2076 = vmatprep.subr.mxu0 0.0
    %2077 = vmatpush2.xpose.msra.mxu0 0.0
    %2078 = vmatprep.subr.mxu0 0.0
    %2079 = vmatpush2.xpose.msra.mxu0 0.0
    %2080 = vmatprep.subr.mxu0 0.0
    %2081 = vmatpush2.xpose.msra.mxu0 0.0
    %2082 = vmatprep.subr.mxu0 0.0
    %2083 = vmatpush2.xpose.msra.mxu0 0.0
    %2084 = vmatprep.subr.mxu0 0.0
    %2085 = vmatpush2.xpose.msra.mxu0 0.0
    %2086 = vmatprep.subr.mxu0 0.0
    %2087 = vmatpush2.xpose.msra.mxu0 0.0
    %2088 = vmatprep.subr.mxu0 0.0
    %2089 = vmatpush2.xpose.msra.mxu0 0.0
    %2090 = vmatprep.subr.mxu0 0.0
    %2091 = vmatpush2.xpose.msra.mxu0 0.0
    %2092 = vmatprep.subr.mxu0 0.0
    %2093 = vmatpush2.xpose.msra.mxu0 0.0
    %2094 = vmatprep.subr.mxu0 0.0
    %2095 = vmatpush2.xpose.msra.mxu0 0.0
    %2096 = vmatprep.subr.mxu0 0.0
    %2097 = vmatpush2.xpose.msra.mxu0 0.0
    %2098 = vmatprep.subr.mxu0 0.0
    %2099 = vmatpush2.xpose.msra.mxu0 0.0
    %2100 = vmatprep.subr.mxu0 0.0
    %2101 = vmatpush2.xpose.msra.mxu0 0.0
    %2102 = vmatprep.mubr.f32.mxu0 0.0
    %2103 = vmatmul.mubr.f32.gmra.mxu0 %v1978
    %v2104 = vpop.f32.mrf.mxu0
    %v2105 = vadd.f32 0.0, %v2104
    %v2106 = vpop.f32.mrf.mxu0
    %2107 = vmatprep.mubr.f32.mxu0 0.0
    %2108 = vmatmul.mubr.f32.gmra.mxu0 %v1979
    %v2109 = vpop.f32.mrf.mxu0
    %v2110 = vadd.f32 0.0, %v2109
    %v2111 = vpop.f32.mrf.mxu0
    %2112 = vmatprep.mubr.f32.mxu0 0.0
    %2113 = vmatmul.mubr.f32.gmra.mxu0 %v1980
    %v2114 = vpop.f32.mrf.mxu0
    %v2115 = vadd.f32 0.0, %v2114
    %v2116 = vpop.f32.mrf.mxu0
    %2117 = vmatprep.mubr.f32.mxu0 0.0
    %2118 = vmatmul.mubr.f32.gmra.mxu0 %v1981
    %v2119 = vpop.f32.mrf.mxu0
    %v2120 = vadd.f32 0.0, %v2119
    %v2121 = vpop.f32.mrf.mxu0
    %2122 = vdwg.mxu0
    %v2123 = vsel %vm2034, %v2105, -inf
    %v2124 = vsel %vm2035, %v2110, -inf
    %v2125 = vsel %vm2036, %v2115, -inf
    %v2126 = vsel %vm2037, %v2120, -inf
    %v2127 = vsel %vm1172, %v2123, -inf
    %2128 = vmax.xlane.f32.xlu0 %v2127
    %v2129 = vpop.xlane.xlu0 %2128
    %v2130 = vsel %vm1172, %v2124, -inf
    %2131 = vmax.xlane.f32.xlu0 %v2130
    %v2132 = vpop.xlane.xlu0 %2131
    %v2133 = vsel %vm1172, %v2125, -inf
    %2134 = vmax.xlane.f32.xlu0 %v2133
    %v2135 = vpop.xlane.xlu0 %2134
    %v2136 = vsel %vm1172, %v2126, -inf
    %2137 = vmax.xlane.f32.xlu0 %v2136
    %v2138 = vpop.xlane.xlu0 %2137
    %vm2139 = vcmp.ge.f32.partialorder %v2123, %v2129
    %vm2140 = vcmp.ge.f32.partialorder %v2124, %v2132
    %vm2141 = vcmp.ge.f32.partialorder %v2125, %v2135
    %vm2142 = vcmp.ge.f32.partialorder %v2126, %v2138
    %v2143 = vsel %vm2139, %v1989, 32.0
    %v2144 = vsel %vm2140, %v1989, 32.0
    %v2145 = vsel %vm2141, %v1989, 32.0
    %v2146 = vsel %vm2142, %v1989, 32.0
    %v2147 = vsel %vm1172, %v2143, inf
    %2148 = vmin.xlane.f32.xlu0 %v2147
    %v2149 = vpop.xlane.xlu0 %2148
    %v2150 = vsel %vm1172, %v2144, inf
    %2151 = vmin.xlane.f32.xlu0 %v2150
    %v2152 = vpop.xlane.xlu0 %2151
    %v2153 = vsel %vm1172, %v2145, inf
    %2154 = vmin.xlane.f32.xlu0 %v2153
    %v2155 = vpop.xlane.xlu0 %2154
    %v2156 = vsel %vm1172, %v2146, inf
    %2157 = vmin.xlane.f32.xlu0 %v2156
    %v2158 = vpop.xlane.xlu0 %2157
    %vm2159 = vcmp.eq.f32.partialorder %v1989, %v2149
    %vm2160 = vcmp.eq.f32.partialorder %v1989, %v2152
    %vm2161 = vcmp.eq.f32.partialorder %v1989, %v2155
    %vm2162 = vcmp.eq.f32.partialorder %v1989, %v2158
    %v2163 = vsel %vm2159, 1, 0
    %v2164 = vsel %vm2160, 1, 0
    %v2165 = vsel %vm2161, 1, 0
    %v2166 = vsel %vm2162, 1, 0
    %v2167 = vcvt.s32.f32 %v2163
    %v2168 = vcvt.s32.f32 %v2164
    %v2169 = vcvt.s32.f32 %v2165
    %v2170 = vcvt.s32.f32 %v2166
    %v2171 = vsel %vm2159, -inf, %v2123
    %v2172 = vsel %vm2160, -inf, %v2124
    %v2173 = vsel %vm2161, -inf, %v2125
    %v2174 = vsel %vm2162, -inf, %v2126
    %v2175 = vsel %vm1172, %v2171, -inf
    %2176 = vmax.xlane.f32.xlu0 %v2175
    %v2177 = vpop.xlane.xlu0 %2176
    %v2178 = vsel %vm1172, %v2172, -inf
    %2179 = vmax.xlane.f32.xlu0 %v2178
    %v2180 = vpop.xlane.xlu0 %2179
    %v2181 = vsel %vm1172, %v2173, -inf
    %2182 = vmax.xlane.f32.xlu0 %v2181
    %v2183 = vpop.xlane.xlu0 %2182
    %v2184 = vsel %vm1172, %v2174, -inf
    %2185 = vmax.xlane.f32.xlu0 %v2184
    %v2186 = vpop.xlane.xlu0 %2185
    %vm2187 = vcmp.ge.f32.partialorder %v2171, %v2177
    %vm2188 = vcmp.ge.f32.partialorder %v2172, %v2180
    %vm2189 = vcmp.ge.f32.partialorder %v2173, %v2183
    %vm2190 = vcmp.ge.f32.partialorder %v2174, %v2186
    %v2191 = vsel %vm2187, %v1989, 32.0
    %v2192 = vsel %vm2188, %v1989, 32.0
    %v2193 = vsel %vm2189, %v1989, 32.0
    %v2194 = vsel %vm2190, %v1989, 32.0
    %v2195 = vsel %vm1172, %v2191, inf
    %2196 = vmin.xlane.f32.xlu0 %v2195
    %v2197 = vpop.xlane.xlu0 %2196
    %v2198 = vsel %vm1172, %v2192, inf
    %2199 = vmin.xlane.f32.xlu0 %v2198
    %v2200 = vpop.xlane.xlu0 %2199
    %v2201 = vsel %vm1172, %v2193, inf
    %2202 = vmin.xlane.f32.xlu0 %v2201
    %v2203 = vpop.xlane.xlu0 %2202
    %v2204 = vsel %vm1172, %v2194, inf
    %2205 = vmin.xlane.f32.xlu0 %v2204
    %v2206 = vpop.xlane.xlu0 %2205
    %vm2207 = vcmp.eq.f32.partialorder %v1989, %v2197
    %vm2208 = vcmp.eq.f32.partialorder %v1989, %v2200
    %vm2209 = vcmp.eq.f32.partialorder %v1989, %v2203
    %vm2210 = vcmp.eq.f32.partialorder %v1989, %v2206
    %v2211 = vsel %vm2207, 1, 0
    %v2212 = vsel %vm2208, 1, 0
    %v2213 = vsel %vm2209, 1, 0
    %v2214 = vsel %vm2210, 1, 0
    %v2215 = vcvt.s32.f32 %v2211
    %v2216 = vcvt.s32.f32 %v2212
    %v2217 = vcvt.s32.f32 %v2213
    %v2218 = vcvt.s32.f32 %v2214
    %v2219 = vsel %vm2207, -inf, %v2171
    %v2220 = vsel %vm2208, -inf, %v2172
    %v2221 = vsel %vm2209, -inf, %v2173
    %v2222 = vsel %vm2210, -inf, %v2174
    %v2223 = vsel %vm1172, %v2219, -inf
    %2224 = vmax.xlane.f32.xlu0 %v2223
    %v2225 = vpop.xlane.xlu0 %2224
    %v2226 = vsel %vm1172, %v2220, -inf
    %2227 = vmax.xlane.f32.xlu0 %v2226
    %v2228 = vpop.xlane.xlu0 %2227
    %v2229 = vsel %vm1172, %v2221, -inf
    %2230 = vmax.xlane.f32.xlu0 %v2229
    %v2231 = vpop.xlane.xlu0 %2230
    %v2232 = vsel %vm1172, %v2222, -inf
    %2233 = vmax.xlane.f32.xlu0 %v2232
    %v2234 = vpop.xlane.xlu0 %2233
    %vm2235 = vcmp.ge.f32.partialorder %v2219, %v2225
    %vm2236 = vcmp.ge.f32.partialorder %v2220, %v2228
    %vm2237 = vcmp.ge.f32.partialorder %v2221, %v2231
    %vm2238 = vcmp.ge.f32.partialorder %v2222, %v2234
    %v2239 = vsel %vm2235, %v1989, 32.0
    %v2240 = vsel %vm2236, %v1989, 32.0
    %v2241 = vsel %vm2237, %v1989, 32.0
    %v2242 = vsel %vm2238, %v1989, 32.0
    %v2243 = vsel %vm1172, %v2239, inf
    %2244 = vmin.xlane.f32.xlu0 %v2243
    %v2245 = vpop.xlane.xlu0 %2244
    %v2246 = vsel %vm1172, %v2240, inf
    %2247 = vmin.xlane.f32.xlu0 %v2246
    %v2248 = vpop.xlane.xlu0 %2247
    %v2249 = vsel %vm1172, %v2241, inf
    %2250 = vmin.xlane.f32.xlu0 %v2249
    %v2251 = vpop.xlane.xlu0 %2250
    %v2252 = vsel %vm1172, %v2242, inf
    %2253 = vmin.xlane.f32.xlu0 %v2252
    %v2254 = vpop.xlane.xlu0 %2253
    %vm2255 = vcmp.eq.f32.partialorder %v1989, %v2245
    %vm2256 = vcmp.eq.f32.partialorder %v1989, %v2248
    %vm2257 = vcmp.eq.f32.partialorder %v1989, %v2251
    %vm2258 = vcmp.eq.f32.partialorder %v1989, %v2254
    %v2259 = vsel %vm2255, 1, 0
    %v2260 = vsel %vm2256, 1, 0
    %v2261 = vsel %vm2257, 1, 0
    %v2262 = vsel %vm2258, 1, 0
    %v2263 = vcvt.s32.f32 %v2259
    %v2264 = vcvt.s32.f32 %v2260
    %v2265 = vcvt.s32.f32 %v2261
    %v2266 = vcvt.s32.f32 %v2262
    %v2267 = vsel %vm2255, -inf, %v2219
    %v2268 = vsel %vm2256, -inf, %v2220
    %v2269 = vsel %vm2257, -inf, %v2221
    %v2270 = vsel %vm2258, -inf, %v2222
    %v2271 = vsel %vm1172, %v2267, -inf
    %2272 = vmax.xlane.f32.xlu0 %v2271
    %v2273 = vpop.xlane.xlu0 %2272
    %v2274 = vsel %vm1172, %v2268, -inf
    %2275 = vmax.xlane.f32.xlu0 %v2274
    %v2276 = vpop.xlane.xlu0 %2275
    %v2277 = vsel %vm1172, %v2269, -inf
    %2278 = vmax.xlane.f32.xlu0 %v2277
    %v2279 = vpop.xlane.xlu0 %2278
    %v2280 = vsel %vm1172, %v2270, -inf
    %2281 = vmax.xlane.f32.xlu0 %v2280
    %v2282 = vpop.xlane.xlu0 %2281
    %vm2283 = vcmp.ge.f32.partialorder %v2267, %v2273
    %vm2284 = vcmp.ge.f32.partialorder %v2268, %v2276
    %vm2285 = vcmp.ge.f32.partialorder %v2269, %v2279
    %vm2286 = vcmp.ge.f32.partialorder %v2270, %v2282
    %v2287 = vsel %vm2283, %v1989, 32.0
    %v2288 = vsel %vm2284, %v1989, 32.0
    %v2289 = vsel %vm2285, %v1989, 32.0
    %v2290 = vsel %vm2286, %v1989, 32.0
    %v2291 = vsel %vm1172, %v2287, inf
    %2292 = vmin.xlane.f32.xlu0 %v2291
    %v2293 = vpop.xlane.xlu0 %2292
    %v2294 = vsel %vm1172, %v2288, inf
    %2295 = vmin.xlane.f32.xlu0 %v2294
    %v2296 = vpop.xlane.xlu0 %2295
    %v2297 = vsel %vm1172, %v2289, inf
    %2298 = vmin.xlane.f32.xlu0 %v2297
    %v2299 = vpop.xlane.xlu0 %2298
    %v2300 = vsel %vm1172, %v2290, inf
    %2301 = vmin.xlane.f32.xlu0 %v2300
    %v2302 = vpop.xlane.xlu0 %2301
    %vm2303 = vcmp.eq.f32.partialorder %v1989, %v2293
    %vm2304 = vcmp.eq.f32.partialorder %v1989, %v2296
    %vm2305 = vcmp.eq.f32.partialorder %v1989, %v2299
    %vm2306 = vcmp.eq.f32.partialorder %v1989, %v2302
    %v2307 = vsel %vm2303, 1, 0
    %v2308 = vsel %vm2304, 1, 0
    %v2309 = vsel %vm2305, 1, 0
    %v2310 = vsel %vm2306, 1, 0
    %v2311 = vcvt.s32.f32 %v2307
    %v2312 = vcvt.s32.f32 %v2308
    %v2313 = vcvt.s32.f32 %v2309
    %v2314 = vcvt.s32.f32 %v2310
    %v2315 = vld [vmem:[%s41] sm:$0xff]
    %v2316 = vld [vmem:[%s41 + $0x8] sm:$0xff]
    %v2317 = vld [vmem:[%s41 + $0x10] sm:$0xff]
    %v2318 = vld [vmem:[%s41 + $0x18] sm:$0xff]
    %v2319 = vld [vmem:[%s41 + $0x20] sm:$0xff]
    %v2320 = vld [vmem:[%s41 + $0x28] sm:$0xff]
    %v2321 = vld [vmem:[%s41 + $0x30] sm:$0xff]
    %v2322 = vld [vmem:[%s41 + $0x38] sm:$0xff]
    %v2323 = vld [vmem:[%s41 + $0x40] sm:$0xff]
    %v2324 = vld [vmem:[%s41 + $0x48] sm:$0xff]
    %v2325 = vld [vmem:[%s41 + $0x50] sm:$0xff]
    %v2326 = vld [vmem:[%s41 + $0x58] sm:$0xff]
    %v2327 = vld [vmem:[%s41 + $0x60] sm:$0xff]
    %v2328 = vld [vmem:[%s41 + $0x68] sm:$0xff]
    %v2329 = vld [vmem:[%s41 + $0x70] sm:$0xff]
    %v2330 = vld [vmem:[%s41 + $0x78] sm:$0xff]
    %v2331 = vld [vmem:[#allocation8] sm:$0x1]
    %v2333 = vlaneseq
    %v2334 = vshrl.u32 %v2333, 7
    %v2335 = vsub.s32 0, %v2334
    %v2336 = vrot.slane %v2331, %v2335
    %2338 = vmatprep.subr.mxu0 0.0
    %2339 = vmatpush1.msra.mxu0 %v2330
    %2340 = vmatprep.subr.mxu0 0.0
    %2341 = vmatpush1.msra.mxu0 %v2329
    %2342 = vmatprep.subr.mxu0 0.0
    %2343 = vmatpush1.msra.mxu0 %v2328
    %2344 = vmatprep.subr.mxu0 0.0
    %2345 = vmatpush1.msra.mxu0 %v2327
    %2346 = vmatprep.subr.mxu0 0.0
    %2347 = vmatpush1.msra.mxu0 %v2326
    %2348 = vmatprep.subr.mxu0 0.0
    %2349 = vmatpush1.msra.mxu0 %v2325
    %2350 = vmatprep.subr.mxu0 0.0
    %2351 = vmatpush1.msra.mxu0 %v2324
    %2352 = vmatprep.subr.mxu0 0.0
    %2353 = vmatpush1.msra.mxu0 %v2323
    %2354 = vmatprep.subr.mxu0 0.0
    %2355 = vmatpush1.msra.mxu0 %v2322
    %2356 = vmatprep.subr.mxu0 0.0
    %2357 = vmatpush1.msra.mxu0 %v2321
    %2358 = vmatprep.subr.mxu0 0.0
    %2359 = vmatpush1.msra.mxu0 %v2320
    %2360 = vmatprep.subr.mxu0 0.0
    %2361 = vmatpush1.msra.mxu0 %v2319
    %2362 = vmatprep.subr.mxu0 0.0
    %2363 = vmatpush1.msra.mxu0 %v2318
    %2364 = vmatprep.subr.mxu0 0.0
    %2365 = vmatpush1.msra.mxu0 %v2317
    %2366 = vmatprep.subr.mxu0 0.0
    %2367 = vmatpush1.msra.mxu0 %v2316
    %2368 = vmatprep.subr.mxu0 0.0
    %2369 = vmatpush1.msra.mxu0 %v2315
    %2370 = vmatprep.subr.mxu0 0.0
    %2371 = vmatpush2.msra.mxu0 0.0
    %2372 = vmatprep.subr.mxu0 0.0
    %2373 = vmatpush2.msra.mxu0 0.0
    %2374 = vmatprep.subr.mxu0 0.0
    %2375 = vmatpush2.msra.mxu0 0.0
    %2376 = vmatprep.subr.mxu0 0.0
    %2377 = vmatpush2.msra.mxu0 0.0
    %2378 = vmatprep.subr.mxu0 0.0
    %2379 = vmatpush2.msra.mxu0 0.0
    %2380 = vmatprep.subr.mxu0 0.0
    %2381 = vmatpush2.msra.mxu0 0.0
    %2382 = vmatprep.subr.mxu0 0.0
    %2383 = vmatpush2.msra.mxu0 0.0
    %2384 = vmatprep.subr.mxu0 0.0
    %2385 = vmatpush2.msra.mxu0 0.0
    %2386 = vmatprep.subr.mxu0 0.0
    %2387 = vmatpush2.msra.mxu0 0.0
    %2388 = vmatprep.subr.mxu0 0.0
    %2389 = vmatpush2.msra.mxu0 0.0
    %2390 = vmatprep.subr.mxu0 0.0
    %2391 = vmatpush2.msra.mxu0 0.0
    %2392 = vmatprep.subr.mxu0 0.0
    %2393 = vmatpush2.msra.mxu0 0.0
    %2394 = vmatprep.subr.mxu0 0.0
    %2395 = vmatpush2.msra.mxu0 0.0
    %2396 = vmatprep.subr.mxu0 0.0
    %2397 = vmatpush2.msra.mxu0 0.0
    %2398 = vmatprep.subr.mxu0 0.0
    %2399 = vmatpush2.msra.mxu0 0.0
    %2400 = vmatprep.subr.mxu0 0.0
    %2401 = vmatpush2.msra.mxu0 0.0
    %2402 = vmatprep.mubr.f32.mxu0 0.0
    %2403 = vmatmul.mubr.f32.gmra.mxu0 %v1978
    %v2404 = vpop.f32.mrf.mxu0
    %v2405 = vadd.f32 %v2336, %v2404
    %v2406 = vpop.f32.mrf.mxu0
    %2407 = vmatprep.mubr.f32.mxu0 0.0
    %2408 = vmatmul.mubr.f32.gmra.mxu0 %v1979
    %v2409 = vpop.f32.mrf.mxu0
    %v2410 = vadd.f32 %v2336, %v2409
    %v2411 = vpop.f32.mrf.mxu0
    %2412 = vmatprep.mubr.f32.mxu0 0.0
    %2413 = vmatmul.mubr.f32.gmra.mxu0 %v1980
    %v2414 = vpop.f32.mrf.mxu0
    %v2415 = vadd.f32 %v2336, %v2414
    %v2416 = vpop.f32.mrf.mxu0
    %2417 = vmatprep.mubr.f32.mxu0 0.0
    %2418 = vmatmul.mubr.f32.gmra.mxu0 %v1981
    %v2419 = vpop.f32.mrf.mxu0
    %v2420 = vadd.f32 %v2336, %v2419
    %v2421 = vpop.f32.mrf.mxu0
    %2422 = vdwg.mxu0
    %v2423 = vmul.f32 %v2405, 0.5
    %v2424 = vmul.f32 %v2410, 0.5
    %v2425 = vmul.f32 %v2415, 0.5
    %v2426 = vmul.f32 %v2420, 0.5
    %v2427 = vmul.f32 %v2405, 0.70710677
    %v2428 = vmul.f32 %v2410, 0.70710677
    %v2429 = vmul.f32 %v2415, 0.70710677
    %v2430 = vmul.f32 %v2420, 0.70710677
    %vm2431 = vcmp.lt.f32.partialorder %v2427, 0.0
    %vm2432 = vcmp.lt.f32.partialorder %v2428, 0.0
    %vm2433 = vcmp.lt.f32.partialorder %v2429, 0.0
    %vm2434 = vcmp.lt.f32.partialorder %v2430, 0.0
    %v2435 = vsel %vm2431, -1.0, 1.0
    %v2436 = vsel %vm2432, -1.0, 1.0
    %v2437 = vsel %vm2433, -1.0, 1.0
    %v2438 = vsel %vm2434, -1.0, 1.0
    %v2439 = vand.u32 2147483647, %v2427
    %v2440 = vand.u32 2147483647, %v2428
    %v2441 = vand.u32 2147483647, %v2429
    %v2442 = vand.u32 2147483647, %v2430
    %v2443 = vmul.f32 %v2439, 0.3275911
    %v2444 = vmul.f32 %v2440, 0.3275911
    %v2445 = vmul.f32 %v2441, 0.3275911
    %v2446 = vmul.f32 %v2442, 0.3275911
    %v2447 = vadd.f32 %v2443, 1.0
    %v2448 = vadd.f32 %v2444, 1.0
    %v2449 = vadd.f32 %v2445, 1.0
    %v2450 = vadd.f32 %v2446, 1.0
    %v2451 = vrcp.pop %v2447
    %v2452 = vrcp.pop %v2448
    %v2453 = vrcp.pop %v2449
    %v2454 = vrcp.pop %v2450
    %v2455 = vmul.f32 %v2451, 1.0614054
    %v2456 = vmul.f32 %v2452, 1.0614054
    %v2457 = vmul.f32 %v2453, 1.0614054
    %v2458 = vmul.f32 %v2454, 1.0614054
    %v2459 = vadd.f32 %v2455, -1.4531521
    %v2460 = vadd.f32 %v2456, -1.4531521
    %v2461 = vadd.f32 %v2457, -1.4531521
    %v2462 = vadd.f32 %v2458, -1.4531521
    %v2463 = vmul.f32 %v2459, %v2451
    %v2464 = vmul.f32 %v2460, %v2452
    %v2465 = vmul.f32 %v2461, %v2453
    %v2466 = vmul.f32 %v2462, %v2454
    %v2467 = vadd.f32 %v2463, 1.4214138
    %v2468 = vadd.f32 %v2464, 1.4214138
    %v2469 = vadd.f32 %v2465, 1.4214138
    %v2470 = vadd.f32 %v2466, 1.4214138
    %v2471 = vmul.f32 %v2467, %v2451
    %v2472 = vmul.f32 %v2468, %v2452
    %v2473 = vmul.f32 %v2469, %v2453
    %v2474 = vmul.f32 %v2470, %v2454
    %v2475 = vadd.f32 %v2471, -0.28449672
    %v2476 = vadd.f32 %v2472, -0.28449672
    %v2477 = vadd.f32 %v2473, -0.28449672
    %v2478 = vadd.f32 %v2474, -0.28449672
    %v2479 = vmul.f32 %v2475, %v2451
    %v2480 = vmul.f32 %v2476, %v2452
    %v2481 = vmul.f32 %v2477, %v2453
    %v2482 = vmul.f32 %v2478, %v2454
    %v2483 = vadd.f32 %v2479, 0.2548296
    %v2484 = vadd.f32 %v2480, 0.2548296
    %v2485 = vadd.f32 %v2481, 0.2548296
    %v2486 = vadd.f32 %v2482, 0.2548296
    %v2487 = vmul.f32 %v2483, %v2451
    %v2488 = vmul.f32 %v2484, %v2452
    %v2489 = vmul.f32 %v2485, %v2453
    %v2490 = vmul.f32 %v2486, %v2454
    %v2491 = vsub.f32 0.0, %v2439
    %v2492 = vsub.f32 0.0, %v2440
    %v2493 = vsub.f32 0.0, %v2441
    %v2494 = vsub.f32 0.0, %v2442
    %v2495 = vmul.f32 %v2491, %v2439
    %v2496 = vmul.f32 %v2492, %v2440
    %v2497 = vmul.f32 %v2493, %v2441
    %v2498 = vmul.f32 %v2494, %v2442
    %v2499 = vmul.f32 %v2495, 1.442695
    %v2500 = vpow.pop %v2499
    %v2501 = vmul.f32 %v2496, 1.442695
    %v2502 = vpow.pop %v2501
    %v2503 = vmul.f32 %v2497, 1.442695
    %v2504 = vpow.pop %v2503
    %v2505 = vmul.f32 %v2498, 1.442695
    %v2506 = vpow.pop %v2505
    %v2507 = vmul.f32 %v2487, %v2500
    %v2508 = vmul.f32 %v2488, %v2502
    %v2509 = vmul.f32 %v2489, %v2504
    %v2510 = vmul.f32 %v2490, %v2506
    %v2511 = vsub.f32 1.0, %v2507
    %v2512 = vsub.f32 1.0, %v2508
    %v2513 = vsub.f32 1.0, %v2509
    %v2514 = vsub.f32 1.0, %v2510
    %v2515 = vmul.f32 %v2435, %v2511
    %v2516 = vmul.f32 %v2436, %v2512
    %v2517 = vmul.f32 %v2437, %v2513
    %v2518 = vmul.f32 %v2438, %v2514
    %v2519 = vadd.f32 %v2515, 1.0
    %v2520 = vadd.f32 %v2516, 1.0
    %v2521 = vadd.f32 %v2517, 1.0
    %v2522 = vadd.f32 %v2518, 1.0
    %v2523 = vmul.f32 %v2423, %v2519
    %v2524 = vmul.f32 %v2424, %v2520
    %v2525 = vmul.f32 %v2425, %v2521
    %v2526 = vmul.f32 %v2426, %v2522
    %v2527 = vld [vmem:[%s45] sm:$0xff]
    %v2528 = vld [vmem:[%s45 + $0x8] sm:$0xff]
    %v2529 = vld [vmem:[%s45 + $0x10] sm:$0xff]
    %v2530 = vld [vmem:[%s45 + $0x18] sm:$0xff]
    %v2531 = vld [vmem:[%s45 + $0x20] sm:$0xff]
    %v2532 = vld [vmem:[%s45 + $0x28] sm:$0xff]
    %v2533 = vld [vmem:[%s45 + $0x30] sm:$0xff]
    %v2534 = vld [vmem:[%s45 + $0x38] sm:$0xff]
    %v2535 = vld [vmem:[%s45 + $0x40] sm:$0xff]
    %v2536 = vld [vmem:[%s45 + $0x48] sm:$0xff]
    %v2537 = vld [vmem:[%s45 + $0x50] sm:$0xff]
    %v2538 = vld [vmem:[%s45 + $0x58] sm:$0xff]
    %v2539 = vld [vmem:[%s45 + $0x60] sm:$0xff]
    %v2540 = vld [vmem:[%s45 + $0x68] sm:$0xff]
    %v2541 = vld [vmem:[%s45 + $0x70] sm:$0xff]
    %v2542 = vld [vmem:[%s45 + $0x78] sm:$0xff]
    %v2543 = vld [vmem:[#allocation10] sm:$0x1]
    %v2545 = vlaneseq
    %v2546 = vshrl.u32 %v2545, 7
    %v2547 = vsub.s32 0, %v2546
    %v2548 = vrot.slane %v2543, %v2547
    %2550 = vmatprep.subr.mxu0 0.0
    %2551 = vmatpush1.msra.mxu0 %v2542
    %2552 = vmatprep.subr.mxu0 0.0
    %2553 = vmatpush1.msra.mxu0 %v2541
    %2554 = vmatprep.subr.mxu0 0.0
    %2555 = vmatpush1.msra.mxu0 %v2540
    %2556 = vmatprep.subr.mxu0 0.0
    %2557 = vmatpush1.msra.mxu0 %v2539
    %2558 = vmatprep.subr.mxu0 0.0
    %2559 = vmatpush1.msra.mxu0 %v2538
    %2560 = vmatprep.subr.mxu0 0.0
    %2561 = vmatpush1.msra.mxu0 %v2537
    %2562 = vmatprep.subr.mxu0 0.0
    %2563 = vmatpush1.msra.mxu0 %v2536
    %2564 = vmatprep.subr.mxu0 0.0
    %2565 = vmatpush1.msra.mxu0 %v2535
    %2566 = vmatprep.subr.mxu0 0.0
    %2567 = vmatpush1.msra.mxu0 %v2534
    %2568 = vmatprep.subr.mxu0 0.0
    %2569 = vmatpush1.msra.mxu0 %v2533
    %2570 = vmatprep.subr.mxu0 0.0
    %2571 = vmatpush1.msra.mxu0 %v2532
    %2572 = vmatprep.subr.mxu0 0.0
    %2573 = vmatpush1.msra.mxu0 %v2531
    %2574 = vmatprep.subr.mxu0 0.0
    %2575 = vmatpush1.msra.mxu0 %v2530
    %2576 = vmatprep.subr.mxu0 0.0
    %2577 = vmatpush1.msra.mxu0 %v2529
    %2578 = vmatprep.subr.mxu0 0.0
    %2579 = vmatpush1.msra.mxu0 %v2528
    %2580 = vmatprep.subr.mxu0 0.0
    %2581 = vmatpush1.msra.mxu0 %v2527
    %2582 = vmatprep.subr.mxu0 0.0
    %2583 = vmatpush2.msra.mxu0 0.0
    %2584 = vmatprep.subr.mxu0 0.0
    %2585 = vmatpush2.msra.mxu0 0.0
    %2586 = vmatprep.subr.mxu0 0.0
    %2587 = vmatpush2.msra.mxu0 0.0
    %2588 = vmatprep.subr.mxu0 0.0
    %2589 = vmatpush2.msra.mxu0 0.0
    %2590 = vmatprep.subr.mxu0 0.0
    %2591 = vmatpush2.msra.mxu0 0.0
    %2592 = vmatprep.subr.mxu0 0.0
    %2593 = vmatpush2.msra.mxu0 0.0
    %2594 = vmatprep.subr.mxu0 0.0
    %2595 = vmatpush2.msra.mxu0 0.0
    %2596 = vmatprep.subr.mxu0 0.0
    %2597 = vmatpush2.msra.mxu0 0.0
    %2598 = vmatprep.subr.mxu0 0.0
    %2599 = vmatpush2.msra.mxu0 0.0
    %2600 = vmatprep.subr.mxu0 0.0
    %2601 = vmatpush2.msra.mxu0 0.0
    %2602 = vmatprep.subr.mxu0 0.0
    %2603 = vmatpush2.msra.mxu0 0.0
    %2604 = vmatprep.subr.mxu0 0.0
    %2605 = vmatpush2.msra.mxu0 0.0
    %2606 = vmatprep.subr.mxu0 0.0
    %2607 = vmatpush2.msra.mxu0 0.0
    %2608 = vmatprep.subr.mxu0 0.0
    %2609 = vmatpush2.msra.mxu0 0.0
    %2610 = vmatprep.subr.mxu0 0.0
    %2611 = vmatpush2.msra.mxu0 0.0
    %2612 = vmatprep.subr.mxu0 0.0
    %2613 = vmatpush2.msra.mxu0 0.0
    %2614 = vmatprep.mubr.f32.mxu0 0.0
    %2615 = vmatmul.mubr.f32.gmra.mxu0 %v2523
    %v2616 = vpop.f32.mrf.mxu0
    %v2617 = vadd.f32 %v2548, %v2616
    %v2618 = vpop.f32.mrf.mxu0
    %2619 = vmatprep.mubr.f32.mxu0 0.0
    %2620 = vmatmul.mubr.f32.gmra.mxu0 %v2524
    %v2621 = vpop.f32.mrf.mxu0
    %v2622 = vadd.f32 %v2548, %v2621
    %v2623 = vpop.f32.mrf.mxu0
    %2624 = vmatprep.mubr.f32.mxu0 0.0
    %2625 = vmatmul.mubr.f32.gmra.mxu0 %v2525
    %v2626 = vpop.f32.mrf.mxu0
    %v2627 = vadd.f32 %v2548, %v2626
    %v2628 = vpop.f32.mrf.mxu0
    %2629 = vmatprep.mubr.f32.mxu0 0.0
    %2630 = vmatmul.mubr.f32.gmra.mxu0 %v2526
    %v2631 = vpop.f32.mrf.mxu0
    %v2632 = vadd.f32 %v2548, %v2631
    %v2633 = vpop.f32.mrf.mxu0
    %2634 = vdwg.mxu0
    %v2636 = vsel %vm1172, %v2167, 0
    %v2639 = vsel %vm1172, %v2168, 0
    %v2642 = vsel %vm1172, %v2169, 0
    %v2645 = vsel %vm1172, %v2170, 0
    %v2648 = vsel %vm1172, %v2215, 0
    %v2651 = vsel %vm1172, %v2216, 0
    %v2654 = vsel %vm1172, %v2217, 0
    %v2657 = vsel %vm1172, %v2218, 0
    %v2660 = vsel %vm1172, %v2263, 0
    %v2663 = vsel %vm1172, %v2264, 0
    %v2666 = vsel %vm1172, %v2265, 0
    %v2669 = vsel %vm1172, %v2266, 0
    %v2672 = vsel %vm1172, %v2311, 0
    %v2675 = vsel %vm1172, %v2312, 0
    %v2678 = vsel %vm1172, %v2313, 0
    %v2681 = vsel %vm1172, %v2314, 0
    %2683 = vmatprep.subr.mxu0 0.0
    %2684 = vmatpush1.msra.mxu0 0.0
    %2685 = vmatprep.subr.mxu0 0.0
    %2686 = vmatpush1.msra.mxu0 0.0
    %2687 = vmatprep.subr.mxu0 0.0
    %2688 = vmatpush1.msra.mxu0 0.0
    %2689 = vmatprep.subr.mxu0 0.0
    %2690 = vmatpush1.msra.mxu0 0.0
    %2691 = vmatprep.subr.mxu0 0.0
    %2692 = vmatpush1.msra.mxu0 0.0
    %2693 = vmatprep.subr.mxu0 0.0
    %2694 = vmatpush1.msra.mxu0 0.0
    %2695 = vmatprep.subr.mxu0 0.0
    %2696 = vmatpush1.msra.mxu0 0.0
    %2697 = vmatprep.subr.mxu0 0.0
    %2698 = vmatpush1.msra.mxu0 0.0
    %2699 = vmatprep.subr.mxu0 0.0
    %2700 = vmatpush1.msra.mxu0 0.0
    %2701 = vmatprep.subr.mxu0 0.0
    %2702 = vmatpush1.msra.mxu0 0.0
    %2703 = vmatprep.subr.mxu0 0.0
    %2704 = vmatpush1.msra.mxu0 0.0
    %2705 = vmatprep.subr.mxu0 0.0
    %2706 = vmatpush1.msra.mxu0 0.0
    %2707 = vmatprep.subr.mxu0 0.0
    %2708 = vmatpush1.msra.mxu0 %v2632
    %2709 = vmatprep.subr.mxu0 0.0
    %2710 = vmatpush1.msra.mxu0 %v2627
    %2711 = vmatprep.subr.mxu0 0.0
    %2712 = vmatpush1.msra.mxu0 %v2622
    %2713 = vmatprep.subr.mxu0 0.0
    %2714 = vmatpush1.msra.mxu0 %v2617
    %2715 = vmatprep.subr.mxu0 0.0
    %2716 = vmatpush2.msra.mxu0 0.0
    %2717 = vmatprep.subr.mxu0 0.0
    %2718 = vmatpush2.msra.mxu0 0.0
    %2719 = vmatprep.subr.mxu0 0.0
    %2720 = vmatpush2.msra.mxu0 0.0
    %2721 = vmatprep.subr.mxu0 0.0
    %2722 = vmatpush2.msra.mxu0 0.0
    %2723 = vmatprep.subr.mxu0 0.0
    %2724 = vmatpush2.msra.mxu0 0.0
    %2725 = vmatprep.subr.mxu0 0.0
    %2726 = vmatpush2.msra.mxu0 0.0
    %2727 = vmatprep.subr.mxu0 0.0
    %2728 = vmatpush2.msra.mxu0 0.0
    %2729 = vmatprep.subr.mxu0 0.0
    %2730 = vmatpush2.msra.mxu0 0.0
    %2731 = vmatprep.subr.mxu0 0.0
    %2732 = vmatpush2.msra.mxu0 0.0
    %2733 = vmatprep.subr.mxu0 0.0
    %2734 = vmatpush2.msra.mxu0 0.0
    %2735 = vmatprep.subr.mxu0 0.0
    %2736 = vmatpush2.msra.mxu0 0.0
    %2737 = vmatprep.subr.mxu0 0.0
    %2738 = vmatpush2.msra.mxu0 0.0
    %2739 = vmatprep.subr.mxu0 0.0
    %2740 = vmatpush2.msra.mxu0 0.0
    %2741 = vmatprep.subr.mxu0 0.0
    %2742 = vmatpush2.msra.mxu0 0.0
    %2743 = vmatprep.subr.mxu0 0.0
    %2744 = vmatpush2.msra.mxu0 0.0
    %2745 = vmatprep.subr.mxu0 0.0
    %2746 = vmatpush2.msra.mxu0 0.0
    %2747 = vmatprep.mubr.f32.mxu0 0.0
    %2748 = vmatmul.mubr.f32.gmra.mxu0 %v2636
    %v2749 = vpop.f32.mrf.mxu0
    %v2750 = vadd.f32 0.0, %v2749
    %v2751 = vpop.f32.mrf.mxu0
    %2752 = vmatprep.mubr.f32.mxu0 0.0
    %2753 = vmatmul.mubr.f32.gmra.mxu0 %v2639
    %v2754 = vpop.f32.mrf.mxu0
    %v2755 = vadd.f32 0.0, %v2754
    %v2756 = vpop.f32.mrf.mxu0
    %2757 = vmatprep.mubr.f32.mxu0 0.0
    %2758 = vmatmul.mubr.f32.gmra.mxu0 %v2642
    %v2759 = vpop.f32.mrf.mxu0
    %v2760 = vadd.f32 0.0, %v2759
    %v2761 = vpop.f32.mrf.mxu0
    %2762 = vmatprep.mubr.f32.mxu0 0.0
    %2763 = vmatmul.mubr.f32.gmra.mxu0 %v2645
    %v2764 = vpop.f32.mrf.mxu0
    %v2765 = vadd.f32 0.0, %v2764
    %v2766 = vpop.f32.mrf.mxu0
    %2767 = vmatprep.mubr.f32.mxu0 0.0
    %2768 = vmatmul.mubr.f32.gmra.mxu0 %v2648
    %v2769 = vpop.f32.mrf.mxu0
    %v2770 = vadd.f32 0.0, %v2769
    %v2771 = vpop.f32.mrf.mxu0
    %2772 = vmatprep.mubr.f32.mxu0 0.0
    %2773 = vmatmul.mubr.f32.gmra.mxu0 %v2651
    %v2774 = vpop.f32.mrf.mxu0
    %v2775 = vadd.f32 0.0, %v2774
    %v2776 = vpop.f32.mrf.mxu0
    %2777 = vmatprep.mubr.f32.mxu0 0.0
    %2778 = vmatmul.mubr.f32.gmra.mxu0 %v2654
    %v2779 = vpop.f32.mrf.mxu0
    %v2780 = vadd.f32 0.0, %v2779
    %v2781 = vpop.f32.mrf.mxu0
    %2782 = vmatprep.mubr.f32.mxu0 0.0
    %2783 = vmatmul.mubr.f32.gmra.mxu0 %v2657
    %v2784 = vpop.f32.mrf.mxu0
    %v2785 = vadd.f32 0.0, %v2784
    %v2786 = vpop.f32.mrf.mxu0
    %2787 = vmatprep.mubr.f32.mxu0 0.0
    %2788 = vmatmul.mubr.f32.gmra.mxu0 %v2660
    %v2789 = vpop.f32.mrf.mxu0
    %v2790 = vadd.f32 0.0, %v2789
    %v2791 = vpop.f32.mrf.mxu0
    %2792 = vmatprep.mubr.f32.mxu0 0.0
    %2793 = vmatmul.mubr.f32.gmra.mxu0 %v2663
    %v2794 = vpop.f32.mrf.mxu0
    %v2795 = vadd.f32 0.0, %v2794
    %v2796 = vpop.f32.mrf.mxu0
    %2797 = vmatprep.mubr.f32.mxu0 0.0
    %2798 = vmatmul.mubr.f32.gmra.mxu0 %v2666
    %v2799 = vpop.f32.mrf.mxu0
    %v2800 = vadd.f32 0.0, %v2799
    %v2801 = vpop.f32.mrf.mxu0
    %2802 = vmatprep.mubr.f32.mxu0 0.0
    %2803 = vmatmul.mubr.f32.gmra.mxu0 %v2669
    %v2804 = vpop.f32.mrf.mxu0
    %v2805 = vadd.f32 0.0, %v2804
    %v2806 = vpop.f32.mrf.mxu0
    %2807 = vmatprep.mubr.f32.mxu0 0.0
    %2808 = vmatmul.mubr.f32.gmra.mxu0 %v2672
    %v2809 = vpop.f32.mrf.mxu0
    %v2810 = vadd.f32 0.0, %v2809
    %v2811 = vpop.f32.mrf.mxu0
    %2812 = vmatprep.mubr.f32.mxu0 0.0
    %2813 = vmatmul.mubr.f32.gmra.mxu0 %v2675
    %v2814 = vpop.f32.mrf.mxu0
    %v2815 = vadd.f32 0.0, %v2814
    %v2816 = vpop.f32.mrf.mxu0
    %2817 = vmatprep.mubr.f32.mxu0 0.0
    %2818 = vmatmul.mubr.f32.gmra.mxu0 %v2678
    %v2819 = vpop.f32.mrf.mxu0
    %v2820 = vadd.f32 0.0, %v2819
    %v2821 = vpop.f32.mrf.mxu0
    %2822 = vmatprep.mubr.f32.mxu0 0.0
    %2823 = vmatmul.mubr.f32.gmra.mxu0 %v2681
    %v2824 = vpop.f32.mrf.mxu0
    %v2825 = vadd.f32 0.0, %v2824
    %v2826 = vpop.f32.mrf.mxu0
    %2827 = vdwg.mxu0
    %v2828 = vmax.f32 %v2750, %v2770
    %v2829 = vmax.f32 %v2755, %v2775
    %v2830 = vmax.f32 %v2760, %v2780
    %v2831 = vmax.f32 %v2765, %v2785
    %v2832 = vmax.f32 %v2828, %v2790
    %v2833 = vmax.f32 %v2829, %v2795
    %v2834 = vmax.f32 %v2830, %v2800
    %v2835 = vmax.f32 %v2831, %v2805
    %v2836 = vmax.f32 %v2832, %v2810
    %v2837 = vmax.f32 %v2833, %v2815
    %v2838 = vmax.f32 %v2834, %v2820
    %v2839 = vmax.f32 %v2835, %v2825
    %v2840 = vsub.f32 %v2836, %v2617
    %v2841 = vsub.f32 %v2837, %v2622
    %v2842 = vsub.f32 %v2838, %v2627
    %v2843 = vsub.f32 %v2839, %v2632
    %v2844 = vld [vmem:[%s49] sm:$0xff]
    %v2845 = vld [vmem:[%s49 + $0x8] sm:$0xff]
    %v2846 = vld [vmem:[%s49 + $0x10] sm:$0xff]
    %v2847 = vld [vmem:[%s49 + $0x18] sm:$0xff]
    %v2848 = vld [vmem:[%s49 + $0x20] sm:$0xff]
    %v2849 = vld [vmem:[%s49 + $0x28] sm:$0xff]
    %v2850 = vld [vmem:[%s49 + $0x30] sm:$0xff]
    %v2851 = vld [vmem:[%s49 + $0x38] sm:$0xff]
    %v2852 = vld [vmem:[%s49 + $0x40] sm:$0xff]
    %v2853 = vld [vmem:[%s49 + $0x48] sm:$0xff]
    %v2854 = vld [vmem:[%s49 + $0x50] sm:$0xff]
    %v2855 = vld [vmem:[%s49 + $0x58] sm:$0xff]
    %v2856 = vld [vmem:[%s49 + $0x60] sm:$0xff]
    %v2857 = vld [vmem:[%s49 + $0x68] sm:$0xff]
    %v2858 = vld [vmem:[%s49 + $0x70] sm:$0xff]
    %v2859 = vld [vmem:[%s49 + $0x78] sm:$0xff]
    %v2860 = vld [vmem:[%s51] sm:$0xff]
    %v2861 = vld [vmem:[%s51 + $0x8] sm:$0xff]
    %v2862 = vld [vmem:[%s51 + $0x10] sm:$0xff]
    %v2863 = vld [vmem:[%s51 + $0x18] sm:$0xff]
    %v2864 = vld [vmem:[%s51 + $0x20] sm:$0xff]
    %v2865 = vld [vmem:[%s51 + $0x28] sm:$0xff]
    %v2866 = vld [vmem:[%s51 + $0x30] sm:$0xff]
    %v2867 = vld [vmem:[%s51 + $0x38] sm:$0xff]
    %v2868 = vld [vmem:[%s51 + $0x40] sm:$0xff]
    %v2869 = vld [vmem:[%s51 + $0x48] sm:$0xff]
    %v2870 = vld [vmem:[%s51 + $0x50] sm:$0xff]
    %v2871 = vld [vmem:[%s51 + $0x58] sm:$0xff]
    %v2872 = vld [vmem:[%s51 + $0x60] sm:$0xff]
    %v2873 = vld [vmem:[%s51 + $0x68] sm:$0xff]
    %v2874 = vld [vmem:[%s51 + $0x70] sm:$0xff]
    %v2875 = vld [vmem:[%s51 + $0x78] sm:$0xff]
    %2876 = vmatprep.subr.mxu0 0.0
    %2877 = vmatpush1.msra.mxu0 %v2875
    %2878 = vmatprep.subr.mxu0 0.0
    %2879 = vmatpush1.msra.mxu0 %v2874
    %2880 = vmatprep.subr.mxu0 0.0
    %2881 = vmatpush1.msra.mxu0 %v2873
    %2882 = vmatprep.subr.mxu0 0.0
    %2883 = vmatpush1.msra.mxu0 %v2872
    %2884 = vmatprep.subr.mxu0 0.0
    %2885 = vmatpush1.msra.mxu0 %v2871
    %2886 = vmatprep.subr.mxu0 0.0
    %2887 = vmatpush1.msra.mxu0 %v2870
    %2888 = vmatprep.subr.mxu0 0.0
    %2889 = vmatpush1.msra.mxu0 %v2869
    %2890 = vmatprep.subr.mxu0 0.0
    %2891 = vmatpush1.msra.mxu0 %v2868
    %2892 = vmatprep.subr.mxu0 0.0
    %2893 = vmatpush1.msra.mxu0 %v2867
    %2894 = vmatprep.subr.mxu0 0.0
    %2895 = vmatpush1.msra.mxu0 %v2866
    %2896 = vmatprep.subr.mxu0 0.0
    %2897 = vmatpush1.msra.mxu0 %v2865
    %2898 = vmatprep.subr.mxu0 0.0
    %2899 = vmatpush1.msra.mxu0 %v2864
    %2900 = vmatprep.subr.mxu0 0.0
    %2901 = vmatpush1.msra.mxu0 %v2863
    %2902 = vmatprep.subr.mxu0 0.0
    %2903 = vmatpush1.msra.mxu0 %v2862
    %2904 = vmatprep.subr.mxu0 0.0
    %2905 = vmatpush1.msra.mxu0 %v2861
    %2906 = vmatprep.subr.mxu0 0.0
    %2907 = vmatpush1.msra.mxu0 %v2860
    %2908 = vmatprep.subr.mxu0 0.0
    %2909 = vmatpush2.msra.mxu0 0.0
    %2910 = vmatprep.subr.mxu0 0.0
    %2911 = vmatpush2.msra.mxu0 0.0
    %2912 = vmatprep.subr.mxu0 0.0
    %2913 = vmatpush2.msra.mxu0 0.0
    %2914 = vmatprep.subr.mxu0 0.0
    %2915 = vmatpush2.msra.mxu0 0.0
    %2916 = vmatprep.subr.mxu0 0.0
    %2917 = vmatpush2.msra.mxu0 0.0
    %2918 = vmatprep.subr.mxu0 0.0
    %2919 = vmatpush2.msra.mxu0 0.0
    %2920 = vmatprep.subr.mxu0 0.0
    %2921 = vmatpush2.msra.mxu0 0.0
    %2922 = vmatprep.subr.mxu0 0.0
    %2923 = vmatpush2.msra.mxu0 0.0
    %2924 = vmatprep.subr.mxu0 0.0
    %2925 = vmatpush2.msra.mxu0 0.0
    %2926 = vmatprep.subr.mxu0 0.0
    %2927 = vmatpush2.msra.mxu0 0.0
    %2928 = vmatprep.subr.mxu0 0.0
    %2929 = vmatpush2.msra.mxu0 0.0
    %2930 = vmatprep.subr.mxu0 0.0
    %2931 = vmatpush2.msra.mxu0 0.0
    %2932 = vmatprep.subr.mxu0 0.0
    %2933 = vmatpush2.msra.mxu0 0.0
    %2934 = vmatprep.subr.mxu0 0.0
    %2935 = vmatpush2.msra.mxu0 0.0
    %2936 = vmatprep.subr.mxu0 0.0
    %2937 = vmatpush2.msra.mxu0 0.0
    %2938 = vmatprep.subr.mxu0 0.0
    %2939 = vmatpush2.msra.mxu0 0.0
    %2940 = vmatprep.mubr.f32.mxu0 0.0
    %2941 = vmatmul.mubr.f32.gmra.mxu0 %v2840
    %v2942 = vpop.f32.mrf.mxu0
    %v2943 = vadd.f32 0.0, %v2942
    %v2944 = vpop.f32.mrf.mxu0
    %2945 = vmatprep.mubr.f32.mxu0 0.0
    %2946 = vmatmul.mubr.f32.gmra.mxu0 %v2841
    %v2947 = vpop.f32.mrf.mxu0
    %v2948 = vadd.f32 0.0, %v2947
    %v2949 = vpop.f32.mrf.mxu0
    %2950 = vmatprep.mubr.f32.mxu0 0.0
    %2951 = vmatmul.mubr.f32.gmra.mxu0 %v2842
    %v2952 = vpop.f32.mrf.mxu0
    %v2953 = vadd.f32 0.0, %v2952
    %v2954 = vpop.f32.mrf.mxu0
    %2955 = vmatprep.mubr.f32.mxu0 0.0
    %2956 = vmatmul.mubr.f32.gmra.mxu0 %v2843
    %v2957 = vpop.f32.mrf.mxu0
    %v2958 = vadd.f32 0.0, %v2957
    %v2959 = vpop.f32.mrf.mxu0
    %2960 = vdwg.mxu0
    %2961 = vmatprep.subr.mxu0 0.0
    %2962 = vmatpush1.msra.mxu0 %v2859
    %2963 = vmatprep.subr.mxu0 0.0
    %2964 = vmatpush1.msra.mxu0 %v2858
    %2965 = vmatprep.subr.mxu0 0.0
    %2966 = vmatpush1.msra.mxu0 %v2857
    %2967 = vmatprep.subr.mxu0 0.0
    %2968 = vmatpush1.msra.mxu0 %v2856
    %2969 = vmatprep.subr.mxu0 0.0
    %2970 = vmatpush1.msra.mxu0 %v2855
    %2971 = vmatprep.subr.mxu0 0.0
    %2972 = vmatpush1.msra.mxu0 %v2854
    %2973 = vmatprep.subr.mxu0 0.0
    %2974 = vmatpush1.msra.mxu0 %v2853
    %2975 = vmatprep.subr.mxu0 0.0
    %2976 = vmatpush1.msra.mxu0 %v2852
    %2977 = vmatprep.subr.mxu0 0.0
    %2978 = vmatpush1.msra.mxu0 %v2851
    %2979 = vmatprep.subr.mxu0 0.0
    %2980 = vmatpush1.msra.mxu0 %v2850
    %2981 = vmatprep.subr.mxu0 0.0
    %2982 = vmatpush1.msra.mxu0 %v2849
    %2983 = vmatprep.subr.mxu0 0.0
    %2984 = vmatpush1.msra.mxu0 %v2848
    %2985 = vmatprep.subr.mxu0 0.0
    %2986 = vmatpush1.msra.mxu0 %v2847
    %2987 = vmatprep.subr.mxu0 0.0
    %2988 = vmatpush1.msra.mxu0 %v2846
    %2989 = vmatprep.subr.mxu0 0.0
    %2990 = vmatpush1.msra.mxu0 %v2845
    %2991 = vmatprep.subr.mxu0 0.0
    %2992 = vmatpush1.msra.mxu0 %v2844
    %2993 = vmatprep.subr.mxu0 0.0
    %2994 = vmatpush2.msra.mxu0 0.0
    %2995 = vmatprep.subr.mxu0 0.0
    %2996 = vmatpush2.msra.mxu0 0.0
    %2997 = vmatprep.subr.mxu0 0.0
    %2998 = vmatpush2.msra.mxu0 0.0
    %2999 = vmatprep.subr.mxu0 0.0
    %3000 = vmatpush2.msra.mxu0 0.0
    %3001 = vmatprep.subr.mxu0 0.0
    %3002 = vmatpush2.msra.mxu0 0.0
    %3003 = vmatprep.subr.mxu0 0.0
    %3004 = vmatpush2.msra.mxu0 0.0
    %3005 = vmatprep.subr.mxu0 0.0
    %3006 = vmatpush2.msra.mxu0 0.0
    %3007 = vmatprep.subr.mxu0 0.0
    %3008 = vmatpush2.msra.mxu0 0.0
    %3009 = vmatprep.subr.mxu0 0.0
    %3010 = vmatpush2.msra.mxu0 0.0
    %3011 = vmatprep.subr.mxu0 0.0
    %3012 = vmatpush2.msra.mxu0 0.0
    %3013 = vmatprep.subr.mxu0 0.0
    %3014 = vmatpush2.msra.mxu0 0.0
    %3015 = vmatprep.subr.mxu0 0.0
    %3016 = vmatpush2.msra.mxu0 0.0
    %3017 = vmatprep.subr.mxu0 0.0
    %3018 = vmatpush2.msra.mxu0 0.0
    %3019 = vmatprep.subr.mxu0 0.0
    %3020 = vmatpush2.msra.mxu0 0.0
    %3021 = vmatprep.subr.mxu0 0.0
    %3022 = vmatpush2.msra.mxu0 0.0
    %3023 = vmatprep.subr.mxu0 0.0
    %3024 = vmatpush2.msra.mxu0 0.0
    %3025 = vmatprep.mubr.f32.mxu0 0.0
    %3026 = vmatmul.mubr.f32.gmra.mxu0 %v2617
    %v3027 = vpop.f32.mrf.mxu0
    %v3028 = vadd.f32 %v2943, %v3027
    %v3029 = vpop.f32.mrf.mxu0
    %3030 = vmatprep.mubr.f32.mxu0 0.0
    %3031 = vmatmul.mubr.f32.gmra.mxu0 %v2622
    %v3032 = vpop.f32.mrf.mxu0
    %v3033 = vadd.f32 %v2948, %v3032
    %v3034 = vpop.f32.mrf.mxu0
    %3035 = vmatprep.mubr.f32.mxu0 0.0
    %3036 = vmatmul.mubr.f32.gmra.mxu0 %v2627
    %v3037 = vpop.f32.mrf.mxu0
    %v3038 = vadd.f32 %v2953, %v3037
    %v3039 = vpop.f32.mrf.mxu0
    %3040 = vmatprep.mubr.f32.mxu0 0.0
    %3041 = vmatmul.mubr.f32.gmra.mxu0 %v2632
    %v3042 = vpop.f32.mrf.mxu0
    %v3043 = vadd.f32 %v2958, %v3042
    %v3044 = vpop.f32.mrf.mxu0
    %3045 = vdwg.mxu0
    %v3046 = vld [vmem:[#allocation11] sm:$0x1]
    %v3048 = vlaneseq
    %v3049 = vshrl.u32 %v3048, 7
    %v3050 = vsub.s32 0, %v3049
    %v3051 = vrot.slane %v3046, %v3050
    %v3053 = vadd.f32 %v3028, %v3051
    %v3054 = vadd.f32 %v3033, %v3051
    %v3055 = vadd.f32 %v3038, %v3051
    %v3056 = vadd.f32 %v3043, %v3051
    %v3057 = vmul.f32 %v3053, 0.5
    %v3058 = vmul.f32 %v3054, 0.5
    %v3059 = vmul.f32 %v3055, 0.5
    %v3060 = vmul.f32 %v3056, 0.5
    %v3061 = vmul.f32 %v3053, 0.70710677
    %v3062 = vmul.f32 %v3054, 0.70710677
    %v3063 = vmul.f32 %v3055, 0.70710677
    %v3064 = vmul.f32 %v3056, 0.70710677
    %vm3065 = vcmp.lt.f32.partialorder %v3061, 0.0
    %vm3066 = vcmp.lt.f32.partialorder %v3062, 0.0
    %vm3067 = vcmp.lt.f32.partialorder %v3063, 0.0
    %vm3068 = vcmp.lt.f32.partialorder %v3064, 0.0
    %v3069 = vsel %vm3065, -1.0, 1.0
    %v3070 = vsel %vm3066, -1.0, 1.0
    %v3071 = vsel %vm3067, -1.0, 1.0
    %v3072 = vsel %vm3068, -1.0, 1.0
    %v3073 = vand.u32 2147483647, %v3061
    %v3074 = vand.u32 2147483647, %v3062
    %v3075 = vand.u32 2147483647, %v3063
    %v3076 = vand.u32 2147483647, %v3064
    %v3077 = vmul.f32 %v3073, 0.3275911
    %v3078 = vmul.f32 %v3074, 0.3275911
    %v3079 = vmul.f32 %v3075, 0.3275911
    %v3080 = vmul.f32 %v3076, 0.3275911
    %v3081 = vadd.f32 %v3077, 1.0
    %v3082 = vadd.f32 %v3078, 1.0
    %v3083 = vadd.f32 %v3079, 1.0
    %v3084 = vadd.f32 %v3080, 1.0
    %v3085 = vrcp.pop %v3081
    %v3086 = vrcp.pop %v3082
    %v3087 = vrcp.pop %v3083
    %v3088 = vrcp.pop %v3084
    %v3089 = vmul.f32 %v3085, 1.0614054
    %v3090 = vmul.f32 %v3086, 1.0614054
    %v3091 = vmul.f32 %v3087, 1.0614054
    %v3092 = vmul.f32 %v3088, 1.0614054
    %v3093 = vadd.f32 %v3089, -1.4531521
    %v3094 = vadd.f32 %v3090, -1.4531521
    %v3095 = vadd.f32 %v3091, -1.4531521
    %v3096 = vadd.f32 %v3092, -1.4531521
    %v3097 = vmul.f32 %v3093, %v3085
    %v3098 = vmul.f32 %v3094, %v3086
    %v3099 = vmul.f32 %v3095, %v3087
    %v3100 = vmul.f32 %v3096, %v3088
    %v3101 = vadd.f32 %v3097, 1.4214138
    %v3102 = vadd.f32 %v3098, 1.4214138
    %v3103 = vadd.f32 %v3099, 1.4214138
    %v3104 = vadd.f32 %v3100, 1.4214138
    %v3105 = vmul.f32 %v3101, %v3085
    %v3106 = vmul.f32 %v3102, %v3086
    %v3107 = vmul.f32 %v3103, %v3087
    %v3108 = vmul.f32 %v3104, %v3088
    %v3109 = vadd.f32 %v3105, -0.28449672
    %v3110 = vadd.f32 %v3106, -0.28449672
    %v3111 = vadd.f32 %v3107, -0.28449672
    %v3112 = vadd.f32 %v3108, -0.28449672
    %v3113 = vmul.f32 %v3109, %v3085
    %v3114 = vmul.f32 %v3110, %v3086
    %v3115 = vmul.f32 %v3111, %v3087
    %v3116 = vmul.f32 %v3112, %v3088
    %v3117 = vadd.f32 %v3113, 0.2548296
    %v3118 = vadd.f32 %v3114, 0.2548296
    %v3119 = vadd.f32 %v3115, 0.2548296
    %v3120 = vadd.f32 %v3116, 0.2548296
    %v3121 = vmul.f32 %v3117, %v3085
    %v3122 = vmul.f32 %v3118, %v3086
    %v3123 = vmul.f32 %v3119, %v3087
    %v3124 = vmul.f32 %v3120, %v3088
    %v3125 = vsub.f32 0.0, %v3073
    %v3126 = vsub.f32 0.0, %v3074
    %v3127 = vsub.f32 0.0, %v3075
    %v3128 = vsub.f32 0.0, %v3076
    %v3129 = vmul.f32 %v3125, %v3073
    %v3130 = vmul.f32 %v3126, %v3074
    %v3131 = vmul.f32 %v3127, %v3075
    %v3132 = vmul.f32 %v3128, %v3076
    %v3133 = vmul.f32 %v3129, 1.442695
    %v3134 = vpow.pop %v3133
    %v3135 = vmul.f32 %v3130, 1.442695
    %v3136 = vpow.pop %v3135
    %v3137 = vmul.f32 %v3131, 1.442695
    %v3138 = vpow.pop %v3137
    %v3139 = vmul.f32 %v3132, 1.442695
    %v3140 = vpow.pop %v3139
    %v3141 = vmul.f32 %v3121, %v3134
    %v3142 = vmul.f32 %v3122, %v3136
    %v3143 = vmul.f32 %v3123, %v3138
    %v3144 = vmul.f32 %v3124, %v3140
    %v3145 = vsub.f32 1.0, %v3141
    %v3146 = vsub.f32 1.0, %v3142
    %v3147 = vsub.f32 1.0, %v3143
    %v3148 = vsub.f32 1.0, %v3144
    %v3149 = vmul.f32 %v3069, %v3145
    %v3150 = vmul.f32 %v3070, %v3146
    %v3151 = vmul.f32 %v3071, %v3147
    %v3152 = vmul.f32 %v3072, %v3148
    %v3153 = vadd.f32 %v3149, 1.0
    %v3154 = vadd.f32 %v3150, 1.0
    %v3155 = vadd.f32 %v3151, 1.0
    %v3156 = vadd.f32 %v3152, 1.0
    %v3157 = vmul.f32 %v3057, %v3153
    %v3158 = vmul.f32 %v3058, %v3154
    %v3159 = vmul.f32 %v3059, %v3155
    %v3160 = vmul.f32 %v3060, %v3156
    %v3161 = vld [vmem:[%s55] sm:$0xff]
    %v3162 = vld [vmem:[%s55 + $0x8] sm:$0xff]
    %v3163 = vld [vmem:[%s55 + $0x10] sm:$0xff]
    %v3164 = vld [vmem:[%s55 + $0x18] sm:$0xff]
    %v3165 = vld [vmem:[%s55 + $0x20] sm:$0xff]
    %v3166 = vld [vmem:[%s55 + $0x28] sm:$0xff]
    %v3167 = vld [vmem:[%s55 + $0x30] sm:$0xff]
    %v3168 = vld [vmem:[%s55 + $0x38] sm:$0xff]
    %v3169 = vld [vmem:[%s55 + $0x40] sm:$0xff]
    %v3170 = vld [vmem:[%s55 + $0x48] sm:$0xff]
    %v3171 = vld [vmem:[%s55 + $0x50] sm:$0xff]
    %v3172 = vld [vmem:[%s55 + $0x58] sm:$0xff]
    %v3173 = vld [vmem:[%s55 + $0x60] sm:$0xff]
    %v3174 = vld [vmem:[%s55 + $0x68] sm:$0xff]
    %v3175 = vld [vmem:[%s55 + $0x70] sm:$0xff]
    %v3176 = vld [vmem:[%s55 + $0x78] sm:$0xff]
    %v3177 = vld [vmem:[#allocation13] sm:$0x1]
    %v3179 = vlaneseq
    %v3180 = vshrl.u32 %v3179, 7
    %v3181 = vsub.s32 0, %v3180
    %v3182 = vrot.slane %v3177, %v3181
    %3184 = vmatprep.subr.mxu0 0.0
    %3185 = vmatpush1.msra.mxu0 %v3176
    %3186 = vmatprep.subr.mxu0 0.0
    %3187 = vmatpush1.msra.mxu0 %v3175
    %3188 = vmatprep.subr.mxu0 0.0
    %3189 = vmatpush1.msra.mxu0 %v3174
    %3190 = vmatprep.subr.mxu0 0.0
    %3191 = vmatpush1.msra.mxu0 %v3173
    %3192 = vmatprep.subr.mxu0 0.0
    %3193 = vmatpush1.msra.mxu0 %v3172
    %3194 = vmatprep.subr.mxu0 0.0
    %3195 = vmatpush1.msra.mxu0 %v3171
    %3196 = vmatprep.subr.mxu0 0.0
    %3197 = vmatpush1.msra.mxu0 %v3170
    %3198 = vmatprep.subr.mxu0 0.0
    %3199 = vmatpush1.msra.mxu0 %v3169
    %3200 = vmatprep.subr.mxu0 0.0
    %3201 = vmatpush1.msra.mxu0 %v3168
    %3202 = vmatprep.subr.mxu0 0.0
    %3203 = vmatpush1.msra.mxu0 %v3167
    %3204 = vmatprep.subr.mxu0 0.0
    %3205 = vmatpush1.msra.mxu0 %v3166
    %3206 = vmatprep.subr.mxu0 0.0
    %3207 = vmatpush1.msra.mxu0 %v3165
    %3208 = vmatprep.subr.mxu0 0.0
    %3209 = vmatpush1.msra.mxu0 %v3164
    %3210 = vmatprep.subr.mxu0 0.0
    %3211 = vmatpush1.msra.mxu0 %v3163
    %3212 = vmatprep.subr.mxu0 0.0
    %3213 = vmatpush1.msra.mxu0 %v3162
    %3214 = vmatprep.subr.mxu0 0.0
    %3215 = vmatpush1.msra.mxu0 %v3161
    %3216 = vmatprep.subr.mxu0 0.0
    %3217 = vmatpush2.msra.mxu0 0.0
    %3218 = vmatprep.subr.mxu0 0.0
    %3219 = vmatpush2.msra.mxu0 0.0
    %3220 = vmatprep.subr.mxu0 0.0
    %3221 = vmatpush2.msra.mxu0 0.0
    %3222 = vmatprep.subr.mxu0 0.0
    %3223 = vmatpush2.msra.mxu0 0.0
    %3224 = vmatprep.subr.mxu0 0.0
    %3225 = vmatpush2.msra.mxu0 0.0
    %3226 = vmatprep.subr.mxu0 0.0
    %3227 = vmatpush2.msra.mxu0 0.0
    %3228 = vmatprep.subr.mxu0 0.0
    %3229 = vmatpush2.msra.mxu0 0.0
    %3230 = vmatprep.subr.mxu0 0.0
    %3231 = vmatpush2.msra.mxu0 0.0
    %3232 = vmatprep.subr.mxu0 0.0
    %3233 = vmatpush2.msra.mxu0 0.0
    %3234 = vmatprep.subr.mxu0 0.0
    %3235 = vmatpush2.msra.mxu0 0.0
    %3236 = vmatprep.subr.mxu0 0.0
    %3237 = vmatpush2.msra.mxu0 0.0
    %3238 = vmatprep.subr.mxu0 0.0
    %3239 = vmatpush2.msra.mxu0 0.0
    %3240 = vmatprep.subr.mxu0 0.0
    %3241 = vmatpush2.msra.mxu0 0.0
    %3242 = vmatprep.subr.mxu0 0.0
    %3243 = vmatpush2.msra.mxu0 0.0
    %3244 = vmatprep.subr.mxu0 0.0
    %3245 = vmatpush2.msra.mxu0 0.0
    %3246 = vmatprep.subr.mxu0 0.0
    %3247 = vmatpush2.msra.mxu0 0.0
    %3248 = vmatprep.mubr.f32.mxu0 0.0
    %3249 = vmatmul.mubr.f32.gmra.mxu0 %v3157
    %v3250 = vpop.f32.mrf.mxu0
    %v3251 = vadd.f32 %v3182, %v3250
    %v3252 = vpop.f32.mrf.mxu0
    %3253 = vmatprep.mubr.f32.mxu0 0.0
    %3254 = vmatmul.mubr.f32.gmra.mxu0 %v3158
    %v3255 = vpop.f32.mrf.mxu0
    %v3256 = vadd.f32 %v3182, %v3255
    %v3257 = vpop.f32.mrf.mxu0
    %3258 = vmatprep.mubr.f32.mxu0 0.0
    %3259 = vmatmul.mubr.f32.gmra.mxu0 %v3159
    %v3260 = vpop.f32.mrf.mxu0
    %v3261 = vadd.f32 %v3182, %v3260
    %v3262 = vpop.f32.mrf.mxu0
    %3263 = vmatprep.mubr.f32.mxu0 0.0
    %3264 = vmatmul.mubr.f32.gmra.mxu0 %v3160
    %v3265 = vpop.f32.mrf.mxu0
    %v3266 = vadd.f32 %v3182, %v3265
    %v3267 = vpop.f32.mrf.mxu0
    %3268 = vdwg.mxu0
    %v3269 = vmul.f32 %v3251, 0.5
    %v3270 = vmul.f32 %v3256, 0.5
    %v3271 = vmul.f32 %v3261, 0.5
    %v3272 = vmul.f32 %v3266, 0.5
    %v3273 = vmul.f32 %v3251, 0.70710677
    %v3274 = vmul.f32 %v3256, 0.70710677
    %v3275 = vmul.f32 %v3261, 0.70710677
    %v3276 = vmul.f32 %v3266, 0.70710677
    %vm3277 = vcmp.lt.f32.partialorder %v3273, 0.0
    %vm3278 = vcmp.lt.f32.partialorder %v3274, 0.0
    %vm3279 = vcmp.lt.f32.partialorder %v3275, 0.0
    %vm3280 = vcmp.lt.f32.partialorder %v3276, 0.0
    %v3281 = vsel %vm3277, -1.0, 1.0
    %v3282 = vsel %vm3278, -1.0, 1.0
    %v3283 = vsel %vm3279, -1.0, 1.0
    %v3284 = vsel %vm3280, -1.0, 1.0
    %v3285 = vand.u32 2147483647, %v3273
    %v3286 = vand.u32 2147483647, %v3274
    %v3287 = vand.u32 2147483647, %v3275
    %v3288 = vand.u32 2147483647, %v3276
    %v3289 = vmul.f32 %v3285, 0.3275911
    %v3290 = vmul.f32 %v3286, 0.3275911
    %v3291 = vmul.f32 %v3287, 0.3275911
    %v3292 = vmul.f32 %v3288, 0.3275911
    %v3293 = vadd.f32 %v3289, 1.0
    %v3294 = vadd.f32 %v3290, 1.0
    %v3295 = vadd.f32 %v3291, 1.0
    %v3296 = vadd.f32 %v3292, 1.0
    %v3297 = vrcp.pop %v3293
    %v3298 = vrcp.pop %v3294
    %v3299 = vrcp.pop %v3295
    %v3300 = vrcp.pop %v3296
    %v3301 = vmul.f32 %v3297, 1.0614054
    %v3302 = vmul.f32 %v3298, 1.0614054
    %v3303 = vmul.f32 %v3299, 1.0614054
    %v3304 = vmul.f32 %v3300, 1.0614054
    %v3305 = vadd.f32 %v3301, -1.4531521
    %v3306 = vadd.f32 %v3302, -1.4531521
    %v3307 = vadd.f32 %v3303, -1.4531521
    %v3308 = vadd.f32 %v3304, -1.4531521
    %v3309 = vmul.f32 %v3305, %v3297
    %v3310 = vmul.f32 %v3306, %v3298
    %v3311 = vmul.f32 %v3307, %v3299
    %v3312 = vmul.f32 %v3308, %v3300
    %v3313 = vadd.f32 %v3309, 1.4214138
    %v3314 = vadd.f32 %v3310, 1.4214138
    %v3315 = vadd.f32 %v3311, 1.4214138
    %v3316 = vadd.f32 %v3312, 1.4214138
    %v3317 = vmul.f32 %v3313, %v3297
    %v3318 = vmul.f32 %v3314, %v3298
    %v3319 = vmul.f32 %v3315, %v3299
    %v3320 = vmul.f32 %v3316, %v3300
    %v3321 = vadd.f32 %v3317, -0.28449672
    %v3322 = vadd.f32 %v3318, -0.28449672
    %v3323 = vadd.f32 %v3319, -0.28449672
    %v3324 = vadd.f32 %v3320, -0.28449672
    %v3325 = vmul.f32 %v3321, %v3297
    %v3326 = vmul.f32 %v3322, %v3298
    %v3327 = vmul.f32 %v3323, %v3299
    %v3328 = vmul.f32 %v3324, %v3300
    %v3329 = vadd.f32 %v3325, 0.2548296
    %v3330 = vadd.f32 %v3326, 0.2548296
    %v3331 = vadd.f32 %v3327, 0.2548296
    %v3332 = vadd.f32 %v3328, 0.2548296
    %v3333 = vmul.f32 %v3329, %v3297
    %v3334 = vmul.f32 %v3330, %v3298
    %v3335 = vmul.f32 %v3331, %v3299
    %v3336 = vmul.f32 %v3332, %v3300
    %v3337 = vsub.f32 0.0, %v3285
    %v3338 = vsub.f32 0.0, %v3286
    %v3339 = vsub.f32 0.0, %v3287
    %v3340 = vsub.f32 0.0, %v3288
    %v3341 = vmul.f32 %v3337, %v3285
    %v3342 = vmul.f32 %v3338, %v3286
    %v3343 = vmul.f32 %v3339, %v3287
    %v3344 = vmul.f32 %v3340, %v3288
    %v3345 = vmul.f32 %v3341, 1.442695
    %v3346 = vpow.pop %v3345
    %v3347 = vmul.f32 %v3342, 1.442695
    %v3348 = vpow.pop %v3347
    %v3349 = vmul.f32 %v3343, 1.442695
    %v3350 = vpow.pop %v3349
    %v3351 = vmul.f32 %v3344, 1.442695
    %v3352 = vpow.pop %v3351
    %v3353 = vmul.f32 %v3333, %v3346
    %v3354 = vmul.f32 %v3334, %v3348
    %v3355 = vmul.f32 %v3335, %v3350
    %v3356 = vmul.f32 %v3336, %v3352
    %v3357 = vsub.f32 1.0, %v3353
    %v3358 = vsub.f32 1.0, %v3354
    %v3359 = vsub.f32 1.0, %v3355
    %v3360 = vsub.f32 1.0, %v3356
    %v3361 = vmul.f32 %v3281, %v3357
    %v3362 = vmul.f32 %v3282, %v3358
    %v3363 = vmul.f32 %v3283, %v3359
    %v3364 = vmul.f32 %v3284, %v3360
    %v3365 = vadd.f32 %v3361, 1.0
    %v3366 = vadd.f32 %v3362, 1.0
    %v3367 = vadd.f32 %v3363, 1.0
    %v3368 = vadd.f32 %v3364, 1.0
    %v3369 = vmul.f32 %v3269, %v3365
    %v3370 = vmul.f32 %v3270, %v3366
    %v3371 = vmul.f32 %v3271, %v3367
    %v3372 = vmul.f32 %v3272, %v3368
    %v3373 = vld [vmem:[%s59] sm:$0xff]
    %v3374 = vld [vmem:[%s59 + $0x8] sm:$0xff]
    %v3375 = vld [vmem:[%s59 + $0x10] sm:$0xff]
    %v3376 = vld [vmem:[%s59 + $0x18] sm:$0xff]
    %v3377 = vld [vmem:[%s59 + $0x20] sm:$0xff]
    %v3378 = vld [vmem:[%s59 + $0x28] sm:$0xff]
    %v3379 = vld [vmem:[%s59 + $0x30] sm:$0xff]
    %v3380 = vld [vmem:[%s59 + $0x38] sm:$0xff]
    %v3381 = vld [vmem:[%s59 + $0x40] sm:$0xff]
    %v3382 = vld [vmem:[%s59 + $0x48] sm:$0xff]
    %v3383 = vld [vmem:[%s59 + $0x50] sm:$0xff]
    %v3384 = vld [vmem:[%s59 + $0x58] sm:$0xff]
    %v3385 = vld [vmem:[%s59 + $0x60] sm:$0xff]
    %v3386 = vld [vmem:[%s59 + $0x68] sm:$0xff]
    %v3387 = vld [vmem:[%s59 + $0x70] sm:$0xff]
    %v3388 = vld [vmem:[%s59 + $0x78] sm:$0xff]
    %v3389 = vld [vmem:[#allocation14] sm:$0x1]
    %v3391 = vlaneseq
    %v3392 = vshrl.u32 %v3391, 7
    %v3393 = vsub.s32 0, %v3392
    %v3394 = vrot.slane %v3389, %v3393
    %3396 = vmatprep.subr.mxu0 0.0
    %3397 = vmatpush1.msra.mxu0 %v3388
    %3398 = vmatprep.subr.mxu0 0.0
    %3399 = vmatpush1.msra.mxu0 %v3387
    %3400 = vmatprep.subr.mxu0 0.0
    %3401 = vmatpush1.msra.mxu0 %v3386
    %3402 = vmatprep.subr.mxu0 0.0
    %3403 = vmatpush1.msra.mxu0 %v3385
    %3404 = vmatprep.subr.mxu0 0.0
    %3405 = vmatpush1.msra.mxu0 %v3384
    %3406 = vmatprep.subr.mxu0 0.0
    %3407 = vmatpush1.msra.mxu0 %v3383
    %3408 = vmatprep.subr.mxu0 0.0
    %3409 = vmatpush1.msra.mxu0 %v3382
    %3410 = vmatprep.subr.mxu0 0.0
    %3411 = vmatpush1.msra.mxu0 %v3381
    %3412 = vmatprep.subr.mxu0 0.0
    %3413 = vmatpush1.msra.mxu0 %v3380
    %3414 = vmatprep.subr.mxu0 0.0
    %3415 = vmatpush1.msra.mxu0 %v3379
    %3416 = vmatprep.subr.mxu0 0.0
    %3417 = vmatpush1.msra.mxu0 %v3378
    %3418 = vmatprep.subr.mxu0 0.0
    %3419 = vmatpush1.msra.mxu0 %v3377
    %3420 = vmatprep.subr.mxu0 0.0
    %3421 = vmatpush1.msra.mxu0 %v3376
    %3422 = vmatprep.subr.mxu0 0.0
    %3423 = vmatpush1.msra.mxu0 %v3375
    %3424 = vmatprep.subr.mxu0 0.0
    %3425 = vmatpush1.msra.mxu0 %v3374
    %3426 = vmatprep.subr.mxu0 0.0
    %3427 = vmatpush1.msra.mxu0 %v3373
    %3428 = vmatprep.subr.mxu0 0.0
    %3429 = vmatpush2.msra.mxu0 0.0
    %3430 = vmatprep.subr.mxu0 0.0
    %3431 = vmatpush2.msra.mxu0 0.0
    %3432 = vmatprep.subr.mxu0 0.0
    %3433 = vmatpush2.msra.mxu0 0.0
    %3434 = vmatprep.subr.mxu0 0.0
    %3435 = vmatpush2.msra.mxu0 0.0
    %3436 = vmatprep.subr.mxu0 0.0
    %3437 = vmatpush2.msra.mxu0 0.0
    %3438 = vmatprep.subr.mxu0 0.0
    %3439 = vmatpush2.msra.mxu0 0.0
    %3440 = vmatprep.subr.mxu0 0.0
    %3441 = vmatpush2.msra.mxu0 0.0
    %3442 = vmatprep.subr.mxu0 0.0
    %3443 = vmatpush2.msra.mxu0 0.0
    %3444 = vmatprep.subr.mxu0 0.0
    %3445 = vmatpush2.msra.mxu0 0.0
    %3446 = vmatprep.subr.mxu0 0.0
    %3447 = vmatpush2.msra.mxu0 0.0
    %3448 = vmatprep.subr.mxu0 0.0
    %3449 = vmatpush2.msra.mxu0 0.0
    %3450 = vmatprep.subr.mxu0 0.0
    %3451 = vmatpush2.msra.mxu0 0.0
    %3452 = vmatprep.subr.mxu0 0.0
    %3453 = vmatpush2.msra.mxu0 0.0
    %3454 = vmatprep.subr.mxu0 0.0
    %3455 = vmatpush2.msra.mxu0 0.0
    %3456 = vmatprep.subr.mxu0 0.0
    %3457 = vmatpush2.msra.mxu0 0.0
    %3458 = vmatprep.subr.mxu0 0.0
    %3459 = vmatpush2.msra.mxu0 0.0
    %3460 = vmatprep.mubr.f32.mxu0 0.0
    %3461 = vmatmul.mubr.f32.gmra.mxu0 %v3369
    %v3462 = vpop.f32.mrf.mxu0
    %v3463 = vadd.f32 %v3394, %v3462
    %v3464 = vpop.f32.mrf.mxu0
    %3465 = vmatprep.mubr.f32.mxu0 0.0
    %3466 = vmatmul.mubr.f32.gmra.mxu0 %v3370
    %v3467 = vpop.f32.mrf.mxu0
    %v3468 = vadd.f32 %v3394, %v3467
    %v3469 = vpop.f32.mrf.mxu0
    %3470 = vmatprep.mubr.f32.mxu0 0.0
    %3471 = vmatmul.mubr.f32.gmra.mxu0 %v3371
    %v3472 = vpop.f32.mrf.mxu0
    %v3473 = vadd.f32 %v3394, %v3472
    %v3474 = vpop.f32.mrf.mxu0
    %3475 = vmatprep.mubr.f32.mxu0 0.0
    %3476 = vmatmul.mubr.f32.gmra.mxu0 %v3372
    %v3477 = vpop.f32.mrf.mxu0
    %v3478 = vadd.f32 %v3394, %v3477
    %v3479 = vpop.f32.mrf.mxu0
    %3480 = vdwg.mxu0
    %v3481 = vadd.f32 %v3463, %v1978
    %v3482 = vadd.f32 %v3468, %v1979
    %v3483 = vadd.f32 %v3473, %v1980
    %v3484 = vadd.f32 %v3478, %v1981
    %v3485 = vld [vmem:[%s63] sm:$0xff]
    %v3486 = vld [vmem:[%s63 + $0x8] sm:$0xff]
    %v3487 = vld [vmem:[%s63 + $0x10] sm:$0xff]
    %v3488 = vld [vmem:[%s63 + $0x18] sm:$0xff]
    %v3489 = vld [vmem:[%s63 + $0x20] sm:$0xff]
    %v3490 = vld [vmem:[%s63 + $0x28] sm:$0xff]
    %v3491 = vld [vmem:[%s63 + $0x30] sm:$0xff]
    %v3492 = vld [vmem:[%s63 + $0x38] sm:$0xff]
    %v3493 = vld [vmem:[%s63 + $0x40] sm:$0xff]
    %v3494 = vld [vmem:[%s63 + $0x48] sm:$0xff]
    %v3495 = vld [vmem:[%s63 + $0x50] sm:$0xff]
    %v3496 = vld [vmem:[%s63 + $0x58] sm:$0xff]
    %v3497 = vld [vmem:[%s63 + $0x60] sm:$0xff]
    %v3498 = vld [vmem:[%s63 + $0x68] sm:$0xff]
    %v3499 = vld [vmem:[%s63 + $0x70] sm:$0xff]
    %v3500 = vld [vmem:[%s63 + $0x78] sm:$0xff]
    %v3501 = vld [vmem:[%s63 + $0x80] sm:$0xff]
    %v3502 = vld [vmem:[%s63 + $0x88] sm:$0xff]
    %v3503 = vld [vmem:[%s63 + $0x90] sm:$0xff]
    %v3504 = vld [vmem:[%s63 + $0x98] sm:$0xff]
    %v3505 = vld [vmem:[%s63 + $0xa0] sm:$0xff]
    %v3506 = vld [vmem:[%s63 + $0xa8] sm:$0xff]
    %v3507 = vld [vmem:[%s63 + $0xb0] sm:$0xff]
    %v3508 = vld [vmem:[%s63 + $0xb8] sm:$0xff]
    %v3509 = vld [vmem:[%s63 + $0xc0] sm:$0xff]
    %v3510 = vld [vmem:[%s63 + $0xc8] sm:$0xff]
    %v3511 = vld [vmem:[%s63 + $0xd0] sm:$0xff]
    %v3512 = vld [vmem:[%s63 + $0xd8] sm:$0xff]
    %v3513 = vld [vmem:[%s63 + $0xe0] sm:$0xff]
    %v3514 = vld [vmem:[%s63 + $0xe8] sm:$0xff]
    %v3515 = vld [vmem:[%s63 + $0xf0] sm:$0xff]
    %v3516 = vld [vmem:[%s63 + $0xf8] sm:$0xff]
    %v3517 = vld [vmem:[%s63 + $0x100] sm:$0xff]
    %v3518 = vld [vmem:[%s63 + $0x108] sm:$0xff]
    %v3519 = vld [vmem:[%s63 + $0x110] sm:$0xff]
    %v3520 = vld [vmem:[%s63 + $0x118] sm:$0xff]
    %v3521 = vld [vmem:[%s63 + $0x120] sm:$0xff]
    %v3522 = vld [vmem:[%s63 + $0x128] sm:$0xff]
    %v3523 = vld [vmem:[%s63 + $0x130] sm:$0xff]
    %v3524 = vld [vmem:[%s63 + $0x138] sm:$0xff]
    %v3525 = vld [vmem:[%s63 + $0x140] sm:$0xff]
    %v3526 = vld [vmem:[%s63 + $0x148] sm:$0xff]
    %v3527 = vld [vmem:[%s63 + $0x150] sm:$0xff]
    %v3528 = vld [vmem:[%s63 + $0x158] sm:$0xff]
    %v3529 = vld [vmem:[%s63 + $0x160] sm:$0xff]
    %v3530 = vld [vmem:[%s63 + $0x168] sm:$0xff]
    %v3531 = vld [vmem:[%s63 + $0x170] sm:$0xff]
    %v3532 = vld [vmem:[%s63 + $0x178] sm:$0xff]
    %v3533 = vld [vmem:[%s63 + $0x180] sm:$0xff]
    %v3534 = vld [vmem:[%s63 + $0x188] sm:$0xff]
    %v3535 = vld [vmem:[%s63 + $0x190] sm:$0xff]
    %v3536 = vld [vmem:[%s63 + $0x198] sm:$0xff]
    %v3537 = vld [vmem:[%s63 + $0x1a0] sm:$0xff]
    %v3538 = vld [vmem:[%s63 + $0x1a8] sm:$0xff]
    %v3539 = vld [vmem:[%s63 + $0x1b0] sm:$0xff]
    %v3540 = vld [vmem:[%s63 + $0x1b8] sm:$0xff]
    %v3541 = vld [vmem:[%s63 + $0x1c0] sm:$0xff]
    %v3542 = vld [vmem:[%s63 + $0x1c8] sm:$0xff]
    %v3543 = vld [vmem:[%s63 + $0x1d0] sm:$0xff]
    %v3544 = vld [vmem:[%s63 + $0x1d8] sm:$0xff]
    %v3545 = vld [vmem:[%s63 + $0x1e0] sm:$0xff]
    %v3546 = vld [vmem:[%s63 + $0x1e8] sm:$0xff]
    %v3547 = vld [vmem:[%s63 + $0x1f0] sm:$0xff]
    %v3548 = vld [vmem:[%s63 + $0x1f8] sm:$0xff]
    %v3549 = vld [vmem:[%s65] sm:$0xf]
    %v3551 = vlaneseq
    %v3552 = vshrl.u32 %v3551, 7
    %v3553 = vsub.s32 0, %v3552
    %v3554 = vrot.slane %v3549, %v3553
    %v3555 = vlaneseq
    %v3556 = vshrl.u32 %v3555, 7
    %v3557 = vsub.s32 1, %v3556
    %v3558 = vrot.slane %v3549, %v3557
    %v3559 = vlaneseq
    %v3560 = vshrl.u32 %v3559, 7
    %v3561 = vsub.s32 2, %v3560
    %v3562 = vrot.slane %v3549, %v3561
    %v3563 = vlaneseq
    %v3564 = vshrl.u32 %v3563, 7
    %v3565 = vsub.s32 3, %v3564
    %v3566 = vrot.slane %v3549, %v3565
    %3571 = vmatprep.subr.mxu0 %v3546
    %3572 = vmatpush1.msra.mxu0 %v3545
    %3573 = vmatprep.subr.mxu0 %v3542
    %3574 = vmatpush1.msra.mxu0 %v3541
    %3575 = vmatprep.subr.mxu0 %v3538
    %3576 = vmatpush1.msra.mxu0 %v3537
    %3577 = vmatprep.subr.mxu0 %v3534
    %3578 = vmatpush1.msra.mxu0 %v3533
    %3579 = vmatprep.subr.mxu0 %v3530
    %3580 = vmatpush1.msra.mxu0 %v3529
    %3581 = vmatprep.subr.mxu0 %v3526
    %3582 = vmatpush1.msra.mxu0 %v3525
    %3583 = vmatprep.subr.mxu0 %v3522
    %3584 = vmatpush1.msra.mxu0 %v3521
    %3585 = vmatprep.subr.mxu0 %v3518
    %3586 = vmatpush1.msra.mxu0 %v3517
    %3587 = vmatprep.subr.mxu0 %v3514
    %3588 = vmatpush1.msra.mxu0 %v3513
    %3589 = vmatprep.subr.mxu0 %v3510
    %3590 = vmatpush1.msra.mxu0 %v3509
    %3591 = vmatprep.subr.mxu0 %v3506
    %3592 = vmatpush1.msra.mxu0 %v3505
    %3593 = vmatprep.subr.mxu0 %v3502
    %3594 = vmatpush1.msra.mxu0 %v3501
    %3595 = vmatprep.subr.mxu0 %v3498
    %3596 = vmatpush1.msra.mxu0 %v3497
    %3597 = vmatprep.subr.mxu0 %v3494
    %3598 = vmatpush1.msra.mxu0 %v3493
    %3599 = vmatprep.subr.mxu0 %v3490
    %3600 = vmatpush1.msra.mxu0 %v3489
    %3601 = vmatprep.subr.mxu0 %v3486
    %3602 = vmatpush1.msra.mxu0 %v3485
    %3603 = vmatprep.subr.mxu0 0.0
    %3604 = vmatpush2.msra.mxu0 0.0
    %3605 = vmatprep.subr.mxu0 0.0
    %3606 = vmatpush2.msra.mxu0 0.0
    %3607 = vmatprep.subr.mxu0 0.0
    %3608 = vmatpush2.msra.mxu0 0.0
    %3609 = vmatprep.subr.mxu0 0.0
    %3610 = vmatpush2.msra.mxu0 0.0
    %3611 = vmatprep.subr.mxu0 0.0
    %3612 = vmatpush2.msra.mxu0 0.0
    %3613 = vmatprep.subr.mxu0 0.0
    %3614 = vmatpush2.msra.mxu0 0.0
    %3615 = vmatprep.subr.mxu0 0.0
    %3616 = vmatpush2.msra.mxu0 0.0
    %3617 = vmatprep.subr.mxu0 0.0
    %3618 = vmatpush2.msra.mxu0 0.0
    %3619 = vmatprep.subr.mxu0 0.0
    %3620 = vmatpush2.msra.mxu0 0.0
    %3621 = vmatprep.subr.mxu0 0.0
    %3622 = vmatpush2.msra.mxu0 0.0
    %3623 = vmatprep.subr.mxu0 0.0
    %3624 = vmatpush2.msra.mxu0 0.0
    %3625 = vmatprep.subr.mxu0 0.0
    %3626 = vmatpush2.msra.mxu0 0.0
    %3627 = vmatprep.subr.mxu0 0.0
    %3628 = vmatpush2.msra.mxu0 0.0
    %3629 = vmatprep.subr.mxu0 0.0
    %3630 = vmatpush2.msra.mxu0 0.0
    %3631 = vmatprep.subr.mxu0 0.0
    %3632 = vmatpush2.msra.mxu0 0.0
    %3633 = vmatprep.subr.mxu0 0.0
    %3634 = vmatpush2.msra.mxu0 0.0
    %3635 = vmatprep.mubr.f32.mxu0 0.0
    %3636 = vmatmul.mubr.f32.gmra.mxu0 %v3481
    %v3637 = vpop.f32.mrf.mxu0
    %v3638 = vadd.f32 %v3554, %v3637
    %v3639 = vpop.f32.mrf.mxu0
    %v3640 = vadd.f32 %v3558, %v3639
    %3641 = vmatprep.mubr.f32.mxu0 0.0
    %3642 = vmatmul.mubr.f32.gmra.mxu0 %v3482
    %v3643 = vpop.f32.mrf.mxu0
    %v3644 = vadd.f32 %v3554, %v3643
    %v3645 = vpop.f32.mrf.mxu0
    %v3646 = vadd.f32 %v3558, %v3645
    %3647 = vmatprep.mubr.f32.mxu0 0.0
    %3648 = vmatmul.mubr.f32.gmra.mxu0 %v3483
    %v3649 = vpop.f32.mrf.mxu0
    %v3650 = vadd.f32 %v3554, %v3649
    %v3651 = vpop.f32.mrf.mxu0
    %v3652 = vadd.f32 %v3558, %v3651
    %3653 = vmatprep.mubr.f32.mxu0 0.0
    %3654 = vmatmul.mubr.f32.gmra.mxu0 %v3484
    %v3655 = vpop.f32.mrf.mxu0
    %v3656 = vadd.f32 %v3554, %v3655
    %v3657 = vpop.f32.mrf.mxu0
    %v3658 = vadd.f32 %v3558, %v3657
    %3659 = vdwg.mxu0
    %3660 = vmatprep.subr.mxu0 %v3548
    %3661 = vmatpush1.msra.mxu0 %v3547
    %3662 = vmatprep.subr.mxu0 %v3544
    %3663 = vmatpush1.msra.mxu0 %v3543
    %3664 = vmatprep.subr.mxu0 %v3540
    %3665 = vmatpush1.msra.mxu0 %v3539
    %3666 = vmatprep.subr.mxu0 %v3536
    %3667 = vmatpush1.msra.mxu0 %v3535
    %3668 = vmatprep.subr.mxu0 %v3532
    %3669 = vmatpush1.msra.mxu0 %v3531
    %3670 = vmatprep.subr.mxu0 %v3528
    %3671 = vmatpush1.msra.mxu0 %v3527
    %3672 = vmatprep.subr.mxu0 %v3524
    %3673 = vmatpush1.msra.mxu0 %v3523
    %3674 = vmatprep.subr.mxu0 %v3520
    %3675 = vmatpush1.msra.mxu0 %v3519
    %3676 = vmatprep.subr.mxu0 %v3516
    %3677 = vmatpush1.msra.mxu0 %v3515
    %3678 = vmatprep.subr.mxu0 %v3512
    %3679 = vmatpush1.msra.mxu0 %v3511
    %3680 = vmatprep.subr.mxu0 %v3508
    %3681 = vmatpush1.msra.mxu0 %v3507
    %3682 = vmatprep.subr.mxu0 %v3504
    %3683 = vmatpush1.msra.mxu0 %v3503
    %3684 = vmatprep.subr.mxu0 %v3500
    %3685 = vmatpush1.msra.mxu0 %v3499
    %3686 = vmatprep.subr.mxu0 %v3496
    %3687 = vmatpush1.msra.mxu0 %v3495
    %3688 = vmatprep.subr.mxu0 %v3492
    %3689 = vmatpush1.msra.mxu0 %v3491
    %3690 = vmatprep.subr.mxu0 %v3488
    %3691 = vmatpush1.msra.mxu0 %v3487
    %3692 = vmatprep.subr.mxu0 0.0
    %3693 = vmatpush2.msra.mxu0 0.0
    %3694 = vmatprep.subr.mxu0 0.0
    %3695 = vmatpush2.msra.mxu0 0.0
    %3696 = vmatprep.subr.mxu0 0.0
    %3697 = vmatpush2.msra.mxu0 0.0
    %3698 = vmatprep.subr.mxu0 0.0
    %3699 = vmatpush2.msra.mxu0 0.0
    %3700 = vmatprep.subr.mxu0 0.0
    %3701 = vmatpush2.msra.mxu0 0.0
    %3702 = vmatprep.subr.mxu0 0.0
    %3703 = vmatpush2.msra.mxu0 0.0
    %3704 = vmatprep.subr.mxu0 0.0
    %3705 = vmatpush2.msra.mxu0 0.0
    %3706 = vmatprep.subr.mxu0 0.0
    %3707 = vmatpush2.msra.mxu0 0.0
    %3708 = vmatprep.subr.mxu0 0.0
    %3709 = vmatpush2.msra.mxu0 0.0
    %3710 = vmatprep.subr.mxu0 0.0
    %3711 = vmatpush2.msra.mxu0 0.0
    %3712 = vmatprep.subr.mxu0 0.0
    %3713 = vmatpush2.msra.mxu0 0.0
    %3714 = vmatprep.subr.mxu0 0.0
    %3715 = vmatpush2.msra.mxu0 0.0
    %3716 = vmatprep.subr.mxu0 0.0
    %3717 = vmatpush2.msra.mxu0 0.0
    %3718 = vmatprep.subr.mxu0 0.0
    %3719 = vmatpush2.msra.mxu0 0.0
    %3720 = vmatprep.subr.mxu0 0.0
    %3721 = vmatpush2.msra.mxu0 0.0
    %3722 = vmatprep.subr.mxu0 0.0
    %3723 = vmatpush2.msra.mxu0 0.0
    %3724 = vmatprep.mubr.f32.mxu0 0.0
    %3725 = vmatmul.mubr.f32.gmra.mxu0 %v3481
    %v3726 = vpop.f32.mrf.mxu0
    %v3727 = vadd.f32 %v3562, %v3726
    %v3728 = vpop.f32.mrf.mxu0
    %v3729 = vadd.f32 %v3566, %v3728
    %3730 = vmatprep.mubr.f32.mxu0 0.0
    %3731 = vmatmul.mubr.f32.gmra.mxu0 %v3482
    %v3732 = vpop.f32.mrf.mxu0
    %v3733 = vadd.f32 %v3562, %v3732
    %v3734 = vpop.f32.mrf.mxu0
    %v3735 = vadd.f32 %v3566, %v3734
    %3736 = vmatprep.mubr.f32.mxu0 0.0
    %3737 = vmatmul.mubr.f32.gmra.mxu0 %v3483
    %v3738 = vpop.f32.mrf.mxu0
    %v3739 = vadd.f32 %v3562, %v3738
    %v3740 = vpop.f32.mrf.mxu0
    %v3741 = vadd.f32 %v3566, %v3740
    %3742 = vmatprep.mubr.f32.mxu0 0.0
    %3743 = vmatmul.mubr.f32.gmra.mxu0 %v3484
    %v3744 = vpop.f32.mrf.mxu0
    %v3745 = vadd.f32 %v3562, %v3744
    %v3746 = vpop.f32.mrf.mxu0
    %v3747 = vadd.f32 %v3566, %v3746
    %3748 = vdwg.mxu0
    %v3749 = vmul.f32 %v3638, 0.5
    %v3750 = vmul.f32 %v3640, 0.5
    %v3751 = vmul.f32 %v3727, 0.5
    %v3752 = vmul.f32 %v3729, 0.5
    %v3753 = vmul.f32 %v3644, 0.5
    %v3754 = vmul.f32 %v3646, 0.5
    %v3755 = vmul.f32 %v3733, 0.5
    %v3756 = vmul.f32 %v3735, 0.5
    %v3757 = vmul.f32 %v3650, 0.5
    %v3758 = vmul.f32 %v3652, 0.5
    %v3759 = vmul.f32 %v3739, 0.5
    %v3760 = vmul.f32 %v3741, 0.5
    %v3761 = vmul.f32 %v3656, 0.5
    %v3762 = vmul.f32 %v3658, 0.5
    %v3763 = vmul.f32 %v3745, 0.5
    %v3764 = vmul.f32 %v3747, 0.5
    %v3765 = vmul.f32 %v3638, 0.70710677
    %v3766 = vmul.f32 %v3640, 0.70710677
    %v3767 = vmul.f32 %v3727, 0.70710677
    %v3768 = vmul.f32 %v3729, 0.70710677
    %v3769 = vmul.f32 %v3644, 0.70710677
    %v3770 = vmul.f32 %v3646, 0.70710677
    %v3771 = vmul.f32 %v3733, 0.70710677
    %v3772 = vmul.f32 %v3735, 0.70710677
    %v3773 = vmul.f32 %v3650, 0.70710677
    %v3774 = vmul.f32 %v3652, 0.70710677
    %v3775 = vmul.f32 %v3739, 0.70710677
    %v3776 = vmul.f32 %v3741, 0.70710677
    %v3777 = vmul.f32 %v3656, 0.70710677
    %v3778 = vmul.f32 %v3658, 0.70710677
    %v3779 = vmul.f32 %v3745, 0.70710677
    %v3780 = vmul.f32 %v3747, 0.70710677
    %vm3781 = vcmp.lt.f32.partialorder %v3765, 0.0
    %vm3782 = vcmp.lt.f32.partialorder %v3766, 0.0
    %vm3783 = vcmp.lt.f32.partialorder %v3767, 0.0
    %vm3784 = vcmp.lt.f32.partialorder %v3768, 0.0
    %vm3785 = vcmp.lt.f32.partialorder %v3769, 0.0
    %vm3786 = vcmp.lt.f32.partialorder %v3770, 0.0
    %vm3787 = vcmp.lt.f32.partialorder %v3771, 0.0
    %vm3788 = vcmp.lt.f32.partialorder %v3772, 0.0
    %vm3789 = vcmp.lt.f32.partialorder %v3773, 0.0
    %vm3790 = vcmp.lt.f32.partialorder %v3774, 0.0
    %vm3791 = vcmp.lt.f32.partialorder %v3775, 0.0
    %vm3792 = vcmp.lt.f32.partialorder %v3776, 0.0
    %vm3793 = vcmp.lt.f32.partialorder %v3777, 0.0
    %vm3794 = vcmp.lt.f32.partialorder %v3778, 0.0
    %vm3795 = vcmp.lt.f32.partialorder %v3779, 0.0
    %vm3796 = vcmp.lt.f32.partialorder %v3780, 0.0
    %v3797 = vsel %vm3781, -1.0, 1.0
    %v3798 = vsel %vm3782, -1.0, 1.0
    %v3799 = vsel %vm3783, -1.0, 1.0
    %v3800 = vsel %vm3784, -1.0, 1.0
    %v3801 = vsel %vm3785, -1.0, 1.0
    %v3802 = vsel %vm3786, -1.0, 1.0
    %v3803 = vsel %vm3787, -1.0, 1.0
    %v3804 = vsel %vm3788, -1.0, 1.0
    %v3805 = vsel %vm3789, -1.0, 1.0
    %v3806 = vsel %vm3790, -1.0, 1.0
    %v3807 = vsel %vm3791, -1.0, 1.0
    %v3808 = vsel %vm3792, -1.0, 1.0
    %v3809 = vsel %vm3793, -1.0, 1.0
    %v3810 = vsel %vm3794, -1.0, 1.0
    %v3811 = vsel %vm3795, -1.0, 1.0
    %v3812 = vsel %vm3796, -1.0, 1.0
    %v3813 = vand.u32 2147483647, %v3765
    %v3814 = vand.u32 2147483647, %v3766
    %v3815 = vand.u32 2147483647, %v3767
    %v3816 = vand.u32 2147483647, %v3768
    %v3817 = vand.u32 2147483647, %v3769
    %v3818 = vand.u32 2147483647, %v3770
    %v3819 = vand.u32 2147483647, %v3771
    %v3820 = vand.u32 2147483647, %v3772
    %v3821 = vand.u32 2147483647, %v3773
    %v3822 = vand.u32 2147483647, %v3774
    %v3823 = vand.u32 2147483647, %v3775
    %v3824 = vand.u32 2147483647, %v3776
    %v3825 = vand.u32 2147483647, %v3777
    %v3826 = vand.u32 2147483647, %v3778
    %v3827 = vand.u32 2147483647, %v3779
    %v3828 = vand.u32 2147483647, %v3780
    %v3829 = vmul.f32 %v3813, 0.3275911
    %v3830 = vmul.f32 %v3814, 0.3275911
    %v3831 = vmul.f32 %v3815, 0.3275911
    %v3832 = vmul.f32 %v3816, 0.3275911
    %v3833 = vmul.f32 %v3817, 0.3275911
    %v3834 = vmul.f32 %v3818, 0.3275911
    %v3835 = vmul.f32 %v3819, 0.3275911
    %v3836 = vmul.f32 %v3820, 0.3275911
    %v3837 = vmul.f32 %v3821, 0.3275911
    %v3838 = vmul.f32 %v3822, 0.3275911
    %v3839 = vmul.f32 %v3823, 0.3275911
    %v3840 = vmul.f32 %v3824, 0.3275911
    %v3841 = vmul.f32 %v3825, 0.3275911
    %v3842 = vmul.f32 %v3826, 0.3275911
    %v3843 = vmul.f32 %v3827, 0.3275911
    %v3844 = vmul.f32 %v3828, 0.3275911
    %v3845 = vadd.f32 %v3829, 1.0
    %v3846 = vadd.f32 %v3830, 1.0
    %v3847 = vadd.f32 %v3831, 1.0
    %v3848 = vadd.f32 %v3832, 1.0
    %v3849 = vadd.f32 %v3833, 1.0
    %v3850 = vadd.f32 %v3834, 1.0
    %v3851 = vadd.f32 %v3835, 1.0
    %v3852 = vadd.f32 %v3836, 1.0
    %v3853 = vadd.f32 %v3837, 1.0
    %v3854 = vadd.f32 %v3838, 1.0
    %v3855 = vadd.f32 %v3839, 1.0
    %v3856 = vadd.f32 %v3840, 1.0
    %v3857 = vadd.f32 %v3841, 1.0
    %v3858 = vadd.f32 %v3842, 1.0
    %v3859 = vadd.f32 %v3843, 1.0
    %v3860 = vadd.f32 %v3844, 1.0
    %v3861 = vrcp.pop %v3845
    %v3862 = vrcp.pop %v3846
    %v3863 = vrcp.pop %v3847
    %v3864 = vrcp.pop %v3848
    %v3865 = vrcp.pop %v3849
    %v3866 = vrcp.pop %v3850
    %v3867 = vrcp.pop %v3851
    %v3868 = vrcp.pop %v3852
    %v3869 = vrcp.pop %v3853
    %v3870 = vrcp.pop %v3854
    %v3871 = vrcp.pop %v3855
    %v3872 = vrcp.pop %v3856
    %v3873 = vrcp.pop %v3857
    %v3874 = vrcp.pop %v3858
    %v3875 = vrcp.pop %v3859
    %v3876 = vrcp.pop %v3860
    %v3877 = vmul.f32 %v3861, 1.0614054
    %v3878 = vmul.f32 %v3862, 1.0614054
    %v3879 = vmul.f32 %v3863, 1.0614054
    %v3880 = vmul.f32 %v3864, 1.0614054
    %v3881 = vmul.f32 %v3865, 1.0614054
    %v3882 = vmul.f32 %v3866, 1.0614054
    %v3883 = vmul.f32 %v3867, 1.0614054
    %v3884 = vmul.f32 %v3868, 1.0614054
    %v3885 = vmul.f32 %v3869, 1.0614054
    %v3886 = vmul.f32 %v3870, 1.0614054
    %v3887 = vmul.f32 %v3871, 1.0614054
    %v3888 = vmul.f32 %v3872, 1.0614054
    %v3889 = vmul.f32 %v3873, 1.0614054
    %v3890 = vmul.f32 %v3874, 1.0614054
    %v3891 = vmul.f32 %v3875, 1.0614054
    %v3892 = vmul.f32 %v3876, 1.0614054
    %v3893 = vadd.f32 %v3877, -1.4531521
    %v3894 = vadd.f32 %v3878, -1.4531521
    %v3895 = vadd.f32 %v3879, -1.4531521
    %v3896 = vadd.f32 %v3880, -1.4531521
    %v3897 = vadd.f32 %v3881, -1.4531521
    %v3898 = vadd.f32 %v3882, -1.4531521
    %v3899 = vadd.f32 %v3883, -1.4531521
    %v3900 = vadd.f32 %v3884, -1.4531521
    %v3901 = vadd.f32 %v3885, -1.4531521
    %v3902 = vadd.f32 %v3886, -1.4531521
    %v3903 = vadd.f32 %v3887, -1.4531521
    %v3904 = vadd.f32 %v3888, -1.4531521
    %v3905 = vadd.f32 %v3889, -1.4531521
    %v3906 = vadd.f32 %v3890, -1.4531521
    %v3907 = vadd.f32 %v3891, -1.4531521
    %v3908 = vadd.f32 %v3892, -1.4531521
    %v3909 = vmul.f32 %v3893, %v3861
    %v3910 = vmul.f32 %v3894, %v3862
    %v3911 = vmul.f32 %v3895, %v3863
    %v3912 = vmul.f32 %v3896, %v3864
    %v3913 = vmul.f32 %v3897, %v3865
    %v3914 = vmul.f32 %v3898, %v3866
    %v3915 = vmul.f32 %v3899, %v3867
    %v3916 = vmul.f32 %v3900, %v3868
    %v3917 = vmul.f32 %v3901, %v3869
    %v3918 = vmul.f32 %v3902, %v3870
    %v3919 = vmul.f32 %v3903, %v3871
    %v3920 = vmul.f32 %v3904, %v3872
    %v3921 = vmul.f32 %v3905, %v3873
    %v3922 = vmul.f32 %v3906, %v3874
    %v3923 = vmul.f32 %v3907, %v3875
    %v3924 = vmul.f32 %v3908, %v3876
    %v3925 = vadd.f32 %v3909, 1.4214138
    %v3926 = vadd.f32 %v3910, 1.4214138
    %v3927 = vadd.f32 %v3911, 1.4214138
    %v3928 = vadd.f32 %v3912, 1.4214138
    %v3929 = vadd.f32 %v3913, 1.4214138
    %v3930 = vadd.f32 %v3914, 1.4214138
    %v3931 = vadd.f32 %v3915, 1.4214138
    %v3932 = vadd.f32 %v3916, 1.4214138
    %v3933 = vadd.f32 %v3917, 1.4214138
    %v3934 = vadd.f32 %v3918, 1.4214138
    %v3935 = vadd.f32 %v3919, 1.4214138
    %v3936 = vadd.f32 %v3920, 1.4214138
    %v3937 = vadd.f32 %v3921, 1.4214138
    %v3938 = vadd.f32 %v3922, 1.4214138
    %v3939 = vadd.f32 %v3923, 1.4214138
    %v3940 = vadd.f32 %v3924, 1.4214138
    %v3941 = vmul.f32 %v3925, %v3861
    %v3942 = vmul.f32 %v3926, %v3862
    %v3943 = vmul.f32 %v3927, %v3863
    %v3944 = vmul.f32 %v3928, %v3864
    %v3945 = vmul.f32 %v3929, %v3865
    %v3946 = vmul.f32 %v3930, %v3866
    %v3947 = vmul.f32 %v3931, %v3867
    %v3948 = vmul.f32 %v3932, %v3868
    %v3949 = vmul.f32 %v3933, %v3869
    %v3950 = vmul.f32 %v3934, %v3870
    %v3951 = vmul.f32 %v3935, %v3871
    %v3952 = vmul.f32 %v3936, %v3872
    %v3953 = vmul.f32 %v3937, %v3873
    %v3954 = vmul.f32 %v3938, %v3874
    %v3955 = vmul.f32 %v3939, %v3875
    %v3956 = vmul.f32 %v3940, %v3876
    %v3957 = vadd.f32 %v3941, -0.28449672
    %v3958 = vadd.f32 %v3942, -0.28449672
    %v3959 = vadd.f32 %v3943, -0.28449672
    %v3960 = vadd.f32 %v3944, -0.28449672
    %v3961 = vadd.f32 %v3945, -0.28449672
    %v3962 = vadd.f32 %v3946, -0.28449672
    %v3963 = vadd.f32 %v3947, -0.28449672
    %v3964 = vadd.f32 %v3948, -0.28449672
    %v3965 = vadd.f32 %v3949, -0.28449672
    %v3966 = vadd.f32 %v3950, -0.28449672
    %v3967 = vadd.f32 %v3951, -0.28449672
    %v3968 = vadd.f32 %v3952, -0.28449672
    %v3969 = vadd.f32 %v3953, -0.28449672
    %v3970 = vadd.f32 %v3954, -0.28449672
    %v3971 = vadd.f32 %v3955, -0.28449672
    %v3972 = vadd.f32 %v3956, -0.28449672
    %v3973 = vmul.f32 %v3957, %v3861
    %v3974 = vmul.f32 %v3958, %v3862
    %v3975 = vmul.f32 %v3959, %v3863
    %v3976 = vmul.f32 %v3960, %v3864
    %v3977 = vmul.f32 %v3961, %v3865
    %v3978 = vmul.f32 %v3962, %v3866
    %v3979 = vmul.f32 %v3963, %v3867
    %v3980 = vmul.f32 %v3964, %v3868
    %v3981 = vmul.f32 %v3965, %v3869
    %v3982 = vmul.f32 %v3966, %v3870
    %v3983 = vmul.f32 %v3967, %v3871
    %v3984 = vmul.f32 %v3968, %v3872
    %v3985 = vmul.f32 %v3969, %v3873
    %v3986 = vmul.f32 %v3970, %v3874
    %v3987 = vmul.f32 %v3971, %v3875
    %v3988 = vmul.f32 %v3972, %v3876
    %v3989 = vadd.f32 %v3973, 0.2548296
    %v3990 = vadd.f32 %v3974, 0.2548296
    %v3991 = vadd.f32 %v3975, 0.2548296
    %v3992 = vadd.f32 %v3976, 0.2548296
    %v3993 = vadd.f32 %v3977, 0.2548296
    %v3994 = vadd.f32 %v3978, 0.2548296
    %v3995 = vadd.f32 %v3979, 0.2548296
    %v3996 = vadd.f32 %v3980, 0.2548296
    %v3997 = vadd.f32 %v3981, 0.2548296
    %v3998 = vadd.f32 %v3982, 0.2548296
    %v3999 = vadd.f32 %v3983, 0.2548296
    %v4000 = vadd.f32 %v3984, 0.2548296
    %v4001 = vadd.f32 %v3985, 0.2548296
    %v4002 = vadd.f32 %v3986, 0.2548296
    %v4003 = vadd.f32 %v3987, 0.2548296
    %v4004 = vadd.f32 %v3988, 0.2548296
    %v4005 = vmul.f32 %v3989, %v3861
    %v4006 = vmul.f32 %v3990, %v3862
    %v4007 = vmul.f32 %v3991, %v3863
    %v4008 = vmul.f32 %v3992, %v3864
    %v4009 = vmul.f32 %v3993, %v3865
    %v4010 = vmul.f32 %v3994, %v3866
    %v4011 = vmul.f32 %v3995, %v3867
    %v4012 = vmul.f32 %v3996, %v3868
    %v4013 = vmul.f32 %v3997, %v3869
    %v4014 = vmul.f32 %v3998, %v3870
    %v4015 = vmul.f32 %v3999, %v3871
    %v4016 = vmul.f32 %v4000, %v3872
    %v4017 = vmul.f32 %v4001, %v3873
    %v4018 = vmul.f32 %v4002, %v3874
    %v4019 = vmul.f32 %v4003, %v3875
    %v4020 = vmul.f32 %v4004, %v3876
    %v4021 = vsub.f32 0.0, %v3813
    %v4022 = vsub.f32 0.0, %v3814
    %v4023 = vsub.f32 0.0, %v3815
    %v4024 = vsub.f32 0.0, %v3816
    %v4025 = vsub.f32 0.0, %v3817
    %v4026 = vsub.f32 0.0, %v3818
    %v4027 = vsub.f32 0.0, %v3819
    %v4028 = vsub.f32 0.0, %v3820
    %v4029 = vsub.f32 0.0, %v3821
    %v4030 = vsub.f32 0.0, %v3822
    %v4031 = vsub.f32 0.0, %v3823
    %v4032 = vsub.f32 0.0, %v3824
    %v4033 = vsub.f32 0.0, %v3825
    %v4034 = vsub.f32 0.0, %v3826
    %v4035 = vsub.f32 0.0, %v3827
    %v4036 = vsub.f32 0.0, %v3828
    %v4037 = vmul.f32 %v4021, %v3813
    %v4038 = vmul.f32 %v4022, %v3814
    %v4039 = vmul.f32 %v4023, %v3815
    %v4040 = vmul.f32 %v4024, %v3816
    %v4041 = vmul.f32 %v4025, %v3817
    %v4042 = vmul.f32 %v4026, %v3818
    %v4043 = vmul.f32 %v4027, %v3819
    %v4044 = vmul.f32 %v4028, %v3820
    %v4045 = vmul.f32 %v4029, %v3821
    %v4046 = vmul.f32 %v4030, %v3822
    %v4047 = vmul.f32 %v4031, %v3823
    %v4048 = vmul.f32 %v4032, %v3824
    %v4049 = vmul.f32 %v4033, %v3825
    %v4050 = vmul.f32 %v4034, %v3826
    %v4051 = vmul.f32 %v4035, %v3827
    %v4052 = vmul.f32 %v4036, %v3828
    %v4053 = vmul.f32 %v4037, 1.442695
    %v4054 = vpow.pop %v4053
    %v4055 = vmul.f32 %v4038, 1.442695
    %v4056 = vpow.pop %v4055
    %v4057 = vmul.f32 %v4039, 1.442695
    %v4058 = vpow.pop %v4057
    %v4059 = vmul.f32 %v4040, 1.442695
    %v4060 = vpow.pop %v4059
    %v4061 = vmul.f32 %v4041, 1.442695
    %v4062 = vpow.pop %v4061
    %v4063 = vmul.f32 %v4042, 1.442695
    %v4064 = vpow.pop %v4063
    %v4065 = vmul.f32 %v4043, 1.442695
    %v4066 = vpow.pop %v4065
    %v4067 = vmul.f32 %v4044, 1.442695
    %v4068 = vpow.pop %v4067
    %v4069 = vmul.f32 %v4045, 1.442695
    %v4070 = vpow.pop %v4069
    %v4071 = vmul.f32 %v4046, 1.442695
    %v4072 = vpow.pop %v4071
    %v4073 = vmul.f32 %v4047, 1.442695
    %v4074 = vpow.pop %v4073
    %v4075 = vmul.f32 %v4048, 1.442695
    %v4076 = vpow.pop %v4075
    %v4077 = vmul.f32 %v4049, 1.442695
    %v4078 = vpow.pop %v4077
    %v4079 = vmul.f32 %v4050, 1.442695
    %v4080 = vpow.pop %v4079
    %v4081 = vmul.f32 %v4051, 1.442695
    %v4082 = vpow.pop %v4081
    %v4083 = vmul.f32 %v4052, 1.442695
    %v4084 = vpow.pop %v4083
    %v4085 = vmul.f32 %v4005, %v4054
    %v4086 = vmul.f32 %v4006, %v4056
    %v4087 = vmul.f32 %v4007, %v4058
    %v4088 = vmul.f32 %v4008, %v4060
    %v4089 = vmul.f32 %v4009, %v4062
    %v4090 = vmul.f32 %v4010, %v4064
    %v4091 = vmul.f32 %v4011, %v4066
    %v4092 = vmul.f32 %v4012, %v4068
    %v4093 = vmul.f32 %v4013, %v4070
    %v4094 = vmul.f32 %v4014, %v4072
    %v4095 = vmul.f32 %v4015, %v4074
    %v4096 = vmul.f32 %v4016, %v4076
    %v4097 = vmul.f32 %v4017, %v4078
    %v4098 = vmul.f32 %v4018, %v4080
    %v4099 = vmul.f32 %v4019, %v4082
    %v4100 = vmul.f32 %v4020, %v4084
    %v4101 = vsub.f32 1.0, %v4085
    %v4102 = vsub.f32 1.0, %v4086
    %v4103 = vsub.f32 1.0, %v4087
    %v4104 = vsub.f32 1.0, %v4088
    %v4105 = vsub.f32 1.0, %v4089
    %v4106 = vsub.f32 1.0, %v4090
    %v4107 = vsub.f32 1.0, %v4091
    %v4108 = vsub.f32 1.0, %v4092
    %v4109 = vsub.f32 1.0, %v4093
    %v4110 = vsub.f32 1.0, %v4094
    %v4111 = vsub.f32 1.0, %v4095
    %v4112 = vsub.f32 1.0, %v4096
    %v4113 = vsub.f32 1.0, %v4097
    %v4114 = vsub.f32 1.0, %v4098
    %v4115 = vsub.f32 1.0, %v4099
    %v4116 = vsub.f32 1.0, %v4100
    %v4117 = vmul.f32 %v3797, %v4101
    %v4118 = vmul.f32 %v3798, %v4102
    %v4119 = vmul.f32 %v3799, %v4103
    %v4120 = vmul.f32 %v3800, %v4104
    %v4121 = vmul.f32 %v3801, %v4105
    %v4122 = vmul.f32 %v3802, %v4106
    %v4123 = vmul.f32 %v3803, %v4107
    %v4124 = vmul.f32 %v3804, %v4108
    %v4125 = vmul.f32 %v3805, %v4109
    %v4126 = vmul.f32 %v3806, %v4110
    %v4127 = vmul.f32 %v3807, %v4111
    %v4128 = vmul.f32 %v3808, %v4112
    %v4129 = vmul.f32 %v3809, %v4113
    %v4130 = vmul.f32 %v3810, %v4114
    %v4131 = vmul.f32 %v3811, %v4115
    %v4132 = vmul.f32 %v3812, %v4116
    %v4133 = vadd.f32 %v4117, 1.0
    %v4134 = vadd.f32 %v4118, 1.0
    %v4135 = vadd.f32 %v4119, 1.0
    %v4136 = vadd.f32 %v4120, 1.0
    %v4137 = vadd.f32 %v4121, 1.0
    %v4138 = vadd.f32 %v4122, 1.0
    %v4139 = vadd.f32 %v4123, 1.0
    %v4140 = vadd.f32 %v4124, 1.0
    %v4141 = vadd.f32 %v4125, 1.0
    %v4142 = vadd.f32 %v4126, 1.0
    %v4143 = vadd.f32 %v4127, 1.0
    %v4144 = vadd.f32 %v4128, 1.0
    %v4145 = vadd.f32 %v4129, 1.0
    %v4146 = vadd.f32 %v4130, 1.0
    %v4147 = vadd.f32 %v4131, 1.0
    %v4148 = vadd.f32 %v4132, 1.0
    %v4149 = vmul.f32 %v3749, %v4133
    %v4150 = vmul.f32 %v3750, %v4134
    %v4151 = vmul.f32 %v3751, %v4135
    %v4152 = vmul.f32 %v3752, %v4136
    %v4153 = vmul.f32 %v3753, %v4137
    %v4154 = vmul.f32 %v3754, %v4138
    %v4155 = vmul.f32 %v3755, %v4139
    %v4156 = vmul.f32 %v3756, %v4140
    %v4157 = vmul.f32 %v3757, %v4141
    %v4158 = vmul.f32 %v3758, %v4142
    %v4159 = vmul.f32 %v3759, %v4143
    %v4160 = vmul.f32 %v3760, %v4144
    %v4161 = vmul.f32 %v3761, %v4145
    %v4162 = vmul.f32 %v3762, %v4146
    %v4163 = vmul.f32 %v3763, %v4147
    %v4164 = vmul.f32 %v3764, %v4148
    %v4165 = vld [vmem:[%s67] sm:$0xff]
    %v4166 = vld [vmem:[%s67 + $0x8] sm:$0xff]
    %v4167 = vld [vmem:[%s67 + $0x10] sm:$0xff]
    %v4168 = vld [vmem:[%s67 + $0x18] sm:$0xff]
    %v4169 = vld [vmem:[%s67 + $0x20] sm:$0xff]
    %v4170 = vld [vmem:[%s67 + $0x28] sm:$0xff]
    %v4171 = vld [vmem:[%s67 + $0x30] sm:$0xff]
    %v4172 = vld [vmem:[%s67 + $0x38] sm:$0xff]
    %v4173 = vld [vmem:[%s67 + $0x40] sm:$0xff]
    %v4174 = vld [vmem:[%s67 + $0x48] sm:$0xff]
    %v4175 = vld [vmem:[%s67 + $0x50] sm:$0xff]
    %v4176 = vld [vmem:[%s67 + $0x58] sm:$0xff]
    %v4177 = vld [vmem:[%s67 + $0x60] sm:$0xff]
    %v4178 = vld [vmem:[%s67 + $0x68] sm:$0xff]
    %v4179 = vld [vmem:[%s67 + $0x70] sm:$0xff]
    %v4180 = vld [vmem:[%s67 + $0x78] sm:$0xff]
    %v4181 = vld [vmem:[%s67 + $0x80] sm:$0xff]
    %v4182 = vld [vmem:[%s67 + $0x88] sm:$0xff]
    %v4183 = vld [vmem:[%s67 + $0x90] sm:$0xff]
    %v4184 = vld [vmem:[%s67 + $0x98] sm:$0xff]
    %v4185 = vld [vmem:[%s67 + $0xa0] sm:$0xff]
    %v4186 = vld [vmem:[%s67 + $0xa8] sm:$0xff]
    %v4187 = vld [vmem:[%s67 + $0xb0] sm:$0xff]
    %v4188 = vld [vmem:[%s67 + $0xb8] sm:$0xff]
    %v4189 = vld [vmem:[%s67 + $0xc0] sm:$0xff]
    %v4190 = vld [vmem:[%s67 + $0xc8] sm:$0xff]
    %v4191 = vld [vmem:[%s67 + $0xd0] sm:$0xff]
    %v4192 = vld [vmem:[%s67 + $0xd8] sm:$0xff]
    %v4193 = vld [vmem:[%s67 + $0xe0] sm:$0xff]
    %v4194 = vld [vmem:[%s67 + $0xe8] sm:$0xff]
    %v4195 = vld [vmem:[%s67 + $0xf0] sm:$0xff]
    %v4196 = vld [vmem:[%s67 + $0xf8] sm:$0xff]
    %v4197 = vld [vmem:[%s67 + $0x100] sm:$0xff]
    %v4198 = vld [vmem:[%s67 + $0x108] sm:$0xff]
    %v4199 = vld [vmem:[%s67 + $0x110] sm:$0xff]
    %v4200 = vld [vmem:[%s67 + $0x118] sm:$0xff]
    %v4201 = vld [vmem:[%s67 + $0x120] sm:$0xff]
    %v4202 = vld [vmem:[%s67 + $0x128] sm:$0xff]
    %v4203 = vld [vmem:[%s67 + $0x130] sm:$0xff]
    %v4204 = vld [vmem:[%s67 + $0x138] sm:$0xff]
    %v4205 = vld [vmem:[%s67 + $0x140] sm:$0xff]
    %v4206 = vld [vmem:[%s67 + $0x148] sm:$0xff]
    %v4207 = vld [vmem:[%s67 + $0x150] sm:$0xff]
    %v4208 = vld [vmem:[%s67 + $0x158] sm:$0xff]
    %v4209 = vld [vmem:[%s67 + $0x160] sm:$0xff]
    %v4210 = vld [vmem:[%s67 + $0x168] sm:$0xff]
    %v4211 = vld [vmem:[%s67 + $0x170] sm:$0xff]
    %v4212 = vld [vmem:[%s67 + $0x178] sm:$0xff]
    %v4213 = vld [vmem:[%s67 + $0x180] sm:$0xff]
    %v4214 = vld [vmem:[%s67 + $0x188] sm:$0xff]
    %v4215 = vld [vmem:[%s67 + $0x190] sm:$0xff]
    %v4216 = vld [vmem:[%s67 + $0x198] sm:$0xff]
    %v4217 = vld [vmem:[%s67 + $0x1a0] sm:$0xff]
    %v4218 = vld [vmem:[%s67 + $0x1a8] sm:$0xff]
    %v4219 = vld [vmem:[%s67 + $0x1b0] sm:$0xff]
    %v4220 = vld [vmem:[%s67 + $0x1b8] sm:$0xff]
    %v4221 = vld [vmem:[%s67 + $0x1c0] sm:$0xff]
    %v4222 = vld [vmem:[%s67 + $0x1c8] sm:$0xff]
    %v4223 = vld [vmem:[%s67 + $0x1d0] sm:$0xff]
    %v4224 = vld [vmem:[%s67 + $0x1d8] sm:$0xff]
    %v4225 = vld [vmem:[%s67 + $0x1e0] sm:$0xff]
    %v4226 = vld [vmem:[%s67 + $0x1e8] sm:$0xff]
    %v4227 = vld [vmem:[%s67 + $0x1f0] sm:$0xff]
    %v4228 = vld [vmem:[%s67 + $0x1f8] sm:$0xff]
    %v4229 = vld [vmem:[#allocation16] sm:$0x1]
    %v4231 = vlaneseq
    %v4232 = vshrl.u32 %v4231, 7
    %v4233 = vsub.s32 0, %v4232
    %v4234 = vrot.slane %v4229, %v4233
    %4236 = vmatprep.subr.mxu0 0.0
    %4237 = vmatpush1.msra.mxu0 %v4180
    %4238 = vmatprep.subr.mxu0 0.0
    %4239 = vmatpush1.msra.mxu0 %v4179
    %4240 = vmatprep.subr.mxu0 0.0
    %4241 = vmatpush1.msra.mxu0 %v4178
    %4242 = vmatprep.subr.mxu0 0.0
    %4243 = vmatpush1.msra.mxu0 %v4177
    %4244 = vmatprep.subr.mxu0 0.0
    %4245 = vmatpush1.msra.mxu0 %v4176
    %4246 = vmatprep.subr.mxu0 0.0
    %4247 = vmatpush1.msra.mxu0 %v4175
    %4248 = vmatprep.subr.mxu0 0.0
    %4249 = vmatpush1.msra.mxu0 %v4174
    %4250 = vmatprep.subr.mxu0 0.0
    %4251 = vmatpush1.msra.mxu0 %v4173
    %4252 = vmatprep.subr.mxu0 0.0
    %4253 = vmatpush1.msra.mxu0 %v4172
    %4254 = vmatprep.subr.mxu0 0.0
    %4255 = vmatpush1.msra.mxu0 %v4171
    %4256 = vmatprep.subr.mxu0 0.0
    %4257 = vmatpush1.msra.mxu0 %v4170
    %4258 = vmatprep.subr.mxu0 0.0
    %4259 = vmatpush1.msra.mxu0 %v4169
    %4260 = vmatprep.subr.mxu0 0.0
    %4261 = vmatpush1.msra.mxu0 %v4168
    %4262 = vmatprep.subr.mxu0 0.0
    %4263 = vmatpush1.msra.mxu0 %v4167
    %4264 = vmatprep.subr.mxu0 0.0
    %4265 = vmatpush1.msra.mxu0 %v4166
    %4266 = vmatprep.subr.mxu0 0.0
    %4267 = vmatpush1.msra.mxu0 %v4165
    %4268 = vmatprep.subr.mxu0 0.0
    %4269 = vmatpush2.msra.mxu0 %v4196
    %4270 = vmatprep.subr.mxu0 0.0
    %4271 = vmatpush2.msra.mxu0 %v4195
    %4272 = vmatprep.subr.mxu0 0.0
    %4273 = vmatpush2.msra.mxu0 %v4194
    %4274 = vmatprep.subr.mxu0 0.0
    %4275 = vmatpush2.msra.mxu0 %v4193
    %4276 = vmatprep.subr.mxu0 0.0
    %4277 = vmatpush2.msra.mxu0 %v4192
    %4278 = vmatprep.subr.mxu0 0.0
    %4279 = vmatpush2.msra.mxu0 %v4191
    %4280 = vmatprep.subr.mxu0 0.0
    %4281 = vmatpush2.msra.mxu0 %v4190
    %4282 = vmatprep.subr.mxu0 0.0
    %4283 = vmatpush2.msra.mxu0 %v4189
    %4284 = vmatprep.subr.mxu0 0.0
    %4285 = vmatpush2.msra.mxu0 %v4188
    %4286 = vmatprep.subr.mxu0 0.0
    %4287 = vmatpush2.msra.mxu0 %v4187
    %4288 = vmatprep.subr.mxu0 0.0
    %4289 = vmatpush2.msra.mxu0 %v4186
    %4290 = vmatprep.subr.mxu0 0.0
    %4291 = vmatpush2.msra.mxu0 %v4185
    %4292 = vmatprep.subr.mxu0 0.0
    %4293 = vmatpush2.msra.mxu0 %v4184
    %4294 = vmatprep.subr.mxu0 0.0
    %4295 = vmatpush2.msra.mxu0 %v4183
    %4296 = vmatprep.subr.mxu0 0.0
    %4297 = vmatpush2.msra.mxu0 %v4182
    %4298 = vmatprep.subr.mxu0 0.0
    %4299 = vmatpush2.msra.mxu0 %v4181
    %4300 = vmatprep.mubr.f32.mxu0 %v4150
    %4301 = vmatmul.mubr.f32.gmra.mxu0 %v4149
    %v4302 = vpop.f32.mrf.mxu0
    %v4303 = vadd.f32 %v4234, %v4302
    %v4304 = vpop.f32.mrf.mxu0
    %4305 = vmatprep.mubr.f32.mxu0 %v4154
    %4306 = vmatmul.mubr.f32.gmra.mxu0 %v4153
    %v4307 = vpop.f32.mrf.mxu0
    %v4308 = vadd.f32 %v4234, %v4307
    %v4309 = vpop.f32.mrf.mxu0
    %4310 = vmatprep.mubr.f32.mxu0 %v4158
    %4311 = vmatmul.mubr.f32.gmra.mxu0 %v4157
    %v4312 = vpop.f32.mrf.mxu0
    %v4313 = vadd.f32 %v4234, %v4312
    %v4314 = vpop.f32.mrf.mxu0
    %4315 = vmatprep.mubr.f32.mxu0 %v4162
    %4316 = vmatmul.mubr.f32.gmra.mxu0 %v4161
    %v4317 = vpop.f32.mrf.mxu0
    %v4318 = vadd.f32 %v4234, %v4317
    %v4319 = vpop.f32.mrf.mxu0
    %4320 = vdwg.mxu0
    %4321 = vmatprep.subr.mxu0 0.0
    %4322 = vmatpush1.msra.mxu0 %v4212
    %4323 = vmatprep.subr.mxu0 0.0
    %4324 = vmatpush1.msra.mxu0 %v4211
    %4325 = vmatprep.subr.mxu0 0.0
    %4326 = vmatpush1.msra.mxu0 %v4210
    %4327 = vmatprep.subr.mxu0 0.0
    %4328 = vmatpush1.msra.mxu0 %v4209
    %4329 = vmatprep.subr.mxu0 0.0
    %4330 = vmatpush1.msra.mxu0 %v4208
    %4331 = vmatprep.subr.mxu0 0.0
    %4332 = vmatpush1.msra.mxu0 %v4207
    %4333 = vmatprep.subr.mxu0 0.0
    %4334 = vmatpush1.msra.mxu0 %v4206
    %4335 = vmatprep.subr.mxu0 0.0
    %4336 = vmatpush1.msra.mxu0 %v4205
    %4337 = vmatprep.subr.mxu0 0.0
    %4338 = vmatpush1.msra.mxu0 %v4204
    %4339 = vmatprep.subr.mxu0 0.0
    %4340 = vmatpush1.msra.mxu0 %v4203
    %4341 = vmatprep.subr.mxu0 0.0
    %4342 = vmatpush1.msra.mxu0 %v4202
    %4343 = vmatprep.subr.mxu0 0.0
    %4344 = vmatpush1.msra.mxu0 %v4201
    %4345 = vmatprep.subr.mxu0 0.0
    %4346 = vmatpush1.msra.mxu0 %v4200
    %4347 = vmatprep.subr.mxu0 0.0
    %4348 = vmatpush1.msra.mxu0 %v4199
    %4349 = vmatprep.subr.mxu0 0.0
    %4350 = vmatpush1.msra.mxu0 %v4198
    %4351 = vmatprep.subr.mxu0 0.0
    %4352 = vmatpush1.msra.mxu0 %v4197
    %4353 = vmatprep.subr.mxu0 0.0
    %4354 = vmatpush2.msra.mxu0 %v4228
    %4355 = vmatprep.subr.mxu0 0.0
    %4356 = vmatpush2.msra.mxu0 %v4227
    %4357 = vmatprep.subr.mxu0 0.0
    %4358 = vmatpush2.msra.mxu0 %v4226
    %4359 = vmatprep.subr.mxu0 0.0
    %4360 = vmatpush2.msra.mxu0 %v4225
    %4361 = vmatprep.subr.mxu0 0.0
    %4362 = vmatpush2.msra.mxu0 %v4224
    %4363 = vmatprep.subr.mxu0 0.0
    %4364 = vmatpush2.msra.mxu0 %v4223
    %4365 = vmatprep.subr.mxu0 0.0
    %4366 = vmatpush2.msra.mxu0 %v4222
    %4367 = vmatprep.subr.mxu0 0.0
    %4368 = vmatpush2.msra.mxu0 %v4221
    %4369 = vmatprep.subr.mxu0 0.0
    %4370 = vmatpush2.msra.mxu0 %v4220
    %4371 = vmatprep.subr.mxu0 0.0
    %4372 = vmatpush2.msra.mxu0 %v4219
    %4373 = vmatprep.subr.mxu0 0.0
    %4374 = vmatpush2.msra.mxu0 %v4218
    %4375 = vmatprep.subr.mxu0 0.0
    %4376 = vmatpush2.msra.mxu0 %v4217
    %4377 = vmatprep.subr.mxu0 0.0
    %4378 = vmatpush2.msra.mxu0 %v4216
    %4379 = vmatprep.subr.mxu0 0.0
    %4380 = vmatpush2.msra.mxu0 %v4215
    %4381 = vmatprep.subr.mxu0 0.0
    %4382 = vmatpush2.msra.mxu0 %v4214
    %4383 = vmatprep.subr.mxu0 0.0
    %4384 = vmatpush2.msra.mxu0 %v4213
    %4385 = vmatprep.mubr.f32.mxu0 %v4152
    %4386 = vmatmul.mubr.f32.gmra.mxu0 %v4151
    %v4387 = vpop.f32.mrf.mxu0
    %v4388 = vadd.f32 %v4303, %v4387
    %v4389 = vpop.f32.mrf.mxu0
    %4390 = vmatprep.mubr.f32.mxu0 %v4156
    %4391 = vmatmul.mubr.f32.gmra.mxu0 %v4155
    %v4392 = vpop.f32.mrf.mxu0
    %v4393 = vadd.f32 %v4308, %v4392
    %v4394 = vpop.f32.mrf.mxu0
    %4395 = vmatprep.mubr.f32.mxu0 %v4160
    %4396 = vmatmul.mubr.f32.gmra.mxu0 %v4159
    %v4397 = vpop.f32.mrf.mxu0
    %v4398 = vadd.f32 %v4313, %v4397
    %v4399 = vpop.f32.mrf.mxu0
    %4400 = vmatprep.mubr.f32.mxu0 %v4164
    %4401 = vmatmul.mubr.f32.gmra.mxu0 %v4163
    %v4402 = vpop.f32.mrf.mxu0
    %v4403 = vadd.f32 %v4318, %v4402
    %v4404 = vpop.f32.mrf.mxu0
    %4405 = vdwg.mxu0
    %v4406 = vmul.f32 %v4388, 0.5
    %v4407 = vmul.f32 %v4393, 0.5
    %v4408 = vmul.f32 %v4398, 0.5
    %v4409 = vmul.f32 %v4403, 0.5
    %v4410 = vmul.f32 %v4388, 0.70710677
    %v4411 = vmul.f32 %v4393, 0.70710677
    %v4412 = vmul.f32 %v4398, 0.70710677
    %v4413 = vmul.f32 %v4403, 0.70710677
    %vm4414 = vcmp.lt.f32.partialorder %v4410, 0.0
    %vm4415 = vcmp.lt.f32.partialorder %v4411, 0.0
    %vm4416 = vcmp.lt.f32.partialorder %v4412, 0.0
    %vm4417 = vcmp.lt.f32.partialorder %v4413, 0.0
    %v4418 = vsel %vm4414, -1.0, 1.0
    %v4419 = vsel %vm4415, -1.0, 1.0
    %v4420 = vsel %vm4416, -1.0, 1.0
    %v4421 = vsel %vm4417, -1.0, 1.0
    %v4422 = vand.u32 2147483647, %v4410
    %v4423 = vand.u32 2147483647, %v4411
    %v4424 = vand.u32 2147483647, %v4412
    %v4425 = vand.u32 2147483647, %v4413
    %v4426 = vmul.f32 %v4422, 0.3275911
    %v4427 = vmul.f32 %v4423, 0.3275911
    %v4428 = vmul.f32 %v4424, 0.3275911
    %v4429 = vmul.f32 %v4425, 0.3275911
    %v4430 = vadd.f32 %v4426, 1.0
    %v4431 = vadd.f32 %v4427, 1.0
    %v4432 = vadd.f32 %v4428, 1.0
    %v4433 = vadd.f32 %v4429, 1.0
    %v4434 = vrcp.pop %v4430
    %v4435 = vrcp.pop %v4431
    %v4436 = vrcp.pop %v4432
    %v4437 = vrcp.pop %v4433
    %v4438 = vmul.f32 %v4434, 1.0614054
    %v4439 = vmul.f32 %v4435, 1.0614054
    %v4440 = vmul.f32 %v4436, 1.0614054
    %v4441 = vmul.f32 %v4437, 1.0614054
    %v4442 = vadd.f32 %v4438, -1.4531521
    %v4443 = vadd.f32 %v4439, -1.4531521
    %v4444 = vadd.f32 %v4440, -1.4531521
    %v4445 = vadd.f32 %v4441, -1.4531521
    %v4446 = vmul.f32 %v4442, %v4434
    %v4447 = vmul.f32 %v4443, %v4435
    %v4448 = vmul.f32 %v4444, %v4436
    %v4449 = vmul.f32 %v4445, %v4437
    %v4450 = vadd.f32 %v4446, 1.4214138
    %v4451 = vadd.f32 %v4447, 1.4214138
    %v4452 = vadd.f32 %v4448, 1.4214138
    %v4453 = vadd.f32 %v4449, 1.4214138
    %v4454 = vmul.f32 %v4450, %v4434
    %v4455 = vmul.f32 %v4451, %v4435
    %v4456 = vmul.f32 %v4452, %v4436
    %v4457 = vmul.f32 %v4453, %v4437
    %v4458 = vadd.f32 %v4454, -0.28449672
    %v4459 = vadd.f32 %v4455, -0.28449672
    %v4460 = vadd.f32 %v4456, -0.28449672
    %v4461 = vadd.f32 %v4457, -0.28449672
    %v4462 = vmul.f32 %v4458, %v4434
    %v4463 = vmul.f32 %v4459, %v4435
    %v4464 = vmul.f32 %v4460, %v4436
    %v4465 = vmul.f32 %v4461, %v4437
    %v4466 = vadd.f32 %v4462, 0.2548296
    %v4467 = vadd.f32 %v4463, 0.2548296
    %v4468 = vadd.f32 %v4464, 0.2548296
    %v4469 = vadd.f32 %v4465, 0.2548296
    %v4470 = vmul.f32 %v4466, %v4434
    %v4471 = vmul.f32 %v4467, %v4435
    %v4472 = vmul.f32 %v4468, %v4436
    %v4473 = vmul.f32 %v4469, %v4437
    %v4474 = vsub.f32 0.0, %v4422
    %v4475 = vsub.f32 0.0, %v4423
    %v4476 = vsub.f32 0.0, %v4424
    %v4477 = vsub.f32 0.0, %v4425
    %v4478 = vmul.f32 %v4474, %v4422
    %v4479 = vmul.f32 %v4475, %v4423
    %v4480 = vmul.f32 %v4476, %v4424
    %v4481 = vmul.f32 %v4477, %v4425
    %v4482 = vmul.f32 %v4478, 1.442695
    %v4483 = vpow.pop %v4482
    %v4484 = vmul.f32 %v4479, 1.442695
    %v4485 = vpow.pop %v4484
    %v4486 = vmul.f32 %v4480, 1.442695
    %v4487 = vpow.pop %v4486
    %v4488 = vmul.f32 %v4481, 1.442695
    %v4489 = vpow.pop %v4488
    %v4490 = vmul.f32 %v4470, %v4483
    %v4491 = vmul.f32 %v4471, %v4485
    %v4492 = vmul.f32 %v4472, %v4487
    %v4493 = vmul.f32 %v4473, %v4489
    %v4494 = vsub.f32 1.0, %v4490
    %v4495 = vsub.f32 1.0, %v4491
    %v4496 = vsub.f32 1.0, %v4492
    %v4497 = vsub.f32 1.0, %v4493
    %v4498 = vmul.f32 %v4418, %v4494
    %v4499 = vmul.f32 %v4419, %v4495
    %v4500 = vmul.f32 %v4420, %v4496
    %v4501 = vmul.f32 %v4421, %v4497
    %v4502 = vadd.f32 %v4498, 1.0
    %v4503 = vadd.f32 %v4499, 1.0
    %v4504 = vadd.f32 %v4500, 1.0
    %v4505 = vadd.f32 %v4501, 1.0
    %v4506 = vmul.f32 %v4406, %v4502
    %v4507 = vmul.f32 %v4407, %v4503
    %v4508 = vmul.f32 %v4408, %v4504
    %v4509 = vmul.f32 %v4409, %v4505
    %v4510 = vld [vmem:[%s71] sm:$0xff]
    %v4511 = vld [vmem:[%s71 + $0x8] sm:$0xff]
    %v4512 = vld [vmem:[%s71 + $0x10] sm:$0xff]
    %v4513 = vld [vmem:[%s71 + $0x18] sm:$0xff]
    %v4514 = vld [vmem:[%s71 + $0x20] sm:$0xff]
    %v4515 = vld [vmem:[%s71 + $0x28] sm:$0xff]
    %v4516 = vld [vmem:[%s71 + $0x30] sm:$0xff]
    %v4517 = vld [vmem:[%s71 + $0x38] sm:$0xff]
    %v4518 = vld [vmem:[%s71 + $0x40] sm:$0xff]
    %v4519 = vld [vmem:[%s71 + $0x48] sm:$0xff]
    %v4520 = vld [vmem:[%s71 + $0x50] sm:$0xff]
    %v4521 = vld [vmem:[%s71 + $0x58] sm:$0xff]
    %v4522 = vld [vmem:[%s71 + $0x60] sm:$0xff]
    %v4523 = vld [vmem:[%s71 + $0x68] sm:$0xff]
    %v4524 = vld [vmem:[%s71 + $0x70] sm:$0xff]
    %v4525 = vld [vmem:[%s71 + $0x78] sm:$0xff]
    %v4526 = vld [vmem:[%s71 + $0x80] sm:$0xff]
    %v4527 = vld [vmem:[%s71 + $0x88] sm:$0xff]
    %v4528 = vld [vmem:[%s71 + $0x90] sm:$0xff]
    %v4529 = vld [vmem:[%s71 + $0x98] sm:$0xff]
    %v4530 = vld [vmem:[%s71 + $0xa0] sm:$0xff]
    %v4531 = vld [vmem:[%s71 + $0xa8] sm:$0xff]
    %v4532 = vld [vmem:[%s71 + $0xb0] sm:$0xff]
    %v4533 = vld [vmem:[%s71 + $0xb8] sm:$0xff]
    %v4534 = vld [vmem:[%s71 + $0xc0] sm:$0xff]
    %v4535 = vld [vmem:[%s71 + $0xc8] sm:$0xff]
    %v4536 = vld [vmem:[%s71 + $0xd0] sm:$0xff]
    %v4537 = vld [vmem:[%s71 + $0xd8] sm:$0xff]
    %v4538 = vld [vmem:[%s71 + $0xe0] sm:$0xff]
    %v4539 = vld [vmem:[%s71 + $0xe8] sm:$0xff]
    %v4540 = vld [vmem:[%s71 + $0xf0] sm:$0xff]
    %v4541 = vld [vmem:[%s71 + $0xf8] sm:$0xff]
    %v4542 = vld [vmem:[%s71 + $0x100] sm:$0xff]
    %v4543 = vld [vmem:[%s71 + $0x108] sm:$0xff]
    %v4544 = vld [vmem:[%s71 + $0x110] sm:$0xff]
    %v4545 = vld [vmem:[%s71 + $0x118] sm:$0xff]
    %v4546 = vld [vmem:[%s71 + $0x120] sm:$0xff]
    %v4547 = vld [vmem:[%s71 + $0x128] sm:$0xff]
    %v4548 = vld [vmem:[%s71 + $0x130] sm:$0xff]
    %v4549 = vld [vmem:[%s71 + $0x138] sm:$0xff]
    %v4550 = vld [vmem:[%s71 + $0x140] sm:$0xff]
    %v4551 = vld [vmem:[%s71 + $0x148] sm:$0xff]
    %v4552 = vld [vmem:[%s71 + $0x150] sm:$0xff]
    %v4553 = vld [vmem:[%s71 + $0x158] sm:$0xff]
    %v4554 = vld [vmem:[%s71 + $0x160] sm:$0xff]
    %v4555 = vld [vmem:[%s71 + $0x168] sm:$0xff]
    %v4556 = vld [vmem:[%s71 + $0x170] sm:$0xff]
    %v4557 = vld [vmem:[%s71 + $0x178] sm:$0xff]
    %v4558 = vld [vmem:[%s71 + $0x180] sm:$0xff]
    %v4559 = vld [vmem:[%s71 + $0x188] sm:$0xff]
    %v4560 = vld [vmem:[%s71 + $0x190] sm:$0xff]
    %v4561 = vld [vmem:[%s71 + $0x198] sm:$0xff]
    %v4562 = vld [vmem:[%s71 + $0x1a0] sm:$0xff]
    %v4563 = vld [vmem:[%s71 + $0x1a8] sm:$0xff]
    %v4564 = vld [vmem:[%s71 + $0x1b0] sm:$0xff]
    %v4565 = vld [vmem:[%s71 + $0x1b8] sm:$0xff]
    %v4566 = vld [vmem:[%s71 + $0x1c0] sm:$0xff]
    %v4567 = vld [vmem:[%s71 + $0x1c8] sm:$0xff]
    %v4568 = vld [vmem:[%s71 + $0x1d0] sm:$0xff]
    %v4569 = vld [vmem:[%s71 + $0x1d8] sm:$0xff]
    %v4570 = vld [vmem:[%s71 + $0x1e0] sm:$0xff]
    %v4571 = vld [vmem:[%s71 + $0x1e8] sm:$0xff]
    %v4572 = vld [vmem:[%s71 + $0x1f0] sm:$0xff]
    %v4573 = vld [vmem:[%s71 + $0x1f8] sm:$0xff]
    %v4574 = vld [vmem:[%s73] sm:$0xf]
    %v4576 = vlaneseq
    %v4577 = vshrl.u32 %v4576, 7
    %v4578 = vsub.s32 0, %v4577
    %v4579 = vrot.slane %v4574, %v4578
    %v4580 = vlaneseq
    %v4581 = vshrl.u32 %v4580, 7
    %v4582 = vsub.s32 1, %v4581
    %v4583 = vrot.slane %v4574, %v4582
    %v4584 = vlaneseq
    %v4585 = vshrl.u32 %v4584, 7
    %v4586 = vsub.s32 2, %v4585
    %v4587 = vrot.slane %v4574, %v4586
    %v4588 = vlaneseq
    %v4589 = vshrl.u32 %v4588, 7
    %v4590 = vsub.s32 3, %v4589
    %v4591 = vrot.slane %v4574, %v4590
    %4596 = vmatprep.subr.mxu0 %v4571
    %4597 = vmatpush1.msra.mxu0 %v4570
    %4598 = vmatprep.subr.mxu0 %v4567
    %4599 = vmatpush1.msra.mxu0 %v4566
    %4600 = vmatprep.subr.mxu0 %v4563
    %4601 = vmatpush1.msra.mxu0 %v4562
    %4602 = vmatprep.subr.mxu0 %v4559
    %4603 = vmatpush1.msra.mxu0 %v4558
    %4604 = vmatprep.subr.mxu0 %v4555
    %4605 = vmatpush1.msra.mxu0 %v4554
    %4606 = vmatprep.subr.mxu0 %v4551
    %4607 = vmatpush1.msra.mxu0 %v4550
    %4608 = vmatprep.subr.mxu0 %v4547
    %4609 = vmatpush1.msra.mxu0 %v4546
    %4610 = vmatprep.subr.mxu0 %v4543
    %4611 = vmatpush1.msra.mxu0 %v4542
    %4612 = vmatprep.subr.mxu0 %v4539
    %4613 = vmatpush1.msra.mxu0 %v4538
    %4614 = vmatprep.subr.mxu0 %v4535
    %4615 = vmatpush1.msra.mxu0 %v4534
    %4616 = vmatprep.subr.mxu0 %v4531
    %4617 = vmatpush1.msra.mxu0 %v4530
    %4618 = vmatprep.subr.mxu0 %v4527
    %4619 = vmatpush1.msra.mxu0 %v4526
    %4620 = vmatprep.subr.mxu0 %v4523
    %4621 = vmatpush1.msra.mxu0 %v4522
    %4622 = vmatprep.subr.mxu0 %v4519
    %4623 = vmatpush1.msra.mxu0 %v4518
    %4624 = vmatprep.subr.mxu0 %v4515
    %4625 = vmatpush1.msra.mxu0 %v4514
    %4626 = vmatprep.subr.mxu0 %v4511
    %4627 = vmatpush1.msra.mxu0 %v4510
    %4628 = vmatprep.subr.mxu0 0.0
    %4629 = vmatpush2.msra.mxu0 0.0
    %4630 = vmatprep.subr.mxu0 0.0
    %4631 = vmatpush2.msra.mxu0 0.0
    %4632 = vmatprep.subr.mxu0 0.0
    %4633 = vmatpush2.msra.mxu0 0.0
    %4634 = vmatprep.subr.mxu0 0.0
    %4635 = vmatpush2.msra.mxu0 0.0
    %4636 = vmatprep.subr.mxu0 0.0
    %4637 = vmatpush2.msra.mxu0 0.0
    %4638 = vmatprep.subr.mxu0 0.0
    %4639 = vmatpush2.msra.mxu0 0.0
    %4640 = vmatprep.subr.mxu0 0.0
    %4641 = vmatpush2.msra.mxu0 0.0
    %4642 = vmatprep.subr.mxu0 0.0
    %4643 = vmatpush2.msra.mxu0 0.0
    %4644 = vmatprep.subr.mxu0 0.0
    %4645 = vmatpush2.msra.mxu0 0.0
    %4646 = vmatprep.subr.mxu0 0.0
    %4647 = vmatpush2.msra.mxu0 0.0
    %4648 = vmatprep.subr.mxu0 0.0
    %4649 = vmatpush2.msra.mxu0 0.0
    %4650 = vmatprep.subr.mxu0 0.0
    %4651 = vmatpush2.msra.mxu0 0.0
    %4652 = vmatprep.subr.mxu0 0.0
    %4653 = vmatpush2.msra.mxu0 0.0
    %4654 = vmatprep.subr.mxu0 0.0
    %4655 = vmatpush2.msra.mxu0 0.0
    %4656 = vmatprep.subr.mxu0 0.0
    %4657 = vmatpush2.msra.mxu0 0.0
    %4658 = vmatprep.subr.mxu0 0.0
    %4659 = vmatpush2.msra.mxu0 0.0
    %4660 = vmatprep.mubr.f32.mxu0 0.0
    %4661 = vmatmul.mubr.f32.gmra.mxu0 %v4506
    %v4662 = vpop.f32.mrf.mxu0
    %v4663 = vadd.f32 %v4579, %v4662
    %v4664 = vpop.f32.mrf.mxu0
    %v4665 = vadd.f32 %v4583, %v4664
    %4666 = vmatprep.mubr.f32.mxu0 0.0
    %4667 = vmatmul.mubr.f32.gmra.mxu0 %v4507
    %v4668 = vpop.f32.mrf.mxu0
    %v4669 = vadd.f32 %v4579, %v4668
    %v4670 = vpop.f32.mrf.mxu0
    %v4671 = vadd.f32 %v4583, %v4670
    %4672 = vmatprep.mubr.f32.mxu0 0.0
    %4673 = vmatmul.mubr.f32.gmra.mxu0 %v4508
    %v4674 = vpop.f32.mrf.mxu0
    %v4675 = vadd.f32 %v4579, %v4674
    %v4676 = vpop.f32.mrf.mxu0
    %v4677 = vadd.f32 %v4583, %v4676
    %4678 = vmatprep.mubr.f32.mxu0 0.0
    %4679 = vmatmul.mubr.f32.gmra.mxu0 %v4509
    %v4680 = vpop.f32.mrf.mxu0
    %v4681 = vadd.f32 %v4579, %v4680
    %v4682 = vpop.f32.mrf.mxu0
    %v4683 = vadd.f32 %v4583, %v4682
    %4684 = vdwg.mxu0
    %4685 = vmatprep.subr.mxu0 %v4573
    %4686 = vmatpush1.msra.mxu0 %v4572
    %4687 = vmatprep.subr.mxu0 %v4569
    %4688 = vmatpush1.msra.mxu0 %v4568
    %4689 = vmatprep.subr.mxu0 %v4565
    %4690 = vmatpush1.msra.mxu0 %v4564
    %4691 = vmatprep.subr.mxu0 %v4561
    %4692 = vmatpush1.msra.mxu0 %v4560
    %4693 = vmatprep.subr.mxu0 %v4557
    %4694 = vmatpush1.msra.mxu0 %v4556
    %4695 = vmatprep.subr.mxu0 %v4553
    %4696 = vmatpush1.msra.mxu0 %v4552
    %4697 = vmatprep.subr.mxu0 %v4549
    %4698 = vmatpush1.msra.mxu0 %v4548
    %4699 = vmatprep.subr.mxu0 %v4545
    %4700 = vmatpush1.msra.mxu0 %v4544
    %4701 = vmatprep.subr.mxu0 %v4541
    %4702 = vmatpush1.msra.mxu0 %v4540
    %4703 = vmatprep.subr.mxu0 %v4537
    %4704 = vmatpush1.msra.mxu0 %v4536
    %4705 = vmatprep.subr.mxu0 %v4533
    %4706 = vmatpush1.msra.mxu0 %v4532
    %4707 = vmatprep.subr.mxu0 %v4529
    %4708 = vmatpush1.msra.mxu0 %v4528
    %4709 = vmatprep.subr.mxu0 %v4525
    %4710 = vmatpush1.msra.mxu0 %v4524
    %4711 = vmatprep.subr.mxu0 %v4521
    %4712 = vmatpush1.msra.mxu0 %v4520
    %4713 = vmatprep.subr.mxu0 %v4517
    %4714 = vmatpush1.msra.mxu0 %v4516
    %4715 = vmatprep.subr.mxu0 %v4513
    %4716 = vmatpush1.msra.mxu0 %v4512
    %4717 = vmatprep.subr.mxu0 0.0
    %4718 = vmatpush2.msra.mxu0 0.0
    %4719 = vmatprep.subr.mxu0 0.0
    %4720 = vmatpush2.msra.mxu0 0.0
    %4721 = vmatprep.subr.mxu0 0.0
    %4722 = vmatpush2.msra.mxu0 0.0
    %4723 = vmatprep.subr.mxu0 0.0
    %4724 = vmatpush2.msra.mxu0 0.0
    %4725 = vmatprep.subr.mxu0 0.0
    %4726 = vmatpush2.msra.mxu0 0.0
    %4727 = vmatprep.subr.mxu0 0.0
    %4728 = vmatpush2.msra.mxu0 0.0
    %4729 = vmatprep.subr.mxu0 0.0
    %4730 = vmatpush2.msra.mxu0 0.0
    %4731 = vmatprep.subr.mxu0 0.0
    %4732 = vmatpush2.msra.mxu0 0.0
    %4733 = vmatprep.subr.mxu0 0.0
    %4734 = vmatpush2.msra.mxu0 0.0
    %4735 = vmatprep.subr.mxu0 0.0
    %4736 = vmatpush2.msra.mxu0 0.0
    %4737 = vmatprep.subr.mxu0 0.0
    %4738 = vmatpush2.msra.mxu0 0.0
    %4739 = vmatprep.subr.mxu0 0.0
    %4740 = vmatpush2.msra.mxu0 0.0
    %4741 = vmatprep.subr.mxu0 0.0
    %4742 = vmatpush2.msra.mxu0 0.0
    %4743 = vmatprep.subr.mxu0 0.0
    %4744 = vmatpush2.msra.mxu0 0.0
    %4745 = vmatprep.subr.mxu0 0.0
    %4746 = vmatpush2.msra.mxu0 0.0
    %4747 = vmatprep.subr.mxu0 0.0
    %4748 = vmatpush2.msra.mxu0 0.0
    %4749 = vmatprep.mubr.f32.mxu0 0.0
    %4750 = vmatmul.mubr.f32.gmra.mxu0 %v4506
    %v4751 = vpop.f32.mrf.mxu0
    %v4752 = vadd.f32 %v4587, %v4751
    %v4753 = vpop.f32.mrf.mxu0
    %v4754 = vadd.f32 %v4591, %v4753
    %4755 = vmatprep.mubr.f32.mxu0 0.0
    %4756 = vmatmul.mubr.f32.gmra.mxu0 %v4507
    %v4757 = vpop.f32.mrf.mxu0
    %v4758 = vadd.f32 %v4587, %v4757
    %v4759 = vpop.f32.mrf.mxu0
    %v4760 = vadd.f32 %v4591, %v4759
    %4761 = vmatprep.mubr.f32.mxu0 0.0
    %4762 = vmatmul.mubr.f32.gmra.mxu0 %v4508
    %v4763 = vpop.f32.mrf.mxu0
    %v4764 = vadd.f32 %v4587, %v4763
    %v4765 = vpop.f32.mrf.mxu0
    %v4766 = vadd.f32 %v4591, %v4765
    %4767 = vmatprep.mubr.f32.mxu0 0.0
    %4768 = vmatmul.mubr.f32.gmra.mxu0 %v4509
    %v4769 = vpop.f32.mrf.mxu0
    %v4770 = vadd.f32 %v4587, %v4769
    %v4771 = vpop.f32.mrf.mxu0
    %v4772 = vadd.f32 %v4591, %v4771
    %4773 = vdwg.mxu0
    %v4774 = vmul.f32 %v4663, 0.5
    %v4775 = vmul.f32 %v4665, 0.5
    %v4776 = vmul.f32 %v4752, 0.5
    %v4777 = vmul.f32 %v4754, 0.5
    %v4778 = vmul.f32 %v4669, 0.5
    %v4779 = vmul.f32 %v4671, 0.5
    %v4780 = vmul.f32 %v4758, 0.5
    %v4781 = vmul.f32 %v4760, 0.5
    %v4782 = vmul.f32 %v4675, 0.5
    %v4783 = vmul.f32 %v4677, 0.5
    %v4784 = vmul.f32 %v4764, 0.5
    %v4785 = vmul.f32 %v4766, 0.5
    %v4786 = vmul.f32 %v4681, 0.5
    %v4787 = vmul.f32 %v4683, 0.5
    %v4788 = vmul.f32 %v4770, 0.5
    %v4789 = vmul.f32 %v4772, 0.5
    %v4790 = vmul.f32 %v4663, 0.70710677
    %v4791 = vmul.f32 %v4665, 0.70710677
    %v4792 = vmul.f32 %v4752, 0.70710677
    %v4793 = vmul.f32 %v4754, 0.70710677
    %v4794 = vmul.f32 %v4669, 0.70710677
    %v4795 = vmul.f32 %v4671, 0.70710677
    %v4796 = vmul.f32 %v4758, 0.70710677
    %v4797 = vmul.f32 %v4760, 0.70710677
    %v4798 = vmul.f32 %v4675, 0.70710677
    %v4799 = vmul.f32 %v4677, 0.70710677
    %v4800 = vmul.f32 %v4764, 0.70710677
    %v4801 = vmul.f32 %v4766, 0.70710677
    %v4802 = vmul.f32 %v4681, 0.70710677
    %v4803 = vmul.f32 %v4683, 0.70710677
    %v4804 = vmul.f32 %v4770, 0.70710677
    %v4805 = vmul.f32 %v4772, 0.70710677
    %vm4806 = vcmp.lt.f32.partialorder %v4790, 0.0
    %vm4807 = vcmp.lt.f32.partialorder %v4791, 0.0
    %vm4808 = vcmp.lt.f32.partialorder %v4792, 0.0
    %vm4809 = vcmp.lt.f32.partialorder %v4793, 0.0
    %vm4810 = vcmp.lt.f32.partialorder %v4794, 0.0
    %vm4811 = vcmp.lt.f32.partialorder %v4795, 0.0
    %vm4812 = vcmp.lt.f32.partialorder %v4796, 0.0
    %vm4813 = vcmp.lt.f32.partialorder %v4797, 0.0
    %vm4814 = vcmp.lt.f32.partialorder %v4798, 0.0
    %vm4815 = vcmp.lt.f32.partialorder %v4799, 0.0
    %vm4816 = vcmp.lt.f32.partialorder %v4800, 0.0
    %vm4817 = vcmp.lt.f32.partialorder %v4801, 0.0
    %vm4818 = vcmp.lt.f32.partialorder %v4802, 0.0
    %vm4819 = vcmp.lt.f32.partialorder %v4803, 0.0
    %vm4820 = vcmp.lt.f32.partialorder %v4804, 0.0
    %vm4821 = vcmp.lt.f32.partialorder %v4805, 0.0
    %v4822 = vsel %vm4806, -1.0, 1.0
    %v4823 = vsel %vm4807, -1.0, 1.0
    %v4824 = vsel %vm4808, -1.0, 1.0
    %v4825 = vsel %vm4809, -1.0, 1.0
    %v4826 = vsel %vm4810, -1.0, 1.0
    %v4827 = vsel %vm4811, -1.0, 1.0
    %v4828 = vsel %vm4812, -1.0, 1.0
    %v4829 = vsel %vm4813, -1.0, 1.0
    %v4830 = vsel %vm4814, -1.0, 1.0
    %v4831 = vsel %vm4815, -1.0, 1.0
    %v4832 = vsel %vm4816, -1.0, 1.0
    %v4833 = vsel %vm4817, -1.0, 1.0
    %v4834 = vsel %vm4818, -1.0, 1.0
    %v4835 = vsel %vm4819, -1.0, 1.0
    %v4836 = vsel %vm4820, -1.0, 1.0
    %v4837 = vsel %vm4821, -1.0, 1.0
    %v4838 = vand.u32 2147483647, %v4790
    %v4839 = vand.u32 2147483647, %v4791
    %v4840 = vand.u32 2147483647, %v4792
    %v4841 = vand.u32 2147483647, %v4793
    %v4842 = vand.u32 2147483647, %v4794
    %v4843 = vand.u32 2147483647, %v4795
    %v4844 = vand.u32 2147483647, %v4796
    %v4845 = vand.u32 2147483647, %v4797
    %v4846 = vand.u32 2147483647, %v4798
    %v4847 = vand.u32 2147483647, %v4799
    %v4848 = vand.u32 2147483647, %v4800
    %v4849 = vand.u32 2147483647, %v4801
    %v4850 = vand.u32 2147483647, %v4802
    %v4851 = vand.u32 2147483647, %v4803
    %v4852 = vand.u32 2147483647, %v4804
    %v4853 = vand.u32 2147483647, %v4805
    %v4854 = vmul.f32 %v4838, 0.3275911
    %v4855 = vmul.f32 %v4839, 0.3275911
    %v4856 = vmul.f32 %v4840, 0.3275911
    %v4857 = vmul.f32 %v4841, 0.3275911
    %v4858 = vmul.f32 %v4842, 0.3275911
    %v4859 = vmul.f32 %v4843, 0.3275911
    %v4860 = vmul.f32 %v4844, 0.3275911
    %v4861 = vmul.f32 %v4845, 0.3275911
    %v4862 = vmul.f32 %v4846, 0.3275911
    %v4863 = vmul.f32 %v4847, 0.3275911
    %v4864 = vmul.f32 %v4848, 0.3275911
    %v4865 = vmul.f32 %v4849, 0.3275911
    %v4866 = vmul.f32 %v4850, 0.3275911
    %v4867 = vmul.f32 %v4851, 0.3275911
    %v4868 = vmul.f32 %v4852, 0.3275911
    %v4869 = vmul.f32 %v4853, 0.3275911
    %v4870 = vadd.f32 %v4854, 1.0
    %v4871 = vadd.f32 %v4855, 1.0
    %v4872 = vadd.f32 %v4856, 1.0
    %v4873 = vadd.f32 %v4857, 1.0
    %v4874 = vadd.f32 %v4858, 1.0
    %v4875 = vadd.f32 %v4859, 1.0
    %v4876 = vadd.f32 %v4860, 1.0
    %v4877 = vadd.f32 %v4861, 1.0
    %v4878 = vadd.f32 %v4862, 1.0
    %v4879 = vadd.f32 %v4863, 1.0
    %v4880 = vadd.f32 %v4864, 1.0
    %v4881 = vadd.f32 %v4865, 1.0
    %v4882 = vadd.f32 %v4866, 1.0
    %v4883 = vadd.f32 %v4867, 1.0
    %v4884 = vadd.f32 %v4868, 1.0
    %v4885 = vadd.f32 %v4869, 1.0
    %v4886 = vrcp.pop %v4870
    %v4887 = vrcp.pop %v4871
    %v4888 = vrcp.pop %v4872
    %v4889 = vrcp.pop %v4873
    %v4890 = vrcp.pop %v4874
    %v4891 = vrcp.pop %v4875
    %v4892 = vrcp.pop %v4876
    %v4893 = vrcp.pop %v4877
    %v4894 = vrcp.pop %v4878
    %v4895 = vrcp.pop %v4879
    %v4896 = vrcp.pop %v4880
    %v4897 = vrcp.pop %v4881
    %v4898 = vrcp.pop %v4882
    %v4899 = vrcp.pop %v4883
    %v4900 = vrcp.pop %v4884
    %v4901 = vrcp.pop %v4885
    %v4902 = vmul.f32 %v4886, 1.0614054
    %v4903 = vmul.f32 %v4887, 1.0614054
    %v4904 = vmul.f32 %v4888, 1.0614054
    %v4905 = vmul.f32 %v4889, 1.0614054
    %v4906 = vmul.f32 %v4890, 1.0614054
    %v4907 = vmul.f32 %v4891, 1.0614054
    %v4908 = vmul.f32 %v4892, 1.0614054
    %v4909 = vmul.f32 %v4893, 1.0614054
    %v4910 = vmul.f32 %v4894, 1.0614054
    %v4911 = vmul.f32 %v4895, 1.0614054
    %v4912 = vmul.f32 %v4896, 1.0614054
    %v4913 = vmul.f32 %v4897, 1.0614054
    %v4914 = vmul.f32 %v4898, 1.0614054
    %v4915 = vmul.f32 %v4899, 1.0614054
    %v4916 = vmul.f32 %v4900, 1.0614054
    %v4917 = vmul.f32 %v4901, 1.0614054
    %v4918 = vadd.f32 %v4902, -1.4531521
    %v4919 = vadd.f32 %v4903, -1.4531521
    %v4920 = vadd.f32 %v4904, -1.4531521
    %v4921 = vadd.f32 %v4905, -1.4531521
    %v4922 = vadd.f32 %v4906, -1.4531521
    %v4923 = vadd.f32 %v4907, -1.4531521
    %v4924 = vadd.f32 %v4908, -1.4531521
    %v4925 = vadd.f32 %v4909, -1.4531521
    %v4926 = vadd.f32 %v4910, -1.4531521
    %v4927 = vadd.f32 %v4911, -1.4531521
    %v4928 = vadd.f32 %v4912, -1.4531521
    %v4929 = vadd.f32 %v4913, -1.4531521
    %v4930 = vadd.f32 %v4914, -1.4531521
    %v4931 = vadd.f32 %v4915, -1.4531521
    %v4932 = vadd.f32 %v4916, -1.4531521
    %v4933 = vadd.f32 %v4917, -1.4531521
    %v4934 = vmul.f32 %v4918, %v4886
    %v4935 = vmul.f32 %v4919, %v4887
    %v4936 = vmul.f32 %v4920, %v4888
    %v4937 = vmul.f32 %v4921, %v4889
    %v4938 = vmul.f32 %v4922, %v4890
    %v4939 = vmul.f32 %v4923, %v4891
    %v4940 = vmul.f32 %v4924, %v4892
    %v4941 = vmul.f32 %v4925, %v4893
    %v4942 = vmul.f32 %v4926, %v4894
    %v4943 = vmul.f32 %v4927, %v4895
    %v4944 = vmul.f32 %v4928, %v4896
    %v4945 = vmul.f32 %v4929, %v4897
    %v4946 = vmul.f32 %v4930, %v4898
    %v4947 = vmul.f32 %v4931, %v4899
    %v4948 = vmul.f32 %v4932, %v4900
    %v4949 = vmul.f32 %v4933, %v4901
    %v4950 = vadd.f32 %v4934, 1.4214138
    %v4951 = vadd.f32 %v4935, 1.4214138
    %v4952 = vadd.f32 %v4936, 1.4214138
    %v4953 = vadd.f32 %v4937, 1.4214138
    %v4954 = vadd.f32 %v4938, 1.4214138
    %v4955 = vadd.f32 %v4939, 1.4214138
    %v4956 = vadd.f32 %v4940, 1.4214138
    %v4957 = vadd.f32 %v4941, 1.4214138
    %v4958 = vadd.f32 %v4942, 1.4214138
    %v4959 = vadd.f32 %v4943, 1.4214138
    %v4960 = vadd.f32 %v4944, 1.4214138
    %v4961 = vadd.f32 %v4945, 1.4214138
    %v4962 = vadd.f32 %v4946, 1.4214138
    %v4963 = vadd.f32 %v4947, 1.4214138
    %v4964 = vadd.f32 %v4948, 1.4214138
    %v4965 = vadd.f32 %v4949, 1.4214138
    %v4966 = vmul.f32 %v4950, %v4886
    %v4967 = vmul.f32 %v4951, %v4887
    %v4968 = vmul.f32 %v4952, %v4888
    %v4969 = vmul.f32 %v4953, %v4889
    %v4970 = vmul.f32 %v4954, %v4890
    %v4971 = vmul.f32 %v4955, %v4891
    %v4972 = vmul.f32 %v4956, %v4892
    %v4973 = vmul.f32 %v4957, %v4893
    %v4974 = vmul.f32 %v4958, %v4894
    %v4975 = vmul.f32 %v4959, %v4895
    %v4976 = vmul.f32 %v4960, %v4896
    %v4977 = vmul.f32 %v4961, %v4897
    %v4978 = vmul.f32 %v4962, %v4898
    %v4979 = vmul.f32 %v4963, %v4899
    %v4980 = vmul.f32 %v4964, %v4900
    %v4981 = vmul.f32 %v4965, %v4901
    %v4982 = vadd.f32 %v4966, -0.28449672
    %v4983 = vadd.f32 %v4967, -0.28449672
    %v4984 = vadd.f32 %v4968, -0.28449672
    %v4985 = vadd.f32 %v4969, -0.28449672
    %v4986 = vadd.f32 %v4970, -0.28449672
    %v4987 = vadd.f32 %v4971, -0.28449672
    %v4988 = vadd.f32 %v4972, -0.28449672
    %v4989 = vadd.f32 %v4973, -0.28449672
    %v4990 = vadd.f32 %v4974, -0.28449672
    %v4991 = vadd.f32 %v4975, -0.28449672
    %v4992 = vadd.f32 %v4976, -0.28449672
    %v4993 = vadd.f32 %v4977, -0.28449672
    %v4994 = vadd.f32 %v4978, -0.28449672
    %v4995 = vadd.f32 %v4979, -0.28449672
    %v4996 = vadd.f32 %v4980, -0.28449672
    %v4997 = vadd.f32 %v4981, -0.28449672
    %v4998 = vmul.f32 %v4982, %v4886
    %v4999 = vmul.f32 %v4983, %v4887
    %v5000 = vmul.f32 %v4984, %v4888
    %v5001 = vmul.f32 %v4985, %v4889
    %v5002 = vmul.f32 %v4986, %v4890
    %v5003 = vmul.f32 %v4987, %v4891
    %v5004 = vmul.f32 %v4988, %v4892
    %v5005 = vmul.f32 %v4989, %v4893
    %v5006 = vmul.f32 %v4990, %v4894
    %v5007 = vmul.f32 %v4991, %v4895
    %v5008 = vmul.f32 %v4992, %v4896
    %v5009 = vmul.f32 %v4993, %v4897
    %v5010 = vmul.f32 %v4994, %v4898
    %v5011 = vmul.f32 %v4995, %v4899
    %v5012 = vmul.f32 %v4996, %v4900
    %v5013 = vmul.f32 %v4997, %v4901
    %v5014 = vadd.f32 %v4998, 0.2548296
    %v5015 = vadd.f32 %v4999, 0.2548296
    %v5016 = vadd.f32 %v5000, 0.2548296
    %v5017 = vadd.f32 %v5001, 0.2548296
    %v5018 = vadd.f32 %v5002, 0.2548296
    %v5019 = vadd.f32 %v5003, 0.2548296
    %v5020 = vadd.f32 %v5004, 0.2548296
    %v5021 = vadd.f32 %v5005, 0.2548296
    %v5022 = vadd.f32 %v5006, 0.2548296
    %v5023 = vadd.f32 %v5007, 0.2548296
    %v5024 = vadd.f32 %v5008, 0.2548296
    %v5025 = vadd.f32 %v5009, 0.2548296
    %v5026 = vadd.f32 %v5010, 0.2548296
    %v5027 = vadd.f32 %v5011, 0.2548296
    %v5028 = vadd.f32 %v5012, 0.2548296
    %v5029 = vadd.f32 %v5013, 0.2548296
    %v5030 = vmul.f32 %v5014, %v4886
    %v5031 = vmul.f32 %v5015, %v4887
    %v5032 = vmul.f32 %v5016, %v4888
    %v5033 = vmul.f32 %v5017, %v4889
    %v5034 = vmul.f32 %v5018, %v4890
    %v5035 = vmul.f32 %v5019, %v4891
    %v5036 = vmul.f32 %v5020, %v4892
    %v5037 = vmul.f32 %v5021, %v4893
    %v5038 = vmul.f32 %v5022, %v4894
    %v5039 = vmul.f32 %v5023, %v4895
    %v5040 = vmul.f32 %v5024, %v4896
    %v5041 = vmul.f32 %v5025, %v4897
    %v5042 = vmul.f32 %v5026, %v4898
    %v5043 = vmul.f32 %v5027, %v4899
    %v5044 = vmul.f32 %v5028, %v4900
    %v5045 = vmul.f32 %v5029, %v4901
    %v5046 = vsub.f32 0.0, %v4838
    %v5047 = vsub.f32 0.0, %v4839
    %v5048 = vsub.f32 0.0, %v4840
    %v5049 = vsub.f32 0.0, %v4841
    %v5050 = vsub.f32 0.0, %v4842
    %v5051 = vsub.f32 0.0, %v4843
    %v5052 = vsub.f32 0.0, %v4844
    %v5053 = vsub.f32 0.0, %v4845
    %v5054 = vsub.f32 0.0, %v4846
    %v5055 = vsub.f32 0.0, %v4847
    %v5056 = vsub.f32 0.0, %v4848
    %v5057 = vsub.f32 0.0, %v4849
    %v5058 = vsub.f32 0.0, %v4850
    %v5059 = vsub.f32 0.0, %v4851
    %v5060 = vsub.f32 0.0, %v4852
    %v5061 = vsub.f32 0.0, %v4853
    %v5062 = vmul.f32 %v5046, %v4838
    %v5063 = vmul.f32 %v5047, %v4839
    %v5064 = vmul.f32 %v5048, %v4840
    %v5065 = vmul.f32 %v5049, %v4841
    %v5066 = vmul.f32 %v5050, %v4842
    %v5067 = vmul.f32 %v5051, %v4843
    %v5068 = vmul.f32 %v5052, %v4844
    %v5069 = vmul.f32 %v5053, %v4845
    %v5070 = vmul.f32 %v5054, %v4846
    %v5071 = vmul.f32 %v5055, %v4847
    %v5072 = vmul.f32 %v5056, %v4848
    %v5073 = vmul.f32 %v5057, %v4849
    %v5074 = vmul.f32 %v5058, %v4850
    %v5075 = vmul.f32 %v5059, %v4851
    %v5076 = vmul.f32 %v5060, %v4852
    %v5077 = vmul.f32 %v5061, %v4853
    %v5078 = vmul.f32 %v5062, 1.442695
    %v5079 = vpow.pop %v5078
    %v5080 = vmul.f32 %v5063, 1.442695
    %v5081 = vpow.pop %v5080
    %v5082 = vmul.f32 %v5064, 1.442695
    %v5083 = vpow.pop %v5082
    %v5084 = vmul.f32 %v5065, 1.442695
    %v5085 = vpow.pop %v5084
    %v5086 = vmul.f32 %v5066, 1.442695
    %v5087 = vpow.pop %v5086
    %v5088 = vmul.f32 %v5067, 1.442695
    %v5089 = vpow.pop %v5088
    %v5090 = vmul.f32 %v5068, 1.442695
    %v5091 = vpow.pop %v5090
    %v5092 = vmul.f32 %v5069, 1.442695
    %v5093 = vpow.pop %v5092
    %v5094 = vmul.f32 %v5070, 1.442695
    %v5095 = vpow.pop %v5094
    %v5096 = vmul.f32 %v5071, 1.442695
    %v5097 = vpow.pop %v5096
    %v5098 = vmul.f32 %v5072, 1.442695
    %v5099 = vpow.pop %v5098
    %v5100 = vmul.f32 %v5073, 1.442695
    %v5101 = vpow.pop %v5100
    %v5102 = vmul.f32 %v5074, 1.442695
    %v5103 = vpow.pop %v5102
    %v5104 = vmul.f32 %v5075, 1.442695
    %v5105 = vpow.pop %v5104
    %v5106 = vmul.f32 %v5076, 1.442695
    %v5107 = vpow.pop %v5106
    %v5108 = vmul.f32 %v5077, 1.442695
    %v5109 = vpow.pop %v5108
    %v5110 = vmul.f32 %v5030, %v5079
    %v5111 = vmul.f32 %v5031, %v5081
    %v5112 = vmul.f32 %v5032, %v5083
    %v5113 = vmul.f32 %v5033, %v5085
    %v5114 = vmul.f32 %v5034, %v5087
    %v5115 = vmul.f32 %v5035, %v5089
    %v5116 = vmul.f32 %v5036, %v5091
    %v5117 = vmul.f32 %v5037, %v5093
    %v5118 = vmul.f32 %v5038, %v5095
    %v5119 = vmul.f32 %v5039, %v5097
    %v5120 = vmul.f32 %v5040, %v5099
    %v5121 = vmul.f32 %v5041, %v5101
    %v5122 = vmul.f32 %v5042, %v5103
    %v5123 = vmul.f32 %v5043, %v5105
    %v5124 = vmul.f32 %v5044, %v5107
    %v5125 = vmul.f32 %v5045, %v5109
    %v5126 = vsub.f32 1.0, %v5110
    %v5127 = vsub.f32 1.0, %v5111
    %v5128 = vsub.f32 1.0, %v5112
    %v5129 = vsub.f32 1.0, %v5113
    %v5130 = vsub.f32 1.0, %v5114
    %v5131 = vsub.f32 1.0, %v5115
    %v5132 = vsub.f32 1.0, %v5116
    %v5133 = vsub.f32 1.0, %v5117
    %v5134 = vsub.f32 1.0, %v5118
    %v5135 = vsub.f32 1.0, %v5119
    %v5136 = vsub.f32 1.0, %v5120
    %v5137 = vsub.f32 1.0, %v5121
    %v5138 = vsub.f32 1.0, %v5122
    %v5139 = vsub.f32 1.0, %v5123
    %v5140 = vsub.f32 1.0, %v5124
    %v5141 = vsub.f32 1.0, %v5125
    %v5142 = vmul.f32 %v4822, %v5126
    %v5143 = vmul.f32 %v4823, %v5127
    %v5144 = vmul.f32 %v4824, %v5128
    %v5145 = vmul.f32 %v4825, %v5129
    %v5146 = vmul.f32 %v4826, %v5130
    %v5147 = vmul.f32 %v4827, %v5131
    %v5148 = vmul.f32 %v4828, %v5132
    %v5149 = vmul.f32 %v4829, %v5133
    %v5150 = vmul.f32 %v4830, %v5134
    %v5151 = vmul.f32 %v4831, %v5135
    %v5152 = vmul.f32 %v4832, %v5136
    %v5153 = vmul.f32 %v4833, %v5137
    %v5154 = vmul.f32 %v4834, %v5138
    %v5155 = vmul.f32 %v4835, %v5139
    %v5156 = vmul.f32 %v4836, %v5140
    %v5157 = vmul.f32 %v4837, %v5141
    %v5158 = vadd.f32 %v5142, 1.0
    %v5159 = vadd.f32 %v5143, 1.0
    %v5160 = vadd.f32 %v5144, 1.0
    %v5161 = vadd.f32 %v5145, 1.0
    %v5162 = vadd.f32 %v5146, 1.0
    %v5163 = vadd.f32 %v5147, 1.0
    %v5164 = vadd.f32 %v5148, 1.0
    %v5165 = vadd.f32 %v5149, 1.0
    %v5166 = vadd.f32 %v5150, 1.0
    %v5167 = vadd.f32 %v5151, 1.0
    %v5168 = vadd.f32 %v5152, 1.0
    %v5169 = vadd.f32 %v5153, 1.0
    %v5170 = vadd.f32 %v5154, 1.0
    %v5171 = vadd.f32 %v5155, 1.0
    %v5172 = vadd.f32 %v5156, 1.0
    %v5173 = vadd.f32 %v5157, 1.0
    %v5174 = vmul.f32 %v4774, %v5158
    %v5175 = vmul.f32 %v4775, %v5159
    %v5176 = vmul.f32 %v4776, %v5160
    %v5177 = vmul.f32 %v4777, %v5161
    %v5178 = vmul.f32 %v4778, %v5162
    %v5179 = vmul.f32 %v4779, %v5163
    %v5180 = vmul.f32 %v4780, %v5164
    %v5181 = vmul.f32 %v4781, %v5165
    %v5182 = vmul.f32 %v4782, %v5166
    %v5183 = vmul.f32 %v4783, %v5167
    %v5184 = vmul.f32 %v4784, %v5168
    %v5185 = vmul.f32 %v4785, %v5169
    %v5186 = vmul.f32 %v4786, %v5170
    %v5187 = vmul.f32 %v4787, %v5171
    %v5188 = vmul.f32 %v4788, %v5172
    %v5189 = vmul.f32 %v4789, %v5173
    %v5190 = vld [vmem:[%s75] sm:$0xff]
    %v5191 = vld [vmem:[%s75 + $0x8] sm:$0xff]
    %v5192 = vld [vmem:[%s75 + $0x10] sm:$0xff]
    %v5193 = vld [vmem:[%s75 + $0x18] sm:$0xff]
    %v5194 = vld [vmem:[%s75 + $0x20] sm:$0xff]
    %v5195 = vld [vmem:[%s75 + $0x28] sm:$0xff]
    %v5196 = vld [vmem:[%s75 + $0x30] sm:$0xff]
    %v5197 = vld [vmem:[%s75 + $0x38] sm:$0xff]
    %v5198 = vld [vmem:[%s75 + $0x40] sm:$0xff]
    %v5199 = vld [vmem:[%s75 + $0x48] sm:$0xff]
    %v5200 = vld [vmem:[%s75 + $0x50] sm:$0xff]
    %v5201 = vld [vmem:[%s75 + $0x58] sm:$0xff]
    %v5202 = vld [vmem:[%s75 + $0x60] sm:$0xff]
    %v5203 = vld [vmem:[%s75 + $0x68] sm:$0xff]
    %v5204 = vld [vmem:[%s75 + $0x70] sm:$0xff]
    %v5205 = vld [vmem:[%s75 + $0x78] sm:$0xff]
    %v5206 = vld [vmem:[%s75 + $0x80] sm:$0xff]
    %v5207 = vld [vmem:[%s75 + $0x88] sm:$0xff]
    %v5208 = vld [vmem:[%s75 + $0x90] sm:$0xff]
    %v5209 = vld [vmem:[%s75 + $0x98] sm:$0xff]
    %v5210 = vld [vmem:[%s75 + $0xa0] sm:$0xff]
    %v5211 = vld [vmem:[%s75 + $0xa8] sm:$0xff]
    %v5212 = vld [vmem:[%s75 + $0xb0] sm:$0xff]
    %v5213 = vld [vmem:[%s75 + $0xb8] sm:$0xff]
    %v5214 = vld [vmem:[%s75 + $0xc0] sm:$0xff]
    %v5215 = vld [vmem:[%s75 + $0xc8] sm:$0xff]
    %v5216 = vld [vmem:[%s75 + $0xd0] sm:$0xff]
    %v5217 = vld [vmem:[%s75 + $0xd8] sm:$0xff]
    %v5218 = vld [vmem:[%s75 + $0xe0] sm:$0xff]
    %v5219 = vld [vmem:[%s75 + $0xe8] sm:$0xff]
    %v5220 = vld [vmem:[%s75 + $0xf0] sm:$0xff]
    %v5221 = vld [vmem:[%s75 + $0xf8] sm:$0xff]
    %v5222 = vld [vmem:[%s75 + $0x100] sm:$0xff]
    %v5223 = vld [vmem:[%s75 + $0x108] sm:$0xff]
    %v5224 = vld [vmem:[%s75 + $0x110] sm:$0xff]
    %v5225 = vld [vmem:[%s75 + $0x118] sm:$0xff]
    %v5226 = vld [vmem:[%s75 + $0x120] sm:$0xff]
    %v5227 = vld [vmem:[%s75 + $0x128] sm:$0xff]
    %v5228 = vld [vmem:[%s75 + $0x130] sm:$0xff]
    %v5229 = vld [vmem:[%s75 + $0x138] sm:$0xff]
    %v5230 = vld [vmem:[%s75 + $0x140] sm:$0xff]
    %v5231 = vld [vmem:[%s75 + $0x148] sm:$0xff]
    %v5232 = vld [vmem:[%s75 + $0x150] sm:$0xff]
    %v5233 = vld [vmem:[%s75 + $0x158] sm:$0xff]
    %v5234 = vld [vmem:[%s75 + $0x160] sm:$0xff]
    %v5235 = vld [vmem:[%s75 + $0x168] sm:$0xff]
    %v5236 = vld [vmem:[%s75 + $0x170] sm:$0xff]
    %v5237 = vld [vmem:[%s75 + $0x178] sm:$0xff]
    %v5238 = vld [vmem:[%s75 + $0x180] sm:$0xff]
    %v5239 = vld [vmem:[%s75 + $0x188] sm:$0xff]
    %v5240 = vld [vmem:[%s75 + $0x190] sm:$0xff]
    %v5241 = vld [vmem:[%s75 + $0x198] sm:$0xff]
    %v5242 = vld [vmem:[%s75 + $0x1a0] sm:$0xff]
    %v5243 = vld [vmem:[%s75 + $0x1a8] sm:$0xff]
    %v5244 = vld [vmem:[%s75 + $0x1b0] sm:$0xff]
    %v5245 = vld [vmem:[%s75 + $0x1b8] sm:$0xff]
    %v5246 = vld [vmem:[%s75 + $0x1c0] sm:$0xff]
    %v5247 = vld [vmem:[%s75 + $0x1c8] sm:$0xff]
    %v5248 = vld [vmem:[%s75 + $0x1d0] sm:$0xff]
    %v5249 = vld [vmem:[%s75 + $0x1d8] sm:$0xff]
    %v5250 = vld [vmem:[%s75 + $0x1e0] sm:$0xff]
    %v5251 = vld [vmem:[%s75 + $0x1e8] sm:$0xff]
    %v5252 = vld [vmem:[%s75 + $0x1f0] sm:$0xff]
    %v5253 = vld [vmem:[%s75 + $0x1f8] sm:$0xff]
    %v5254 = vld [vmem:[#allocation17] sm:$0x1]
    %v5256 = vlaneseq
    %v5257 = vshrl.u32 %v5256, 7
    %v5258 = vsub.s32 0, %v5257
    %v5259 = vrot.slane %v5254, %v5258
    %5261 = vmatprep.subr.mxu0 0.0
    %5262 = vmatpush1.msra.mxu0 %v5205
    %5263 = vmatprep.subr.mxu0 0.0
    %5264 = vmatpush1.msra.mxu0 %v5204
    %5265 = vmatprep.subr.mxu0 0.0
    %5266 = vmatpush1.msra.mxu0 %v5203
    %5267 = vmatprep.subr.mxu0 0.0
    %5268 = vmatpush1.msra.mxu0 %v5202
    %5269 = vmatprep.subr.mxu0 0.0
    %5270 = vmatpush1.msra.mxu0 %v5201
    %5271 = vmatprep.subr.mxu0 0.0
    %5272 = vmatpush1.msra.mxu0 %v5200
    %5273 = vmatprep.subr.mxu0 0.0
    %5274 = vmatpush1.msra.mxu0 %v5199
    %5275 = vmatprep.subr.mxu0 0.0
    %5276 = vmatpush1.msra.mxu0 %v5198
    %5277 = vmatprep.subr.mxu0 0.0
    %5278 = vmatpush1.msra.mxu0 %v5197
    %5279 = vmatprep.subr.mxu0 0.0
    %5280 = vmatpush1.msra.mxu0 %v5196
    %5281 = vmatprep.subr.mxu0 0.0
    %5282 = vmatpush1.msra.mxu0 %v5195
    %5283 = vmatprep.subr.mxu0 0.0
    %5284 = vmatpush1.msra.mxu0 %v5194
    %5285 = vmatprep.subr.mxu0 0.0
    %5286 = vmatpush1.msra.mxu0 %v5193
    %5287 = vmatprep.subr.mxu0 0.0
    %5288 = vmatpush1.msra.mxu0 %v5192
    %5289 = vmatprep.subr.mxu0 0.0
    %5290 = vmatpush1.msra.mxu0 %v5191
    %5291 = vmatprep.subr.mxu0 0.0
    %5292 = vmatpush1.msra.mxu0 %v5190
    %5293 = vmatprep.subr.mxu0 0.0
    %5294 = vmatpush2.msra.mxu0 %v5221
    %5295 = vmatprep.subr.mxu0 0.0
    %5296 = vmatpush2.msra.mxu0 %v5220
    %5297 = vmatprep.subr.mxu0 0.0
    %5298 = vmatpush2.msra.mxu0 %v5219
    %5299 = vmatprep.subr.mxu0 0.0
    %5300 = vmatpush2.msra.mxu0 %v5218
    %5301 = vmatprep.subr.mxu0 0.0
    %5302 = vmatpush2.msra.mxu0 %v5217
    %5303 = vmatprep.subr.mxu0 0.0
    %5304 = vmatpush2.msra.mxu0 %v5216
    %5305 = vmatprep.subr.mxu0 0.0
    %5306 = vmatpush2.msra.mxu0 %v5215
    %5307 = vmatprep.subr.mxu0 0.0
    %5308 = vmatpush2.msra.mxu0 %v5214
    %5309 = vmatprep.subr.mxu0 0.0
    %5310 = vmatpush2.msra.mxu0 %v5213
    %5311 = vmatprep.subr.mxu0 0.0
    %5312 = vmatpush2.msra.mxu0 %v5212
    %5313 = vmatprep.subr.mxu0 0.0
    %5314 = vmatpush2.msra.mxu0 %v5211
    %5315 = vmatprep.subr.mxu0 0.0
    %5316 = vmatpush2.msra.mxu0 %v5210
    %5317 = vmatprep.subr.mxu0 0.0
    %5318 = vmatpush2.msra.mxu0 %v5209
    %5319 = vmatprep.subr.mxu0 0.0
    %5320 = vmatpush2.msra.mxu0 %v5208
    %5321 = vmatprep.subr.mxu0 0.0
    %5322 = vmatpush2.msra.mxu0 %v5207
    %5323 = vmatprep.subr.mxu0 0.0
    %5324 = vmatpush2.msra.mxu0 %v5206
    %5325 = vmatprep.mubr.f32.mxu0 %v5175
    %5326 = vmatmul.mubr.f32.gmra.mxu0 %v5174
    %v5327 = vpop.f32.mrf.mxu0
    %v5328 = vadd.f32 %v5259, %v5327
    %v5329 = vpop.f32.mrf.mxu0
    %5330 = vmatprep.mubr.f32.mxu0 %v5179
    %5331 = vmatmul.mubr.f32.gmra.mxu0 %v5178
    %v5332 = vpop.f32.mrf.mxu0
    %v5333 = vadd.f32 %v5259, %v5332
    %v5334 = vpop.f32.mrf.mxu0
    %5335 = vmatprep.mubr.f32.mxu0 %v5183
    %5336 = vmatmul.mubr.f32.gmra.mxu0 %v5182
    %v5337 = vpop.f32.mrf.mxu0
    %v5338 = vadd.f32 %v5259, %v5337
    %v5339 = vpop.f32.mrf.mxu0
    %5340 = vmatprep.mubr.f32.mxu0 %v5187
    %5341 = vmatmul.mubr.f32.gmra.mxu0 %v5186
    %v5342 = vpop.f32.mrf.mxu0
    %v5343 = vadd.f32 %v5259, %v5342
    %v5344 = vpop.f32.mrf.mxu0
    %5345 = vdwg.mxu0
    %5346 = vmatprep.subr.mxu0 0.0
    %5347 = vmatpush1.msra.mxu0 %v5237
    %5348 = vmatprep.subr.mxu0 0.0
    %5349 = vmatpush1.msra.mxu0 %v5236
    %5350 = vmatprep.subr.mxu0 0.0
    %5351 = vmatpush1.msra.mxu0 %v5235
    %5352 = vmatprep.subr.mxu0 0.0
    %5353 = vmatpush1.msra.mxu0 %v5234
    %5354 = vmatprep.subr.mxu0 0.0
    %5355 = vmatpush1.msra.mxu0 %v5233
    %5356 = vmatprep.subr.mxu0 0.0
    %5357 = vmatpush1.msra.mxu0 %v5232
    %5358 = vmatprep.subr.mxu0 0.0
    %5359 = vmatpush1.msra.mxu0 %v5231
    %5360 = vmatprep.subr.mxu0 0.0
    %5361 = vmatpush1.msra.mxu0 %v5230
    %5362 = vmatprep.subr.mxu0 0.0
    %5363 = vmatpush1.msra.mxu0 %v5229
    %5364 = vmatprep.subr.mxu0 0.0
    %5365 = vmatpush1.msra.mxu0 %v5228
    %5366 = vmatprep.subr.mxu0 0.0
    %5367 = vmatpush1.msra.mxu0 %v5227
    %5368 = vmatprep.subr.mxu0 0.0
    %5369 = vmatpush1.msra.mxu0 %v5226
    %5370 = vmatprep.subr.mxu0 0.0
    %5371 = vmatpush1.msra.mxu0 %v5225
    %5372 = vmatprep.subr.mxu0 0.0
    %5373 = vmatpush1.msra.mxu0 %v5224
    %5374 = vmatprep.subr.mxu0 0.0
    %5375 = vmatpush1.msra.mxu0 %v5223
    %5376 = vmatprep.subr.mxu0 0.0
    %5377 = vmatpush1.msra.mxu0 %v5222
    %5378 = vmatprep.subr.mxu0 0.0
    %5379 = vmatpush2.msra.mxu0 %v5253
    %5380 = vmatprep.subr.mxu0 0.0
    %5381 = vmatpush2.msra.mxu0 %v5252
    %5382 = vmatprep.subr.mxu0 0.0
    %5383 = vmatpush2.msra.mxu0 %v5251
    %5384 = vmatprep.subr.mxu0 0.0
    %5385 = vmatpush2.msra.mxu0 %v5250
    %5386 = vmatprep.subr.mxu0 0.0
    %5387 = vmatpush2.msra.mxu0 %v5249
    %5388 = vmatprep.subr.mxu0 0.0
    %5389 = vmatpush2.msra.mxu0 %v5248
    %5390 = vmatprep.subr.mxu0 0.0
    %5391 = vmatpush2.msra.mxu0 %v5247
    %5392 = vmatprep.subr.mxu0 0.0
    %5393 = vmatpush2.msra.mxu0 %v5246
    %5394 = vmatprep.subr.mxu0 0.0
    %5395 = vmatpush2.msra.mxu0 %v5245
    %5396 = vmatprep.subr.mxu0 0.0
    %5397 = vmatpush2.msra.mxu0 %v5244
    %5398 = vmatprep.subr.mxu0 0.0
    %5399 = vmatpush2.msra.mxu0 %v5243
    %5400 = vmatprep.subr.mxu0 0.0
    %5401 = vmatpush2.msra.mxu0 %v5242
    %5402 = vmatprep.subr.mxu0 0.0
    %5403 = vmatpush2.msra.mxu0 %v5241
    %5404 = vmatprep.subr.mxu0 0.0
    %5405 = vmatpush2.msra.mxu0 %v5240
    %5406 = vmatprep.subr.mxu0 0.0
    %5407 = vmatpush2.msra.mxu0 %v5239
    %5408 = vmatprep.subr.mxu0 0.0
    %5409 = vmatpush2.msra.mxu0 %v5238
    %5410 = vmatprep.mubr.f32.mxu0 %v5177
    %5411 = vmatmul.mubr.f32.gmra.mxu0 %v5176
    %v5412 = vpop.f32.mrf.mxu0
    %v5413 = vadd.f32 %v5328, %v5412
    %v5414 = vpop.f32.mrf.mxu0
    %5415 = vmatprep.mubr.f32.mxu0 %v5181
    %5416 = vmatmul.mubr.f32.gmra.mxu0 %v5180
    %v5417 = vpop.f32.mrf.mxu0
    %v5418 = vadd.f32 %v5333, %v5417
    %v5419 = vpop.f32.mrf.mxu0
    %5420 = vmatprep.mubr.f32.mxu0 %v5185
    %5421 = vmatmul.mubr.f32.gmra.mxu0 %v5184
    %v5422 = vpop.f32.mrf.mxu0
    %v5423 = vadd.f32 %v5338, %v5422
    %v5424 = vpop.f32.mrf.mxu0
    %5425 = vmatprep.mubr.f32.mxu0 %v5189
    %5426 = vmatmul.mubr.f32.gmra.mxu0 %v5188
    %v5427 = vpop.f32.mrf.mxu0
    %v5428 = vadd.f32 %v5343, %v5427
    %v5429 = vpop.f32.mrf.mxu0
    %5430 = vdwg.mxu0
    %v5431 = vadd.f32 %v5413, %v3481
    %v5432 = vadd.f32 %v5418, %v3482
    %v5433 = vadd.f32 %v5423, %v3483
    %v5434 = vadd.f32 %v5428, %v3484
    %5435 = vmatprep.subr.mxu0 0.0
    %5436 = vmatpush1.xpose.msra.mxu0 0.0
    %5437 = vmatprep.subr.mxu0 0.0
    %5438 = vmatpush1.xpose.msra.mxu0 0.0
    %5439 = vmatprep.subr.mxu0 0.0
    %5440 = vmatpush1.xpose.msra.mxu0 0.0
    %5441 = vmatprep.subr.mxu0 0.0
    %5442 = vmatpush1.xpose.msra.mxu0 0.0
    %5443 = vmatprep.subr.mxu0 0.0
    %5444 = vmatpush1.xpose.msra.mxu0 0.0
    %5445 = vmatprep.subr.mxu0 0.0
    %5446 = vmatpush1.xpose.msra.mxu0 0.0
    %5447 = vmatprep.subr.mxu0 0.0
    %5448 = vmatpush1.xpose.msra.mxu0 0.0
    %5449 = vmatprep.subr.mxu0 0.0
    %5450 = vmatpush1.xpose.msra.mxu0 0.0
    %5451 = vmatprep.subr.mxu0 0.0
    %5452 = vmatpush1.xpose.msra.mxu0 0.0
    %5453 = vmatprep.subr.mxu0 0.0
    %5454 = vmatpush1.xpose.msra.mxu0 0.0
    %5455 = vmatprep.subr.mxu0 0.0
    %5456 = vmatpush1.xpose.msra.mxu0 0.0
    %5457 = vmatprep.subr.mxu0 0.0
    %5458 = vmatpush1.xpose.msra.mxu0 0.0
    %5459 = vmatprep.subr.mxu0 0.0
    %5460 = vmatpush1.xpose.msra.mxu0 %v5434
    %5461 = vmatprep.subr.mxu0 0.0
    %5462 = vmatpush1.xpose.msra.mxu0 %v5433
    %5463 = vmatprep.subr.mxu0 0.0
    %5464 = vmatpush1.xpose.msra.mxu0 %v5432
    %5465 = vmatprep.subr.mxu0 0.0
    %5466 = vmatpush1.xpose.msra.mxu0 %v5431
    %5467 = vmatprep.subr.mxu0 0.0
    %5468 = vmatpush2.xpose.msra.mxu0 0.0
    %5469 = vmatprep.subr.mxu0 0.0
    %5470 = vmatpush2.xpose.msra.mxu0 0.0
    %5471 = vmatprep.subr.mxu0 0.0
    %5472 = vmatpush2.xpose.msra.mxu0 0.0
    %5473 = vmatprep.subr.mxu0 0.0
    %5474 = vmatpush2.xpose.msra.mxu0 0.0
    %5475 = vmatprep.subr.mxu0 0.0
    %5476 = vmatpush2.xpose.msra.mxu0 0.0
    %5477 = vmatprep.subr.mxu0 0.0
    %5478 = vmatpush2.xpose.msra.mxu0 0.0
    %5479 = vmatprep.subr.mxu0 0.0
    %5480 = vmatpush2.xpose.msra.mxu0 0.0
    %5481 = vmatprep.subr.mxu0 0.0
    %5482 = vmatpush2.xpose.msra.mxu0 0.0
    %5483 = vmatprep.subr.mxu0 0.0
    %5484 = vmatpush2.xpose.msra.mxu0 0.0
    %5485 = vmatprep.subr.mxu0 0.0
    %5486 = vmatpush2.xpose.msra.mxu0 0.0
    %5487 = vmatprep.subr.mxu0 0.0
    %5488 = vmatpush2.xpose.msra.mxu0 0.0
    %5489 = vmatprep.subr.mxu0 0.0
    %5490 = vmatpush2.xpose.msra.mxu0 0.0
    %5491 = vmatprep.subr.mxu0 0.0
    %5492 = vmatpush2.xpose.msra.mxu0 0.0
    %5493 = vmatprep.subr.mxu0 0.0
    %5494 = vmatpush2.xpose.msra.mxu0 0.0
    %5495 = vmatprep.subr.mxu0 0.0
    %5496 = vmatpush2.xpose.msra.mxu0 0.0
    %5497 = vmatprep.subr.mxu0 0.0
    %5498 = vmatpush2.xpose.msra.mxu0 0.0
    %5499 = vmatprep.mubr.f32.mxu0 0.0
    %5500 = vmatmul.mubr.f32.gmra.mxu0 %v5431
    %v5501 = vpop.f32.mrf.mxu0
    %v5502 = vadd.f32 0.0, %v5501
    %v5503 = vpop.f32.mrf.mxu0
    %5504 = vmatprep.mubr.f32.mxu0 0.0
    %5505 = vmatmul.mubr.f32.gmra.mxu0 %v5432
    %v5506 = vpop.f32.mrf.mxu0
    %v5507 = vadd.f32 0.0, %v5506
    %v5508 = vpop.f32.mrf.mxu0
    %5509 = vmatprep.mubr.f32.mxu0 0.0
    %5510 = vmatmul.mubr.f32.gmra.mxu0 %v5433
    %v5511 = vpop.f32.mrf.mxu0
    %v5512 = vadd.f32 0.0, %v5511
    %v5513 = vpop.f32.mrf.mxu0
    %5514 = vmatprep.mubr.f32.mxu0 0.0
    %5515 = vmatmul.mubr.f32.gmra.mxu0 %v5434
    %v5516 = vpop.f32.mrf.mxu0
    %v5517 = vadd.f32 0.0, %v5516
    %v5518 = vpop.f32.mrf.mxu0
    %5519 = vdwg.mxu0
    %v5520 = vsel %vm2034, %v5502, -inf
    %v5521 = vsel %vm2035, %v5507, -inf
    %v5522 = vsel %vm2036, %v5512, -inf
    %v5523 = vsel %vm2037, %v5517, -inf
    %v5524 = vsel %vm1172, %v5520, -inf
    %5525 = vmax.xlane.f32.xlu0 %v5524
    %v5526 = vpop.xlane.xlu0 %5525
    %v5527 = vsel %vm1172, %v5521, -inf
    %5528 = vmax.xlane.f32.xlu0 %v5527
    %v5529 = vpop.xlane.xlu0 %5528
    %v5530 = vsel %vm1172, %v5522, -inf
    %5531 = vmax.xlane.f32.xlu0 %v5530
    %v5532 = vpop.xlane.xlu0 %5531
    %v5533 = vsel %vm1172, %v5523, -inf
    %5534 = vmax.xlane.f32.xlu0 %v5533
    %v5535 = vpop.xlane.xlu0 %5534
    %vm5536 = vcmp.ge.f32.partialorder %v5520, %v5526
    %vm5537 = vcmp.ge.f32.partialorder %v5521, %v5529
    %vm5538 = vcmp.ge.f32.partialorder %v5522, %v5532
    %vm5539 = vcmp.ge.f32.partialorder %v5523, %v5535
    %v5540 = vsel %vm5536, %v1989, 32.0
    %v5541 = vsel %vm5537, %v1989, 32.0
    %v5542 = vsel %vm5538, %v1989, 32.0
    %v5543 = vsel %vm5539, %v1989, 32.0
    %v5544 = vsel %vm1172, %v5540, inf
    %5545 = vmin.xlane.f32.xlu0 %v5544
    %v5546 = vpop.xlane.xlu0 %5545
    %v5547 = vsel %vm1172, %v5541, inf
    %5548 = vmin.xlane.f32.xlu0 %v5547
    %v5549 = vpop.xlane.xlu0 %5548
    %v5550 = vsel %vm1172, %v5542, inf
    %5551 = vmin.xlane.f32.xlu0 %v5550
    %v5552 = vpop.xlane.xlu0 %5551
    %v5553 = vsel %vm1172, %v5543, inf
    %5554 = vmin.xlane.f32.xlu0 %v5553
    %v5555 = vpop.xlane.xlu0 %5554
    %vm5556 = vcmp.eq.f32.partialorder %v1989, %v5546
    %vm5557 = vcmp.eq.f32.partialorder %v1989, %v5549
    %vm5558 = vcmp.eq.f32.partialorder %v1989, %v5552
    %vm5559 = vcmp.eq.f32.partialorder %v1989, %v5555
    %v5560 = vsel %vm5556, 1, 0
    %v5561 = vsel %vm5557, 1, 0
    %v5562 = vsel %vm5558, 1, 0
    %v5563 = vsel %vm5559, 1, 0
    %v5564 = vcvt.s32.f32 %v5560
    %v5565 = vcvt.s32.f32 %v5561
    %v5566 = vcvt.s32.f32 %v5562
    %v5567 = vcvt.s32.f32 %v5563
    %v5568 = vsel %vm5556, -inf, %v5520
    %v5569 = vsel %vm5557, -inf, %v5521
    %v5570 = vsel %vm5558, -inf, %v5522
    %v5571 = vsel %vm5559, -inf, %v5523
    %v5572 = vsel %vm1172, %v5568, -inf
    %5573 = vmax.xlane.f32.xlu0 %v5572
    %v5574 = vpop.xlane.xlu0 %5573
    %v5575 = vsel %vm1172, %v5569, -inf
    %5576 = vmax.xlane.f32.xlu0 %v5575
    %v5577 = vpop.xlane.xlu0 %5576
    %v5578 = vsel %vm1172, %v5570, -inf
    %5579 = vmax.xlane.f32.xlu0 %v5578
    %v5580 = vpop.xlane.xlu0 %5579
    %v5581 = vsel %vm1172, %v5571, -inf
    %5582 = vmax.xlane.f32.xlu0 %v5581
    %v5583 = vpop.xlane.xlu0 %5582
    %vm5584 = vcmp.ge.f32.partialorder %v5568, %v5574
    %vm5585 = vcmp.ge.f32.partialorder %v5569, %v5577
    %vm5586 = vcmp.ge.f32.partialorder %v5570, %v5580
    %vm5587 = vcmp.ge.f32.partialorder %v5571, %v5583
    %v5588 = vsel %vm5584, %v1989, 32.0
    %v5589 = vsel %vm5585, %v1989, 32.0
    %v5590 = vsel %vm5586, %v1989, 32.0
    %v5591 = vsel %vm5587, %v1989, 32.0
    %v5592 = vsel %vm1172, %v5588, inf
    %5593 = vmin.xlane.f32.xlu0 %v5592
    %v5594 = vpop.xlane.xlu0 %5593
    %v5595 = vsel %vm1172, %v5589, inf
    %5596 = vmin.xlane.f32.xlu0 %v5595
    %v5597 = vpop.xlane.xlu0 %5596
    %v5598 = vsel %vm1172, %v5590, inf
    %5599 = vmin.xlane.f32.xlu0 %v5598
    %v5600 = vpop.xlane.xlu0 %5599
    %v5601 = vsel %vm1172, %v5591, inf
    %5602 = vmin.xlane.f32.xlu0 %v5601
    %v5603 = vpop.xlane.xlu0 %5602
    %vm5604 = vcmp.eq.f32.partialorder %v1989, %v5594
    %vm5605 = vcmp.eq.f32.partialorder %v1989, %v5597
    %vm5606 = vcmp.eq.f32.partialorder %v1989, %v5600
    %vm5607 = vcmp.eq.f32.partialorder %v1989, %v5603
    %v5608 = vsel %vm5604, 1, 0
    %v5609 = vsel %vm5605, 1, 0
    %v5610 = vsel %vm5606, 1, 0
    %v5611 = vsel %vm5607, 1, 0
    %v5612 = vcvt.s32.f32 %v5608
    %v5613 = vcvt.s32.f32 %v5609
    %v5614 = vcvt.s32.f32 %v5610
    %v5615 = vcvt.s32.f32 %v5611
    %v5616 = vsel %vm5604, -inf, %v5568
    %v5617 = vsel %vm5605, -inf, %v5569
    %v5618 = vsel %vm5606, -inf, %v5570
    %v5619 = vsel %vm5607, -inf, %v5571
    %v5620 = vsel %vm1172, %v5616, -inf
    %5621 = vmax.xlane.f32.xlu0 %v5620
    %v5622 = vpop.xlane.xlu0 %5621
    %v5623 = vsel %vm1172, %v5617, -inf
    %5624 = vmax.xlane.f32.xlu0 %v5623
    %v5625 = vpop.xlane.xlu0 %5624
    %v5626 = vsel %vm1172, %v5618, -inf
    %5627 = vmax.xlane.f32.xlu0 %v5626
    %v5628 = vpop.xlane.xlu0 %5627
    %v5629 = vsel %vm1172, %v5619, -inf
    %5630 = vmax.xlane.f32.xlu0 %v5629
    %v5631 = vpop.xlane.xlu0 %5630
    %vm5632 = vcmp.ge.f32.partialorder %v5616, %v5622
    %vm5633 = vcmp.ge.f32.partialorder %v5617, %v5625
    %vm5634 = vcmp.ge.f32.partialorder %v5618, %v5628
    %vm5635 = vcmp.ge.f32.partialorder %v5619, %v5631
    %v5636 = vsel %vm5632, %v1989, 32.0
    %v5637 = vsel %vm5633, %v1989, 32.0
    %v5638 = vsel %vm5634, %v1989, 32.0
    %v5639 = vsel %vm5635, %v1989, 32.0
    %v5640 = vsel %vm1172, %v5636, inf
    %5641 = vmin.xlane.f32.xlu0 %v5640
    %v5642 = vpop.xlane.xlu0 %5641
    %v5643 = vsel %vm1172, %v5637, inf
    %5644 = vmin.xlane.f32.xlu0 %v5643
    %v5645 = vpop.xlane.xlu0 %5644
    %v5646 = vsel %vm1172, %v5638, inf
    %5647 = vmin.xlane.f32.xlu0 %v5646
    %v5648 = vpop.xlane.xlu0 %5647
    %v5649 = vsel %vm1172, %v5639, inf
    %5650 = vmin.xlane.f32.xlu0 %v5649
    %v5651 = vpop.xlane.xlu0 %5650
    %vm5652 = vcmp.eq.f32.partialorder %v1989, %v5642
    %vm5653 = vcmp.eq.f32.partialorder %v1989, %v5645
    %vm5654 = vcmp.eq.f32.partialorder %v1989, %v5648
    %vm5655 = vcmp.eq.f32.partialorder %v1989, %v5651
    %v5656 = vsel %vm5652, 1, 0
    %v5657 = vsel %vm5653, 1, 0
    %v5658 = vsel %vm5654, 1, 0
    %v5659 = vsel %vm5655, 1, 0
    %v5660 = vcvt.s32.f32 %v5656
    %v5661 = vcvt.s32.f32 %v5657
    %v5662 = vcvt.s32.f32 %v5658
    %v5663 = vcvt.s32.f32 %v5659
    %v5664 = vsel %vm5652, -inf, %v5616
    %v5665 = vsel %vm5653, -inf, %v5617
    %v5666 = vsel %vm5654, -inf, %v5618
    %v5667 = vsel %vm5655, -inf, %v5619
    %v5668 = vsel %vm1172, %v5664, -inf
    %5669 = vmax.xlane.f32.xlu0 %v5668
    %v5670 = vpop.xlane.xlu0 %5669
    %v5671 = vsel %vm1172, %v5665, -inf
    %5672 = vmax.xlane.f32.xlu0 %v5671
    %v5673 = vpop.xlane.xlu0 %5672
    %v5674 = vsel %vm1172, %v5666, -inf
    %5675 = vmax.xlane.f32.xlu0 %v5674
    %v5676 = vpop.xlane.xlu0 %5675
    %v5677 = vsel %vm1172, %v5667, -inf
    %5678 = vmax.xlane.f32.xlu0 %v5677
    %v5679 = vpop.xlane.xlu0 %5678
    %vm5680 = vcmp.ge.f32.partialorder %v5664, %v5670
    %vm5681 = vcmp.ge.f32.partialorder %v5665, %v5673
    %vm5682 = vcmp.ge.f32.partialorder %v5666, %v5676
    %vm5683 = vcmp.ge.f32.partialorder %v5667, %v5679
    %v5684 = vsel %vm5680, %v1989, 32.0
    %v5685 = vsel %vm5681, %v1989, 32.0
    %v5686 = vsel %vm5682, %v1989, 32.0
    %v5687 = vsel %vm5683, %v1989, 32.0
    %v5688 = vsel %vm1172, %v5684, inf
    %5689 = vmin.xlane.f32.xlu0 %v5688
    %v5690 = vpop.xlane.xlu0 %5689
    %v5691 = vsel %vm1172, %v5685, inf
    %5692 = vmin.xlane.f32.xlu0 %v5691
    %v5693 = vpop.xlane.xlu0 %5692
    %v5694 = vsel %vm1172, %v5686, inf
    %5695 = vmin.xlane.f32.xlu0 %v5694
    %v5696 = vpop.xlane.xlu0 %5695
    %v5697 = vsel %vm1172, %v5687, inf
    %5698 = vmin.xlane.f32.xlu0 %v5697
    %v5699 = vpop.xlane.xlu0 %5698
    %vm5700 = vcmp.eq.f32.partialorder %v1989, %v5690
    %vm5701 = vcmp.eq.f32.partialorder %v1989, %v5693
    %vm5702 = vcmp.eq.f32.partialorder %v1989, %v5696
    %vm5703 = vcmp.eq.f32.partialorder %v1989, %v5699
    %v5704 = vsel %vm5700, 1, 0
    %v5705 = vsel %vm5701, 1, 0
    %v5706 = vsel %vm5702, 1, 0
    %v5707 = vsel %vm5703, 1, 0
    %v5708 = vcvt.s32.f32 %v5704
    %v5709 = vcvt.s32.f32 %v5705
    %v5710 = vcvt.s32.f32 %v5706
    %v5711 = vcvt.s32.f32 %v5707
    %v5712 = vld [vmem:[%s79] sm:$0xff]
    %v5713 = vld [vmem:[%s79 + $0x8] sm:$0xff]
    %v5714 = vld [vmem:[%s79 + $0x10] sm:$0xff]
    %v5715 = vld [vmem:[%s79 + $0x18] sm:$0xff]
    %v5716 = vld [vmem:[%s79 + $0x20] sm:$0xff]
    %v5717 = vld [vmem:[%s79 + $0x28] sm:$0xff]
    %v5718 = vld [vmem:[%s79 + $0x30] sm:$0xff]
    %v5719 = vld [vmem:[%s79 + $0x38] sm:$0xff]
    %v5720 = vld [vmem:[%s79 + $0x40] sm:$0xff]
    %v5721 = vld [vmem:[%s79 + $0x48] sm:$0xff]
    %v5722 = vld [vmem:[%s79 + $0x50] sm:$0xff]
    %v5723 = vld [vmem:[%s79 + $0x58] sm:$0xff]
    %v5724 = vld [vmem:[%s79 + $0x60] sm:$0xff]
    %v5725 = vld [vmem:[%s79 + $0x68] sm:$0xff]
    %v5726 = vld [vmem:[%s79 + $0x70] sm:$0xff]
    %v5727 = vld [vmem:[%s79 + $0x78] sm:$0xff]
    %v5728 = vld [vmem:[#allocation19] sm:$0x1]
    %v5730 = vlaneseq
    %v5731 = vshrl.u32 %v5730, 7
    %v5732 = vsub.s32 0, %v5731
    %v5733 = vrot.slane %v5728, %v5732
    %5735 = vmatprep.subr.mxu0 0.0
    %5736 = vmatpush1.msra.mxu0 %v5727
    %5737 = vmatprep.subr.mxu0 0.0
    %5738 = vmatpush1.msra.mxu0 %v5726
    %5739 = vmatprep.subr.mxu0 0.0
    %5740 = vmatpush1.msra.mxu0 %v5725
    %5741 = vmatprep.subr.mxu0 0.0
    %5742 = vmatpush1.msra.mxu0 %v5724
    %5743 = vmatprep.subr.mxu0 0.0
    %5744 = vmatpush1.msra.mxu0 %v5723
    %5745 = vmatprep.subr.mxu0 0.0
    %5746 = vmatpush1.msra.mxu0 %v5722
    %5747 = vmatprep.subr.mxu0 0.0
    %5748 = vmatpush1.msra.mxu0 %v5721
    %5749 = vmatprep.subr.mxu0 0.0
    %5750 = vmatpush1.msra.mxu0 %v5720
    %5751 = vmatprep.subr.mxu0 0.0
    %5752 = vmatpush1.msra.mxu0 %v5719
    %5753 = vmatprep.subr.mxu0 0.0
    %5754 = vmatpush1.msra.mxu0 %v5718
    %5755 = vmatprep.subr.mxu0 0.0
    %5756 = vmatpush1.msra.mxu0 %v5717
    %5757 = vmatprep.subr.mxu0 0.0
    %5758 = vmatpush1.msra.mxu0 %v5716
    %5759 = vmatprep.subr.mxu0 0.0
    %5760 = vmatpush1.msra.mxu0 %v5715
    %5761 = vmatprep.subr.mxu0 0.0
    %5762 = vmatpush1.msra.mxu0 %v5714
    %5763 = vmatprep.subr.mxu0 0.0
    %5764 = vmatpush1.msra.mxu0 %v5713
    %5765 = vmatprep.subr.mxu0 0.0
    %5766 = vmatpush1.msra.mxu0 %v5712
    %5767 = vmatprep.subr.mxu0 0.0
    %5768 = vmatpush2.msra.mxu0 0.0
    %5769 = vmatprep.subr.mxu0 0.0
    %5770 = vmatpush2.msra.mxu0 0.0
    %5771 = vmatprep.subr.mxu0 0.0
    %5772 = vmatpush2.msra.mxu0 0.0
    %5773 = vmatprep.subr.mxu0 0.0
    %5774 = vmatpush2.msra.mxu0 0.0
    %5775 = vmatprep.subr.mxu0 0.0
    %5776 = vmatpush2.msra.mxu0 0.0
    %5777 = vmatprep.subr.mxu0 0.0
    %5778 = vmatpush2.msra.mxu0 0.0
    %5779 = vmatprep.subr.mxu0 0.0
    %5780 = vmatpush2.msra.mxu0 0.0
    %5781 = vmatprep.subr.mxu0 0.0
    %5782 = vmatpush2.msra.mxu0 0.0
    %5783 = vmatprep.subr.mxu0 0.0
    %5784 = vmatpush2.msra.mxu0 0.0
    %5785 = vmatprep.subr.mxu0 0.0
    %5786 = vmatpush2.msra.mxu0 0.0
    %5787 = vmatprep.subr.mxu0 0.0
    %5788 = vmatpush2.msra.mxu0 0.0
    %5789 = vmatprep.subr.mxu0 0.0
    %5790 = vmatpush2.msra.mxu0 0.0
    %5791 = vmatprep.subr.mxu0 0.0
    %5792 = vmatpush2.msra.mxu0 0.0
    %5793 = vmatprep.subr.mxu0 0.0
    %5794 = vmatpush2.msra.mxu0 0.0
    %5795 = vmatprep.subr.mxu0 0.0
    %5796 = vmatpush2.msra.mxu0 0.0
    %5797 = vmatprep.subr.mxu0 0.0
    %5798 = vmatpush2.msra.mxu0 0.0
    %5799 = vmatprep.mubr.f32.mxu0 0.0
    %5800 = vmatmul.mubr.f32.gmra.mxu0 %v5431
    %v5801 = vpop.f32.mrf.mxu0
    %v5802 = vadd.f32 %v5733, %v5801
    %v5803 = vpop.f32.mrf.mxu0
    %5804 = vmatprep.mubr.f32.mxu0 0.0
    %5805 = vmatmul.mubr.f32.gmra.mxu0 %v5432
    %v5806 = vpop.f32.mrf.mxu0
    %v5807 = vadd.f32 %v5733, %v5806
    %v5808 = vpop.f32.mrf.mxu0
    %5809 = vmatprep.mubr.f32.mxu0 0.0
    %5810 = vmatmul.mubr.f32.gmra.mxu0 %v5433
    %v5811 = vpop.f32.mrf.mxu0
    %v5812 = vadd.f32 %v5733, %v5811
    %v5813 = vpop.f32.mrf.mxu0
    %5814 = vmatprep.mubr.f32.mxu0 0.0
    %5815 = vmatmul.mubr.f32.gmra.mxu0 %v5434
    %v5816 = vpop.f32.mrf.mxu0
    %v5817 = vadd.f32 %v5733, %v5816
    %v5818 = vpop.f32.mrf.mxu0
    %5819 = vdwg.mxu0
    %v5820 = vmul.f32 %v5802, 0.5
    %v5821 = vmul.f32 %v5807, 0.5
    %v5822 = vmul.f32 %v5812, 0.5
    %v5823 = vmul.f32 %v5817, 0.5
    %v5824 = vmul.f32 %v5802, 0.70710677
    %v5825 = vmul.f32 %v5807, 0.70710677
    %v5826 = vmul.f32 %v5812, 0.70710677
    %v5827 = vmul.f32 %v5817, 0.70710677
    %vm5828 = vcmp.lt.f32.partialorder %v5824, 0.0
    %vm5829 = vcmp.lt.f32.partialorder %v5825, 0.0
    %vm5830 = vcmp.lt.f32.partialorder %v5826, 0.0
    %vm5831 = vcmp.lt.f32.partialorder %v5827, 0.0
    %v5832 = vsel %vm5828, -1.0, 1.0
    %v5833 = vsel %vm5829, -1.0, 1.0
    %v5834 = vsel %vm5830, -1.0, 1.0
    %v5835 = vsel %vm5831, -1.0, 1.0
    %v5836 = vand.u32 2147483647, %v5824
    %v5837 = vand.u32 2147483647, %v5825
    %v5838 = vand.u32 2147483647, %v5826
    %v5839 = vand.u32 2147483647, %v5827
    %v5840 = vmul.f32 %v5836, 0.3275911
    %v5841 = vmul.f32 %v5837, 0.3275911
    %v5842 = vmul.f32 %v5838, 0.3275911
    %v5843 = vmul.f32 %v5839, 0.3275911
    %v5844 = vadd.f32 %v5840, 1.0
    %v5845 = vadd.f32 %v5841, 1.0
    %v5846 = vadd.f32 %v5842, 1.0
    %v5847 = vadd.f32 %v5843, 1.0
    %v5848 = vrcp.pop %v5844
    %v5849 = vrcp.pop %v5845
    %v5850 = vrcp.pop %v5846
    %v5851 = vrcp.pop %v5847
    %v5852 = vmul.f32 %v5848, 1.0614054
    %v5853 = vmul.f32 %v5849, 1.0614054
    %v5854 = vmul.f32 %v5850, 1.0614054
    %v5855 = vmul.f32 %v5851, 1.0614054
    %v5856 = vadd.f32 %v5852, -1.4531521
    %v5857 = vadd.f32 %v5853, -1.4531521
    %v5858 = vadd.f32 %v5854, -1.4531521
    %v5859 = vadd.f32 %v5855, -1.4531521
    %v5860 = vmul.f32 %v5856, %v5848
    %v5861 = vmul.f32 %v5857, %v5849
    %v5862 = vmul.f32 %v5858, %v5850
    %v5863 = vmul.f32 %v5859, %v5851
    %v5864 = vadd.f32 %v5860, 1.4214138
    %v5865 = vadd.f32 %v5861, 1.4214138
    %v5866 = vadd.f32 %v5862, 1.4214138
    %v5867 = vadd.f32 %v5863, 1.4214138
    %v5868 = vmul.f32 %v5864, %v5848
    %v5869 = vmul.f32 %v5865, %v5849
    %v5870 = vmul.f32 %v5866, %v5850
    %v5871 = vmul.f32 %v5867, %v5851
    %v5872 = vadd.f32 %v5868, -0.28449672
    %v5873 = vadd.f32 %v5869, -0.28449672
    %v5874 = vadd.f32 %v5870, -0.28449672
    %v5875 = vadd.f32 %v5871, -0.28449672
    %v5876 = vmul.f32 %v5872, %v5848
    %v5877 = vmul.f32 %v5873, %v5849
    %v5878 = vmul.f32 %v5874, %v5850
    %v5879 = vmul.f32 %v5875, %v5851
    %v5880 = vadd.f32 %v5876, 0.2548296
    %v5881 = vadd.f32 %v5877, 0.2548296
    %v5882 = vadd.f32 %v5878, 0.2548296
    %v5883 = vadd.f32 %v5879, 0.2548296
    %v5884 = vmul.f32 %v5880, %v5848
    %v5885 = vmul.f32 %v5881, %v5849
    %v5886 = vmul.f32 %v5882, %v5850
    %v5887 = vmul.f32 %v5883, %v5851
    %v5888 = vsub.f32 0.0, %v5836
    %v5889 = vsub.f32 0.0, %v5837
    %v5890 = vsub.f32 0.0, %v5838
    %v5891 = vsub.f32 0.0, %v5839
    %v5892 = vmul.f32 %v5888, %v5836
    %v5893 = vmul.f32 %v5889, %v5837
    %v5894 = vmul.f32 %v5890, %v5838
    %v5895 = vmul.f32 %v5891, %v5839
    %v5896 = vmul.f32 %v5892, 1.442695
    %v5897 = vpow.pop %v5896
    %v5898 = vmul.f32 %v5893, 1.442695
    %v5899 = vpow.pop %v5898
    %v5900 = vmul.f32 %v5894, 1.442695
    %v5901 = vpow.pop %v5900
    %v5902 = vmul.f32 %v5895, 1.442695
    %v5903 = vpow.pop %v5902
    %v5904 = vmul.f32 %v5884, %v5897
    %v5905 = vmul.f32 %v5885, %v5899
    %v5906 = vmul.f32 %v5886, %v5901
    %v5907 = vmul.f32 %v5887, %v5903
    %v5908 = vsub.f32 1.0, %v5904
    %v5909 = vsub.f32 1.0, %v5905
    %v5910 = vsub.f32 1.0, %v5906
    %v5911 = vsub.f32 1.0, %v5907
    %v5912 = vmul.f32 %v5832, %v5908
    %v5913 = vmul.f32 %v5833, %v5909
    %v5914 = vmul.f32 %v5834, %v5910
    %v5915 = vmul.f32 %v5835, %v5911
    %v5916 = vadd.f32 %v5912, 1.0
    %v5917 = vadd.f32 %v5913, 1.0
    %v5918 = vadd.f32 %v5914, 1.0
    %v5919 = vadd.f32 %v5915, 1.0
    %v5920 = vmul.f32 %v5820, %v5916
    %v5921 = vmul.f32 %v5821, %v5917
    %v5922 = vmul.f32 %v5822, %v5918
    %v5923 = vmul.f32 %v5823, %v5919
    %v5924 = vld [vmem:[%s83] sm:$0xff]
    %v5925 = vld [vmem:[%s83 + $0x8] sm:$0xff]
    %v5926 = vld [vmem:[%s83 + $0x10] sm:$0xff]
    %v5927 = vld [vmem:[%s83 + $0x18] sm:$0xff]
    %v5928 = vld [vmem:[%s83 + $0x20] sm:$0xff]
    %v5929 = vld [vmem:[%s83 + $0x28] sm:$0xff]
    %v5930 = vld [vmem:[%s83 + $0x30] sm:$0xff]
    %v5931 = vld [vmem:[%s83 + $0x38] sm:$0xff]
    %v5932 = vld [vmem:[%s83 + $0x40] sm:$0xff]
    %v5933 = vld [vmem:[%s83 + $0x48] sm:$0xff]
    %v5934 = vld [vmem:[%s83 + $0x50] sm:$0xff]
    %v5935 = vld [vmem:[%s83 + $0x58] sm:$0xff]
    %v5936 = vld [vmem:[%s83 + $0x60] sm:$0xff]
    %v5937 = vld [vmem:[%s83 + $0x68] sm:$0xff]
    %v5938 = vld [vmem:[%s83 + $0x70] sm:$0xff]
    %v5939 = vld [vmem:[%s83 + $0x78] sm:$0xff]
    %v5940 = vld [vmem:[#allocation20] sm:$0x1]
    %v5942 = vlaneseq
    %v5943 = vshrl.u32 %v5942, 7
    %v5944 = vsub.s32 0, %v5943
    %v5945 = vrot.slane %v5940, %v5944
    %5947 = vmatprep.subr.mxu0 0.0
    %5948 = vmatpush1.msra.mxu0 %v5939
    %5949 = vmatprep.subr.mxu0 0.0
    %5950 = vmatpush1.msra.mxu0 %v5938
    %5951 = vmatprep.subr.mxu0 0.0
    %5952 = vmatpush1.msra.mxu0 %v5937
    %5953 = vmatprep.subr.mxu0 0.0
    %5954 = vmatpush1.msra.mxu0 %v5936
    %5955 = vmatprep.subr.mxu0 0.0
    %5956 = vmatpush1.msra.mxu0 %v5935
    %5957 = vmatprep.subr.mxu0 0.0
    %5958 = vmatpush1.msra.mxu0 %v5934
    %5959 = vmatprep.subr.mxu0 0.0
    %5960 = vmatpush1.msra.mxu0 %v5933
    %5961 = vmatprep.subr.mxu0 0.0
    %5962 = vmatpush1.msra.mxu0 %v5932
    %5963 = vmatprep.subr.mxu0 0.0
    %5964 = vmatpush1.msra.mxu0 %v5931
    %5965 = vmatprep.subr.mxu0 0.0
    %5966 = vmatpush1.msra.mxu0 %v5930
    %5967 = vmatprep.subr.mxu0 0.0
    %5968 = vmatpush1.msra.mxu0 %v5929
    %5969 = vmatprep.subr.mxu0 0.0
    %5970 = vmatpush1.msra.mxu0 %v5928
    %5971 = vmatprep.subr.mxu0 0.0
    %5972 = vmatpush1.msra.mxu0 %v5927
    %5973 = vmatprep.subr.mxu0 0.0
    %5974 = vmatpush1.msra.mxu0 %v5926
    %5975 = vmatprep.subr.mxu0 0.0
    %5976 = vmatpush1.msra.mxu0 %v5925
    %5977 = vmatprep.subr.mxu0 0.0
    %5978 = vmatpush1.msra.mxu0 %v5924
    %5979 = vmatprep.subr.mxu0 0.0
    %5980 = vmatpush2.msra.mxu0 0.0
    %5981 = vmatprep.subr.mxu0 0.0
    %5982 = vmatpush2.msra.mxu0 0.0
    %5983 = vmatprep.subr.mxu0 0.0
    %5984 = vmatpush2.msra.mxu0 0.0
    %5985 = vmatprep.subr.mxu0 0.0
    %5986 = vmatpush2.msra.mxu0 0.0
    %5987 = vmatprep.subr.mxu0 0.0
    %5988 = vmatpush2.msra.mxu0 0.0
    %5989 = vmatprep.subr.mxu0 0.0
    %5990 = vmatpush2.msra.mxu0 0.0
    %5991 = vmatprep.subr.mxu0 0.0
    %5992 = vmatpush2.msra.mxu0 0.0
    %5993 = vmatprep.subr.mxu0 0.0
    %5994 = vmatpush2.msra.mxu0 0.0
    %5995 = vmatprep.subr.mxu0 0.0
    %5996 = vmatpush2.msra.mxu0 0.0
    %5997 = vmatprep.subr.mxu0 0.0
    %5998 = vmatpush2.msra.mxu0 0.0
    %5999 = vmatprep.subr.mxu0 0.0
    %6000 = vmatpush2.msra.mxu0 0.0
    %6001 = vmatprep.subr.mxu0 0.0
    %6002 = vmatpush2.msra.mxu0 0.0
    %6003 = vmatprep.subr.mxu0 0.0
    %6004 = vmatpush2.msra.mxu0 0.0
    %6005 = vmatprep.subr.mxu0 0.0
    %6006 = vmatpush2.msra.mxu0 0.0
    %6007 = vmatprep.subr.mxu0 0.0
    %6008 = vmatpush2.msra.mxu0 0.0
    %6009 = vmatprep.subr.mxu0 0.0
    %6010 = vmatpush2.msra.mxu0 0.0
    %6011 = vmatprep.mubr.f32.mxu0 0.0
    %6012 = vmatmul.mubr.f32.gmra.mxu0 %v5920
    %v6013 = vpop.f32.mrf.mxu0
    %v6014 = vadd.f32 %v5945, %v6013
    %v6015 = vpop.f32.mrf.mxu0
    %6016 = vmatprep.mubr.f32.mxu0 0.0
    %6017 = vmatmul.mubr.f32.gmra.mxu0 %v5921
    %v6018 = vpop.f32.mrf.mxu0
    %v6019 = vadd.f32 %v5945, %v6018
    %v6020 = vpop.f32.mrf.mxu0
    %6021 = vmatprep.mubr.f32.mxu0 0.0
    %6022 = vmatmul.mubr.f32.gmra.mxu0 %v5922
    %v6023 = vpop.f32.mrf.mxu0
    %v6024 = vadd.f32 %v5945, %v6023
    %v6025 = vpop.f32.mrf.mxu0
    %6026 = vmatprep.mubr.f32.mxu0 0.0
    %6027 = vmatmul.mubr.f32.gmra.mxu0 %v5923
    %v6028 = vpop.f32.mrf.mxu0
    %v6029 = vadd.f32 %v5945, %v6028
    %v6030 = vpop.f32.mrf.mxu0
    %6031 = vdwg.mxu0
    %v6033 = vsel %vm1172, %v5564, 0
    %v6036 = vsel %vm1172, %v5565, 0
    %v6039 = vsel %vm1172, %v5566, 0
    %v6042 = vsel %vm1172, %v5567, 0
    %v6045 = vsel %vm1172, %v5612, 0
    %v6048 = vsel %vm1172, %v5613, 0
    %v6051 = vsel %vm1172, %v5614, 0
    %v6054 = vsel %vm1172, %v5615, 0
    %v6057 = vsel %vm1172, %v5660, 0
    %v6060 = vsel %vm1172, %v5661, 0
    %v6063 = vsel %vm1172, %v5662, 0
    %v6066 = vsel %vm1172, %v5663, 0
    %v6069 = vsel %vm1172, %v5708, 0
    %v6072 = vsel %vm1172, %v5709, 0
    %v6075 = vsel %vm1172, %v5710, 0
    %v6078 = vsel %vm1172, %v5711, 0
    %6080 = vmatprep.subr.mxu0 0.0
    %6081 = vmatpush1.msra.mxu0 0.0
    %6082 = vmatprep.subr.mxu0 0.0
    %6083 = vmatpush1.msra.mxu0 0.0
    %6084 = vmatprep.subr.mxu0 0.0
    %6085 = vmatpush1.msra.mxu0 0.0
    %6086 = vmatprep.subr.mxu0 0.0
    %6087 = vmatpush1.msra.mxu0 0.0
    %6088 = vmatprep.subr.mxu0 0.0
    %6089 = vmatpush1.msra.mxu0 0.0
    %6090 = vmatprep.subr.mxu0 0.0
    %6091 = vmatpush1.msra.mxu0 0.0
    %6092 = vmatprep.subr.mxu0 0.0
    %6093 = vmatpush1.msra.mxu0 0.0
    %6094 = vmatprep.subr.mxu0 0.0
    %6095 = vmatpush1.msra.mxu0 0.0
    %6096 = vmatprep.subr.mxu0 0.0
    %6097 = vmatpush1.msra.mxu0 0.0
    %6098 = vmatprep.subr.mxu0 0.0
    %6099 = vmatpush1.msra.mxu0 0.0
    %6100 = vmatprep.subr.mxu0 0.0
    %6101 = vmatpush1.msra.mxu0 0.0
    %6102 = vmatprep.subr.mxu0 0.0
    %6103 = vmatpush1.msra.mxu0 0.0
    %6104 = vmatprep.subr.mxu0 0.0
    %6105 = vmatpush1.msra.mxu0 %v6029
    %6106 = vmatprep.subr.mxu0 0.0
    %6107 = vmatpush1.msra.mxu0 %v6024
    %6108 = vmatprep.subr.mxu0 0.0
    %6109 = vmatpush1.msra.mxu0 %v6019
    %6110 = vmatprep.subr.mxu0 0.0
    %6111 = vmatpush1.msra.mxu0 %v6014
    %6112 = vmatprep.subr.mxu0 0.0
    %6113 = vmatpush2.msra.mxu0 0.0
    %6114 = vmatprep.subr.mxu0 0.0
    %6115 = vmatpush2.msra.mxu0 0.0
    %6116 = vmatprep.subr.mxu0 0.0
    %6117 = vmatpush2.msra.mxu0 0.0
    %6118 = vmatprep.subr.mxu0 0.0
    %6119 = vmatpush2.msra.mxu0 0.0
    %6120 = vmatprep.subr.mxu0 0.0
    %6121 = vmatpush2.msra.mxu0 0.0
    %6122 = vmatprep.subr.mxu0 0.0
    %6123 = vmatpush2.msra.mxu0 0.0
    %6124 = vmatprep.subr.mxu0 0.0
    %6125 = vmatpush2.msra.mxu0 0.0
    %6126 = vmatprep.subr.mxu0 0.0
    %6127 = vmatpush2.msra.mxu0 0.0
    %6128 = vmatprep.subr.mxu0 0.0
    %6129 = vmatpush2.msra.mxu0 0.0
    %6130 = vmatprep.subr.mxu0 0.0
    %6131 = vmatpush2.msra.mxu0 0.0
    %6132 = vmatprep.subr.mxu0 0.0
    %6133 = vmatpush2.msra.mxu0 0.0
    %6134 = vmatprep.subr.mxu0 0.0
    %6135 = vmatpush2.msra.mxu0 0.0
    %6136 = vmatprep.subr.mxu0 0.0
    %6137 = vmatpush2.msra.mxu0 0.0
    %6138 = vmatprep.subr.mxu0 0.0
    %6139 = vmatpush2.msra.mxu0 0.0
    %6140 = vmatprep.subr.mxu0 0.0
    %6141 = vmatpush2.msra.mxu0 0.0
    %6142 = vmatprep.subr.mxu0 0.0
    %6143 = vmatpush2.msra.mxu0 0.0
    %6144 = vmatprep.mubr.f32.mxu0 0.0
    %6145 = vmatmul.mubr.f32.gmra.mxu0 %v6033
    %v6146 = vpop.f32.mrf.mxu0
    %v6147 = vadd.f32 0.0, %v6146
    %v6148 = vpop.f32.mrf.mxu0
    %6149 = vmatprep.mubr.f32.mxu0 0.0
    %6150 = vmatmul.mubr.f32.gmra.mxu0 %v6036
    %v6151 = vpop.f32.mrf.mxu0
    %v6152 = vadd.f32 0.0, %v6151
    %v6153 = vpop.f32.mrf.mxu0
    %6154 = vmatprep.mubr.f32.mxu0 0.0
    %6155 = vmatmul.mubr.f32.gmra.mxu0 %v6039
    %v6156 = vpop.f32.mrf.mxu0
    %v6157 = vadd.f32 0.0, %v6156
    %v6158 = vpop.f32.mrf.mxu0
    %6159 = vmatprep.mubr.f32.mxu0 0.0
    %6160 = vmatmul.mubr.f32.gmra.mxu0 %v6042
    %v6161 = vpop.f32.mrf.mxu0
    %v6162 = vadd.f32 0.0, %v6161
    %v6163 = vpop.f32.mrf.mxu0
    %6164 = vmatprep.mubr.f32.mxu0 0.0
    %6165 = vmatmul.mubr.f32.gmra.mxu0 %v6045
    %v6166 = vpop.f32.mrf.mxu0
    %v6167 = vadd.f32 0.0, %v6166
    %v6168 = vpop.f32.mrf.mxu0
    %6169 = vmatprep.mubr.f32.mxu0 0.0
    %6170 = vmatmul.mubr.f32.gmra.mxu0 %v6048
    %v6171 = vpop.f32.mrf.mxu0
    %v6172 = vadd.f32 0.0, %v6171
    %v6173 = vpop.f32.mrf.mxu0
    %6174 = vmatprep.mubr.f32.mxu0 0.0
    %6175 = vmatmul.mubr.f32.gmra.mxu0 %v6051
    %v6176 = vpop.f32.mrf.mxu0
    %v6177 = vadd.f32 0.0, %v6176
    %v6178 = vpop.f32.mrf.mxu0
    %6179 = vmatprep.mubr.f32.mxu0 0.0
    %6180 = vmatmul.mubr.f32.gmra.mxu0 %v6054
    %v6181 = vpop.f32.mrf.mxu0
    %v6182 = vadd.f32 0.0, %v6181
    %v6183 = vpop.f32.mrf.mxu0
    %6184 = vmatprep.mubr.f32.mxu0 0.0
    %6185 = vmatmul.mubr.f32.gmra.mxu0 %v6057
    %v6186 = vpop.f32.mrf.mxu0
    %v6187 = vadd.f32 0.0, %v6186
    %v6188 = vpop.f32.mrf.mxu0
    %6189 = vmatprep.mubr.f32.mxu0 0.0
    %6190 = vmatmul.mubr.f32.gmra.mxu0 %v6060
    %v6191 = vpop.f32.mrf.mxu0
    %v6192 = vadd.f32 0.0, %v6191
    %v6193 = vpop.f32.mrf.mxu0
    %6194 = vmatprep.mubr.f32.mxu0 0.0
    %6195 = vmatmul.mubr.f32.gmra.mxu0 %v6063
    %v6196 = vpop.f32.mrf.mxu0
    %v6197 = vadd.f32 0.0, %v6196
    %v6198 = vpop.f32.mrf.mxu0
    %6199 = vmatprep.mubr.f32.mxu0 0.0
    %6200 = vmatmul.mubr.f32.gmra.mxu0 %v6066
    %v6201 = vpop.f32.mrf.mxu0
    %v6202 = vadd.f32 0.0, %v6201
    %v6203 = vpop.f32.mrf.mxu0
    %6204 = vmatprep.mubr.f32.mxu0 0.0
    %6205 = vmatmul.mubr.f32.gmra.mxu0 %v6069
    %v6206 = vpop.f32.mrf.mxu0
    %v6207 = vadd.f32 0.0, %v6206
    %v6208 = vpop.f32.mrf.mxu0
    %6209 = vmatprep.mubr.f32.mxu0 0.0
    %6210 = vmatmul.mubr.f32.gmra.mxu0 %v6072
    %v6211 = vpop.f32.mrf.mxu0
    %v6212 = vadd.f32 0.0, %v6211
    %v6213 = vpop.f32.mrf.mxu0
    %6214 = vmatprep.mubr.f32.mxu0 0.0
    %6215 = vmatmul.mubr.f32.gmra.mxu0 %v6075
    %v6216 = vpop.f32.mrf.mxu0
    %v6217 = vadd.f32 0.0, %v6216
    %v6218 = vpop.f32.mrf.mxu0
    %6219 = vmatprep.mubr.f32.mxu0 0.0
    %6220 = vmatmul.mubr.f32.gmra.mxu0 %v6078
    %v6221 = vpop.f32.mrf.mxu0
    %v6222 = vadd.f32 0.0, %v6221
    %v6223 = vpop.f32.mrf.mxu0
    %6224 = vdwg.mxu0
    %v6225 = vmax.f32 %v6147, %v6167
    %v6226 = vmax.f32 %v6152, %v6172
    %v6227 = vmax.f32 %v6157, %v6177
    %v6228 = vmax.f32 %v6162, %v6182
    %v6229 = vmax.f32 %v6225, %v6187
    %v6230 = vmax.f32 %v6226, %v6192
    %v6231 = vmax.f32 %v6227, %v6197
    %v6232 = vmax.f32 %v6228, %v6202
    %v6233 = vmax.f32 %v6229, %v6207
    %v6234 = vmax.f32 %v6230, %v6212
    %v6235 = vmax.f32 %v6231, %v6217
    %v6236 = vmax.f32 %v6232, %v6222
    %v6237 = vsub.f32 %v6233, %v6014
    %v6238 = vsub.f32 %v6234, %v6019
    %v6239 = vsub.f32 %v6235, %v6024
    %v6240 = vsub.f32 %v6236, %v6029
    %v6241 = vld [vmem:[%s87] sm:$0xff]
    %v6242 = vld [vmem:[%s87 + $0x8] sm:$0xff]
    %v6243 = vld [vmem:[%s87 + $0x10] sm:$0xff]
    %v6244 = vld [vmem:[%s87 + $0x18] sm:$0xff]
    %v6245 = vld [vmem:[%s87 + $0x20] sm:$0xff]
    %v6246 = vld [vmem:[%s87 + $0x28] sm:$0xff]
    %v6247 = vld [vmem:[%s87 + $0x30] sm:$0xff]
    %v6248 = vld [vmem:[%s87 + $0x38] sm:$0xff]
    %v6249 = vld [vmem:[%s87 + $0x40] sm:$0xff]
    %v6250 = vld [vmem:[%s87 + $0x48] sm:$0xff]
    %v6251 = vld [vmem:[%s87 + $0x50] sm:$0xff]
    %v6252 = vld [vmem:[%s87 + $0x58] sm:$0xff]
    %v6253 = vld [vmem:[%s87 + $0x60] sm:$0xff]
    %v6254 = vld [vmem:[%s87 + $0x68] sm:$0xff]
    %v6255 = vld [vmem:[%s87 + $0x70] sm:$0xff]
    %v6256 = vld [vmem:[%s87 + $0x78] sm:$0xff]
    %v6257 = vld [vmem:[%s89] sm:$0xff]
    %v6258 = vld [vmem:[%s89 + $0x8] sm:$0xff]
    %v6259 = vld [vmem:[%s89 + $0x10] sm:$0xff]
    %v6260 = vld [vmem:[%s89 + $0x18] sm:$0xff]
    %v6261 = vld [vmem:[%s89 + $0x20] sm:$0xff]
    %v6262 = vld [vmem:[%s89 + $0x28] sm:$0xff]
    %v6263 = vld [vmem:[%s89 + $0x30] sm:$0xff]
    %v6264 = vld [vmem:[%s89 + $0x38] sm:$0xff]
    %v6265 = vld [vmem:[%s89 + $0x40] sm:$0xff]
    %v6266 = vld [vmem:[%s89 + $0x48] sm:$0xff]
    %v6267 = vld [vmem:[%s89 + $0x50] sm:$0xff]
    %v6268 = vld [vmem:[%s89 + $0x58] sm:$0xff]
    %v6269 = vld [vmem:[%s89 + $0x60] sm:$0xff]
    %v6270 = vld [vmem:[%s89 + $0x68] sm:$0xff]
    %v6271 = vld [vmem:[%s89 + $0x70] sm:$0xff]
    %v6272 = vld [vmem:[%s89 + $0x78] sm:$0xff]
    %6273 = vmatprep.subr.mxu0 0.0
    %6274 = vmatpush1.msra.mxu0 %v6272
    %6275 = vmatprep.subr.mxu0 0.0
    %6276 = vmatpush1.msra.mxu0 %v6271
    %6277 = vmatprep.subr.mxu0 0.0
    %6278 = vmatpush1.msra.mxu0 %v6270
    %6279 = vmatprep.subr.mxu0 0.0
    %6280 = vmatpush1.msra.mxu0 %v6269
    %6281 = vmatprep.subr.mxu0 0.0
    %6282 = vmatpush1.msra.mxu0 %v6268
    %6283 = vmatprep.subr.mxu0 0.0
    %6284 = vmatpush1.msra.mxu0 %v6267
    %6285 = vmatprep.subr.mxu0 0.0
    %6286 = vmatpush1.msra.mxu0 %v6266
    %6287 = vmatprep.subr.mxu0 0.0
    %6288 = vmatpush1.msra.mxu0 %v6265
    %6289 = vmatprep.subr.mxu0 0.0
    %6290 = vmatpush1.msra.mxu0 %v6264
    %6291 = vmatprep.subr.mxu0 0.0
    %6292 = vmatpush1.msra.mxu0 %v6263
    %6293 = vmatprep.subr.mxu0 0.0
    %6294 = vmatpush1.msra.mxu0 %v6262
    %6295 = vmatprep.subr.mxu0 0.0
    %6296 = vmatpush1.msra.mxu0 %v6261
    %6297 = vmatprep.subr.mxu0 0.0
    %6298 = vmatpush1.msra.mxu0 %v6260
    %6299 = vmatprep.subr.mxu0 0.0
    %6300 = vmatpush1.msra.mxu0 %v6259
    %6301 = vmatprep.subr.mxu0 0.0
    %6302 = vmatpush1.msra.mxu0 %v6258
    %6303 = vmatprep.subr.mxu0 0.0
    %6304 = vmatpush1.msra.mxu0 %v6257
    %6305 = vmatprep.subr.mxu0 0.0
    %6306 = vmatpush2.msra.mxu0 0.0
    %6307 = vmatprep.subr.mxu0 0.0
    %6308 = vmatpush2.msra.mxu0 0.0
    %6309 = vmatprep.subr.mxu0 0.0
    %6310 = vmatpush2.msra.mxu0 0.0
    %6311 = vmatprep.subr.mxu0 0.0
    %6312 = vmatpush2.msra.mxu0 0.0
    %6313 = vmatprep.subr.mxu0 0.0
    %6314 = vmatpush2.msra.mxu0 0.0
    %6315 = vmatprep.subr.mxu0 0.0
    %6316 = vmatpush2.msra.mxu0 0.0
    %6317 = vmatprep.subr.mxu0 0.0
    %6318 = vmatpush2.msra.mxu0 0.0
    %6319 = vmatprep.subr.mxu0 0.0
    %6320 = vmatpush2.msra.mxu0 0.0
    %6321 = vmatprep.subr.mxu0 0.0
    %6322 = vmatpush2.msra.mxu0 0.0
    %6323 = vmatprep.subr.mxu0 0.0
    %6324 = vmatpush2.msra.mxu0 0.0
    %6325 = vmatprep.subr.mxu0 0.0
    %6326 = vmatpush2.msra.mxu0 0.0
    %6327 = vmatprep.subr.mxu0 0.0
    %6328 = vmatpush2.msra.mxu0 0.0
    %6329 = vmatprep.subr.mxu0 0.0
    %6330 = vmatpush2.msra.mxu0 0.0
    %6331 = vmatprep.subr.mxu0 0.0
    %6332 = vmatpush2.msra.mxu0 0.0
    %6333 = vmatprep.subr.mxu0 0.0
    %6334 = vmatpush2.msra.mxu0 0.0
    %6335 = vmatprep.subr.mxu0 0.0
    %6336 = vmatpush2.msra.mxu0 0.0
    %6337 = vmatprep.mubr.f32.mxu0 0.0
    %6338 = vmatmul.mubr.f32.gmra.mxu0 %v6237
    %v6339 = vpop.f32.mrf.mxu0
    %v6340 = vadd.f32 0.0, %v6339
    %v6341 = vpop.f32.mrf.mxu0
    %6342 = vmatprep.mubr.f32.mxu0 0.0
    %6343 = vmatmul.mubr.f32.gmra.mxu0 %v6238
    %v6344 = vpop.f32.mrf.mxu0
    %v6345 = vadd.f32 0.0, %v6344
    %v6346 = vpop.f32.mrf.mxu0
    %6347 = vmatprep.mubr.f32.mxu0 0.0
    %6348 = vmatmul.mubr.f32.gmra.mxu0 %v6239
    %v6349 = vpop.f32.mrf.mxu0
    %v6350 = vadd.f32 0.0, %v6349
    %v6351 = vpop.f32.mrf.mxu0
    %6352 = vmatprep.mubr.f32.mxu0 0.0
    %6353 = vmatmul.mubr.f32.gmra.mxu0 %v6240
    %v6354 = vpop.f32.mrf.mxu0
    %v6355 = vadd.f32 0.0, %v6354
    %v6356 = vpop.f32.mrf.mxu0
    %6357 = vdwg.mxu0
    %6358 = vmatprep.subr.mxu0 0.0
    %6359 = vmatpush1.msra.mxu0 %v6256
    %6360 = vmatprep.subr.mxu0 0.0
    %6361 = vmatpush1.msra.mxu0 %v6255
    %6362 = vmatprep.subr.mxu0 0.0
    %6363 = vmatpush1.msra.mxu0 %v6254
    %6364 = vmatprep.subr.mxu0 0.0
    %6365 = vmatpush1.msra.mxu0 %v6253
    %6366 = vmatprep.subr.mxu0 0.0
    %6367 = vmatpush1.msra.mxu0 %v6252
    %6368 = vmatprep.subr.mxu0 0.0
    %6369 = vmatpush1.msra.mxu0 %v6251
    %6370 = vmatprep.subr.mxu0 0.0
    %6371 = vmatpush1.msra.mxu0 %v6250
    %6372 = vmatprep.subr.mxu0 0.0
    %6373 = vmatpush1.msra.mxu0 %v6249
    %6374 = vmatprep.subr.mxu0 0.0
    %6375 = vmatpush1.msra.mxu0 %v6248
    %6376 = vmatprep.subr.mxu0 0.0
    %6377 = vmatpush1.msra.mxu0 %v6247
    %6378 = vmatprep.subr.mxu0 0.0
    %6379 = vmatpush1.msra.mxu0 %v6246
    %6380 = vmatprep.subr.mxu0 0.0
    %6381 = vmatpush1.msra.mxu0 %v6245
    %6382 = vmatprep.subr.mxu0 0.0
    %6383 = vmatpush1.msra.mxu0 %v6244
    %6384 = vmatprep.subr.mxu0 0.0
    %6385 = vmatpush1.msra.mxu0 %v6243
    %6386 = vmatprep.subr.mxu0 0.0
    %6387 = vmatpush1.msra.mxu0 %v6242
    %6388 = vmatprep.subr.mxu0 0.0
    %6389 = vmatpush1.msra.mxu0 %v6241
    %6390 = vmatprep.subr.mxu0 0.0
    %6391 = vmatpush2.msra.mxu0 0.0
    %6392 = vmatprep.subr.mxu0 0.0
    %6393 = vmatpush2.msra.mxu0 0.0
    %6394 = vmatprep.subr.mxu0 0.0
    %6395 = vmatpush2.msra.mxu0 0.0
    %6396 = vmatprep.subr.mxu0 0.0
    %6397 = vmatpush2.msra.mxu0 0.0
    %6398 = vmatprep.subr.mxu0 0.0
    %6399 = vmatpush2.msra.mxu0 0.0
    %6400 = vmatprep.subr.mxu0 0.0
    %6401 = vmatpush2.msra.mxu0 0.0
    %6402 = vmatprep.subr.mxu0 0.0
    %6403 = vmatpush2.msra.mxu0 0.0
    %6404 = vmatprep.subr.mxu0 0.0
    %6405 = vmatpush2.msra.mxu0 0.0
    %6406 = vmatprep.subr.mxu0 0.0
    %6407 = vmatpush2.msra.mxu0 0.0
    %6408 = vmatprep.subr.mxu0 0.0
    %6409 = vmatpush2.msra.mxu0 0.0
    %6410 = vmatprep.subr.mxu0 0.0
    %6411 = vmatpush2.msra.mxu0 0.0
    %6412 = vmatprep.subr.mxu0 0.0
    %6413 = vmatpush2.msra.mxu0 0.0
    %6414 = vmatprep.subr.mxu0 0.0
    %6415 = vmatpush2.msra.mxu0 0.0
    %6416 = vmatprep.subr.mxu0 0.0
    %6417 = vmatpush2.msra.mxu0 0.0
    %6418 = vmatprep.subr.mxu0 0.0
    %6419 = vmatpush2.msra.mxu0 0.0
    %6420 = vmatprep.subr.mxu0 0.0
    %6421 = vmatpush2.msra.mxu0 0.0
    %6422 = vmatprep.mubr.f32.mxu0 0.0
    %6423 = vmatmul.mubr.f32.gmra.mxu0 %v6014
    %v6424 = vpop.f32.mrf.mxu0
    %v6425 = vadd.f32 %v6340, %v6424
    %v6426 = vpop.f32.mrf.mxu0
    %6427 = vmatprep.mubr.f32.mxu0 0.0
    %6428 = vmatmul.mubr.f32.gmra.mxu0 %v6019
    %v6429 = vpop.f32.mrf.mxu0
    %v6430 = vadd.f32 %v6345, %v6429
    %v6431 = vpop.f32.mrf.mxu0
    %6432 = vmatprep.mubr.f32.mxu0 0.0
    %6433 = vmatmul.mubr.f32.gmra.mxu0 %v6024
    %v6434 = vpop.f32.mrf.mxu0
    %v6435 = vadd.f32 %v6350, %v6434
    %v6436 = vpop.f32.mrf.mxu0
    %6437 = vmatprep.mubr.f32.mxu0 0.0
    %6438 = vmatmul.mubr.f32.gmra.mxu0 %v6029
    %v6439 = vpop.f32.mrf.mxu0
    %v6440 = vadd.f32 %v6355, %v6439
    %v6441 = vpop.f32.mrf.mxu0
    %6442 = vdwg.mxu0
    %v6443 = vld [vmem:[#allocation22] sm:$0x1]
    %v6445 = vlaneseq
    %v6446 = vshrl.u32 %v6445, 7
    %v6447 = vsub.s32 0, %v6446
    %v6448 = vrot.slane %v6443, %v6447
    %v6450 = vadd.f32 %v6425, %v6448
    %v6451 = vadd.f32 %v6430, %v6448
    %v6452 = vadd.f32 %v6435, %v6448
    %v6453 = vadd.f32 %v6440, %v6448
    %v6454 = vmul.f32 %v6450, 0.5
    %v6455 = vmul.f32 %v6451, 0.5
    %v6456 = vmul.f32 %v6452, 0.5
    %v6457 = vmul.f32 %v6453, 0.5
    %v6458 = vmul.f32 %v6450, 0.70710677
    %v6459 = vmul.f32 %v6451, 0.70710677
    %v6460 = vmul.f32 %v6452, 0.70710677
    %v6461 = vmul.f32 %v6453, 0.70710677
    %vm6462 = vcmp.lt.f32.partialorder %v6458, 0.0
    %vm6463 = vcmp.lt.f32.partialorder %v6459, 0.0
    %vm6464 = vcmp.lt.f32.partialorder %v6460, 0.0
    %vm6465 = vcmp.lt.f32.partialorder %v6461, 0.0
    %v6466 = vsel %vm6462, -1.0, 1.0
    %v6467 = vsel %vm6463, -1.0, 1.0
    %v6468 = vsel %vm6464, -1.0, 1.0
    %v6469 = vsel %vm6465, -1.0, 1.0
    %v6470 = vand.u32 2147483647, %v6458
    %v6471 = vand.u32 2147483647, %v6459
    %v6472 = vand.u32 2147483647, %v6460
    %v6473 = vand.u32 2147483647, %v6461
    %v6474 = vmul.f32 %v6470, 0.3275911
    %v6475 = vmul.f32 %v6471, 0.3275911
    %v6476 = vmul.f32 %v6472, 0.3275911
    %v6477 = vmul.f32 %v6473, 0.3275911
    %v6478 = vadd.f32 %v6474, 1.0
    %v6479 = vadd.f32 %v6475, 1.0
    %v6480 = vadd.f32 %v6476, 1.0
    %v6481 = vadd.f32 %v6477, 1.0
    %v6482 = vrcp.pop %v6478
    %v6483 = vrcp.pop %v6479
    %v6484 = vrcp.pop %v6480
    %v6485 = vrcp.pop %v6481
    %v6486 = vmul.f32 %v6482, 1.0614054
    %v6487 = vmul.f32 %v6483, 1.0614054
    %v6488 = vmul.f32 %v6484, 1.0614054
    %v6489 = vmul.f32 %v6485, 1.0614054
    %v6490 = vadd.f32 %v6486, -1.4531521
    %v6491 = vadd.f32 %v6487, -1.4531521
    %v6492 = vadd.f32 %v6488, -1.4531521
    %v6493 = vadd.f32 %v6489, -1.4531521
    %v6494 = vmul.f32 %v6490, %v6482
    %v6495 = vmul.f32 %v6491, %v6483
    %v6496 = vmul.f32 %v6492, %v6484
    %v6497 = vmul.f32 %v6493, %v6485
    %v6498 = vadd.f32 %v6494, 1.4214138
    %v6499 = vadd.f32 %v6495, 1.4214138
    %v6500 = vadd.f32 %v6496, 1.4214138
    %v6501 = vadd.f32 %v6497, 1.4214138
    %v6502 = vmul.f32 %v6498, %v6482
    %v6503 = vmul.f32 %v6499, %v6483
    %v6504 = vmul.f32 %v6500, %v6484
    %v6505 = vmul.f32 %v6501, %v6485
    %v6506 = vadd.f32 %v6502, -0.28449672
    %v6507 = vadd.f32 %v6503, -0.28449672
    %v6508 = vadd.f32 %v6504, -0.28449672
    %v6509 = vadd.f32 %v6505, -0.28449672
    %v6510 = vmul.f32 %v6506, %v6482
    %v6511 = vmul.f32 %v6507, %v6483
    %v6512 = vmul.f32 %v6508, %v6484
    %v6513 = vmul.f32 %v6509, %v6485
    %v6514 = vadd.f32 %v6510, 0.2548296
    %v6515 = vadd.f32 %v6511, 0.2548296
    %v6516 = vadd.f32 %v6512, 0.2548296
    %v6517 = vadd.f32 %v6513, 0.2548296
    %v6518 = vmul.f32 %v6514, %v6482
    %v6519 = vmul.f32 %v6515, %v6483
    %v6520 = vmul.f32 %v6516, %v6484
    %v6521 = vmul.f32 %v6517, %v6485
    %v6522 = vsub.f32 0.0, %v6470
    %v6523 = vsub.f32 0.0, %v6471
    %v6524 = vsub.f32 0.0, %v6472
    %v6525 = vsub.f32 0.0, %v6473
    %v6526 = vmul.f32 %v6522, %v6470
    %v6527 = vmul.f32 %v6523, %v6471
    %v6528 = vmul.f32 %v6524, %v6472
    %v6529 = vmul.f32 %v6525, %v6473
    %v6530 = vmul.f32 %v6526, 1.442695
    %v6531 = vpow.pop %v6530
    %v6532 = vmul.f32 %v6527, 1.442695
    %v6533 = vpow.pop %v6532
    %v6534 = vmul.f32 %v6528, 1.442695
    %v6535 = vpow.pop %v6534
    %v6536 = vmul.f32 %v6529, 1.442695
    %v6537 = vpow.pop %v6536
    %v6538 = vmul.f32 %v6518, %v6531
    %v6539 = vmul.f32 %v6519, %v6533
    %v6540 = vmul.f32 %v6520, %v6535
    %v6541 = vmul.f32 %v6521, %v6537
    %v6542 = vsub.f32 1.0, %v6538
    %v6543 = vsub.f32 1.0, %v6539
    %v6544 = vsub.f32 1.0, %v6540
    %v6545 = vsub.f32 1.0, %v6541
    %v6546 = vmul.f32 %v6466, %v6542
    %v6547 = vmul.f32 %v6467, %v6543
    %v6548 = vmul.f32 %v6468, %v6544
    %v6549 = vmul.f32 %v6469, %v6545
    %v6550 = vadd.f32 %v6546, 1.0
    %v6551 = vadd.f32 %v6547, 1.0
    %v6552 = vadd.f32 %v6548, 1.0
    %v6553 = vadd.f32 %v6549, 1.0
    %v6554 = vmul.f32 %v6454, %v6550
    %v6555 = vmul.f32 %v6455, %v6551
    %v6556 = vmul.f32 %v6456, %v6552
    %v6557 = vmul.f32 %v6457, %v6553
    %v6558 = vld [vmem:[%s93] sm:$0xff]
    %v6559 = vld [vmem:[%s93 + $0x8] sm:$0xff]
    %v6560 = vld [vmem:[%s93 + $0x10] sm:$0xff]
    %v6561 = vld [vmem:[%s93 + $0x18] sm:$0xff]
    %v6562 = vld [vmem:[%s93 + $0x20] sm:$0xff]
    %v6563 = vld [vmem:[%s93 + $0x28] sm:$0xff]
    %v6564 = vld [vmem:[%s93 + $0x30] sm:$0xff]
    %v6565 = vld [vmem:[%s93 + $0x38] sm:$0xff]
    %v6566 = vld [vmem:[%s93 + $0x40] sm:$0xff]
    %v6567 = vld [vmem:[%s93 + $0x48] sm:$0xff]
    %v6568 = vld [vmem:[%s93 + $0x50] sm:$0xff]
    %v6569 = vld [vmem:[%s93 + $0x58] sm:$0xff]
    %v6570 = vld [vmem:[%s93 + $0x60] sm:$0xff]
    %v6571 = vld [vmem:[%s93 + $0x68] sm:$0xff]
    %v6572 = vld [vmem:[%s93 + $0x70] sm:$0xff]
    %v6573 = vld [vmem:[%s93 + $0x78] sm:$0xff]
    %v6574 = vld [vmem:[#allocation23] sm:$0x1]
    %v6576 = vlaneseq
    %v6577 = vshrl.u32 %v6576, 7
    %v6578 = vsub.s32 0, %v6577
    %v6579 = vrot.slane %v6574, %v6578
    %6581 = vmatprep.subr.mxu0 0.0
    %6582 = vmatpush1.msra.mxu0 %v6573
    %6583 = vmatprep.subr.mxu0 0.0
    %6584 = vmatpush1.msra.mxu0 %v6572
    %6585 = vmatprep.subr.mxu0 0.0
    %6586 = vmatpush1.msra.mxu0 %v6571
    %6587 = vmatprep.subr.mxu0 0.0
    %6588 = vmatpush1.msra.mxu0 %v6570
    %6589 = vmatprep.subr.mxu0 0.0
    %6590 = vmatpush1.msra.mxu0 %v6569
    %6591 = vmatprep.subr.mxu0 0.0
    %6592 = vmatpush1.msra.mxu0 %v6568
    %6593 = vmatprep.subr.mxu0 0.0
    %6594 = vmatpush1.msra.mxu0 %v6567
    %6595 = vmatprep.subr.mxu0 0.0
    %6596 = vmatpush1.msra.mxu0 %v6566
    %6597 = vmatprep.subr.mxu0 0.0
    %6598 = vmatpush1.msra.mxu0 %v6565
    %6599 = vmatprep.subr.mxu0 0.0
    %6600 = vmatpush1.msra.mxu0 %v6564
    %6601 = vmatprep.subr.mxu0 0.0
    %6602 = vmatpush1.msra.mxu0 %v6563
    %6603 = vmatprep.subr.mxu0 0.0
    %6604 = vmatpush1.msra.mxu0 %v6562
    %6605 = vmatprep.subr.mxu0 0.0
    %6606 = vmatpush1.msra.mxu0 %v6561
    %6607 = vmatprep.subr.mxu0 0.0
    %6608 = vmatpush1.msra.mxu0 %v6560
    %6609 = vmatprep.subr.mxu0 0.0
    %6610 = vmatpush1.msra.mxu0 %v6559
    %6611 = vmatprep.subr.mxu0 0.0
    %6612 = vmatpush1.msra.mxu0 %v6558
    %6613 = vmatprep.subr.mxu0 0.0
    %6614 = vmatpush2.msra.mxu0 0.0
    %6615 = vmatprep.subr.mxu0 0.0
    %6616 = vmatpush2.msra.mxu0 0.0
    %6617 = vmatprep.subr.mxu0 0.0
    %6618 = vmatpush2.msra.mxu0 0.0
    %6619 = vmatprep.subr.mxu0 0.0
    %6620 = vmatpush2.msra.mxu0 0.0
    %6621 = vmatprep.subr.mxu0 0.0
    %6622 = vmatpush2.msra.mxu0 0.0
    %6623 = vmatprep.subr.mxu0 0.0
    %6624 = vmatpush2.msra.mxu0 0.0
    %6625 = vmatprep.subr.mxu0 0.0
    %6626 = vmatpush2.msra.mxu0 0.0
    %6627 = vmatprep.subr.mxu0 0.0
    %6628 = vmatpush2.msra.mxu0 0.0
    %6629 = vmatprep.subr.mxu0 0.0
    %6630 = vmatpush2.msra.mxu0 0.0
    %6631 = vmatprep.subr.mxu0 0.0
    %6632 = vmatpush2.msra.mxu0 0.0
    %6633 = vmatprep.subr.mxu0 0.0
    %6634 = vmatpush2.msra.mxu0 0.0
    %6635 = vmatprep.subr.mxu0 0.0
    %6636 = vmatpush2.msra.mxu0 0.0
    %6637 = vmatprep.subr.mxu0 0.0
    %6638 = vmatpush2.msra.mxu0 0.0
    %6639 = vmatprep.subr.mxu0 0.0
    %6640 = vmatpush2.msra.mxu0 0.0
    %6641 = vmatprep.subr.mxu0 0.0
    %6642 = vmatpush2.msra.mxu0 0.0
    %6643 = vmatprep.subr.mxu0 0.0
    %6644 = vmatpush2.msra.mxu0 0.0
    %6645 = vmatprep.mubr.f32.mxu0 0.0
    %6646 = vmatmul.mubr.f32.gmra.mxu0 %v6554
    %v6647 = vpop.f32.mrf.mxu0
    %v6648 = vadd.f32 %v6579, %v6647
    %v6649 = vpop.f32.mrf.mxu0
    %6650 = vmatprep.mubr.f32.mxu0 0.0
    %6651 = vmatmul.mubr.f32.gmra.mxu0 %v6555
    %v6652 = vpop.f32.mrf.mxu0
    %v6653 = vadd.f32 %v6579, %v6652
    %v6654 = vpop.f32.mrf.mxu0
    %6655 = vmatprep.mubr.f32.mxu0 0.0
    %6656 = vmatmul.mubr.f32.gmra.mxu0 %v6556
    %v6657 = vpop.f32.mrf.mxu0
    %v6658 = vadd.f32 %v6579, %v6657
    %v6659 = vpop.f32.mrf.mxu0
    %6660 = vmatprep.mubr.f32.mxu0 0.0
    %6661 = vmatmul.mubr.f32.gmra.mxu0 %v6557
    %v6662 = vpop.f32.mrf.mxu0
    %v6663 = vadd.f32 %v6579, %v6662
    %v6664 = vpop.f32.mrf.mxu0
    %6665 = vdwg.mxu0
    %v6666 = vmul.f32 %v6648, 0.5
    %v6667 = vmul.f32 %v6653, 0.5
    %v6668 = vmul.f32 %v6658, 0.5
    %v6669 = vmul.f32 %v6663, 0.5
    %v6670 = vmul.f32 %v6648, 0.70710677
    %v6671 = vmul.f32 %v6653, 0.70710677
    %v6672 = vmul.f32 %v6658, 0.70710677
    %v6673 = vmul.f32 %v6663, 0.70710677
    %vm6674 = vcmp.lt.f32.partialorder %v6670, 0.0
    %vm6675 = vcmp.lt.f32.partialorder %v6671, 0.0
    %vm6676 = vcmp.lt.f32.partialorder %v6672, 0.0
    %vm6677 = vcmp.lt.f32.partialorder %v6673, 0.0
    %v6678 = vsel %vm6674, -1.0, 1.0
    %v6679 = vsel %vm6675, -1.0, 1.0
    %v6680 = vsel %vm6676, -1.0, 1.0
    %v6681 = vsel %vm6677, -1.0, 1.0
    %v6682 = vand.u32 2147483647, %v6670
    %v6683 = vand.u32 2147483647, %v6671
    %v6684 = vand.u32 2147483647, %v6672
    %v6685 = vand.u32 2147483647, %v6673
    %v6686 = vmul.f32 %v6682, 0.3275911
    %v6687 = vmul.f32 %v6683, 0.3275911
    %v6688 = vmul.f32 %v6684, 0.3275911
    %v6689 = vmul.f32 %v6685, 0.3275911
    %v6690 = vadd.f32 %v6686, 1.0
    %v6691 = vadd.f32 %v6687, 1.0
    %v6692 = vadd.f32 %v6688, 1.0
    %v6693 = vadd.f32 %v6689, 1.0
    %v6694 = vrcp.pop %v6690
    %v6695 = vrcp.pop %v6691
    %v6696 = vrcp.pop %v6692
    %v6697 = vrcp.pop %v6693
    %v6698 = vmul.f32 %v6694, 1.0614054
    %v6699 = vmul.f32 %v6695, 1.0614054
    %v6700 = vmul.f32 %v6696, 1.0614054
    %v6701 = vmul.f32 %v6697, 1.0614054
    %v6702 = vadd.f32 %v6698, -1.4531521
    %v6703 = vadd.f32 %v6699, -1.4531521
    %v6704 = vadd.f32 %v6700, -1.4531521
    %v6705 = vadd.f32 %v6701, -1.4531521
    %v6706 = vmul.f32 %v6702, %v6694
    %v6707 = vmul.f32 %v6703, %v6695
    %v6708 = vmul.f32 %v6704, %v6696
    %v6709 = vmul.f32 %v6705, %v6697
    %v6710 = vadd.f32 %v6706, 1.4214138
    %v6711 = vadd.f32 %v6707, 1.4214138
    %v6712 = vadd.f32 %v6708, 1.4214138
    %v6713 = vadd.f32 %v6709, 1.4214138
    %v6714 = vmul.f32 %v6710, %v6694
    %v6715 = vmul.f32 %v6711, %v6695
    %v6716 = vmul.f32 %v6712, %v6696
    %v6717 = vmul.f32 %v6713, %v6697
    %v6718 = vadd.f32 %v6714, -0.28449672
    %v6719 = vadd.f32 %v6715, -0.28449672
    %v6720 = vadd.f32 %v6716, -0.28449672
    %v6721 = vadd.f32 %v6717, -0.28449672
    %v6722 = vmul.f32 %v6718, %v6694
    %v6723 = vmul.f32 %v6719, %v6695
    %v6724 = vmul.f32 %v6720, %v6696
    %v6725 = vmul.f32 %v6721, %v6697
    %v6726 = vadd.f32 %v6722, 0.2548296
    %v6727 = vadd.f32 %v6723, 0.2548296
    %v6728 = vadd.f32 %v6724, 0.2548296
    %v6729 = vadd.f32 %v6725, 0.2548296
    %v6730 = vmul.f32 %v6726, %v6694
    %v6731 = vmul.f32 %v6727, %v6695
    %v6732 = vmul.f32 %v6728, %v6696
    %v6733 = vmul.f32 %v6729, %v6697
    %v6734 = vsub.f32 0.0, %v6682
    %v6735 = vsub.f32 0.0, %v6683
    %v6736 = vsub.f32 0.0, %v6684
    %v6737 = vsub.f32 0.0, %v6685
    %v6738 = vmul.f32 %v6734, %v6682
    %v6739 = vmul.f32 %v6735, %v6683
    %v6740 = vmul.f32 %v6736, %v6684
    %v6741 = vmul.f32 %v6737, %v6685
    %v6742 = vmul.f32 %v6738, 1.442695
    %v6743 = vpow.pop %v6742
    %v6744 = vmul.f32 %v6739, 1.442695
    %v6745 = vpow.pop %v6744
    %v6746 = vmul.f32 %v6740, 1.442695
    %v6747 = vpow.pop %v6746
    %v6748 = vmul.f32 %v6741, 1.442695
    %v6749 = vpow.pop %v6748
    %v6750 = vmul.f32 %v6730, %v6743
    %v6751 = vmul.f32 %v6731, %v6745
    %v6752 = vmul.f32 %v6732, %v6747
    %v6753 = vmul.f32 %v6733, %v6749
    %v6754 = vsub.f32 1.0, %v6750
    %v6755 = vsub.f32 1.0, %v6751
    %v6756 = vsub.f32 1.0, %v6752
    %v6757 = vsub.f32 1.0, %v6753
    %v6758 = vmul.f32 %v6678, %v6754
    %v6759 = vmul.f32 %v6679, %v6755
    %v6760 = vmul.f32 %v6680, %v6756
    %v6761 = vmul.f32 %v6681, %v6757
    %v6762 = vadd.f32 %v6758, 1.0
    %v6763 = vadd.f32 %v6759, 1.0
    %v6764 = vadd.f32 %v6760, 1.0
    %v6765 = vadd.f32 %v6761, 1.0
    %v6766 = vmul.f32 %v6666, %v6762
    %v6767 = vmul.f32 %v6667, %v6763
    %v6768 = vmul.f32 %v6668, %v6764
    %v6769 = vmul.f32 %v6669, %v6765
    %v6770 = vld [vmem:[%s97] sm:$0xff]
    %v6771 = vld [vmem:[%s97 + $0x8] sm:$0xff]
    %v6772 = vld [vmem:[%s97 + $0x10] sm:$0xff]
    %v6773 = vld [vmem:[%s97 + $0x18] sm:$0xff]
    %v6774 = vld [vmem:[%s97 + $0x20] sm:$0xff]
    %v6775 = vld [vmem:[%s97 + $0x28] sm:$0xff]
    %v6776 = vld [vmem:[%s97 + $0x30] sm:$0xff]
    %v6777 = vld [vmem:[%s97 + $0x38] sm:$0xff]
    %v6778 = vld [vmem:[%s97 + $0x40] sm:$0xff]
    %v6779 = vld [vmem:[%s97 + $0x48] sm:$0xff]
    %v6780 = vld [vmem:[%s97 + $0x50] sm:$0xff]
    %v6781 = vld [vmem:[%s97 + $0x58] sm:$0xff]
    %v6782 = vld [vmem:[%s97 + $0x60] sm:$0xff]
    %v6783 = vld [vmem:[%s97 + $0x68] sm:$0xff]
    %v6784 = vld [vmem:[%s97 + $0x70] sm:$0xff]
    %v6785 = vld [vmem:[%s97 + $0x78] sm:$0xff]
    %v6786 = vld [vmem:[#allocation25] sm:$0x1]
    %v6788 = vlaneseq
    %v6789 = vshrl.u32 %v6788, 7
    %v6790 = vsub.s32 0, %v6789
    %v6791 = vrot.slane %v6786, %v6790
    %6793 = vmatprep.subr.mxu0 0.0
    %6794 = vmatpush1.msra.mxu0 %v6785
    %6795 = vmatprep.subr.mxu0 0.0
    %6796 = vmatpush1.msra.mxu0 %v6784
    %6797 = vmatprep.subr.mxu0 0.0
    %6798 = vmatpush1.msra.mxu0 %v6783
    %6799 = vmatprep.subr.mxu0 0.0
    %6800 = vmatpush1.msra.mxu0 %v6782
    %6801 = vmatprep.subr.mxu0 0.0
    %6802 = vmatpush1.msra.mxu0 %v6781
    %6803 = vmatprep.subr.mxu0 0.0
    %6804 = vmatpush1.msra.mxu0 %v6780
    %6805 = vmatprep.subr.mxu0 0.0
    %6806 = vmatpush1.msra.mxu0 %v6779
    %6807 = vmatprep.subr.mxu0 0.0
    %6808 = vmatpush1.msra.mxu0 %v6778
    %6809 = vmatprep.subr.mxu0 0.0
    %6810 = vmatpush1.msra.mxu0 %v6777
    %6811 = vmatprep.subr.mxu0 0.0
    %6812 = vmatpush1.msra.mxu0 %v6776
    %6813 = vmatprep.subr.mxu0 0.0
    %6814 = vmatpush1.msra.mxu0 %v6775
    %6815 = vmatprep.subr.mxu0 0.0
    %6816 = vmatpush1.msra.mxu0 %v6774
    %6817 = vmatprep.subr.mxu0 0.0
    %6818 = vmatpush1.msra.mxu0 %v6773
    %6819 = vmatprep.subr.mxu0 0.0
    %6820 = vmatpush1.msra.mxu0 %v6772
    %6821 = vmatprep.subr.mxu0 0.0
    %6822 = vmatpush1.msra.mxu0 %v6771
    %6823 = vmatprep.subr.mxu0 0.0
    %6824 = vmatpush1.msra.mxu0 %v6770
    %6825 = vmatprep.subr.mxu0 0.0
    %6826 = vmatpush2.msra.mxu0 0.0
    %6827 = vmatprep.subr.mxu0 0.0
    %6828 = vmatpush2.msra.mxu0 0.0
    %6829 = vmatprep.subr.mxu0 0.0
    %6830 = vmatpush2.msra.mxu0 0.0
    %6831 = vmatprep.subr.mxu0 0.0
    %6832 = vmatpush2.msra.mxu0 0.0
    %6833 = vmatprep.subr.mxu0 0.0
    %6834 = vmatpush2.msra.mxu0 0.0
    %6835 = vmatprep.subr.mxu0 0.0
    %6836 = vmatpush2.msra.mxu0 0.0
    %6837 = vmatprep.subr.mxu0 0.0
    %6838 = vmatpush2.msra.mxu0 0.0
    %6839 = vmatprep.subr.mxu0 0.0
    %6840 = vmatpush2.msra.mxu0 0.0
    %6841 = vmatprep.subr.mxu0 0.0
    %6842 = vmatpush2.msra.mxu0 0.0
    %6843 = vmatprep.subr.mxu0 0.0
    %6844 = vmatpush2.msra.mxu0 0.0
    %6845 = vmatprep.subr.mxu0 0.0
    %6846 = vmatpush2.msra.mxu0 0.0
    %6847 = vmatprep.subr.mxu0 0.0
    %6848 = vmatpush2.msra.mxu0 0.0
    %6849 = vmatprep.subr.mxu0 0.0
    %6850 = vmatpush2.msra.mxu0 0.0
    %6851 = vmatprep.subr.mxu0 0.0
    %6852 = vmatpush2.msra.mxu0 0.0
    %6853 = vmatprep.subr.mxu0 0.0
    %6854 = vmatpush2.msra.mxu0 0.0
    %6855 = vmatprep.subr.mxu0 0.0
    %6856 = vmatpush2.msra.mxu0 0.0
    %6857 = vmatprep.mubr.f32.mxu0 0.0
    %6858 = vmatmul.mubr.f32.gmra.mxu0 %v6766
    %v6859 = vpop.f32.mrf.mxu0
    %v6860 = vadd.f32 %v6791, %v6859
    %v6861 = vpop.f32.mrf.mxu0
    %6862 = vmatprep.mubr.f32.mxu0 0.0
    %6863 = vmatmul.mubr.f32.gmra.mxu0 %v6767
    %v6864 = vpop.f32.mrf.mxu0
    %v6865 = vadd.f32 %v6791, %v6864
    %v6866 = vpop.f32.mrf.mxu0
    %6867 = vmatprep.mubr.f32.mxu0 0.0
    %6868 = vmatmul.mubr.f32.gmra.mxu0 %v6768
    %v6869 = vpop.f32.mrf.mxu0
    %v6870 = vadd.f32 %v6791, %v6869
    %v6871 = vpop.f32.mrf.mxu0
    %6872 = vmatprep.mubr.f32.mxu0 0.0
    %6873 = vmatmul.mubr.f32.gmra.mxu0 %v6769
    %v6874 = vpop.f32.mrf.mxu0
    %v6875 = vadd.f32 %v6791, %v6874
    %v6876 = vpop.f32.mrf.mxu0
    %6877 = vdwg.mxu0
    %v6878 = vadd.f32 %v6860, %v5431
    %v6879 = vadd.f32 %v6865, %v5432
    %v6880 = vadd.f32 %v6870, %v5433
    %v6881 = vadd.f32 %v6875, %v5434
    %v6882 = vld [vmem:[%s101] sm:$0xff]
    %v6883 = vld [vmem:[%s101 + $0x8] sm:$0xff]
    %v6884 = vld [vmem:[%s101 + $0x10] sm:$0xff]
    %v6885 = vld [vmem:[%s101 + $0x18] sm:$0xff]
    %v6886 = vld [vmem:[%s101 + $0x20] sm:$0xff]
    %v6887 = vld [vmem:[%s101 + $0x28] sm:$0xff]
    %v6888 = vld [vmem:[%s101 + $0x30] sm:$0xff]
    %v6889 = vld [vmem:[%s101 + $0x38] sm:$0xff]
    %v6890 = vld [vmem:[%s101 + $0x40] sm:$0xff]
    %v6891 = vld [vmem:[%s101 + $0x48] sm:$0xff]
    %v6892 = vld [vmem:[%s101 + $0x50] sm:$0xff]
    %v6893 = vld [vmem:[%s101 + $0x58] sm:$0xff]
    %v6894 = vld [vmem:[%s101 + $0x60] sm:$0xff]
    %v6895 = vld [vmem:[%s101 + $0x68] sm:$0xff]
    %v6896 = vld [vmem:[%s101 + $0x70] sm:$0xff]
    %v6897 = vld [vmem:[%s101 + $0x78] sm:$0xff]
    %v6898 = vld [vmem:[%s101 + $0x80] sm:$0xff]
    %v6899 = vld [vmem:[%s101 + $0x88] sm:$0xff]
    %v6900 = vld [vmem:[%s101 + $0x90] sm:$0xff]
    %v6901 = vld [vmem:[%s101 + $0x98] sm:$0xff]
    %v6902 = vld [vmem:[%s101 + $0xa0] sm:$0xff]
    %v6903 = vld [vmem:[%s101 + $0xa8] sm:$0xff]
    %v6904 = vld [vmem:[%s101 + $0xb0] sm:$0xff]
    %v6905 = vld [vmem:[%s101 + $0xb8] sm:$0xff]
    %v6906 = vld [vmem:[%s101 + $0xc0] sm:$0xff]
    %v6907 = vld [vmem:[%s101 + $0xc8] sm:$0xff]
    %v6908 = vld [vmem:[%s101 + $0xd0] sm:$0xff]
    %v6909 = vld [vmem:[%s101 + $0xd8] sm:$0xff]
    %v6910 = vld [vmem:[%s101 + $0xe0] sm:$0xff]
    %v6911 = vld [vmem:[%s101 + $0xe8] sm:$0xff]
    %v6912 = vld [vmem:[%s101 + $0xf0] sm:$0xff]
    %v6913 = vld [vmem:[%s101 + $0xf8] sm:$0xff]
    %v6914 = vld [vmem:[%s101 + $0x100] sm:$0xff]
    %v6915 = vld [vmem:[%s101 + $0x108] sm:$0xff]
    %v6916 = vld [vmem:[%s101 + $0x110] sm:$0xff]
    %v6917 = vld [vmem:[%s101 + $0x118] sm:$0xff]
    %v6918 = vld [vmem:[%s101 + $0x120] sm:$0xff]
    %v6919 = vld [vmem:[%s101 + $0x128] sm:$0xff]
    %v6920 = vld [vmem:[%s101 + $0x130] sm:$0xff]
    %v6921 = vld [vmem:[%s101 + $0x138] sm:$0xff]
    %v6922 = vld [vmem:[%s101 + $0x140] sm:$0xff]
    %v6923 = vld [vmem:[%s101 + $0x148] sm:$0xff]
    %v6924 = vld [vmem:[%s101 + $0x150] sm:$0xff]
    %v6925 = vld [vmem:[%s101 + $0x158] sm:$0xff]
    %v6926 = vld [vmem:[%s101 + $0x160] sm:$0xff]
    %v6927 = vld [vmem:[%s101 + $0x168] sm:$0xff]
    %v6928 = vld [vmem:[%s101 + $0x170] sm:$0xff]
    %v6929 = vld [vmem:[%s101 + $0x178] sm:$0xff]
    %v6930 = vld [vmem:[%s101 + $0x180] sm:$0xff]
    %v6931 = vld [vmem:[%s101 + $0x188] sm:$0xff]
    %v6932 = vld [vmem:[%s101 + $0x190] sm:$0xff]
    %v6933 = vld [vmem:[%s101 + $0x198] sm:$0xff]
    %v6934 = vld [vmem:[%s101 + $0x1a0] sm:$0xff]
    %v6935 = vld [vmem:[%s101 + $0x1a8] sm:$0xff]
    %v6936 = vld [vmem:[%s101 + $0x1b0] sm:$0xff]
    %v6937 = vld [vmem:[%s101 + $0x1b8] sm:$0xff]
    %v6938 = vld [vmem:[%s101 + $0x1c0] sm:$0xff]
    %v6939 = vld [vmem:[%s101 + $0x1c8] sm:$0xff]
    %v6940 = vld [vmem:[%s101 + $0x1d0] sm:$0xff]
    %v6941 = vld [vmem:[%s101 + $0x1d8] sm:$0xff]
    %v6942 = vld [vmem:[%s101 + $0x1e0] sm:$0xff]
    %v6943 = vld [vmem:[%s101 + $0x1e8] sm:$0xff]
    %v6944 = vld [vmem:[%s101 + $0x1f0] sm:$0xff]
    %v6945 = vld [vmem:[%s101 + $0x1f8] sm:$0xff]
    %v6946 = vld [vmem:[%s103] sm:$0xf]
    %v6948 = vlaneseq
    %v6949 = vshrl.u32 %v6948, 7
    %v6950 = vsub.s32 0, %v6949
    %v6951 = vrot.slane %v6946, %v6950
    %v6952 = vlaneseq
    %v6953 = vshrl.u32 %v6952, 7
    %v6954 = vsub.s32 1, %v6953
    %v6955 = vrot.slane %v6946, %v6954
    %v6956 = vlaneseq
    %v6957 = vshrl.u32 %v6956, 7
    %v6958 = vsub.s32 2, %v6957
    %v6959 = vrot.slane %v6946, %v6958
    %v6960 = vlaneseq
    %v6961 = vshrl.u32 %v6960, 7
    %v6962 = vsub.s32 3, %v6961
    %v6963 = vrot.slane %v6946, %v6962
    %6968 = vmatprep.subr.mxu0 %v6943
    %6969 = vmatpush1.msra.mxu0 %v6942
    %6970 = vmatprep.subr.mxu0 %v6939
    %6971 = vmatpush1.msra.mxu0 %v6938
    %6972 = vmatprep.subr.mxu0 %v6935
    %6973 = vmatpush1.msra.mxu0 %v6934
    %6974 = vmatprep.subr.mxu0 %v6931
    %6975 = vmatpush1.msra.mxu0 %v6930
    %6976 = vmatprep.subr.mxu0 %v6927
    %6977 = vmatpush1.msra.mxu0 %v6926
    %6978 = vmatprep.subr.mxu0 %v6923
    %6979 = vmatpush1.msra.mxu0 %v6922
    %6980 = vmatprep.subr.mxu0 %v6919
    %6981 = vmatpush1.msra.mxu0 %v6918
    %6982 = vmatprep.subr.mxu0 %v6915
    %6983 = vmatpush1.msra.mxu0 %v6914
    %6984 = vmatprep.subr.mxu0 %v6911
    %6985 = vmatpush1.msra.mxu0 %v6910
    %6986 = vmatprep.subr.mxu0 %v6907
    %6987 = vmatpush1.msra.mxu0 %v6906
    %6988 = vmatprep.subr.mxu0 %v6903
    %6989 = vmatpush1.msra.mxu0 %v6902
    %6990 = vmatprep.subr.mxu0 %v6899
    %6991 = vmatpush1.msra.mxu0 %v6898
    %6992 = vmatprep.subr.mxu0 %v6895
    %6993 = vmatpush1.msra.mxu0 %v6894
    %6994 = vmatprep.subr.mxu0 %v6891
    %6995 = vmatpush1.msra.mxu0 %v6890
    %6996 = vmatprep.subr.mxu0 %v6887
    %6997 = vmatpush1.msra.mxu0 %v6886
    %6998 = vmatprep.subr.mxu0 %v6883
    %6999 = vmatpush1.msra.mxu0 %v6882
    %7000 = vmatprep.subr.mxu0 0.0
    %7001 = vmatpush2.msra.mxu0 0.0
    %7002 = vmatprep.subr.mxu0 0.0
    %7003 = vmatpush2.msra.mxu0 0.0
    %7004 = vmatprep.subr.mxu0 0.0
    %7005 = vmatpush2.msra.mxu0 0.0
    %7006 = vmatprep.subr.mxu0 0.0
    %7007 = vmatpush2.msra.mxu0 0.0
    %7008 = vmatprep.subr.mxu0 0.0
    %7009 = vmatpush2.msra.mxu0 0.0
    %7010 = vmatprep.subr.mxu0 0.0
    %7011 = vmatpush2.msra.mxu0 0.0
    %7012 = vmatprep.subr.mxu0 0.0
    %7013 = vmatpush2.msra.mxu0 0.0
    %7014 = vmatprep.subr.mxu0 0.0
    %7015 = vmatpush2.msra.mxu0 0.0
    %7016 = vmatprep.subr.mxu0 0.0
    %7017 = vmatpush2.msra.mxu0 0.0
    %7018 = vmatprep.subr.mxu0 0.0
    %7019 = vmatpush2.msra.mxu0 0.0
    %7020 = vmatprep.subr.mxu0 0.0
    %7021 = vmatpush2.msra.mxu0 0.0
    %7022 = vmatprep.subr.mxu0 0.0
    %7023 = vmatpush2.msra.mxu0 0.0
    %7024 = vmatprep.subr.mxu0 0.0
    %7025 = vmatpush2.msra.mxu0 0.0
    %7026 = vmatprep.subr.mxu0 0.0
    %7027 = vmatpush2.msra.mxu0 0.0
    %7028 = vmatprep.subr.mxu0 0.0
    %7029 = vmatpush2.msra.mxu0 0.0
    %7030 = vmatprep.subr.mxu0 0.0
    %7031 = vmatpush2.msra.mxu0 0.0
    %7032 = vmatprep.mubr.f32.mxu0 0.0
    %7033 = vmatmul.mubr.f32.gmra.mxu0 %v6878
    %v7034 = vpop.f32.mrf.mxu0
    %v7035 = vadd.f32 %v6951, %v7034
    %v7036 = vpop.f32.mrf.mxu0
    %v7037 = vadd.f32 %v6955, %v7036
    %7038 = vmatprep.mubr.f32.mxu0 0.0
    %7039 = vmatmul.mubr.f32.gmra.mxu0 %v6879
    %v7040 = vpop.f32.mrf.mxu0
    %v7041 = vadd.f32 %v6951, %v7040
    %v7042 = vpop.f32.mrf.mxu0
    %v7043 = vadd.f32 %v6955, %v7042
    %7044 = vmatprep.mubr.f32.mxu0 0.0
    %7045 = vmatmul.mubr.f32.gmra.mxu0 %v6880
    %v7046 = vpop.f32.mrf.mxu0
    %v7047 = vadd.f32 %v6951, %v7046
    %v7048 = vpop.f32.mrf.mxu0
    %v7049 = vadd.f32 %v6955, %v7048
    %7050 = vmatprep.mubr.f32.mxu0 0.0
    %7051 = vmatmul.mubr.f32.gmra.mxu0 %v6881
    %v7052 = vpop.f32.mrf.mxu0
    %v7053 = vadd.f32 %v6951, %v7052
    %v7054 = vpop.f32.mrf.mxu0
    %v7055 = vadd.f32 %v6955, %v7054
    %7056 = vdwg.mxu0
    %7057 = vmatprep.subr.mxu0 %v6945
    %7058 = vmatpush1.msra.mxu0 %v6944
    %7059 = vmatprep.subr.mxu0 %v6941
    %7060 = vmatpush1.msra.mxu0 %v6940
    %7061 = vmatprep.subr.mxu0 %v6937
    %7062 = vmatpush1.msra.mxu0 %v6936
    %7063 = vmatprep.subr.mxu0 %v6933
    %7064 = vmatpush1.msra.mxu0 %v6932
    %7065 = vmatprep.subr.mxu0 %v6929
    %7066 = vmatpush1.msra.mxu0 %v6928
    %7067 = vmatprep.subr.mxu0 %v6925
    %7068 = vmatpush1.msra.mxu0 %v6924
    %7069 = vmatprep.subr.mxu0 %v6921
    %7070 = vmatpush1.msra.mxu0 %v6920
    %7071 = vmatprep.subr.mxu0 %v6917
    %7072 = vmatpush1.msra.mxu0 %v6916
    %7073 = vmatprep.subr.mxu0 %v6913
    %7074 = vmatpush1.msra.mxu0 %v6912
    %7075 = vmatprep.subr.mxu0 %v6909
    %7076 = vmatpush1.msra.mxu0 %v6908
    %7077 = vmatprep.subr.mxu0 %v6905
    %7078 = vmatpush1.msra.mxu0 %v6904
    %7079 = vmatprep.subr.mxu0 %v6901
    %7080 = vmatpush1.msra.mxu0 %v6900
    %7081 = vmatprep.subr.mxu0 %v6897
    %7082 = vmatpush1.msra.mxu0 %v6896
    %7083 = vmatprep.subr.mxu0 %v6893
    %7084 = vmatpush1.msra.mxu0 %v6892
    %7085 = vmatprep.subr.mxu0 %v6889
    %7086 = vmatpush1.msra.mxu0 %v6888
    %7087 = vmatprep.subr.mxu0 %v6885
    %7088 = vmatpush1.msra.mxu0 %v6884
    %7089 = vmatprep.subr.mxu0 0.0
    %7090 = vmatpush2.msra.mxu0 0.0
    %7091 = vmatprep.subr.mxu0 0.0
    %7092 = vmatpush2.msra.mxu0 0.0
    %7093 = vmatprep.subr.mxu0 0.0
    %7094 = vmatpush2.msra.mxu0 0.0
    %7095 = vmatprep.subr.mxu0 0.0
    %7096 = vmatpush2.msra.mxu0 0.0
    %7097 = vmatprep.subr.mxu0 0.0
    %7098 = vmatpush2.msra.mxu0 0.0
    %7099 = vmatprep.subr.mxu0 0.0
    %7100 = vmatpush2.msra.mxu0 0.0
    %7101 = vmatprep.subr.mxu0 0.0
    %7102 = vmatpush2.msra.mxu0 0.0
    %7103 = vmatprep.subr.mxu0 0.0
    %7104 = vmatpush2.msra.mxu0 0.0
    %7105 = vmatprep.subr.mxu0 0.0
    %7106 = vmatpush2.msra.mxu0 0.0
    %7107 = vmatprep.subr.mxu0 0.0
    %7108 = vmatpush2.msra.mxu0 0.0
    %7109 = vmatprep.subr.mxu0 0.0
    %7110 = vmatpush2.msra.mxu0 0.0
    %7111 = vmatprep.subr.mxu0 0.0
    %7112 = vmatpush2.msra.mxu0 0.0
    %7113 = vmatprep.subr.mxu0 0.0
    %7114 = vmatpush2.msra.mxu0 0.0
    %7115 = vmatprep.subr.mxu0 0.0
    %7116 = vmatpush2.msra.mxu0 0.0
    %7117 = vmatprep.subr.mxu0 0.0
    %7118 = vmatpush2.msra.mxu0 0.0
    %7119 = vmatprep.subr.mxu0 0.0
    %7120 = vmatpush2.msra.mxu0 0.0
    %7121 = vmatprep.mubr.f32.mxu0 0.0
    %7122 = vmatmul.mubr.f32.gmra.mxu0 %v6878
    %v7123 = vpop.f32.mrf.mxu0
    %v7124 = vadd.f32 %v6959, %v7123
    %v7125 = vpop.f32.mrf.mxu0
    %v7126 = vadd.f32 %v6963, %v7125
    %7127 = vmatprep.mubr.f32.mxu0 0.0
    %7128 = vmatmul.mubr.f32.gmra.mxu0 %v6879
    %v7129 = vpop.f32.mrf.mxu0
    %v7130 = vadd.f32 %v6959, %v7129
    %v7131 = vpop.f32.mrf.mxu0
    %v7132 = vadd.f32 %v6963, %v7131
    %7133 = vmatprep.mubr.f32.mxu0 0.0
    %7134 = vmatmul.mubr.f32.gmra.mxu0 %v6880
    %v7135 = vpop.f32.mrf.mxu0
    %v7136 = vadd.f32 %v6959, %v7135
    %v7137 = vpop.f32.mrf.mxu0
    %v7138 = vadd.f32 %v6963, %v7137
    %7139 = vmatprep.mubr.f32.mxu0 0.0
    %7140 = vmatmul.mubr.f32.gmra.mxu0 %v6881
    %v7141 = vpop.f32.mrf.mxu0
    %v7142 = vadd.f32 %v6959, %v7141
    %v7143 = vpop.f32.mrf.mxu0
    %v7144 = vadd.f32 %v6963, %v7143
    %7145 = vdwg.mxu0
    %v7146 = vmul.f32 %v7035, 0.5
    %v7147 = vmul.f32 %v7037, 0.5
    %v7148 = vmul.f32 %v7124, 0.5
    %v7149 = vmul.f32 %v7126, 0.5
    %v7150 = vmul.f32 %v7041, 0.5
    %v7151 = vmul.f32 %v7043, 0.5
    %v7152 = vmul.f32 %v7130, 0.5
    %v7153 = vmul.f32 %v7132, 0.5
    %v7154 = vmul.f32 %v7047, 0.5
    %v7155 = vmul.f32 %v7049, 0.5
    %v7156 = vmul.f32 %v7136, 0.5
    %v7157 = vmul.f32 %v7138, 0.5
    %v7158 = vmul.f32 %v7053, 0.5
    %v7159 = vmul.f32 %v7055, 0.5
    %v7160 = vmul.f32 %v7142, 0.5
    %v7161 = vmul.f32 %v7144, 0.5
    %v7162 = vmul.f32 %v7035, 0.70710677
    %v7163 = vmul.f32 %v7037, 0.70710677
    %v7164 = vmul.f32 %v7124, 0.70710677
    %v7165 = vmul.f32 %v7126, 0.70710677
    %v7166 = vmul.f32 %v7041, 0.70710677
    %v7167 = vmul.f32 %v7043, 0.70710677
    %v7168 = vmul.f32 %v7130, 0.70710677
    %v7169 = vmul.f32 %v7132, 0.70710677
    %v7170 = vmul.f32 %v7047, 0.70710677
    %v7171 = vmul.f32 %v7049, 0.70710677
    %v7172 = vmul.f32 %v7136, 0.70710677
    %v7173 = vmul.f32 %v7138, 0.70710677
    %v7174 = vmul.f32 %v7053, 0.70710677
    %v7175 = vmul.f32 %v7055, 0.70710677
    %v7176 = vmul.f32 %v7142, 0.70710677
    %v7177 = vmul.f32 %v7144, 0.70710677
    %vm7178 = vcmp.lt.f32.partialorder %v7162, 0.0
    %vm7179 = vcmp.lt.f32.partialorder %v7163, 0.0
    %vm7180 = vcmp.lt.f32.partialorder %v7164, 0.0
    %vm7181 = vcmp.lt.f32.partialorder %v7165, 0.0
    %vm7182 = vcmp.lt.f32.partialorder %v7166, 0.0
    %vm7183 = vcmp.lt.f32.partialorder %v7167, 0.0
    %vm7184 = vcmp.lt.f32.partialorder %v7168, 0.0
    %vm7185 = vcmp.lt.f32.partialorder %v7169, 0.0
    %vm7186 = vcmp.lt.f32.partialorder %v7170, 0.0
    %vm7187 = vcmp.lt.f32.partialorder %v7171, 0.0
    %vm7188 = vcmp.lt.f32.partialorder %v7172, 0.0
    %vm7189 = vcmp.lt.f32.partialorder %v7173, 0.0
    %vm7190 = vcmp.lt.f32.partialorder %v7174, 0.0
    %vm7191 = vcmp.lt.f32.partialorder %v7175, 0.0
    %vm7192 = vcmp.lt.f32.partialorder %v7176, 0.0
    %vm7193 = vcmp.lt.f32.partialorder %v7177, 0.0
    %v7194 = vsel %vm7178, -1.0, 1.0
    %v7195 = vsel %vm7179, -1.0, 1.0
    %v7196 = vsel %vm7180, -1.0, 1.0
    %v7197 = vsel %vm7181, -1.0, 1.0
    %v7198 = vsel %vm7182, -1.0, 1.0
    %v7199 = vsel %vm7183, -1.0, 1.0
    %v7200 = vsel %vm7184, -1.0, 1.0
    %v7201 = vsel %vm7185, -1.0, 1.0
    %v7202 = vsel %vm7186, -1.0, 1.0
    %v7203 = vsel %vm7187, -1.0, 1.0
    %v7204 = vsel %vm7188, -1.0, 1.0
    %v7205 = vsel %vm7189, -1.0, 1.0
    %v7206 = vsel %vm7190, -1.0, 1.0
    %v7207 = vsel %vm7191, -1.0, 1.0
    %v7208 = vsel %vm7192, -1.0, 1.0
    %v7209 = vsel %vm7193, -1.0, 1.0
    %v7210 = vand.u32 2147483647, %v7162
    %v7211 = vand.u32 2147483647, %v7163
    %v7212 = vand.u32 2147483647, %v7164
    %v7213 = vand.u32 2147483647, %v7165
    %v7214 = vand.u32 2147483647, %v7166
    %v7215 = vand.u32 2147483647, %v7167
    %v7216 = vand.u32 2147483647, %v7168
    %v7217 = vand.u32 2147483647, %v7169
    %v7218 = vand.u32 2147483647, %v7170
    %v7219 = vand.u32 2147483647, %v7171
    %v7220 = vand.u32 2147483647, %v7172
    %v7221 = vand.u32 2147483647, %v7173
    %v7222 = vand.u32 2147483647, %v7174
    %v7223 = vand.u32 2147483647, %v7175
    %v7224 = vand.u32 2147483647, %v7176
    %v7225 = vand.u32 2147483647, %v7177
    %v7226 = vmul.f32 %v7210, 0.3275911
    %v7227 = vmul.f32 %v7211, 0.3275911
    %v7228 = vmul.f32 %v7212, 0.3275911
    %v7229 = vmul.f32 %v7213, 0.3275911
    %v7230 = vmul.f32 %v7214, 0.3275911
    %v7231 = vmul.f32 %v7215, 0.3275911
    %v7232 = vmul.f32 %v7216, 0.3275911
    %v7233 = vmul.f32 %v7217, 0.3275911
    %v7234 = vmul.f32 %v7218, 0.3275911
    %v7235 = vmul.f32 %v7219, 0.3275911
    %v7236 = vmul.f32 %v7220, 0.3275911
    %v7237 = vmul.f32 %v7221, 0.3275911
    %v7238 = vmul.f32 %v7222, 0.3275911
    %v7239 = vmul.f32 %v7223, 0.3275911
    %v7240 = vmul.f32 %v7224, 0.3275911
    %v7241 = vmul.f32 %v7225, 0.3275911
    %v7242 = vadd.f32 %v7226, 1.0
    %v7243 = vadd.f32 %v7227, 1.0
    %v7244 = vadd.f32 %v7228, 1.0
    %v7245 = vadd.f32 %v7229, 1.0
    %v7246 = vadd.f32 %v7230, 1.0
    %v7247 = vadd.f32 %v7231, 1.0
    %v7248 = vadd.f32 %v7232, 1.0
    %v7249 = vadd.f32 %v7233, 1.0
    %v7250 = vadd.f32 %v7234, 1.0
    %v7251 = vadd.f32 %v7235, 1.0
    %v7252 = vadd.f32 %v7236, 1.0
    %v7253 = vadd.f32 %v7237, 1.0
    %v7254 = vadd.f32 %v7238, 1.0
    %v7255 = vadd.f32 %v7239, 1.0
    %v7256 = vadd.f32 %v7240, 1.0
    %v7257 = vadd.f32 %v7241, 1.0
    %v7258 = vrcp.pop %v7242
    %v7259 = vrcp.pop %v7243
    %v7260 = vrcp.pop %v7244
    %v7261 = vrcp.pop %v7245
    %v7262 = vrcp.pop %v7246
    %v7263 = vrcp.pop %v7247
    %v7264 = vrcp.pop %v7248
    %v7265 = vrcp.pop %v7249
    %v7266 = vrcp.pop %v7250
    %v7267 = vrcp.pop %v7251
    %v7268 = vrcp.pop %v7252
    %v7269 = vrcp.pop %v7253
    %v7270 = vrcp.pop %v7254
    %v7271 = vrcp.pop %v7255
    %v7272 = vrcp.pop %v7256
    %v7273 = vrcp.pop %v7257
    %v7274 = vmul.f32 %v7258, 1.0614054
    %v7275 = vmul.f32 %v7259, 1.0614054
    %v7276 = vmul.f32 %v7260, 1.0614054
    %v7277 = vmul.f32 %v7261, 1.0614054
    %v7278 = vmul.f32 %v7262, 1.0614054
    %v7279 = vmul.f32 %v7263, 1.0614054
    %v7280 = vmul.f32 %v7264, 1.0614054
    %v7281 = vmul.f32 %v7265, 1.0614054
    %v7282 = vmul.f32 %v7266, 1.0614054
    %v7283 = vmul.f32 %v7267, 1.0614054
    %v7284 = vmul.f32 %v7268, 1.0614054
    %v7285 = vmul.f32 %v7269, 1.0614054
    %v7286 = vmul.f32 %v7270, 1.0614054
    %v7287 = vmul.f32 %v7271, 1.0614054
    %v7288 = vmul.f32 %v7272, 1.0614054
    %v7289 = vmul.f32 %v7273, 1.0614054
    %v7290 = vadd.f32 %v7274, -1.4531521
    %v7291 = vadd.f32 %v7275, -1.4531521
    %v7292 = vadd.f32 %v7276, -1.4531521
    %v7293 = vadd.f32 %v7277, -1.4531521
    %v7294 = vadd.f32 %v7278, -1.4531521
    %v7295 = vadd.f32 %v7279, -1.4531521
    %v7296 = vadd.f32 %v7280, -1.4531521
    %v7297 = vadd.f32 %v7281, -1.4531521
    %v7298 = vadd.f32 %v7282, -1.4531521
    %v7299 = vadd.f32 %v7283, -1.4531521
    %v7300 = vadd.f32 %v7284, -1.4531521
    %v7301 = vadd.f32 %v7285, -1.4531521
    %v7302 = vadd.f32 %v7286, -1.4531521
    %v7303 = vadd.f32 %v7287, -1.4531521
    %v7304 = vadd.f32 %v7288, -1.4531521
    %v7305 = vadd.f32 %v7289, -1.4531521
    %v7306 = vmul.f32 %v7290, %v7258
    %v7307 = vmul.f32 %v7291, %v7259
    %v7308 = vmul.f32 %v7292, %v7260
    %v7309 = vmul.f32 %v7293, %v7261
    %v7310 = vmul.f32 %v7294, %v7262
    %v7311 = vmul.f32 %v7295, %v7263
    %v7312 = vmul.f32 %v7296, %v7264
    %v7313 = vmul.f32 %v7297, %v7265
    %v7314 = vmul.f32 %v7298, %v7266
    %v7315 = vmul.f32 %v7299, %v7267
    %v7316 = vmul.f32 %v7300, %v7268
    %v7317 = vmul.f32 %v7301, %v7269
    %v7318 = vmul.f32 %v7302, %v7270
    %v7319 = vmul.f32 %v7303, %v7271
    %v7320 = vmul.f32 %v7304, %v7272
    %v7321 = vmul.f32 %v7305, %v7273
    %v7322 = vadd.f32 %v7306, 1.4214138
    %v7323 = vadd.f32 %v7307, 1.4214138
    %v7324 = vadd.f32 %v7308, 1.4214138
    %v7325 = vadd.f32 %v7309, 1.4214138
    %v7326 = vadd.f32 %v7310, 1.4214138
    %v7327 = vadd.f32 %v7311, 1.4214138
    %v7328 = vadd.f32 %v7312, 1.4214138
    %v7329 = vadd.f32 %v7313, 1.4214138
    %v7330 = vadd.f32 %v7314, 1.4214138
    %v7331 = vadd.f32 %v7315, 1.4214138
    %v7332 = vadd.f32 %v7316, 1.4214138
    %v7333 = vadd.f32 %v7317, 1.4214138
    %v7334 = vadd.f32 %v7318, 1.4214138
    %v7335 = vadd.f32 %v7319, 1.4214138
    %v7336 = vadd.f32 %v7320, 1.4214138
    %v7337 = vadd.f32 %v7321, 1.4214138
    %v7338 = vmul.f32 %v7322, %v7258
    %v7339 = vmul.f32 %v7323, %v7259
    %v7340 = vmul.f32 %v7324, %v7260
    %v7341 = vmul.f32 %v7325, %v7261
    %v7342 = vmul.f32 %v7326, %v7262
    %v7343 = vmul.f32 %v7327, %v7263
    %v7344 = vmul.f32 %v7328, %v7264
    %v7345 = vmul.f32 %v7329, %v7265
    %v7346 = vmul.f32 %v7330, %v7266
    %v7347 = vmul.f32 %v7331, %v7267
    %v7348 = vmul.f32 %v7332, %v7268
    %v7349 = vmul.f32 %v7333, %v7269
    %v7350 = vmul.f32 %v7334, %v7270
    %v7351 = vmul.f32 %v7335, %v7271
    %v7352 = vmul.f32 %v7336, %v7272
    %v7353 = vmul.f32 %v7337, %v7273
    %v7354 = vadd.f32 %v7338, -0.28449672
    %v7355 = vadd.f32 %v7339, -0.28449672
    %v7356 = vadd.f32 %v7340, -0.28449672
    %v7357 = vadd.f32 %v7341, -0.28449672
    %v7358 = vadd.f32 %v7342, -0.28449672
    %v7359 = vadd.f32 %v7343, -0.28449672
    %v7360 = vadd.f32 %v7344, -0.28449672
    %v7361 = vadd.f32 %v7345, -0.28449672
    %v7362 = vadd.f32 %v7346, -0.28449672
    %v7363 = vadd.f32 %v7347, -0.28449672
    %v7364 = vadd.f32 %v7348, -0.28449672
    %v7365 = vadd.f32 %v7349, -0.28449672
    %v7366 = vadd.f32 %v7350, -0.28449672
    %v7367 = vadd.f32 %v7351, -0.28449672
    %v7368 = vadd.f32 %v7352, -0.28449672
    %v7369 = vadd.f32 %v7353, -0.28449672
    %v7370 = vmul.f32 %v7354, %v7258
    %v7371 = vmul.f32 %v7355, %v7259
    %v7372 = vmul.f32 %v7356, %v7260
    %v7373 = vmul.f32 %v7357, %v7261
    %v7374 = vmul.f32 %v7358, %v7262
    %v7375 = vmul.f32 %v7359, %v7263
    %v7376 = vmul.f32 %v7360, %v7264
    %v7377 = vmul.f32 %v7361, %v7265
    %v7378 = vmul.f32 %v7362, %v7266
    %v7379 = vmul.f32 %v7363, %v7267
    %v7380 = vmul.f32 %v7364, %v7268
    %v7381 = vmul.f32 %v7365, %v7269
    %v7382 = vmul.f32 %v7366, %v7270
    %v7383 = vmul.f32 %v7367, %v7271
    %v7384 = vmul.f32 %v7368, %v7272
    %v7385 = vmul.f32 %v7369, %v7273
    %v7386 = vadd.f32 %v7370, 0.2548296
    %v7387 = vadd.f32 %v7371, 0.2548296
    %v7388 = vadd.f32 %v7372, 0.2548296
    %v7389 = vadd.f32 %v7373, 0.2548296
    %v7390 = vadd.f32 %v7374, 0.2548296
    %v7391 = vadd.f32 %v7375, 0.2548296
    %v7392 = vadd.f32 %v7376, 0.2548296
    %v7393 = vadd.f32 %v7377, 0.2548296
    %v7394 = vadd.f32 %v7378, 0.2548296
    %v7395 = vadd.f32 %v7379, 0.2548296
    %v7396 = vadd.f32 %v7380, 0.2548296
    %v7397 = vadd.f32 %v7381, 0.2548296
    %v7398 = vadd.f32 %v7382, 0.2548296
    %v7399 = vadd.f32 %v7383, 0.2548296
    %v7400 = vadd.f32 %v7384, 0.2548296
    %v7401 = vadd.f32 %v7385, 0.2548296
    %v7402 = vmul.f32 %v7386, %v7258
    %v7403 = vmul.f32 %v7387, %v7259
    %v7404 = vmul.f32 %v7388, %v7260
    %v7405 = vmul.f32 %v7389, %v7261
    %v7406 = vmul.f32 %v7390, %v7262
    %v7407 = vmul.f32 %v7391, %v7263
    %v7408 = vmul.f32 %v7392, %v7264
    %v7409 = vmul.f32 %v7393, %v7265
    %v7410 = vmul.f32 %v7394, %v7266
    %v7411 = vmul.f32 %v7395, %v7267
    %v7412 = vmul.f32 %v7396, %v7268
    %v7413 = vmul.f32 %v7397, %v7269
    %v7414 = vmul.f32 %v7398, %v7270
    %v7415 = vmul.f32 %v7399, %v7271
    %v7416 = vmul.f32 %v7400, %v7272
    %v7417 = vmul.f32 %v7401, %v7273
    %v7418 = vsub.f32 0.0, %v7210
    %v7419 = vsub.f32 0.0, %v7211
    %v7420 = vsub.f32 0.0, %v7212
    %v7421 = vsub.f32 0.0, %v7213
    %v7422 = vsub.f32 0.0, %v7214
    %v7423 = vsub.f32 0.0, %v7215
    %v7424 = vsub.f32 0.0, %v7216
    %v7425 = vsub.f32 0.0, %v7217
    %v7426 = vsub.f32 0.0, %v7218
    %v7427 = vsub.f32 0.0, %v7219
    %v7428 = vsub.f32 0.0, %v7220
    %v7429 = vsub.f32 0.0, %v7221
    %v7430 = vsub.f32 0.0, %v7222
    %v7431 = vsub.f32 0.0, %v7223
    %v7432 = vsub.f32 0.0, %v7224
    %v7433 = vsub.f32 0.0, %v7225
    %v7434 = vmul.f32 %v7418, %v7210
    %v7435 = vmul.f32 %v7419, %v7211
    %v7436 = vmul.f32 %v7420, %v7212
    %v7437 = vmul.f32 %v7421, %v7213
    %v7438 = vmul.f32 %v7422, %v7214
    %v7439 = vmul.f32 %v7423, %v7215
    %v7440 = vmul.f32 %v7424, %v7216
    %v7441 = vmul.f32 %v7425, %v7217
    %v7442 = vmul.f32 %v7426, %v7218
    %v7443 = vmul.f32 %v7427, %v7219
    %v7444 = vmul.f32 %v7428, %v7220
    %v7445 = vmul.f32 %v7429, %v7221
    %v7446 = vmul.f32 %v7430, %v7222
    %v7447 = vmul.f32 %v7431, %v7223
    %v7448 = vmul.f32 %v7432, %v7224
    %v7449 = vmul.f32 %v7433, %v7225
    %v7450 = vmul.f32 %v7434, 1.442695
    %v7451 = vpow.pop %v7450
    %v7452 = vmul.f32 %v7435, 1.442695
    %v7453 = vpow.pop %v7452
    %v7454 = vmul.f32 %v7436, 1.442695
    %v7455 = vpow.pop %v7454
    %v7456 = vmul.f32 %v7437, 1.442695
    %v7457 = vpow.pop %v7456
    %v7458 = vmul.f32 %v7438, 1.442695
    %v7459 = vpow.pop %v7458
    %v7460 = vmul.f32 %v7439, 1.442695
    %v7461 = vpow.pop %v7460
    %v7462 = vmul.f32 %v7440, 1.442695
    %v7463 = vpow.pop %v7462
    %v7464 = vmul.f32 %v7441, 1.442695
    %v7465 = vpow.pop %v7464
    %v7466 = vmul.f32 %v7442, 1.442695
    %v7467 = vpow.pop %v7466
    %v7468 = vmul.f32 %v7443, 1.442695
    %v7469 = vpow.pop %v7468
    %v7470 = vmul.f32 %v7444, 1.442695
    %v7471 = vpow.pop %v7470
    %v7472 = vmul.f32 %v7445, 1.442695
    %v7473 = vpow.pop %v7472
    %v7474 = vmul.f32 %v7446, 1.442695
    %v7475 = vpow.pop %v7474
    %v7476 = vmul.f32 %v7447, 1.442695
    %v7477 = vpow.pop %v7476
    %v7478 = vmul.f32 %v7448, 1.442695
    %v7479 = vpow.pop %v7478
    %v7480 = vmul.f32 %v7449, 1.442695
    %v7481 = vpow.pop %v7480
    %v7482 = vmul.f32 %v7402, %v7451
    %v7483 = vmul.f32 %v7403, %v7453
    %v7484 = vmul.f32 %v7404, %v7455
    %v7485 = vmul.f32 %v7405, %v7457
    %v7486 = vmul.f32 %v7406, %v7459
    %v7487 = vmul.f32 %v7407, %v7461
    %v7488 = vmul.f32 %v7408, %v7463
    %v7489 = vmul.f32 %v7409, %v7465
    %v7490 = vmul.f32 %v7410, %v7467
    %v7491 = vmul.f32 %v7411, %v7469
    %v7492 = vmul.f32 %v7412, %v7471
    %v7493 = vmul.f32 %v7413, %v7473
    %v7494 = vmul.f32 %v7414, %v7475
    %v7495 = vmul.f32 %v7415, %v7477
    %v7496 = vmul.f32 %v7416, %v7479
    %v7497 = vmul.f32 %v7417, %v7481
    %v7498 = vsub.f32 1.0, %v7482
    %v7499 = vsub.f32 1.0, %v7483
    %v7500 = vsub.f32 1.0, %v7484
    %v7501 = vsub.f32 1.0, %v7485
    %v7502 = vsub.f32 1.0, %v7486
    %v7503 = vsub.f32 1.0, %v7487
    %v7504 = vsub.f32 1.0, %v7488
    %v7505 = vsub.f32 1.0, %v7489
    %v7506 = vsub.f32 1.0, %v7490
    %v7507 = vsub.f32 1.0, %v7491
    %v7508 = vsub.f32 1.0, %v7492
    %v7509 = vsub.f32 1.0, %v7493
    %v7510 = vsub.f32 1.0, %v7494
    %v7511 = vsub.f32 1.0, %v7495
    %v7512 = vsub.f32 1.0, %v7496
    %v7513 = vsub.f32 1.0, %v7497
    %v7514 = vmul.f32 %v7194, %v7498
    %v7515 = vmul.f32 %v7195, %v7499
    %v7516 = vmul.f32 %v7196, %v7500
    %v7517 = vmul.f32 %v7197, %v7501
    %v7518 = vmul.f32 %v7198, %v7502
    %v7519 = vmul.f32 %v7199, %v7503
    %v7520 = vmul.f32 %v7200, %v7504
    %v7521 = vmul.f32 %v7201, %v7505
    %v7522 = vmul.f32 %v7202, %v7506
    %v7523 = vmul.f32 %v7203, %v7507
    %v7524 = vmul.f32 %v7204, %v7508
    %v7525 = vmul.f32 %v7205, %v7509
    %v7526 = vmul.f32 %v7206, %v7510
    %v7527 = vmul.f32 %v7207, %v7511
    %v7528 = vmul.f32 %v7208, %v7512
    %v7529 = vmul.f32 %v7209, %v7513
    %v7530 = vadd.f32 %v7514, 1.0
    %v7531 = vadd.f32 %v7515, 1.0
    %v7532 = vadd.f32 %v7516, 1.0
    %v7533 = vadd.f32 %v7517, 1.0
    %v7534 = vadd.f32 %v7518, 1.0
    %v7535 = vadd.f32 %v7519, 1.0
    %v7536 = vadd.f32 %v7520, 1.0
    %v7537 = vadd.f32 %v7521, 1.0
    %v7538 = vadd.f32 %v7522, 1.0
    %v7539 = vadd.f32 %v7523, 1.0
    %v7540 = vadd.f32 %v7524, 1.0
    %v7541 = vadd.f32 %v7525, 1.0
    %v7542 = vadd.f32 %v7526, 1.0
    %v7543 = vadd.f32 %v7527, 1.0
    %v7544 = vadd.f32 %v7528, 1.0
    %v7545 = vadd.f32 %v7529, 1.0
    %v7546 = vmul.f32 %v7146, %v7530
    %v7547 = vmul.f32 %v7147, %v7531
    %v7548 = vmul.f32 %v7148, %v7532
    %v7549 = vmul.f32 %v7149, %v7533
    %v7550 = vmul.f32 %v7150, %v7534
    %v7551 = vmul.f32 %v7151, %v7535
    %v7552 = vmul.f32 %v7152, %v7536
    %v7553 = vmul.f32 %v7153, %v7537
    %v7554 = vmul.f32 %v7154, %v7538
    %v7555 = vmul.f32 %v7155, %v7539
    %v7556 = vmul.f32 %v7156, %v7540
    %v7557 = vmul.f32 %v7157, %v7541
    %v7558 = vmul.f32 %v7158, %v7542
    %v7559 = vmul.f32 %v7159, %v7543
    %v7560 = vmul.f32 %v7160, %v7544
    %v7561 = vmul.f32 %v7161, %v7545
    %v7562 = vld [vmem:[%s105] sm:$0xff]
    %v7563 = vld [vmem:[%s105 + $0x8] sm:$0xff]
    %v7564 = vld [vmem:[%s105 + $0x10] sm:$0xff]
    %v7565 = vld [vmem:[%s105 + $0x18] sm:$0xff]
    %v7566 = vld [vmem:[%s105 + $0x20] sm:$0xff]
    %v7567 = vld [vmem:[%s105 + $0x28] sm:$0xff]
    %v7568 = vld [vmem:[%s105 + $0x30] sm:$0xff]
    %v7569 = vld [vmem:[%s105 + $0x38] sm:$0xff]
    %v7570 = vld [vmem:[%s105 + $0x40] sm:$0xff]
    %v7571 = vld [vmem:[%s105 + $0x48] sm:$0xff]
    %v7572 = vld [vmem:[%s105 + $0x50] sm:$0xff]
    %v7573 = vld [vmem:[%s105 + $0x58] sm:$0xff]
    %v7574 = vld [vmem:[%s105 + $0x60] sm:$0xff]
    %v7575 = vld [vmem:[%s105 + $0x68] sm:$0xff]
    %v7576 = vld [vmem:[%s105 + $0x70] sm:$0xff]
    %v7577 = vld [vmem:[%s105 + $0x78] sm:$0xff]
    %v7578 = vld [vmem:[%s105 + $0x80] sm:$0xff]
    %v7579 = vld [vmem:[%s105 + $0x88] sm:$0xff]
    %v7580 = vld [vmem:[%s105 + $0x90] sm:$0xff]
    %v7581 = vld [vmem:[%s105 + $0x98] sm:$0xff]
    %v7582 = vld [vmem:[%s105 + $0xa0] sm:$0xff]
    %v7583 = vld [vmem:[%s105 + $0xa8] sm:$0xff]
    %v7584 = vld [vmem:[%s105 + $0xb0] sm:$0xff]
    %v7585 = vld [vmem:[%s105 + $0xb8] sm:$0xff]
    %v7586 = vld [vmem:[%s105 + $0xc0] sm:$0xff]
    %v7587 = vld [vmem:[%s105 + $0xc8] sm:$0xff]
    %v7588 = vld [vmem:[%s105 + $0xd0] sm:$0xff]
    %v7589 = vld [vmem:[%s105 + $0xd8] sm:$0xff]
    %v7590 = vld [vmem:[%s105 + $0xe0] sm:$0xff]
    %v7591 = vld [vmem:[%s105 + $0xe8] sm:$0xff]
    %v7592 = vld [vmem:[%s105 + $0xf0] sm:$0xff]
    %v7593 = vld [vmem:[%s105 + $0xf8] sm:$0xff]
    %v7594 = vld [vmem:[%s105 + $0x100] sm:$0xff]
    %v7595 = vld [vmem:[%s105 + $0x108] sm:$0xff]
    %v7596 = vld [vmem:[%s105 + $0x110] sm:$0xff]
    %v7597 = vld [vmem:[%s105 + $0x118] sm:$0xff]
    %v7598 = vld [vmem:[%s105 + $0x120] sm:$0xff]
    %v7599 = vld [vmem:[%s105 + $0x128] sm:$0xff]
    %v7600 = vld [vmem:[%s105 + $0x130] sm:$0xff]
    %v7601 = vld [vmem:[%s105 + $0x138] sm:$0xff]
    %v7602 = vld [vmem:[%s105 + $0x140] sm:$0xff]
    %v7603 = vld [vmem:[%s105 + $0x148] sm:$0xff]
    %v7604 = vld [vmem:[%s105 + $0x150] sm:$0xff]
    %v7605 = vld [vmem:[%s105 + $0x158] sm:$0xff]
    %v7606 = vld [vmem:[%s105 + $0x160] sm:$0xff]
    %v7607 = vld [vmem:[%s105 + $0x168] sm:$0xff]
    %v7608 = vld [vmem:[%s105 + $0x170] sm:$0xff]
    %v7609 = vld [vmem:[%s105 + $0x178] sm:$0xff]
    %v7610 = vld [vmem:[%s105 + $0x180] sm:$0xff]
    %v7611 = vld [vmem:[%s105 + $0x188] sm:$0xff]
    %v7612 = vld [vmem:[%s105 + $0x190] sm:$0xff]
    %v7613 = vld [vmem:[%s105 + $0x198] sm:$0xff]
    %v7614 = vld [vmem:[%s105 + $0x1a0] sm:$0xff]
    %v7615 = vld [vmem:[%s105 + $0x1a8] sm:$0xff]
    %v7616 = vld [vmem:[%s105 + $0x1b0] sm:$0xff]
    %v7617 = vld [vmem:[%s105 + $0x1b8] sm:$0xff]
    %v7618 = vld [vmem:[%s105 + $0x1c0] sm:$0xff]
    %v7619 = vld [vmem:[%s105 + $0x1c8] sm:$0xff]
    %v7620 = vld [vmem:[%s105 + $0x1d0] sm:$0xff]
    %v7621 = vld [vmem:[%s105 + $0x1d8] sm:$0xff]
    %v7622 = vld [vmem:[%s105 + $0x1e0] sm:$0xff]
    %v7623 = vld [vmem:[%s105 + $0x1e8] sm:$0xff]
    %v7624 = vld [vmem:[%s105 + $0x1f0] sm:$0xff]
    %v7625 = vld [vmem:[%s105 + $0x1f8] sm:$0xff]
    %v7626 = vld [vmem:[#allocation26] sm:$0x1]
    %v7628 = vlaneseq
    %v7629 = vshrl.u32 %v7628, 7
    %v7630 = vsub.s32 0, %v7629
    %v7631 = vrot.slane %v7626, %v7630
    %7633 = vmatprep.subr.mxu0 0.0
    %7634 = vmatpush1.msra.mxu0 %v7577
    %7635 = vmatprep.subr.mxu0 0.0
    %7636 = vmatpush1.msra.mxu0 %v7576
    %7637 = vmatprep.subr.mxu0 0.0
    %7638 = vmatpush1.msra.mxu0 %v7575
    %7639 = vmatprep.subr.mxu0 0.0
    %7640 = vmatpush1.msra.mxu0 %v7574
    %7641 = vmatprep.subr.mxu0 0.0
    %7642 = vmatpush1.msra.mxu0 %v7573
    %7643 = vmatprep.subr.mxu0 0.0
    %7644 = vmatpush1.msra.mxu0 %v7572
    %7645 = vmatprep.subr.mxu0 0.0
    %7646 = vmatpush1.msra.mxu0 %v7571
    %7647 = vmatprep.subr.mxu0 0.0
    %7648 = vmatpush1.msra.mxu0 %v7570
    %7649 = vmatprep.subr.mxu0 0.0
    %7650 = vmatpush1.msra.mxu0 %v7569
    %7651 = vmatprep.subr.mxu0 0.0
    %7652 = vmatpush1.msra.mxu0 %v7568
    %7653 = vmatprep.subr.mxu0 0.0
    %7654 = vmatpush1.msra.mxu0 %v7567
    %7655 = vmatprep.subr.mxu0 0.0
    %7656 = vmatpush1.msra.mxu0 %v7566
    %7657 = vmatprep.subr.mxu0 0.0
    %7658 = vmatpush1.msra.mxu0 %v7565
    %7659 = vmatprep.subr.mxu0 0.0
    %7660 = vmatpush1.msra.mxu0 %v7564
    %7661 = vmatprep.subr.mxu0 0.0
    %7662 = vmatpush1.msra.mxu0 %v7563
    %7663 = vmatprep.subr.mxu0 0.0
    %7664 = vmatpush1.msra.mxu0 %v7562
    %7665 = vmatprep.subr.mxu0 0.0
    %7666 = vmatpush2.msra.mxu0 %v7593
    %7667 = vmatprep.subr.mxu0 0.0
    %7668 = vmatpush2.msra.mxu0 %v7592
    %7669 = vmatprep.subr.mxu0 0.0
    %7670 = vmatpush2.msra.mxu0 %v7591
    %7671 = vmatprep.subr.mxu0 0.0
    %7672 = vmatpush2.msra.mxu0 %v7590
    %7673 = vmatprep.subr.mxu0 0.0
    %7674 = vmatpush2.msra.mxu0 %v7589
    %7675 = vmatprep.subr.mxu0 0.0
    %7676 = vmatpush2.msra.mxu0 %v7588
    %7677 = vmatprep.subr.mxu0 0.0
    %7678 = vmatpush2.msra.mxu0 %v7587
    %7679 = vmatprep.subr.mxu0 0.0
    %7680 = vmatpush2.msra.mxu0 %v7586
    %7681 = vmatprep.subr.mxu0 0.0
    %7682 = vmatpush2.msra.mxu0 %v7585
    %7683 = vmatprep.subr.mxu0 0.0
    %7684 = vmatpush2.msra.mxu0 %v7584
    %7685 = vmatprep.subr.mxu0 0.0
    %7686 = vmatpush2.msra.mxu0 %v7583
    %7687 = vmatprep.subr.mxu0 0.0
    %7688 = vmatpush2.msra.mxu0 %v7582
    %7689 = vmatprep.subr.mxu0 0.0
    %7690 = vmatpush2.msra.mxu0 %v7581
    %7691 = vmatprep.subr.mxu0 0.0
    %7692 = vmatpush2.msra.mxu0 %v7580
    %7693 = vmatprep.subr.mxu0 0.0
    %7694 = vmatpush2.msra.mxu0 %v7579
    %7695 = vmatprep.subr.mxu0 0.0
    %7696 = vmatpush2.msra.mxu0 %v7578
    %7697 = vmatprep.mubr.f32.mxu0 %v7547
    %7698 = vmatmul.mubr.f32.gmra.mxu0 %v7546
    %v7699 = vpop.f32.mrf.mxu0
    %v7700 = vadd.f32 %v7631, %v7699
    %v7701 = vpop.f32.mrf.mxu0
    %7702 = vmatprep.mubr.f32.mxu0 %v7551
    %7703 = vmatmul.mubr.f32.gmra.mxu0 %v7550
    %v7704 = vpop.f32.mrf.mxu0
    %v7705 = vadd.f32 %v7631, %v7704
    %v7706 = vpop.f32.mrf.mxu0
    %7707 = vmatprep.mubr.f32.mxu0 %v7555
    %7708 = vmatmul.mubr.f32.gmra.mxu0 %v7554
    %v7709 = vpop.f32.mrf.mxu0
    %v7710 = vadd.f32 %v7631, %v7709
    %v7711 = vpop.f32.mrf.mxu0
    %7712 = vmatprep.mubr.f32.mxu0 %v7559
    %7713 = vmatmul.mubr.f32.gmra.mxu0 %v7558
    %v7714 = vpop.f32.mrf.mxu0
    %v7715 = vadd.f32 %v7631, %v7714
    %v7716 = vpop.f32.mrf.mxu0
    %7717 = vdwg.mxu0
    %7718 = vmatprep.subr.mxu0 0.0
    %7719 = vmatpush1.msra.mxu0 %v7609
    %7720 = vmatprep.subr.mxu0 0.0
    %7721 = vmatpush1.msra.mxu0 %v7608
    %7722 = vmatprep.subr.mxu0 0.0
    %7723 = vmatpush1.msra.mxu0 %v7607
    %7724 = vmatprep.subr.mxu0 0.0
    %7725 = vmatpush1.msra.mxu0 %v7606
    %7726 = vmatprep.subr.mxu0 0.0
    %7727 = vmatpush1.msra.mxu0 %v7605
    %7728 = vmatprep.subr.mxu0 0.0
    %7729 = vmatpush1.msra.mxu0 %v7604
    %7730 = vmatprep.subr.mxu0 0.0
    %7731 = vmatpush1.msra.mxu0 %v7603
    %7732 = vmatprep.subr.mxu0 0.0
    %7733 = vmatpush1.msra.mxu0 %v7602
    %7734 = vmatprep.subr.mxu0 0.0
    %7735 = vmatpush1.msra.mxu0 %v7601
    %7736 = vmatprep.subr.mxu0 0.0
    %7737 = vmatpush1.msra.mxu0 %v7600
    %7738 = vmatprep.subr.mxu0 0.0
    %7739 = vmatpush1.msra.mxu0 %v7599
    %7740 = vmatprep.subr.mxu0 0.0
    %7741 = vmatpush1.msra.mxu0 %v7598
    %7742 = vmatprep.subr.mxu0 0.0
    %7743 = vmatpush1.msra.mxu0 %v7597
    %7744 = vmatprep.subr.mxu0 0.0
    %7745 = vmatpush1.msra.mxu0 %v7596
    %7746 = vmatprep.subr.mxu0 0.0
    %7747 = vmatpush1.msra.mxu0 %v7595
    %7748 = vmatprep.subr.mxu0 0.0
    %7749 = vmatpush1.msra.mxu0 %v7594
    %7750 = vmatprep.subr.mxu0 0.0
    %7751 = vmatpush2.msra.mxu0 %v7625
    %7752 = vmatprep.subr.mxu0 0.0
    %7753 = vmatpush2.msra.mxu0 %v7624
    %7754 = vmatprep.subr.mxu0 0.0
    %7755 = vmatpush2.msra.mxu0 %v7623
    %7756 = vmatprep.subr.mxu0 0.0
    %7757 = vmatpush2.msra.mxu0 %v7622
    %7758 = vmatprep.subr.mxu0 0.0
    %7759 = vmatpush2.msra.mxu0 %v7621
    %7760 = vmatprep.subr.mxu0 0.0
    %7761 = vmatpush2.msra.mxu0 %v7620
    %7762 = vmatprep.subr.mxu0 0.0
    %7763 = vmatpush2.msra.mxu0 %v7619
    %7764 = vmatprep.subr.mxu0 0.0
    %7765 = vmatpush2.msra.mxu0 %v7618
    %7766 = vmatprep.subr.mxu0 0.0
    %7767 = vmatpush2.msra.mxu0 %v7617
    %7768 = vmatprep.subr.mxu0 0.0
    %7769 = vmatpush2.msra.mxu0 %v7616
    %7770 = vmatprep.subr.mxu0 0.0
    %7771 = vmatpush2.msra.mxu0 %v7615
    %7772 = vmatprep.subr.mxu0 0.0
    %7773 = vmatpush2.msra.mxu0 %v7614
    %7774 = vmatprep.subr.mxu0 0.0
    %7775 = vmatpush2.msra.mxu0 %v7613
    %7776 = vmatprep.subr.mxu0 0.0
    %7777 = vmatpush2.msra.mxu0 %v7612
    %7778 = vmatprep.subr.mxu0 0.0
    %7779 = vmatpush2.msra.mxu0 %v7611
    %7780 = vmatprep.subr.mxu0 0.0
    %7781 = vmatpush2.msra.mxu0 %v7610
    %7782 = vmatprep.mubr.f32.mxu0 %v7549
    %7783 = vmatmul.mubr.f32.gmra.mxu0 %v7548
    %v7784 = vpop.f32.mrf.mxu0
    %v7785 = vadd.f32 %v7700, %v7784
    %v7786 = vpop.f32.mrf.mxu0
    %7787 = vmatprep.mubr.f32.mxu0 %v7553
    %7788 = vmatmul.mubr.f32.gmra.mxu0 %v7552
    %v7789 = vpop.f32.mrf.mxu0
    %v7790 = vadd.f32 %v7705, %v7789
    %v7791 = vpop.f32.mrf.mxu0
    %7792 = vmatprep.mubr.f32.mxu0 %v7557
    %7793 = vmatmul.mubr.f32.gmra.mxu0 %v7556
    %v7794 = vpop.f32.mrf.mxu0
    %v7795 = vadd.f32 %v7710, %v7794
    %v7796 = vpop.f32.mrf.mxu0
    %7797 = vmatprep.mubr.f32.mxu0 %v7561
    %7798 = vmatmul.mubr.f32.gmra.mxu0 %v7560
    %v7799 = vpop.f32.mrf.mxu0
    %v7800 = vadd.f32 %v7715, %v7799
    %v7801 = vpop.f32.mrf.mxu0
    %7802 = vdwg.mxu0
    %v7803 = vmul.f32 %v7785, 0.5
    %v7804 = vmul.f32 %v7790, 0.5
    %v7805 = vmul.f32 %v7795, 0.5
    %v7806 = vmul.f32 %v7800, 0.5
    %v7807 = vmul.f32 %v7785, 0.70710677
    %v7808 = vmul.f32 %v7790, 0.70710677
    %v7809 = vmul.f32 %v7795, 0.70710677
    %v7810 = vmul.f32 %v7800, 0.70710677
    %vm7811 = vcmp.lt.f32.partialorder %v7807, 0.0
    %vm7812 = vcmp.lt.f32.partialorder %v7808, 0.0
    %vm7813 = vcmp.lt.f32.partialorder %v7809, 0.0
    %vm7814 = vcmp.lt.f32.partialorder %v7810, 0.0
    %v7815 = vsel %vm7811, -1.0, 1.0
    %v7816 = vsel %vm7812, -1.0, 1.0
    %v7817 = vsel %vm7813, -1.0, 1.0
    %v7818 = vsel %vm7814, -1.0, 1.0
    %v7819 = vand.u32 2147483647, %v7807
    %v7820 = vand.u32 2147483647, %v7808
    %v7821 = vand.u32 2147483647, %v7809
    %v7822 = vand.u32 2147483647, %v7810
    %v7823 = vmul.f32 %v7819, 0.3275911
    %v7824 = vmul.f32 %v7820, 0.3275911
    %v7825 = vmul.f32 %v7821, 0.3275911
    %v7826 = vmul.f32 %v7822, 0.3275911
    %v7827 = vadd.f32 %v7823, 1.0
    %v7828 = vadd.f32 %v7824, 1.0
    %v7829 = vadd.f32 %v7825, 1.0
    %v7830 = vadd.f32 %v7826, 1.0
    %v7831 = vrcp.pop %v7827
    %v7832 = vrcp.pop %v7828
    %v7833 = vrcp.pop %v7829
    %v7834 = vrcp.pop %v7830
    %v7835 = vmul.f32 %v7831, 1.0614054
    %v7836 = vmul.f32 %v7832, 1.0614054
    %v7837 = vmul.f32 %v7833, 1.0614054
    %v7838 = vmul.f32 %v7834, 1.0614054
    %v7839 = vadd.f32 %v7835, -1.4531521
    %v7840 = vadd.f32 %v7836, -1.4531521
    %v7841 = vadd.f32 %v7837, -1.4531521
    %v7842 = vadd.f32 %v7838, -1.4531521
    %v7843 = vmul.f32 %v7839, %v7831
    %v7844 = vmul.f32 %v7840, %v7832
    %v7845 = vmul.f32 %v7841, %v7833
    %v7846 = vmul.f32 %v7842, %v7834
    %v7847 = vadd.f32 %v7843, 1.4214138
    %v7848 = vadd.f32 %v7844, 1.4214138
    %v7849 = vadd.f32 %v7845, 1.4214138
    %v7850 = vadd.f32 %v7846, 1.4214138
    %v7851 = vmul.f32 %v7847, %v7831
    %v7852 = vmul.f32 %v7848, %v7832
    %v7853 = vmul.f32 %v7849, %v7833
    %v7854 = vmul.f32 %v7850, %v7834
    %v7855 = vadd.f32 %v7851, -0.28449672
    %v7856 = vadd.f32 %v7852, -0.28449672
    %v7857 = vadd.f32 %v7853, -0.28449672
    %v7858 = vadd.f32 %v7854, -0.28449672
    %v7859 = vmul.f32 %v7855, %v7831
    %v7860 = vmul.f32 %v7856, %v7832
    %v7861 = vmul.f32 %v7857, %v7833
    %v7862 = vmul.f32 %v7858, %v7834
    %v7863 = vadd.f32 %v7859, 0.2548296
    %v7864 = vadd.f32 %v7860, 0.2548296
    %v7865 = vadd.f32 %v7861, 0.2548296
    %v7866 = vadd.f32 %v7862, 0.2548296
    %v7867 = vmul.f32 %v7863, %v7831
    %v7868 = vmul.f32 %v7864, %v7832
    %v7869 = vmul.f32 %v7865, %v7833
    %v7870 = vmul.f32 %v7866, %v7834
    %v7871 = vsub.f32 0.0, %v7819
    %v7872 = vsub.f32 0.0, %v7820
    %v7873 = vsub.f32 0.0, %v7821
    %v7874 = vsub.f32 0.0, %v7822
    %v7875 = vmul.f32 %v7871, %v7819
    %v7876 = vmul.f32 %v7872, %v7820
    %v7877 = vmul.f32 %v7873, %v7821
    %v7878 = vmul.f32 %v7874, %v7822
    %v7879 = vmul.f32 %v7875, 1.442695
    %v7880 = vpow.pop %v7879
    %v7881 = vmul.f32 %v7876, 1.442695
    %v7882 = vpow.pop %v7881
    %v7883 = vmul.f32 %v7877, 1.442695
    %v7884 = vpow.pop %v7883
    %v7885 = vmul.f32 %v7878, 1.442695
    %v7886 = vpow.pop %v7885
    %v7887 = vmul.f32 %v7867, %v7880
    %v7888 = vmul.f32 %v7868, %v7882
    %v7889 = vmul.f32 %v7869, %v7884
    %v7890 = vmul.f32 %v7870, %v7886
    %v7891 = vsub.f32 1.0, %v7887
    %v7892 = vsub.f32 1.0, %v7888
    %v7893 = vsub.f32 1.0, %v7889
    %v7894 = vsub.f32 1.0, %v7890
    %v7895 = vmul.f32 %v7815, %v7891
    %v7896 = vmul.f32 %v7816, %v7892
    %v7897 = vmul.f32 %v7817, %v7893
    %v7898 = vmul.f32 %v7818, %v7894
    %v7899 = vadd.f32 %v7895, 1.0
    %v7900 = vadd.f32 %v7896, 1.0
    %v7901 = vadd.f32 %v7897, 1.0
    %v7902 = vadd.f32 %v7898, 1.0
    %v7903 = vmul.f32 %v7803, %v7899
    %v7904 = vmul.f32 %v7804, %v7900
    %v7905 = vmul.f32 %v7805, %v7901
    %v7906 = vmul.f32 %v7806, %v7902
    %v7907 = vld [vmem:[%s109] sm:$0xff]
    %v7908 = vld [vmem:[%s109 + $0x8] sm:$0xff]
    %v7909 = vld [vmem:[%s109 + $0x10] sm:$0xff]
    %v7910 = vld [vmem:[%s109 + $0x18] sm:$0xff]
    %v7911 = vld [vmem:[%s109 + $0x20] sm:$0xff]
    %v7912 = vld [vmem:[%s109 + $0x28] sm:$0xff]
    %v7913 = vld [vmem:[%s109 + $0x30] sm:$0xff]
    %v7914 = vld [vmem:[%s109 + $0x38] sm:$0xff]
    %v7915 = vld [vmem:[%s109 + $0x40] sm:$0xff]
    %v7916 = vld [vmem:[%s109 + $0x48] sm:$0xff]
    %v7917 = vld [vmem:[%s109 + $0x50] sm:$0xff]
    %v7918 = vld [vmem:[%s109 + $0x58] sm:$0xff]
    %v7919 = vld [vmem:[%s109 + $0x60] sm:$0xff]
    %v7920 = vld [vmem:[%s109 + $0x68] sm:$0xff]
    %v7921 = vld [vmem:[%s109 + $0x70] sm:$0xff]
    %v7922 = vld [vmem:[%s109 + $0x78] sm:$0xff]
    %v7923 = vld [vmem:[%s109 + $0x80] sm:$0xff]
    %v7924 = vld [vmem:[%s109 + $0x88] sm:$0xff]
    %v7925 = vld [vmem:[%s109 + $0x90] sm:$0xff]
    %v7926 = vld [vmem:[%s109 + $0x98] sm:$0xff]
    %v7927 = vld [vmem:[%s109 + $0xa0] sm:$0xff]
    %v7928 = vld [vmem:[%s109 + $0xa8] sm:$0xff]
    %v7929 = vld [vmem:[%s109 + $0xb0] sm:$0xff]
    %v7930 = vld [vmem:[%s109 + $0xb8] sm:$0xff]
    %v7931 = vld [vmem:[%s109 + $0xc0] sm:$0xff]
    %v7932 = vld [vmem:[%s109 + $0xc8] sm:$0xff]
    %v7933 = vld [vmem:[%s109 + $0xd0] sm:$0xff]
    %v7934 = vld [vmem:[%s109 + $0xd8] sm:$0xff]
    %v7935 = vld [vmem:[%s109 + $0xe0] sm:$0xff]
    %v7936 = vld [vmem:[%s109 + $0xe8] sm:$0xff]
    %v7937 = vld [vmem:[%s109 + $0xf0] sm:$0xff]
    %v7938 = vld [vmem:[%s109 + $0xf8] sm:$0xff]
    %v7939 = vld [vmem:[%s109 + $0x100] sm:$0xff]
    %v7940 = vld [vmem:[%s109 + $0x108] sm:$0xff]
    %v7941 = vld [vmem:[%s109 + $0x110] sm:$0xff]
    %v7942 = vld [vmem:[%s109 + $0x118] sm:$0xff]
    %v7943 = vld [vmem:[%s109 + $0x120] sm:$0xff]
    %v7944 = vld [vmem:[%s109 + $0x128] sm:$0xff]
    %v7945 = vld [vmem:[%s109 + $0x130] sm:$0xff]
    %v7946 = vld [vmem:[%s109 + $0x138] sm:$0xff]
    %v7947 = vld [vmem:[%s109 + $0x140] sm:$0xff]
    %v7948 = vld [vmem:[%s109 + $0x148] sm:$0xff]
    %v7949 = vld [vmem:[%s109 + $0x150] sm:$0xff]
    %v7950 = vld [vmem:[%s109 + $0x158] sm:$0xff]
    %v7951 = vld [vmem:[%s109 + $0x160] sm:$0xff]
    %v7952 = vld [vmem:[%s109 + $0x168] sm:$0xff]
    %v7953 = vld [vmem:[%s109 + $0x170] sm:$0xff]
    %v7954 = vld [vmem:[%s109 + $0x178] sm:$0xff]
    %v7955 = vld [vmem:[%s109 + $0x180] sm:$0xff]
    %v7956 = vld [vmem:[%s109 + $0x188] sm:$0xff]
    %v7957 = vld [vmem:[%s109 + $0x190] sm:$0xff]
    %v7958 = vld [vmem:[%s109 + $0x198] sm:$0xff]
    %v7959 = vld [vmem:[%s109 + $0x1a0] sm:$0xff]
    %v7960 = vld [vmem:[%s109 + $0x1a8] sm:$0xff]
    %v7961 = vld [vmem:[%s109 + $0x1b0] sm:$0xff]
    %v7962 = vld [vmem:[%s109 + $0x1b8] sm:$0xff]
    %v7963 = vld [vmem:[%s109 + $0x1c0] sm:$0xff]
    %v7964 = vld [vmem:[%s109 + $0x1c8] sm:$0xff]
    %v7965 = vld [vmem:[%s109 + $0x1d0] sm:$0xff]
    %v7966 = vld [vmem:[%s109 + $0x1d8] sm:$0xff]
    %v7967 = vld [vmem:[%s109 + $0x1e0] sm:$0xff]
    %v7968 = vld [vmem:[%s109 + $0x1e8] sm:$0xff]
    %v7969 = vld [vmem:[%s109 + $0x1f0] sm:$0xff]
    %v7970 = vld [vmem:[%s109 + $0x1f8] sm:$0xff]
    %v7971 = vld [vmem:[%s111] sm:$0xf]
    %v7973 = vlaneseq
    %v7974 = vshrl.u32 %v7973, 7
    %v7975 = vsub.s32 0, %v7974
    %v7976 = vrot.slane %v7971, %v7975
    %v7977 = vlaneseq
    %v7978 = vshrl.u32 %v7977, 7
    %v7979 = vsub.s32 1, %v7978
    %v7980 = vrot.slane %v7971, %v7979
    %v7981 = vlaneseq
    %v7982 = vshrl.u32 %v7981, 7
    %v7983 = vsub.s32 2, %v7982
    %v7984 = vrot.slane %v7971, %v7983
    %v7985 = vlaneseq
    %v7986 = vshrl.u32 %v7985, 7
    %v7987 = vsub.s32 3, %v7986
    %v7988 = vrot.slane %v7971, %v7987
    %7993 = vmatprep.subr.mxu0 %v7968
    %7994 = vmatpush1.msra.mxu0 %v7967
    %7995 = vmatprep.subr.mxu0 %v7964
    %7996 = vmatpush1.msra.mxu0 %v7963
    %7997 = vmatprep.subr.mxu0 %v7960
    %7998 = vmatpush1.msra.mxu0 %v7959
    %7999 = vmatprep.subr.mxu0 %v7956
    %8000 = vmatpush1.msra.mxu0 %v7955
    %8001 = vmatprep.subr.mxu0 %v7952
    %8002 = vmatpush1.msra.mxu0 %v7951
    %8003 = vmatprep.subr.mxu0 %v7948
    %8004 = vmatpush1.msra.mxu0 %v7947
    %8005 = vmatprep.subr.mxu0 %v7944
    %8006 = vmatpush1.msra.mxu0 %v7943
    %8007 = vmatprep.subr.mxu0 %v7940
    %8008 = vmatpush1.msra.mxu0 %v7939
    %8009 = vmatprep.subr.mxu0 %v7936
    %8010 = vmatpush1.msra.mxu0 %v7935
    %8011 = vmatprep.subr.mxu0 %v7932
    %8012 = vmatpush1.msra.mxu0 %v7931
    %8013 = vmatprep.subr.mxu0 %v7928
    %8014 = vmatpush1.msra.mxu0 %v7927
    %8015 = vmatprep.subr.mxu0 %v7924
    %8016 = vmatpush1.msra.mxu0 %v7923
    %8017 = vmatprep.subr.mxu0 %v7920
    %8018 = vmatpush1.msra.mxu0 %v7919
    %8019 = vmatprep.subr.mxu0 %v7916
    %8020 = vmatpush1.msra.mxu0 %v7915
    %8021 = vmatprep.subr.mxu0 %v7912
    %8022 = vmatpush1.msra.mxu0 %v7911
    %8023 = vmatprep.subr.mxu0 %v7908
    %8024 = vmatpush1.msra.mxu0 %v7907
    %8025 = vmatprep.subr.mxu0 0.0
    %8026 = vmatpush2.msra.mxu0 0.0
    %8027 = vmatprep.subr.mxu0 0.0
    %8028 = vmatpush2.msra.mxu0 0.0
    %8029 = vmatprep.subr.mxu0 0.0
    %8030 = vmatpush2.msra.mxu0 0.0
    %8031 = vmatprep.subr.mxu0 0.0
    %8032 = vmatpush2.msra.mxu0 0.0
    %8033 = vmatprep.subr.mxu0 0.0
    %8034 = vmatpush2.msra.mxu0 0.0
    %8035 = vmatprep.subr.mxu0 0.0
    %8036 = vmatpush2.msra.mxu0 0.0
    %8037 = vmatprep.subr.mxu0 0.0
    %8038 = vmatpush2.msra.mxu0 0.0
    %8039 = vmatprep.subr.mxu0 0.0
    %8040 = vmatpush2.msra.mxu0 0.0
    %8041 = vmatprep.subr.mxu0 0.0
    %8042 = vmatpush2.msra.mxu0 0.0
    %8043 = vmatprep.subr.mxu0 0.0
    %8044 = vmatpush2.msra.mxu0 0.0
    %8045 = vmatprep.subr.mxu0 0.0
    %8046 = vmatpush2.msra.mxu0 0.0
    %8047 = vmatprep.subr.mxu0 0.0
    %8048 = vmatpush2.msra.mxu0 0.0
    %8049 = vmatprep.subr.mxu0 0.0
    %8050 = vmatpush2.msra.mxu0 0.0
    %8051 = vmatprep.subr.mxu0 0.0
    %8052 = vmatpush2.msra.mxu0 0.0
    %8053 = vmatprep.subr.mxu0 0.0
    %8054 = vmatpush2.msra.mxu0 0.0
    %8055 = vmatprep.subr.mxu0 0.0
    %8056 = vmatpush2.msra.mxu0 0.0
    %8057 = vmatprep.mubr.f32.mxu0 0.0
    %8058 = vmatmul.mubr.f32.gmra.mxu0 %v7903
    %v8059 = vpop.f32.mrf.mxu0
    %v8060 = vadd.f32 %v7976, %v8059
    %v8061 = vpop.f32.mrf.mxu0
    %v8062 = vadd.f32 %v7980, %v8061
    %8063 = vmatprep.mubr.f32.mxu0 0.0
    %8064 = vmatmul.mubr.f32.gmra.mxu0 %v7904
    %v8065 = vpop.f32.mrf.mxu0
    %v8066 = vadd.f32 %v7976, %v8065
    %v8067 = vpop.f32.mrf.mxu0
    %v8068 = vadd.f32 %v7980, %v8067
    %8069 = vmatprep.mubr.f32.mxu0 0.0
    %8070 = vmatmul.mubr.f32.gmra.mxu0 %v7905
    %v8071 = vpop.f32.mrf.mxu0
    %v8072 = vadd.f32 %v7976, %v8071
    %v8073 = vpop.f32.mrf.mxu0
    %v8074 = vadd.f32 %v7980, %v8073
    %8075 = vmatprep.mubr.f32.mxu0 0.0
    %8076 = vmatmul.mubr.f32.gmra.mxu0 %v7906
    %v8077 = vpop.f32.mrf.mxu0
    %v8078 = vadd.f32 %v7976, %v8077
    %v8079 = vpop.f32.mrf.mxu0
    %v8080 = vadd.f32 %v7980, %v8079
    %8081 = vdwg.mxu0
    %8082 = vmatprep.subr.mxu0 %v7970
    %8083 = vmatpush1.msra.mxu0 %v7969
    %8084 = vmatprep.subr.mxu0 %v7966
    %8085 = vmatpush1.msra.mxu0 %v7965
    %8086 = vmatprep.subr.mxu0 %v7962
    %8087 = vmatpush1.msra.mxu0 %v7961
    %8088 = vmatprep.subr.mxu0 %v7958
    %8089 = vmatpush1.msra.mxu0 %v7957
    %8090 = vmatprep.subr.mxu0 %v7954
    %8091 = vmatpush1.msra.mxu0 %v7953
    %8092 = vmatprep.subr.mxu0 %v7950
    %8093 = vmatpush1.msra.mxu0 %v7949
    %8094 = vmatprep.subr.mxu0 %v7946
    %8095 = vmatpush1.msra.mxu0 %v7945
    %8096 = vmatprep.subr.mxu0 %v7942
    %8097 = vmatpush1.msra.mxu0 %v7941
    %8098 = vmatprep.subr.mxu0 %v7938
    %8099 = vmatpush1.msra.mxu0 %v7937
    %8100 = vmatprep.subr.mxu0 %v7934
    %8101 = vmatpush1.msra.mxu0 %v7933
    %8102 = vmatprep.subr.mxu0 %v7930
    %8103 = vmatpush1.msra.mxu0 %v7929
    %8104 = vmatprep.subr.mxu0 %v7926
    %8105 = vmatpush1.msra.mxu0 %v7925
    %8106 = vmatprep.subr.mxu0 %v7922
    %8107 = vmatpush1.msra.mxu0 %v7921
    %8108 = vmatprep.subr.mxu0 %v7918
    %8109 = vmatpush1.msra.mxu0 %v7917
    %8110 = vmatprep.subr.mxu0 %v7914
    %8111 = vmatpush1.msra.mxu0 %v7913
    %8112 = vmatprep.subr.mxu0 %v7910
    %8113 = vmatpush1.msra.mxu0 %v7909
    %8114 = vmatprep.subr.mxu0 0.0
    %8115 = vmatpush2.msra.mxu0 0.0
    %8116 = vmatprep.subr.mxu0 0.0
    %8117 = vmatpush2.msra.mxu0 0.0
    %8118 = vmatprep.subr.mxu0 0.0
    %8119 = vmatpush2.msra.mxu0 0.0
    %8120 = vmatprep.subr.mxu0 0.0
    %8121 = vmatpush2.msra.mxu0 0.0
    %8122 = vmatprep.subr.mxu0 0.0
    %8123 = vmatpush2.msra.mxu0 0.0
    %8124 = vmatprep.subr.mxu0 0.0
    %8125 = vmatpush2.msra.mxu0 0.0
    %8126 = vmatprep.subr.mxu0 0.0
    %8127 = vmatpush2.msra.mxu0 0.0
    %8128 = vmatprep.subr.mxu0 0.0
    %8129 = vmatpush2.msra.mxu0 0.0
    %8130 = vmatprep.subr.mxu0 0.0
    %8131 = vmatpush2.msra.mxu0 0.0
    %8132 = vmatprep.subr.mxu0 0.0
    %8133 = vmatpush2.msra.mxu0 0.0
    %8134 = vmatprep.subr.mxu0 0.0
    %8135 = vmatpush2.msra.mxu0 0.0
    %8136 = vmatprep.subr.mxu0 0.0
    %8137 = vmatpush2.msra.mxu0 0.0
    %8138 = vmatprep.subr.mxu0 0.0
    %8139 = vmatpush2.msra.mxu0 0.0
    %8140 = vmatprep.subr.mxu0 0.0
    %8141 = vmatpush2.msra.mxu0 0.0
    %8142 = vmatprep.subr.mxu0 0.0
    %8143 = vmatpush2.msra.mxu0 0.0
    %8144 = vmatprep.subr.mxu0 0.0
    %8145 = vmatpush2.msra.mxu0 0.0
    %8146 = vmatprep.mubr.f32.mxu0 0.0
    %8147 = vmatmul.mubr.f32.gmra.mxu0 %v7903
    %v8148 = vpop.f32.mrf.mxu0
    %v8149 = vadd.f32 %v7984, %v8148
    %v8150 = vpop.f32.mrf.mxu0
    %v8151 = vadd.f32 %v7988, %v8150
    %8152 = vmatprep.mubr.f32.mxu0 0.0
    %8153 = vmatmul.mubr.f32.gmra.mxu0 %v7904
    %v8154 = vpop.f32.mrf.mxu0
    %v8155 = vadd.f32 %v7984, %v8154
    %v8156 = vpop.f32.mrf.mxu0
    %v8157 = vadd.f32 %v7988, %v8156
    %8158 = vmatprep.mubr.f32.mxu0 0.0
    %8159 = vmatmul.mubr.f32.gmra.mxu0 %v7905
    %v8160 = vpop.f32.mrf.mxu0
    %v8161 = vadd.f32 %v7984, %v8160
    %v8162 = vpop.f32.mrf.mxu0
    %v8163 = vadd.f32 %v7988, %v8162
    %8164 = vmatprep.mubr.f32.mxu0 0.0
    %8165 = vmatmul.mubr.f32.gmra.mxu0 %v7906
    %v8166 = vpop.f32.mrf.mxu0
    %v8167 = vadd.f32 %v7984, %v8166
    %v8168 = vpop.f32.mrf.mxu0
    %v8169 = vadd.f32 %v7988, %v8168
    %8170 = vdwg.mxu0
    %v8171 = vmul.f32 %v8060, 0.5
    %v8172 = vmul.f32 %v8062, 0.5
    %v8173 = vmul.f32 %v8149, 0.5
    %v8174 = vmul.f32 %v8151, 0.5
    %v8175 = vmul.f32 %v8066, 0.5
    %v8176 = vmul.f32 %v8068, 0.5
    %v8177 = vmul.f32 %v8155, 0.5
    %v8178 = vmul.f32 %v8157, 0.5
    %v8179 = vmul.f32 %v8072, 0.5
    %v8180 = vmul.f32 %v8074, 0.5
    %v8181 = vmul.f32 %v8161, 0.5
    %v8182 = vmul.f32 %v8163, 0.5
    %v8183 = vmul.f32 %v8078, 0.5
    %v8184 = vmul.f32 %v8080, 0.5
    %v8185 = vmul.f32 %v8167, 0.5
    %v8186 = vmul.f32 %v8169, 0.5
    %v8187 = vmul.f32 %v8060, 0.70710677
    %v8188 = vmul.f32 %v8062, 0.70710677
    %v8189 = vmul.f32 %v8149, 0.70710677
    %v8190 = vmul.f32 %v8151, 0.70710677
    %v8191 = vmul.f32 %v8066, 0.70710677
    %v8192 = vmul.f32 %v8068, 0.70710677
    %v8193 = vmul.f32 %v8155, 0.70710677
    %v8194 = vmul.f32 %v8157, 0.70710677
    %v8195 = vmul.f32 %v8072, 0.70710677
    %v8196 = vmul.f32 %v8074, 0.70710677
    %v8197 = vmul.f32 %v8161, 0.70710677
    %v8198 = vmul.f32 %v8163, 0.70710677
    %v8199 = vmul.f32 %v8078, 0.70710677
    %v8200 = vmul.f32 %v8080, 0.70710677
    %v8201 = vmul.f32 %v8167, 0.70710677
    %v8202 = vmul.f32 %v8169, 0.70710677
    %vm8203 = vcmp.lt.f32.partialorder %v8187, 0.0
    %vm8204 = vcmp.lt.f32.partialorder %v8188, 0.0
    %vm8205 = vcmp.lt.f32.partialorder %v8189, 0.0
    %vm8206 = vcmp.lt.f32.partialorder %v8190, 0.0
    %vm8207 = vcmp.lt.f32.partialorder %v8191, 0.0
    %vm8208 = vcmp.lt.f32.partialorder %v8192, 0.0
    %vm8209 = vcmp.lt.f32.partialorder %v8193, 0.0
    %vm8210 = vcmp.lt.f32.partialorder %v8194, 0.0
    %vm8211 = vcmp.lt.f32.partialorder %v8195, 0.0
    %vm8212 = vcmp.lt.f32.partialorder %v8196, 0.0
    %vm8213 = vcmp.lt.f32.partialorder %v8197, 0.0
    %vm8214 = vcmp.lt.f32.partialorder %v8198, 0.0
    %vm8215 = vcmp.lt.f32.partialorder %v8199, 0.0
    %vm8216 = vcmp.lt.f32.partialorder %v8200, 0.0
    %vm8217 = vcmp.lt.f32.partialorder %v8201, 0.0
    %vm8218 = vcmp.lt.f32.partialorder %v8202, 0.0
    %v8219 = vsel %vm8203, -1.0, 1.0
    %v8220 = vsel %vm8204, -1.0, 1.0
    %v8221 = vsel %vm8205, -1.0, 1.0
    %v8222 = vsel %vm8206, -1.0, 1.0
    %v8223 = vsel %vm8207, -1.0, 1.0
    %v8224 = vsel %vm8208, -1.0, 1.0
    %v8225 = vsel %vm8209, -1.0, 1.0
    %v8226 = vsel %vm8210, -1.0, 1.0
    %v8227 = vsel %vm8211, -1.0, 1.0
    %v8228 = vsel %vm8212, -1.0, 1.0
    %v8229 = vsel %vm8213, -1.0, 1.0
    %v8230 = vsel %vm8214, -1.0, 1.0
    %v8231 = vsel %vm8215, -1.0, 1.0
    %v8232 = vsel %vm8216, -1.0, 1.0
    %v8233 = vsel %vm8217, -1.0, 1.0
    %v8234 = vsel %vm8218, -1.0, 1.0
    %v8235 = vand.u32 2147483647, %v8187
    %v8236 = vand.u32 2147483647, %v8188
    %v8237 = vand.u32 2147483647, %v8189
    %v8238 = vand.u32 2147483647, %v8190
    %v8239 = vand.u32 2147483647, %v8191
    %v8240 = vand.u32 2147483647, %v8192
    %v8241 = vand.u32 2147483647, %v8193
    %v8242 = vand.u32 2147483647, %v8194
    %v8243 = vand.u32 2147483647, %v8195
    %v8244 = vand.u32 2147483647, %v8196
    %v8245 = vand.u32 2147483647, %v8197
    %v8246 = vand.u32 2147483647, %v8198
    %v8247 = vand.u32 2147483647, %v8199
    %v8248 = vand.u32 2147483647, %v8200
    %v8249 = vand.u32 2147483647, %v8201
    %v8250 = vand.u32 2147483647, %v8202
    %v8251 = vmul.f32 %v8235, 0.3275911
    %v8252 = vmul.f32 %v8236, 0.3275911
    %v8253 = vmul.f32 %v8237, 0.3275911
    %v8254 = vmul.f32 %v8238, 0.3275911
    %v8255 = vmul.f32 %v8239, 0.3275911
    %v8256 = vmul.f32 %v8240, 0.3275911
    %v8257 = vmul.f32 %v8241, 0.3275911
    %v8258 = vmul.f32 %v8242, 0.3275911
    %v8259 = vmul.f32 %v8243, 0.3275911
    %v8260 = vmul.f32 %v8244, 0.3275911
    %v8261 = vmul.f32 %v8245, 0.3275911
    %v8262 = vmul.f32 %v8246, 0.3275911
    %v8263 = vmul.f32 %v8247, 0.3275911
    %v8264 = vmul.f32 %v8248, 0.3275911
    %v8265 = vmul.f32 %v8249, 0.3275911
    %v8266 = vmul.f32 %v8250, 0.3275911
    %v8267 = vadd.f32 %v8251, 1.0
    %v8268 = vadd.f32 %v8252, 1.0
    %v8269 = vadd.f32 %v8253, 1.0
    %v8270 = vadd.f32 %v8254, 1.0
    %v8271 = vadd.f32 %v8255, 1.0
    %v8272 = vadd.f32 %v8256, 1.0
    %v8273 = vadd.f32 %v8257, 1.0
    %v8274 = vadd.f32 %v8258, 1.0
    %v8275 = vadd.f32 %v8259, 1.0
    %v8276 = vadd.f32 %v8260, 1.0
    %v8277 = vadd.f32 %v8261, 1.0
    %v8278 = vadd.f32 %v8262, 1.0
    %v8279 = vadd.f32 %v8263, 1.0
    %v8280 = vadd.f32 %v8264, 1.0
    %v8281 = vadd.f32 %v8265, 1.0
    %v8282 = vadd.f32 %v8266, 1.0
    %v8283 = vrcp.pop %v8267
    %v8284 = vrcp.pop %v8268
    %v8285 = vrcp.pop %v8269
    %v8286 = vrcp.pop %v8270
    %v8287 = vrcp.pop %v8271
    %v8288 = vrcp.pop %v8272
    %v8289 = vrcp.pop %v8273
    %v8290 = vrcp.pop %v8274
    %v8291 = vrcp.pop %v8275
    %v8292 = vrcp.pop %v8276
    %v8293 = vrcp.pop %v8277
    %v8294 = vrcp.pop %v8278
    %v8295 = vrcp.pop %v8279
    %v8296 = vrcp.pop %v8280
    %v8297 = vrcp.pop %v8281
    %v8298 = vrcp.pop %v8282
    %v8299 = vmul.f32 %v8283, 1.0614054
    %v8300 = vmul.f32 %v8284, 1.0614054
    %v8301 = vmul.f32 %v8285, 1.0614054
    %v8302 = vmul.f32 %v8286, 1.0614054
    %v8303 = vmul.f32 %v8287, 1.0614054
    %v8304 = vmul.f32 %v8288, 1.0614054
    %v8305 = vmul.f32 %v8289, 1.0614054
    %v8306 = vmul.f32 %v8290, 1.0614054
    %v8307 = vmul.f32 %v8291, 1.0614054
    %v8308 = vmul.f32 %v8292, 1.0614054
    %v8309 = vmul.f32 %v8293, 1.0614054
    %v8310 = vmul.f32 %v8294, 1.0614054
    %v8311 = vmul.f32 %v8295, 1.0614054
    %v8312 = vmul.f32 %v8296, 1.0614054
    %v8313 = vmul.f32 %v8297, 1.0614054
    %v8314 = vmul.f32 %v8298, 1.0614054
    %v8315 = vadd.f32 %v8299, -1.4531521
    %v8316 = vadd.f32 %v8300, -1.4531521
    %v8317 = vadd.f32 %v8301, -1.4531521
    %v8318 = vadd.f32 %v8302, -1.4531521
    %v8319 = vadd.f32 %v8303, -1.4531521
    %v8320 = vadd.f32 %v8304, -1.4531521
    %v8321 = vadd.f32 %v8305, -1.4531521
    %v8322 = vadd.f32 %v8306, -1.4531521
    %v8323 = vadd.f32 %v8307, -1.4531521
    %v8324 = vadd.f32 %v8308, -1.4531521
    %v8325 = vadd.f32 %v8309, -1.4531521
    %v8326 = vadd.f32 %v8310, -1.4531521
    %v8327 = vadd.f32 %v8311, -1.4531521
    %v8328 = vadd.f32 %v8312, -1.4531521
    %v8329 = vadd.f32 %v8313, -1.4531521
    %v8330 = vadd.f32 %v8314, -1.4531521
    %v8331 = vmul.f32 %v8315, %v8283
    %v8332 = vmul.f32 %v8316, %v8284
    %v8333 = vmul.f32 %v8317, %v8285
    %v8334 = vmul.f32 %v8318, %v8286
    %v8335 = vmul.f32 %v8319, %v8287
    %v8336 = vmul.f32 %v8320, %v8288
    %v8337 = vmul.f32 %v8321, %v8289
    %v8338 = vmul.f32 %v8322, %v8290
    %v8339 = vmul.f32 %v8323, %v8291
    %v8340 = vmul.f32 %v8324, %v8292
    %v8341 = vmul.f32 %v8325, %v8293
    %v8342 = vmul.f32 %v8326, %v8294
    %v8343 = vmul.f32 %v8327, %v8295
    %v8344 = vmul.f32 %v8328, %v8296
    %v8345 = vmul.f32 %v8329, %v8297
    %v8346 = vmul.f32 %v8330, %v8298
    %v8347 = vadd.f32 %v8331, 1.4214138
    %v8348 = vadd.f32 %v8332, 1.4214138
    %v8349 = vadd.f32 %v8333, 1.4214138
    %v8350 = vadd.f32 %v8334, 1.4214138
    %v8351 = vadd.f32 %v8335, 1.4214138
    %v8352 = vadd.f32 %v8336, 1.4214138
    %v8353 = vadd.f32 %v8337, 1.4214138
    %v8354 = vadd.f32 %v8338, 1.4214138
    %v8355 = vadd.f32 %v8339, 1.4214138
    %v8356 = vadd.f32 %v8340, 1.4214138
    %v8357 = vadd.f32 %v8341, 1.4214138
    %v8358 = vadd.f32 %v8342, 1.4214138
    %v8359 = vadd.f32 %v8343, 1.4214138
    %v8360 = vadd.f32 %v8344, 1.4214138
    %v8361 = vadd.f32 %v8345, 1.4214138
    %v8362 = vadd.f32 %v8346, 1.4214138
    %v8363 = vmul.f32 %v8347, %v8283
    %v8364 = vmul.f32 %v8348, %v8284
    %v8365 = vmul.f32 %v8349, %v8285
    %v8366 = vmul.f32 %v8350, %v8286
    %v8367 = vmul.f32 %v8351, %v8287
    %v8368 = vmul.f32 %v8352, %v8288
    %v8369 = vmul.f32 %v8353, %v8289
    %v8370 = vmul.f32 %v8354, %v8290
    %v8371 = vmul.f32 %v8355, %v8291
    %v8372 = vmul.f32 %v8356, %v8292
    %v8373 = vmul.f32 %v8357, %v8293
    %v8374 = vmul.f32 %v8358, %v8294
    %v8375 = vmul.f32 %v8359, %v8295
    %v8376 = vmul.f32 %v8360, %v8296
    %v8377 = vmul.f32 %v8361, %v8297
    %v8378 = vmul.f32 %v8362, %v8298
    %v8379 = vadd.f32 %v8363, -0.28449672
    %v8380 = vadd.f32 %v8364, -0.28449672
    %v8381 = vadd.f32 %v8365, -0.28449672
    %v8382 = vadd.f32 %v8366, -0.28449672
    %v8383 = vadd.f32 %v8367, -0.28449672
    %v8384 = vadd.f32 %v8368, -0.28449672
    %v8385 = vadd.f32 %v8369, -0.28449672
    %v8386 = vadd.f32 %v8370, -0.28449672
    %v8387 = vadd.f32 %v8371, -0.28449672
    %v8388 = vadd.f32 %v8372, -0.28449672
    %v8389 = vadd.f32 %v8373, -0.28449672
    %v8390 = vadd.f32 %v8374, -0.28449672
    %v8391 = vadd.f32 %v8375, -0.28449672
    %v8392 = vadd.f32 %v8376, -0.28449672
    %v8393 = vadd.f32 %v8377, -0.28449672
    %v8394 = vadd.f32 %v8378, -0.28449672
    %v8395 = vmul.f32 %v8379, %v8283
    %v8396 = vmul.f32 %v8380, %v8284
    %v8397 = vmul.f32 %v8381, %v8285
    %v8398 = vmul.f32 %v8382, %v8286
    %v8399 = vmul.f32 %v8383, %v8287
    %v8400 = vmul.f32 %v8384, %v8288
    %v8401 = vmul.f32 %v8385, %v8289
    %v8402 = vmul.f32 %v8386, %v8290
    %v8403 = vmul.f32 %v8387, %v8291
    %v8404 = vmul.f32 %v8388, %v8292
    %v8405 = vmul.f32 %v8389, %v8293
    %v8406 = vmul.f32 %v8390, %v8294
    %v8407 = vmul.f32 %v8391, %v8295
    %v8408 = vmul.f32 %v8392, %v8296
    %v8409 = vmul.f32 %v8393, %v8297
    %v8410 = vmul.f32 %v8394, %v8298
    %v8411 = vadd.f32 %v8395, 0.2548296
    %v8412 = vadd.f32 %v8396, 0.2548296
    %v8413 = vadd.f32 %v8397, 0.2548296
    %v8414 = vadd.f32 %v8398, 0.2548296
    %v8415 = vadd.f32 %v8399, 0.2548296
    %v8416 = vadd.f32 %v8400, 0.2548296
    %v8417 = vadd.f32 %v8401, 0.2548296
    %v8418 = vadd.f32 %v8402, 0.2548296
    %v8419 = vadd.f32 %v8403, 0.2548296
    %v8420 = vadd.f32 %v8404, 0.2548296
    %v8421 = vadd.f32 %v8405, 0.2548296
    %v8422 = vadd.f32 %v8406, 0.2548296
    %v8423 = vadd.f32 %v8407, 0.2548296
    %v8424 = vadd.f32 %v8408, 0.2548296
    %v8425 = vadd.f32 %v8409, 0.2548296
    %v8426 = vadd.f32 %v8410, 0.2548296
    %v8427 = vmul.f32 %v8411, %v8283
    %v8428 = vmul.f32 %v8412, %v8284
    %v8429 = vmul.f32 %v8413, %v8285
    %v8430 = vmul.f32 %v8414, %v8286
    %v8431 = vmul.f32 %v8415, %v8287
    %v8432 = vmul.f32 %v8416, %v8288
    %v8433 = vmul.f32 %v8417, %v8289
    %v8434 = vmul.f32 %v8418, %v8290
    %v8435 = vmul.f32 %v8419, %v8291
    %v8436 = vmul.f32 %v8420, %v8292
    %v8437 = vmul.f32 %v8421, %v8293
    %v8438 = vmul.f32 %v8422, %v8294
    %v8439 = vmul.f32 %v8423, %v8295
    %v8440 = vmul.f32 %v8424, %v8296
    %v8441 = vmul.f32 %v8425, %v8297
    %v8442 = vmul.f32 %v8426, %v8298
    %v8443 = vsub.f32 0.0, %v8235
    %v8444 = vsub.f32 0.0, %v8236
    %v8445 = vsub.f32 0.0, %v8237
    %v8446 = vsub.f32 0.0, %v8238
    %v8447 = vsub.f32 0.0, %v8239
    %v8448 = vsub.f32 0.0, %v8240
    %v8449 = vsub.f32 0.0, %v8241
    %v8450 = vsub.f32 0.0, %v8242
    %v8451 = vsub.f32 0.0, %v8243
    %v8452 = vsub.f32 0.0, %v8244
    %v8453 = vsub.f32 0.0, %v8245
    %v8454 = vsub.f32 0.0, %v8246
    %v8455 = vsub.f32 0.0, %v8247
    %v8456 = vsub.f32 0.0, %v8248
    %v8457 = vsub.f32 0.0, %v8249
    %v8458 = vsub.f32 0.0, %v8250
    %v8459 = vmul.f32 %v8443, %v8235
    %v8460 = vmul.f32 %v8444, %v8236
    %v8461 = vmul.f32 %v8445, %v8237
    %v8462 = vmul.f32 %v8446, %v8238
    %v8463 = vmul.f32 %v8447, %v8239
    %v8464 = vmul.f32 %v8448, %v8240
    %v8465 = vmul.f32 %v8449, %v8241
    %v8466 = vmul.f32 %v8450, %v8242
    %v8467 = vmul.f32 %v8451, %v8243
    %v8468 = vmul.f32 %v8452, %v8244
    %v8469 = vmul.f32 %v8453, %v8245
    %v8470 = vmul.f32 %v8454, %v8246
    %v8471 = vmul.f32 %v8455, %v8247
    %v8472 = vmul.f32 %v8456, %v8248
    %v8473 = vmul.f32 %v8457, %v8249
    %v8474 = vmul.f32 %v8458, %v8250
    %v8475 = vmul.f32 %v8459, 1.442695
    %v8476 = vpow.pop %v8475
    %v8477 = vmul.f32 %v8460, 1.442695
    %v8478 = vpow.pop %v8477
    %v8479 = vmul.f32 %v8461, 1.442695
    %v8480 = vpow.pop %v8479
    %v8481 = vmul.f32 %v8462, 1.442695
    %v8482 = vpow.pop %v8481
    %v8483 = vmul.f32 %v8463, 1.442695
    %v8484 = vpow.pop %v8483
    %v8485 = vmul.f32 %v8464, 1.442695
    %v8486 = vpow.pop %v8485
    %v8487 = vmul.f32 %v8465, 1.442695
    %v8488 = vpow.pop %v8487
    %v8489 = vmul.f32 %v8466, 1.442695
    %v8490 = vpow.pop %v8489
    %v8491 = vmul.f32 %v8467, 1.442695
    %v8492 = vpow.pop %v8491
    %v8493 = vmul.f32 %v8468, 1.442695
    %v8494 = vpow.pop %v8493
    %v8495 = vmul.f32 %v8469, 1.442695
    %v8496 = vpow.pop %v8495
    %v8497 = vmul.f32 %v8470, 1.442695
    %v8498 = vpow.pop %v8497
    %v8499 = vmul.f32 %v8471, 1.442695
    %v8500 = vpow.pop %v8499
    %v8501 = vmul.f32 %v8472, 1.442695
    %v8502 = vpow.pop %v8501
    %v8503 = vmul.f32 %v8473, 1.442695
    %v8504 = vpow.pop %v8503
    %v8505 = vmul.f32 %v8474, 1.442695
    %v8506 = vpow.pop %v8505
    %v8507 = vmul.f32 %v8427, %v8476
    %v8508 = vmul.f32 %v8428, %v8478
    %v8509 = vmul.f32 %v8429, %v8480
    %v8510 = vmul.f32 %v8430, %v8482
    %v8511 = vmul.f32 %v8431, %v8484
    %v8512 = vmul.f32 %v8432, %v8486
    %v8513 = vmul.f32 %v8433, %v8488
    %v8514 = vmul.f32 %v8434, %v8490
    %v8515 = vmul.f32 %v8435, %v8492
    %v8516 = vmul.f32 %v8436, %v8494
    %v8517 = vmul.f32 %v8437, %v8496
    %v8518 = vmul.f32 %v8438, %v8498
    %v8519 = vmul.f32 %v8439, %v8500
    %v8520 = vmul.f32 %v8440, %v8502
    %v8521 = vmul.f32 %v8441, %v8504
    %v8522 = vmul.f32 %v8442, %v8506
    %v8523 = vsub.f32 1.0, %v8507
    %v8524 = vsub.f32 1.0, %v8508
    %v8525 = vsub.f32 1.0, %v8509
    %v8526 = vsub.f32 1.0, %v8510
    %v8527 = vsub.f32 1.0, %v8511
    %v8528 = vsub.f32 1.0, %v8512
    %v8529 = vsub.f32 1.0, %v8513
    %v8530 = vsub.f32 1.0, %v8514
    %v8531 = vsub.f32 1.0, %v8515
    %v8532 = vsub.f32 1.0, %v8516
    %v8533 = vsub.f32 1.0, %v8517
    %v8534 = vsub.f32 1.0, %v8518
    %v8535 = vsub.f32 1.0, %v8519
    %v8536 = vsub.f32 1.0, %v8520
    %v8537 = vsub.f32 1.0, %v8521
    %v8538 = vsub.f32 1.0, %v8522
    %v8539 = vmul.f32 %v8219, %v8523
    %v8540 = vmul.f32 %v8220, %v8524
    %v8541 = vmul.f32 %v8221, %v8525
    %v8542 = vmul.f32 %v8222, %v8526
    %v8543 = vmul.f32 %v8223, %v8527
    %v8544 = vmul.f32 %v8224, %v8528
    %v8545 = vmul.f32 %v8225, %v8529
    %v8546 = vmul.f32 %v8226, %v8530
    %v8547 = vmul.f32 %v8227, %v8531
    %v8548 = vmul.f32 %v8228, %v8532
    %v8549 = vmul.f32 %v8229, %v8533
    %v8550 = vmul.f32 %v8230, %v8534
    %v8551 = vmul.f32 %v8231, %v8535
    %v8552 = vmul.f32 %v8232, %v8536
    %v8553 = vmul.f32 %v8233, %v8537
    %v8554 = vmul.f32 %v8234, %v8538
    %v8555 = vadd.f32 %v8539, 1.0
    %v8556 = vadd.f32 %v8540, 1.0
    %v8557 = vadd.f32 %v8541, 1.0
    %v8558 = vadd.f32 %v8542, 1.0
    %v8559 = vadd.f32 %v8543, 1.0
    %v8560 = vadd.f32 %v8544, 1.0
    %v8561 = vadd.f32 %v8545, 1.0
    %v8562 = vadd.f32 %v8546, 1.0
    %v8563 = vadd.f32 %v8547, 1.0
    %v8564 = vadd.f32 %v8548, 1.0
    %v8565 = vadd.f32 %v8549, 1.0
    %v8566 = vadd.f32 %v8550, 1.0
    %v8567 = vadd.f32 %v8551, 1.0
    %v8568 = vadd.f32 %v8552, 1.0
    %v8569 = vadd.f32 %v8553, 1.0
    %v8570 = vadd.f32 %v8554, 1.0
    %v8571 = vmul.f32 %v8171, %v8555
    %v8572 = vmul.f32 %v8172, %v8556
    %v8573 = vmul.f32 %v8173, %v8557
    %v8574 = vmul.f32 %v8174, %v8558
    %v8575 = vmul.f32 %v8175, %v8559
    %v8576 = vmul.f32 %v8176, %v8560
    %v8577 = vmul.f32 %v8177, %v8561
    %v8578 = vmul.f32 %v8178, %v8562
    %v8579 = vmul.f32 %v8179, %v8563
    %v8580 = vmul.f32 %v8180, %v8564
    %v8581 = vmul.f32 %v8181, %v8565
    %v8582 = vmul.f32 %v8182, %v8566
    %v8583 = vmul.f32 %v8183, %v8567
    %v8584 = vmul.f32 %v8184, %v8568
    %v8585 = vmul.f32 %v8185, %v8569
    %v8586 = vmul.f32 %v8186, %v8570
    %v8587 = vld [vmem:[%s113] sm:$0xff]
    %v8588 = vld [vmem:[%s113 + $0x8] sm:$0xff]
    %v8589 = vld [vmem:[%s113 + $0x10] sm:$0xff]
    %v8590 = vld [vmem:[%s113 + $0x18] sm:$0xff]
    %v8591 = vld [vmem:[%s113 + $0x20] sm:$0xff]
    %v8592 = vld [vmem:[%s113 + $0x28] sm:$0xff]
    %v8593 = vld [vmem:[%s113 + $0x30] sm:$0xff]
    %v8594 = vld [vmem:[%s113 + $0x38] sm:$0xff]
    %v8595 = vld [vmem:[%s113 + $0x40] sm:$0xff]
    %v8596 = vld [vmem:[%s113 + $0x48] sm:$0xff]
    %v8597 = vld [vmem:[%s113 + $0x50] sm:$0xff]
    %v8598 = vld [vmem:[%s113 + $0x58] sm:$0xff]
    %v8599 = vld [vmem:[%s113 + $0x60] sm:$0xff]
    %v8600 = vld [vmem:[%s113 + $0x68] sm:$0xff]
    %v8601 = vld [vmem:[%s113 + $0x70] sm:$0xff]
    %v8602 = vld [vmem:[%s113 + $0x78] sm:$0xff]
    %v8603 = vld [vmem:[%s113 + $0x80] sm:$0xff]
    %v8604 = vld [vmem:[%s113 + $0x88] sm:$0xff]
    %v8605 = vld [vmem:[%s113 + $0x90] sm:$0xff]
    %v8606 = vld [vmem:[%s113 + $0x98] sm:$0xff]
    %v8607 = vld [vmem:[%s113 + $0xa0] sm:$0xff]
    %v8608 = vld [vmem:[%s113 + $0xa8] sm:$0xff]
    %v8609 = vld [vmem:[%s113 + $0xb0] sm:$0xff]
    %v8610 = vld [vmem:[%s113 + $0xb8] sm:$0xff]
    %v8611 = vld [vmem:[%s113 + $0xc0] sm:$0xff]
    %v8612 = vld [vmem:[%s113 + $0xc8] sm:$0xff]
    %v8613 = vld [vmem:[%s113 + $0xd0] sm:$0xff]
    %v8614 = vld [vmem:[%s113 + $0xd8] sm:$0xff]
    %v8615 = vld [vmem:[%s113 + $0xe0] sm:$0xff]
    %v8616 = vld [vmem:[%s113 + $0xe8] sm:$0xff]
    %v8617 = vld [vmem:[%s113 + $0xf0] sm:$0xff]
    %v8618 = vld [vmem:[%s113 + $0xf8] sm:$0xff]
    %v8619 = vld [vmem:[%s113 + $0x100] sm:$0xff]
    %v8620 = vld [vmem:[%s113 + $0x108] sm:$0xff]
    %v8621 = vld [vmem:[%s113 + $0x110] sm:$0xff]
    %v8622 = vld [vmem:[%s113 + $0x118] sm:$0xff]
    %v8623 = vld [vmem:[%s113 + $0x120] sm:$0xff]
    %v8624 = vld [vmem:[%s113 + $0x128] sm:$0xff]
    %v8625 = vld [vmem:[%s113 + $0x130] sm:$0xff]
    %v8626 = vld [vmem:[%s113 + $0x138] sm:$0xff]
    %v8627 = vld [vmem:[%s113 + $0x140] sm:$0xff]
    %v8628 = vld [vmem:[%s113 + $0x148] sm:$0xff]
    %v8629 = vld [vmem:[%s113 + $0x150] sm:$0xff]
    %v8630 = vld [vmem:[%s113 + $0x158] sm:$0xff]
    %v8631 = vld [vmem:[%s113 + $0x160] sm:$0xff]
    %v8632 = vld [vmem:[%s113 + $0x168] sm:$0xff]
    %v8633 = vld [vmem:[%s113 + $0x170] sm:$0xff]
    %v8634 = vld [vmem:[%s113 + $0x178] sm:$0xff]
    %v8635 = vld [vmem:[%s113 + $0x180] sm:$0xff]
    %v8636 = vld [vmem:[%s113 + $0x188] sm:$0xff]
    %v8637 = vld [vmem:[%s113 + $0x190] sm:$0xff]
    %v8638 = vld [vmem:[%s113 + $0x198] sm:$0xff]
    %v8639 = vld [vmem:[%s113 + $0x1a0] sm:$0xff]
    %v8640 = vld [vmem:[%s113 + $0x1a8] sm:$0xff]
    %v8641 = vld [vmem:[%s113 + $0x1b0] sm:$0xff]
    %v8642 = vld [vmem:[%s113 + $0x1b8] sm:$0xff]
    %v8643 = vld [vmem:[%s113 + $0x1c0] sm:$0xff]
    %v8644 = vld [vmem:[%s113 + $0x1c8] sm:$0xff]
    %v8645 = vld [vmem:[%s113 + $0x1d0] sm:$0xff]
    %v8646 = vld [vmem:[%s113 + $0x1d8] sm:$0xff]
    %v8647 = vld [vmem:[%s113 + $0x1e0] sm:$0xff]
    %v8648 = vld [vmem:[%s113 + $0x1e8] sm:$0xff]
    %v8649 = vld [vmem:[%s113 + $0x1f0] sm:$0xff]
    %v8650 = vld [vmem:[%s113 + $0x1f8] sm:$0xff]
    %v8651 = vld [vmem:[#allocation28] sm:$0x1]
    %v8653 = vlaneseq
    %v8654 = vshrl.u32 %v8653, 7
    %v8655 = vsub.s32 0, %v8654
    %v8656 = vrot.slane %v8651, %v8655
    %8658 = vmatprep.subr.mxu0 0.0
    %8659 = vmatpush1.msra.mxu0 %v8602
    %8660 = vmatprep.subr.mxu0 0.0
    %8661 = vmatpush1.msra.mxu0 %v8601
    %8662 = vmatprep.subr.mxu0 0.0
    %8663 = vmatpush1.msra.mxu0 %v8600
    %8664 = vmatprep.subr.mxu0 0.0
    %8665 = vmatpush1.msra.mxu0 %v8599
    %8666 = vmatprep.subr.mxu0 0.0
    %8667 = vmatpush1.msra.mxu0 %v8598
    %8668 = vmatprep.subr.mxu0 0.0
    %8669 = vmatpush1.msra.mxu0 %v8597
    %8670 = vmatprep.subr.mxu0 0.0
    %8671 = vmatpush1.msra.mxu0 %v8596
    %8672 = vmatprep.subr.mxu0 0.0
    %8673 = vmatpush1.msra.mxu0 %v8595
    %8674 = vmatprep.subr.mxu0 0.0
    %8675 = vmatpush1.msra.mxu0 %v8594
    %8676 = vmatprep.subr.mxu0 0.0
    %8677 = vmatpush1.msra.mxu0 %v8593
    %8678 = vmatprep.subr.mxu0 0.0
    %8679 = vmatpush1.msra.mxu0 %v8592
    %8680 = vmatprep.subr.mxu0 0.0
    %8681 = vmatpush1.msra.mxu0 %v8591
    %8682 = vmatprep.subr.mxu0 0.0
    %8683 = vmatpush1.msra.mxu0 %v8590
    %8684 = vmatprep.subr.mxu0 0.0
    %8685 = vmatpush1.msra.mxu0 %v8589
    %8686 = vmatprep.subr.mxu0 0.0
    %8687 = vmatpush1.msra.mxu0 %v8588
    %8688 = vmatprep.subr.mxu0 0.0
    %8689 = vmatpush1.msra.mxu0 %v8587
    %8690 = vmatprep.subr.mxu0 0.0
    %8691 = vmatpush2.msra.mxu0 %v8618
    %8692 = vmatprep.subr.mxu0 0.0
    %8693 = vmatpush2.msra.mxu0 %v8617
    %8694 = vmatprep.subr.mxu0 0.0
    %8695 = vmatpush2.msra.mxu0 %v8616
    %8696 = vmatprep.subr.mxu0 0.0
    %8697 = vmatpush2.msra.mxu0 %v8615
    %8698 = vmatprep.subr.mxu0 0.0
    %8699 = vmatpush2.msra.mxu0 %v8614
    %8700 = vmatprep.subr.mxu0 0.0
    %8701 = vmatpush2.msra.mxu0 %v8613
    %8702 = vmatprep.subr.mxu0 0.0
    %8703 = vmatpush2.msra.mxu0 %v8612
    %8704 = vmatprep.subr.mxu0 0.0
    %8705 = vmatpush2.msra.mxu0 %v8611
    %8706 = vmatprep.subr.mxu0 0.0
    %8707 = vmatpush2.msra.mxu0 %v8610
    %8708 = vmatprep.subr.mxu0 0.0
    %8709 = vmatpush2.msra.mxu0 %v8609
    %8710 = vmatprep.subr.mxu0 0.0
    %8711 = vmatpush2.msra.mxu0 %v8608
    %8712 = vmatprep.subr.mxu0 0.0
    %8713 = vmatpush2.msra.mxu0 %v8607
    %8714 = vmatprep.subr.mxu0 0.0
    %8715 = vmatpush2.msra.mxu0 %v8606
    %8716 = vmatprep.subr.mxu0 0.0
    %8717 = vmatpush2.msra.mxu0 %v8605
    %8718 = vmatprep.subr.mxu0 0.0
    %8719 = vmatpush2.msra.mxu0 %v8604
    %8720 = vmatprep.subr.mxu0 0.0
    %8721 = vmatpush2.msra.mxu0 %v8603
    %8722 = vmatprep.mubr.f32.mxu0 %v8572
    %8723 = vmatmul.mubr.f32.gmra.mxu0 %v8571
    %v8724 = vpop.f32.mrf.mxu0
    %v8725 = vadd.f32 %v8656, %v8724
    %v8726 = vpop.f32.mrf.mxu0
    %8727 = vmatprep.mubr.f32.mxu0 %v8576
    %8728 = vmatmul.mubr.f32.gmra.mxu0 %v8575
    %v8729 = vpop.f32.mrf.mxu0
    %v8730 = vadd.f32 %v8656, %v8729
    %v8731 = vpop.f32.mrf.mxu0
    %8732 = vmatprep.mubr.f32.mxu0 %v8580
    %8733 = vmatmul.mubr.f32.gmra.mxu0 %v8579
    %v8734 = vpop.f32.mrf.mxu0
    %v8735 = vadd.f32 %v8656, %v8734
    %v8736 = vpop.f32.mrf.mxu0
    %8737 = vmatprep.mubr.f32.mxu0 %v8584
    %8738 = vmatmul.mubr.f32.gmra.mxu0 %v8583
    %v8739 = vpop.f32.mrf.mxu0
    %v8740 = vadd.f32 %v8656, %v8739
    %v8741 = vpop.f32.mrf.mxu0
    %8742 = vdwg.mxu0
    %8743 = vmatprep.subr.mxu0 0.0
    %8744 = vmatpush1.msra.mxu0 %v8634
    %8745 = vmatprep.subr.mxu0 0.0
    %8746 = vmatpush1.msra.mxu0 %v8633
    %8747 = vmatprep.subr.mxu0 0.0
    %8748 = vmatpush1.msra.mxu0 %v8632
    %8749 = vmatprep.subr.mxu0 0.0
    %8750 = vmatpush1.msra.mxu0 %v8631
    %8751 = vmatprep.subr.mxu0 0.0
    %8752 = vmatpush1.msra.mxu0 %v8630
    %8753 = vmatprep.subr.mxu0 0.0
    %8754 = vmatpush1.msra.mxu0 %v8629
    %8755 = vmatprep.subr.mxu0 0.0
    %8756 = vmatpush1.msra.mxu0 %v8628
    %8757 = vmatprep.subr.mxu0 0.0
    %8758 = vmatpush1.msra.mxu0 %v8627
    %8759 = vmatprep.subr.mxu0 0.0
    %8760 = vmatpush1.msra.mxu0 %v8626
    %8761 = vmatprep.subr.mxu0 0.0
    %8762 = vmatpush1.msra.mxu0 %v8625
    %8763 = vmatprep.subr.mxu0 0.0
    %8764 = vmatpush1.msra.mxu0 %v8624
    %8765 = vmatprep.subr.mxu0 0.0
    %8766 = vmatpush1.msra.mxu0 %v8623
    %8767 = vmatprep.subr.mxu0 0.0
    %8768 = vmatpush1.msra.mxu0 %v8622
    %8769 = vmatprep.subr.mxu0 0.0
    %8770 = vmatpush1.msra.mxu0 %v8621
    %8771 = vmatprep.subr.mxu0 0.0
    %8772 = vmatpush1.msra.mxu0 %v8620
    %8773 = vmatprep.subr.mxu0 0.0
    %8774 = vmatpush1.msra.mxu0 %v8619
    %8775 = vmatprep.subr.mxu0 0.0
    %8776 = vmatpush2.msra.mxu0 %v8650
    %8777 = vmatprep.subr.mxu0 0.0
    %8778 = vmatpush2.msra.mxu0 %v8649
    %8779 = vmatprep.subr.mxu0 0.0
    %8780 = vmatpush2.msra.mxu0 %v8648
    %8781 = vmatprep.subr.mxu0 0.0
    %8782 = vmatpush2.msra.mxu0 %v8647
    %8783 = vmatprep.subr.mxu0 0.0
    %8784 = vmatpush2.msra.mxu0 %v8646
    %8785 = vmatprep.subr.mxu0 0.0
    %8786 = vmatpush2.msra.mxu0 %v8645
    %8787 = vmatprep.subr.mxu0 0.0
    %8788 = vmatpush2.msra.mxu0 %v8644
    %8789 = vmatprep.subr.mxu0 0.0
    %8790 = vmatpush2.msra.mxu0 %v8643
    %8791 = vmatprep.subr.mxu0 0.0
    %8792 = vmatpush2.msra.mxu0 %v8642
    %8793 = vmatprep.subr.mxu0 0.0
    %8794 = vmatpush2.msra.mxu0 %v8641
    %8795 = vmatprep.subr.mxu0 0.0
    %8796 = vmatpush2.msra.mxu0 %v8640
    %8797 = vmatprep.subr.mxu0 0.0
    %8798 = vmatpush2.msra.mxu0 %v8639
    %8799 = vmatprep.subr.mxu0 0.0
    %8800 = vmatpush2.msra.mxu0 %v8638
    %8801 = vmatprep.subr.mxu0 0.0
    %8802 = vmatpush2.msra.mxu0 %v8637
    %8803 = vmatprep.subr.mxu0 0.0
    %8804 = vmatpush2.msra.mxu0 %v8636
    %8805 = vmatprep.subr.mxu0 0.0
    %8806 = vmatpush2.msra.mxu0 %v8635
    %8807 = vmatprep.mubr.f32.mxu0 %v8574
    %8808 = vmatmul.mubr.f32.gmra.mxu0 %v8573
    %v8809 = vpop.f32.mrf.mxu0
    %v8810 = vadd.f32 %v8725, %v8809
    %v8811 = vpop.f32.mrf.mxu0
    %8812 = vmatprep.mubr.f32.mxu0 %v8578
    %8813 = vmatmul.mubr.f32.gmra.mxu0 %v8577
    %v8814 = vpop.f32.mrf.mxu0
    %v8815 = vadd.f32 %v8730, %v8814
    %v8816 = vpop.f32.mrf.mxu0
    %8817 = vmatprep.mubr.f32.mxu0 %v8582
    %8818 = vmatmul.mubr.f32.gmra.mxu0 %v8581
    %v8819 = vpop.f32.mrf.mxu0
    %v8820 = vadd.f32 %v8735, %v8819
    %v8821 = vpop.f32.mrf.mxu0
    %8822 = vmatprep.mubr.f32.mxu0 %v8586
    %8823 = vmatmul.mubr.f32.gmra.mxu0 %v8585
    %v8824 = vpop.f32.mrf.mxu0
    %v8825 = vadd.f32 %v8740, %v8824
    %v8826 = vpop.f32.mrf.mxu0
    %8827 = vdwg.mxu0
    %v8828 = vadd.f32 %v8810, %v6878
    %v8829 = vadd.f32 %v8815, %v6879
    %v8830 = vadd.f32 %v8820, %v6880
    %v8831 = vadd.f32 %v8825, %v6881
    %8832 = vst [vmem:[#allocation29] sm:$0xff] %v8828
    %8833 = vst [vmem:[#allocation29 + $0x8] sm:$0xff] %v8829
    %8834 = vst [vmem:[#allocation29 + $0x10] sm:$0xff] %v8830
    %8835 = vst [vmem:[#allocation29 + $0x18] sm:$0xff] %v8831
    // Predicated region
    $region302: #{vgnn_forward.1} parent=1 // pred_check
      _
    $region303: #{vgnn_forward.1} parent=1 // pred_check_branch
      %8837 = sbr.rel (0) target = $region305
    $region304: #{vgnn_forward.1} parent=1 // pred_region
      %s8839 = ssub.s32 512, 512
      %8840 = vsyncadd [#allocation4], %s8839
      %s8841 = sshll.u32 [#allocation29], 4
      %s8842 = int_to_ptr.vmem [resolvable:$true] %s8841
      %8847 = dma.vmem_to_hbm [thread:$0]  %s8842, 512, %s117, [#allocation4], 128, 128, 8
    $region305: #{vgnn_forward.1} parent=1 // pred_fallthru
      _
    // Predicated region
    $region306: #{vgnn_forward.1} parent=1 // pred_check
      _
    $region307: #{vgnn_forward.1} parent=1 // pred_check_branch
      %8849 = sbr.rel (0) target = $region309
    $region308: #{vgnn_forward.1} parent=1 // pred_region
      %8850 = dma.done [#allocation4], 512
    $region309: #{vgnn_forward.1} parent=1 // pred_fallthru
      _
    %8851 = vsyncpa [#allocation3], 1
    %8852 = vsyncpa [#allocation6], 1
    %8853 = vsyncpa [#allocation9], 1
    %8854 = vsyncpa [#allocation12], 1
    %8855 = vsyncpa [#allocation15], 1
    %8856 = vsyncpa [#allocation18], 1
    %8857 = vsyncpa [#allocation21], 1
    %8858 = vsyncpa [#allocation24], 1
    %8859 = vsyncpa [#allocation27], 1
    %8860 = vsyncpa [#allocation4], 1

</llo_original>
